<compile_context>
chip_gen: v7x
topology: tpu7x:2x2x1
jax: 0.10.0
libtpu: 0.0.40
codegen_flags: <defaults>
</compile_context>

<pallas_src>
import jax
import jax.numpy as jnp
from jax.experimental import pallas as pl
from jax.experimental.pallas import tpu as pltpu

_EPS = 1e-5

# All kernels use a 1-D parallel grid; 32 MiB scoped VMEM is safe on every
# generation (>= default on v5e, == default on v6e/v7x).
_CPARAMS = pltpu.CompilerParams(
    dimension_semantics=("parallel",),
    vmem_limit_bytes=32 * 1024 * 1024,
)


def _instance_norm_lastdim(x):
    # nn.InstanceNorm1d over the last dim: biased variance, eps=1e-5, no affine
    m = jnp.mean(x, axis=-1, keepdims=True)
    v = jnp.mean(jnp.square(x - m), axis=-1, keepdims=True)
    return (x - m) * jax.lax.rsqrt(v + _EPS)


def _weight_spec(a):
    # Weights stay VMEM-resident (constant index map).
    # TODO(synk): pipeline_mode=pl.Buffered(1) would drop the redundant second
    # buffer for these constant blocks; skipped (tiny VMEM win at these sizes).
    return pl.BlockSpec(a.shape, lambda i: (0,) * a.ndim)


def _row_tile(n):
    # Row tile for the pointwise MLP/head kernels:
    #  * <= 1024 rows (amortizes ~0.35us/grid-step, comfortably in VMEM)
    #  * multiple of 8 (f32 sublanes) unless it equals the full array
    #  * >= 2 grid steps whenever possible so both v7x TensorCores get work.
    if n <= 8:
        return n
    tm = (-(-n // 2) + 7) // 8 * 8            # round_up(cdiv(n, 2), 8)
    return min(1024, tm, n)


def _batch_tile(b):
    # Batch rows per LSTM grid step: up to 8 so the (TB, 2H) recurrent state
    # fills the f32 sublanes, while keeping >= 2 grid steps when b > 1
    # (v7x megacore; the grid axis is marked "parallel").
    return max(1, min(8, -(-b // 2)))


# ---------------------------------------------------------------------------
# Kernel 1: linear_proj  (Linear -> InstNorm -> ReLU -> Linear -> InstNorm ->
#                         ReLU -> Linear), fused, row-tiled, bf16 matmuls,
#                         bf16 output (inter-kernel activation).
# ---------------------------------------------------------------------------
def _mlp_proj_kernel(x_ref, w1, b1, w2, b2, w3, b3, o_ref):
    h = jnp.dot(x_ref[...].astype(jnp.bfloat16), w1[...],
                preferred_element_type=jnp.float32) + b1[...]
    h = jnp.maximum(_instance_norm_lastdim(h), 0.0)
    h = jnp.dot(h.astype(jnp.bfloat16), w2[...],
                preferred_element_type=jnp.float32) + b2[...]
    h = jnp.maximum(_instance_norm_lastdim(h), 0.0)
    o_ref[...] = (jnp.dot(h.astype(jnp.bfloat16), w3[...],
                          preferred_element_type=jnp.float32)
                  + b3[...]).astype(o_ref.dtype)


def mlp_proj(x, p):
    n, feat = x.shape
    d_out = p["w3"].shape[1]
    tm = _row_tile(n)
    return pl.pallas_call(
        _mlp_proj_kernel,
        out_shape=jax.ShapeDtypeStruct((n, d_out), jnp.bfloat16),
        grid=(pl.cdiv(n, tm),),
        in_specs=[pl.BlockSpec((tm, feat), lambda i: (i, 0)),
                  _weight_spec(p["w1"]), _weight_spec(p["b1"]),
                  _weight_spec(p["w2"]), _weight_spec(p["b2"]),
                  _weight_spec(p["w3"]), _weight_spec(p["b3"])],
        out_specs=pl.BlockSpec((tm, d_out), lambda i: (i, 0)),
        compiler_params=_CPARAMS,
    )(x, p["w1"], p["b1"], p["w2"], p["b2"], p["w3"], p["b3"])


# ---------------------------------------------------------------------------
# Kernel 2: fused bidirectional LSTM layer, batch-blocked.
#   grid=(ceil(B/TB),): TB batch rows per grid step (parallel across cores).
#   8H column layout: [i_f i_r | f_f f_r | g_f g_r | o_f o_r] (each H wide) so
#   every gate slice is a lane-aligned 2H slab and ONE block-diagonal (2H, 8H)
#   recurrent matmul updates both directions for all TB rows at once.
# ---------------------------------------------------------------------------
def _bilstm_layer_kernel(x_ref, wih_ref, b_ref, whh_ref, o_ref, hbuf_ref):
    tb, seq, din = x_ref.shape
    h8 = wih_ref.shape[1]          # 8H = 4 gates x 2 directions x H
    h2 = h8 // 4                   # 2H (one gate, both directions)
    h1 = h2 // 2                   # H

    # Dense input projection for BOTH directions at once (no zero-padded
    # weights); bias (= b_ih + b_hh) folded in here, off the serial path.
    xb = x_ref[...].astype(jnp.bfloat16).reshape(tb * seq, din)
    xp = (jnp.dot(xb, wih_ref[...], preferred_element_type=jnp.float32)
          + b_ref[...]).reshape(tb, seq, h8)          # (TB, L, 8H) fp32

    # fwd-direction lanes = first H of every interleaved 2H gate pair
    lane = jax.lax.broadcasted_iota(jnp.int32, (tb, h8), 1)
    fwd_mask = (lane % h2) < h1

    whh = whh_ref[...]                                # (2H, 8H) bf16
    h = jnp.zeros((tb, h2), jnp.float32)              # [h_fwd | h_rev]
    c = jnp.zeros((tb, h2), jnp.float32)              # [c_fwd | c_rev]

    # TODO(synk): static unroll assumes small/medium L; long sequences need a
    # lax.fori_loop / time-chunked variant carrying h,c in VMEM scratch.
    for s in range(seq):
        # fwd lanes use x[s], rev lanes use x[seq-1-s]; bias already included.
        gin = jnp.where(fwd_mask, xp[:, s, :], xp[:, seq - 1 - s, :])
        g = gin + jnp.dot(h.astype(jnp.bfloat16), whh,
                          preferred_element_type=jnp.float32)
        i_g = jax.nn.sigmoid(g[:, 0 * h2:1 * h2])
        f_g = jax.nn.sigmoid(g[:, 1 * h2:2 * h2])
        g_g = jnp.tanh(g[:, 2 * h2:3 * h2])
        o_g = jax.nn.sigmoid(g[:, 3 * h2:4 * h2])
        c = f_g * c + i_g * g_g
        h = o_g * jnp.tanh(c)
        # forward output belongs at time s, reverse output at time seq-1-s
        hbuf_ref[:, s, 0:h1] = h[:, 0:h1]
        hbuf_ref[:, seq - 1 - s, h1:h2] = h[:, h1:h2]

    # single lane-dense full-block writeback (bf16 inter-kernel activation)
    o_ref[...] = hbuf_ref[...].astype(o_ref.dtype)


def bilstm_layer(x, lp):
    bsz, seq, din = x.shape
    h2 = lp["whh"].shape[0]
    tb = _batch_tile(bsz)
    return pl.pallas_call(
        _bilstm_layer_kernel,
        out_shape=jax.ShapeDtypeStruct((bsz, seq, h2), jnp.bfloat16),
        grid=(pl.cdiv(bsz, tb),),
        in_specs=[pl.BlockSpec((tb, seq, din), lambda i: (i, 0, 0)),
                  _weight_spec(lp["wih"]), _weight_spec(lp["b"]),
                  _weight_spec(lp["whh"])],
        out_specs=pl.BlockSpec((tb, seq, h2), lambda i: (i, 0, 0)),
        scratch_shapes=[pltpu.VMEM((tb, seq, h2), jnp.float32)],
        compiler_params=_CPARAMS,
    )(x, lp["wih"], lp["b"], lp["whh"])


# ---------------------------------------------------------------------------
# Kernel 3: to_property head (Linear -> InstNorm -> ReLU -> Linear), fused,
#           lane-dense padded output (real class columns sliced outside).
# ---------------------------------------------------------------------------
def _head_kernel(x_ref, wa, ba, wb, bb, o_ref):
    h = jnp.dot(x_ref[...].astype(jnp.bfloat16), wa[...],
                preferred_element_type=jnp.float32) + ba[...]
    h = jnp.maximum(_instance_norm_lastdim(h), 0.0)
    o_ref[...] = (jnp.dot(h.astype(jnp.bfloat16), wb[...],
                          preferred_element_type=jnp.float32)
                  + bb[...]).astype(o_ref.dtype)


def head(x, p):
    n, d_in = x.shape
    cn = p["wb"].shape[1]
    cpad = -(-cn // 128) * 128                 # lane-dense output width
    wb = jnp.pad(p["wb"], ((0, 0), (0, cpad - cn)))
    bb = jnp.pad(p["bb"], ((0, 0), (0, cpad - cn)))
    tm = _row_tile(n)
    y = pl.pallas_call(
        _head_kernel,
        out_shape=jax.ShapeDtypeStruct((n, cpad), jnp.float32),
        grid=(pl.cdiv(n, tm),),
        in_specs=[pl.BlockSpec((tm, d_in), lambda i: (i, 0)),
                  _weight_spec(p["wa"]), _weight_spec(p["ba"]),
                  _weight_spec(wb), _weight_spec(bb)],
        out_specs=pl.BlockSpec((tm, cpad), lambda i: (i, 0)),
        compiler_params=_CPARAMS,
    )(x, p["wa"], p["ba"], wb, bb)
    return y[:, :cn]


# ---------------------------------------------------------------------------
# Parameter init (torch-style U(-1/sqrt(fan), 1/sqrt(fan))) + fused layouts.
# ---------------------------------------------------------------------------
def _dense_init(key, d_in, d_out):
    kw, kb = jax.random.split(key)
    s = d_in ** -0.5
    w = jax.random.uniform(kw, (d_in, d_out), jnp.float32, -s, s)
    b = jax.random.uniform(kb, (1, d_out), jnp.float32, -s, s)
    return w.astype(jnp.bfloat16), b


def _lstm_dir_init(key, d_in, hdim):
    k1, k2, k3, k4 = jax.random.split(key, 4)
    s = hdim ** -0.5
    return {
        "w_ih": jax.random.uniform(k1, (d_in, 4 * hdim), jnp.float32, -s, s),
        "w_hh": jax.random.uniform(k2, (hdim, 4 * hdim), jnp.float32, -s, s),
        # b_ih + b_hh: two independent uniform draws, summed (torch parity)
        "b": (jax.random.uniform(k3, (1, 4 * hdim), jnp.float32, -s, s)
              + jax.random.uniform(k4, (1, 4 * hdim), jnp.float32, -s, s)),
    }


def _arrange_bidir(pf, pr, hdim):
    """Pack a (fwd, rev) LSTM direction pair into the fused-kernel layout."""
    din = pf["w_ih"].shape[0]

    def blocks(w):                      # (X, 4H) -> (X, 4, H), gate-major
        return w.reshape(w.shape[0], 4, hdim)

    # dense W_ih: fwd weights in fwd lanes, rev weights in rev lanes
    wih = jnp.stack([blocks(pf["w_ih"]), blocks(pr["w_ih"])], axis=2)
    wih = wih.reshape(din, 8 * hdim)
    bias = jnp.stack([pf["b"].reshape(4, hdim), pr["b"].reshape(4, hdim)],
                     axis=1).reshape(1, 8 * hdim)
    whh = jnp.zeros((2, hdim, 4, 2, hdim), jnp.float32)
    whh = whh.at[0, :, :, 0, :].set(blocks(pf["w_hh"]))
    whh = whh.at[1, :, :, 1, :].set(blocks(pr["w_hh"]))
    whh = whh.reshape(2 * hdim, 8 * hdim)
    return {"wih": wih.astype(jnp.bfloat16),
            "b": bias,                               # fp32, = b_ih + b_hh
            "whh": whh.astype(jnp.bfloat16)}


def init_params(key, feat, hidden, class_num):
    ks = jax.random.split(key, 9)
    w1, b1 = _dense_init(ks[0], feat, feat // 2)
    w2, b2 = _dense_init(ks[1], feat // 2, feat // 4)
    w3, b3 = _dense_init(ks[2], feat // 4, feat // 4)
    lstm_in0 = feat // 4
    l0 = _arrange_bidir(_lstm_dir_init(ks[3], lstm_in0, hidden),
                        _lstm_dir_init(ks[4], lstm_in0, hidden), hidden)
    l1 = _arrange_bidir(_lstm_dir_init(ks[5], 2 * hidden, hidden),
                        _lstm_dir_init(ks[6], 2 * hidden, hidden), hidden)
    wa, ba = _dense_init(ks[7], 2 * hidden, 2 * hidden)
    wb, bb = _dense_init(ks[8], 2 * hidden, class_num)
    return {
        "proj": {"w1": w1, "b1": b1, "w2": w2, "b2": b2, "w3": w3, "b3": b3},
        "lstm": [l0, l1],
        "head": {"wa": wa, "ba": ba, "wb": wb, "bb": bb},
    }


# ---------------------------------------------------------------------------
# Full forward (need_row_attention=False path).  No transposes, no HBM flips:
# only free row-major reshapes between kernels; glue activations are bf16.
# ---------------------------------------------------------------------------
def forward(params, msa_query_embeddings, msa_row_attentions=None):
    del msa_row_attentions  # unused: need_row_attention defaults to False
    b, l, f = msa_query_embeddings.shape

    x = mlp_proj(msa_query_embeddings.reshape(b * l, f), params["proj"])
    x = x.reshape(b, l, -1)                          # (B, L, F//4), bf16

    # TODO(synk): inter-layer LSTM dropout(0.25) is training-only; eval-mode
    # forward (no dropout) implemented.
    for lp in params["lstm"]:                        # 2 fused bi-LSTM layers
        x = bilstm_layer(x, lp)                      # (B, L, 2H), bf16

    y = head(x.reshape(b * l, -1), params["head"])   # (B*L, class_num), fp32
    return y.reshape(b, l, -1)


if __name__ == "__main__":
    # small shapes consistent with the module's forward
    B, L = 2, 16
    FEAT, HIDDEN, CLASS_NUM = 256, 64, 8

    key = jax.random.PRNGKey(0)
    k_params, k_x, k_attn = jax.random.split(key, 3)
    params = init_params(k_params, FEAT, HIDDEN, CLASS_NUM)

    msa_query_embeddings = jax.random.normal(k_x, (B, L, FEAT), jnp.float32)
    # present for signature parity; unused because need_row_attention=False
    msa_row_attentions = jax.random.normal(k_attn, (B, 1, 1, L, L), jnp.float32)

    out = jax.jit(forward)(params, msa_query_embeddings, msa_row_attentions)
    out = jax.block_until_ready(out)
    assert out.shape == (B, L, CLASS_NUM), out.shape
    assert out.dtype == jnp.float32
    print("KERNEL_OK")
</pallas_src>

<mosaic_0001>
module attributes {stable_mosaic.version = 11 : i64} {
  func.func @_mlp_proj_kernel(%arg0: i32, %arg1: memref<16x256xf32, #tpu.memory_space<vmem>>, %arg2: memref<256x128xbf16, #tpu.memory_space<vmem>>, %arg3: memref<1x128xf32, #tpu.memory_space<vmem>>, %arg4: memref<128x64xbf16, #tpu.memory_space<vmem>>, %arg5: memref<1x64xf32, #tpu.memory_space<vmem>>, %arg6: memref<64x64xbf16, #tpu.memory_space<vmem>>, %arg7: memref<1x64xf32, #tpu.memory_space<vmem>>, %arg8: memref<16x64xbf16, #tpu.memory_space<vmem>>) attributes {dimension_semantics = [#tpu.dimension_semantics<parallel>], iteration_bounds = array<i64: 2>, scalar_prefetch = 0 : i64, scratch_operands = 0 : i64, tpu.core_type = #tpu.core_type<tc>, window_params = [{transform_indices = @transform_0, window_bounds = array<i64: 16, 256>}, {pipeline_mode = #tpu.pipeline_mode<synchronous>, transform_indices = @transform_1, window_bounds = array<i64: 256, 128>}, {pipeline_mode = #tpu.pipeline_mode<synchronous>, transform_indices = @transform_2, window_bounds = array<i64: 1, 128>}, {pipeline_mode = #tpu.pipeline_mode<synchronous>, transform_indices = @transform_3, window_bounds = array<i64: 128, 64>}, {pipeline_mode = #tpu.pipeline_mode<synchronous>, transform_indices = @transform_4, window_bounds = array<i64: 1, 64>}, {pipeline_mode = #tpu.pipeline_mode<synchronous>, transform_indices = @transform_5, window_bounds = array<i64: 64, 64>}, {pipeline_mode = #tpu.pipeline_mode<synchronous>, transform_indices = @transform_6, window_bounds = array<i64: 1, 64>}, {transform_indices = @transform_7, window_bounds = array<i64: 16, 64>}]} {
    %c0 = arith.constant 0 : index
    %c0_0 = arith.constant 0 : index
    %0 = vector.load %arg1[%c0, %c0_0] : memref<16x256xf32, #tpu.memory_space<vmem>>, vector<16x256xf32>
    %1 = arith.truncf %0 : vector<16x256xf32> to vector<16x256xbf16>
    %c0_1 = arith.constant 0 : index
    %c0_2 = arith.constant 0 : index
    %2 = vector.load %arg2[%c0_1, %c0_2] : memref<256x128xbf16, #tpu.memory_space<vmem>>, vector<256x128xbf16>
    %cst = arith.constant dense<0.000000e+00> : vector<16x128xf32>
    %3 = tpu.matmul %1, %2, %cst {dimension_numbers = #tpu.dot_dimension_numbers<[1], [0], [0], [1], [0, 0, 1, 1], [], []>} : vector<16x256xbf16>, vector<256x128xbf16>, vector<16x128xf32> -> vector<16x128xf32>
    %c0_3 = arith.constant 0 : index
    %c0_4 = arith.constant 0 : index
    %4 = vector.load %arg3[%c0_3, %c0_4] : memref<1x128xf32, #tpu.memory_space<vmem>>, vector<1x128xf32>
    %5 = vector.broadcast %4 : vector<1x128xf32> to vector<16x128xf32>
    %6 = arith.addf %3, %5 : vector<16x128xf32>
    %cst_5 = arith.constant dense<0.000000e+00> : vector<16xf32>
    %7 = vector.multi_reduction <add>, %6, %cst_5 [1] : vector<16x128xf32> to vector<16xf32>
    %8 = vector.shape_cast %7 : vector<16xf32> to vector<16x1xf32>
    %cst_6 = arith.constant 1.280000e+02 : f32
    %9 = vector.broadcast %cst_6 : f32 to vector<16x1xf32>
    %10 = arith.divf %8, %9 : vector<16x1xf32>
    %11 = vector.broadcast %10 : vector<16x1xf32> to vector<16x128xf32>
    %12 = arith.subf %6, %11 : vector<16x128xf32>
    %13 = arith.mulf %12, %12 : vector<16x128xf32>
    %cst_7 = arith.constant dense<0.000000e+00> : vector<16xf32>
    %14 = vector.multi_reduction <add>, %13, %cst_7 [1] : vector<16x128xf32> to vector<16xf32>
    %15 = vector.shape_cast %14 : vector<16xf32> to vector<16x1xf32>
    %cst_8 = arith.constant 1.280000e+02 : f32
    %16 = vector.broadcast %cst_8 : f32 to vector<16x1xf32>
    %17 = arith.divf %15, %16 : vector<16x1xf32>
    %18 = vector.broadcast %10 : vector<16x1xf32> to vector<16x128xf32>
    %19 = arith.subf %6, %18 : vector<16x128xf32>
    %cst_9 = arith.constant 9.99999974E-6 : f32
    %20 = vector.broadcast %cst_9 : f32 to vector<16x1xf32>
    %21 = arith.addf %17, %20 : vector<16x1xf32>
    %22 = math.rsqrt %21 : vector<16x1xf32>
    %23 = vector.broadcast %22 : vector<16x1xf32> to vector<16x128xf32>
    %24 = arith.mulf %19, %23 : vector<16x128xf32>
    %cst_10 = arith.constant 0.000000e+00 : f32
    %25 = vector.broadcast %cst_10 : f32 to vector<16x128xf32>
    %26 = arith.maximumf %24, %25 : vector<16x128xf32>
    %27 = arith.truncf %26 : vector<16x128xf32> to vector<16x128xbf16>
    %c0_11 = arith.constant 0 : index
    %c0_12 = arith.constant 0 : index
    %28 = vector.load %arg4[%c0_11, %c0_12] : memref<128x64xbf16, #tpu.memory_space<vmem>>, vector<128x64xbf16>
    %cst_13 = arith.constant dense<0.000000e+00> : vector<16x64xf32>
    %29 = tpu.matmul %27, %28, %cst_13 {dimension_numbers = #tpu.dot_dimension_numbers<[1], [0], [0], [1], [0, 0, 1, 1], [], []>} : vector<16x128xbf16>, vector<128x64xbf16>, vector<16x64xf32> -> vector<16x64xf32>
    %c0_14 = arith.constant 0 : index
    %c0_15 = arith.constant 0 : index
    %30 = vector.load %arg5[%c0_14, %c0_15] : memref<1x64xf32, #tpu.memory_space<vmem>>, vector<1x64xf32>
    %31 = vector.broadcast %30 : vector<1x64xf32> to vector<16x64xf32>
    %32 = arith.addf %29, %31 : vector<16x64xf32>
    %cst_16 = arith.constant dense<0.000000e+00> : vector<16xf32>
    %33 = vector.multi_reduction <add>, %32, %cst_16 [1] : vector<16x64xf32> to vector<16xf32>
    %34 = vector.shape_cast %33 : vector<16xf32> to vector<16x1xf32>
    %cst_17 = arith.constant 6.400000e+01 : f32
    %35 = vector.broadcast %cst_17 : f32 to vector<16x1xf32>
    %36 = arith.divf %34, %35 : vector<16x1xf32>
    %37 = vector.broadcast %36 : vector<16x1xf32> to vector<16x64xf32>
    %38 = arith.subf %32, %37 : vector<16x64xf32>
    %39 = arith.mulf %38, %38 : vector<16x64xf32>
    %cst_18 = arith.constant dense<0.000000e+00> : vector<16xf32>
    %40 = vector.multi_reduction <add>, %39, %cst_18 [1] : vector<16x64xf32> to vector<16xf32>
    %41 = vector.shape_cast %40 : vector<16xf32> to vector<16x1xf32>
    %cst_19 = arith.constant 6.400000e+01 : f32
    %42 = vector.broadcast %cst_19 : f32 to vector<16x1xf32>
    %43 = arith.divf %41, %42 : vector<16x1xf32>
    %44 = vector.broadcast %36 : vector<16x1xf32> to vector<16x64xf32>
    %45 = arith.subf %32, %44 : vector<16x64xf32>
    %cst_20 = arith.constant 9.99999974E-6 : f32
    %46 = vector.broadcast %cst_20 : f32 to vector<16x1xf32>
    %47 = arith.addf %43, %46 : vector<16x1xf32>
    %48 = math.rsqrt %47 : vector<16x1xf32>
    %49 = vector.broadcast %48 : vector<16x1xf32> to vector<16x64xf32>
    %50 = arith.mulf %45, %49 : vector<16x64xf32>
    %cst_21 = arith.constant 0.000000e+00 : f32
    %51 = vector.broadcast %cst_21 : f32 to vector<16x64xf32>
    %52 = arith.maximumf %50, %51 : vector<16x64xf32>
    %53 = arith.truncf %52 : vector<16x64xf32> to vector<16x64xbf16>
    %c0_22 = arith.constant 0 : index
    %c0_23 = arith.constant 0 : index
    %54 = vector.load %arg6[%c0_22, %c0_23] : memref<64x64xbf16, #tpu.memory_space<vmem>>, vector<64x64xbf16>
    %cst_24 = arith.constant dense<0.000000e+00> : vector<16x64xf32>
    %55 = tpu.matmul %53, %54, %cst_24 {dimension_numbers = #tpu.dot_dimension_numbers<[1], [0], [0], [1], [0, 0, 1, 1], [], []>} : vector<16x64xbf16>, vector<64x64xbf16>, vector<16x64xf32> -> vector<16x64xf32>
    %c0_25 = arith.constant 0 : index
    %c0_26 = arith.constant 0 : index
    %56 = vector.load %arg7[%c0_25, %c0_26] : memref<1x64xf32, #tpu.memory_space<vmem>>, vector<1x64xf32>
    %57 = vector.broadcast %56 : vector<1x64xf32> to vector<16x64xf32>
    %58 = arith.addf %55, %57 : vector<16x64xf32>
    %59 = arith.truncf %58 : vector<16x64xf32> to vector<16x64xbf16>
    %c0_27 = arith.constant 0 : index
    %c0_28 = arith.constant 0 : index
    %60 = vector.load %arg8[%c0_27, %c0_28] : memref<16x64xbf16, #tpu.memory_space<vmem>>, vector<16x64xbf16>
    tpu.vector_store %arg8[%c0_27, %c0_28], %59 {strides = array<i32>} : memref<16x64xbf16, #tpu.memory_space<vmem>>, vector<16x64xbf16>,
    return
  }
  func.func @transform_0(%arg0: i32) -> (i32, i32) {
    %c0_i32 = arith.constant 0 : i32
    %c0_i32_0 = arith.constant 0 : i32
    return %arg0, %c0_i32 : i32, i32
  }
  func.func @transform_1(%arg0: i32) -> (i32, i32) {
    %c0_i32 = arith.constant 0 : i32
    %c0_i32_0 = arith.constant 0 : i32
    %c0_i32_1 = arith.constant 0 : i32
    return %c0_i32, %c0_i32_0 : i32, i32
  }
  func.func @transform_2(%arg0: i32) -> (i32, i32) {
    %c0_i32 = arith.constant 0 : i32
    %c0_i32_0 = arith.constant 0 : i32
    %c0_i32_1 = arith.constant 0 : i32
    return %c0_i32, %c0_i32_0 : i32, i32
  }
  func.func @transform_3(%arg0: i32) -> (i32, i32) {
    %c0_i32 = arith.constant 0 : i32
    %c0_i32_0 = arith.constant 0 : i32
    %c0_i32_1 = arith.constant 0 : i32
    return %c0_i32, %c0_i32_0 : i32, i32
  }
  func.func @transform_4(%arg0: i32) -> (i32, i32) {
    %c0_i32 = arith.constant 0 : i32
    %c0_i32_0 = arith.constant 0 : i32
    %c0_i32_1 = arith.constant 0 : i32
    return %c0_i32, %c0_i32_0 : i32, i32
  }
  func.func @transform_5(%arg0: i32) -> (i32, i32) {
    %c0_i32 = arith.constant 0 : i32
    %c0_i32_0 = arith.constant 0 : i32
    %c0_i32_1 = arith.constant 0 : i32
    return %c0_i32, %c0_i32_0 : i32, i32
  }
  func.func @transform_6(%arg0: i32) -> (i32, i32) {
    %c0_i32 = arith.constant 0 : i32
    %c0_i32_0 = arith.constant 0 : i32
    %c0_i32_1 = arith.constant 0 : i32
    return %c0_i32, %c0_i32_0 : i32, i32
  }
  func.func @transform_7(%arg0: i32) -> (i32, i32) {
    %c0_i32 = arith.constant 0 : i32
    %c0_i32_0 = arith.constant 0 : i32
    return %arg0, %c0_i32 : i32, i32
  }
}

module attributes {stable_mosaic.version = 11 : i64} {
  func.func @_head_kernel(%arg0: i32, %arg1: memref<16x128xbf16, #tpu.memory_space<vmem>>, %arg2: memref<128x128xbf16, #tpu.memory_space<vmem>>, %arg3: memref<1x128xf32, #tpu.memory_space<vmem>>, %arg4: memref<128x128xbf16, #tpu.memory_space<vmem>>, %arg5: memref<1x128xf32, #tpu.memory_space<vmem>>, %arg6: memref<16x128xf32, #tpu.memory_space<vmem>>) attributes {dimension_semantics = [#tpu.dimension_semantics<parallel>], iteration_bounds = array<i64: 2>, scalar_prefetch = 0 : i64, scratch_operands = 0 : i64, tpu.core_type = #tpu.core_type<tc>, window_params = [{transform_indices = @transform_0, window_bounds = array<i64: 16, 128>}, {pipeline_mode = #tpu.pipeline_mode<synchronous>, transform_indices = @transform_1, window_bounds = array<i64: 128, 128>}, {pipeline_mode = #tpu.pipeline_mode<synchronous>, transform_indices = @transform_2, window_bounds = array<i64: 1, 128>}, {pipeline_mode = #tpu.pipeline_mode<synchronous>, transform_indices = @transform_3, window_bounds = array<i64: 128, 128>}, {pipeline_mode = #tpu.pipeline_mode<synchronous>, transform_indices = @transform_4, window_bounds = array<i64: 1, 128>}, {transform_indices = @transform_5, window_bounds = array<i64: 16, 128>}]} {
    %c0 = arith.constant 0 : index
    %c0_0 = arith.constant 0 : index
    %0 = vector.load %arg1[%c0, %c0_0] : memref<16x128xbf16, #tpu.memory_space<vmem>>, vector<16x128xbf16>
    %c0_1 = arith.constant 0 : index
    %c0_2 = arith.constant 0 : index
    %1 = vector.load %arg2[%c0_1, %c0_2] : memref<128x128xbf16, #tpu.memory_space<vmem>>, vector<128x128xbf16>
    %cst = arith.constant dense<0.000000e+00> : vector<16x128xf32>
    %2 = tpu.matmul %0, %1, %cst {dimension_numbers = #tpu.dot_dimension_numbers<[1], [0], [0], [1], [0, 0, 1, 1], [], []>} : vector<16x128xbf16>, vector<128x128xbf16>, vector<16x128xf32> -> vector<16x128xf32>
    %c0_3 = arith.constant 0 : index
    %c0_4 = arith.constant 0 : index
    %3 = vector.load %arg3[%c0_3, %c0_4] : memref<1x128xf32, #tpu.memory_space<vmem>>, vector<1x128xf32>
    %4 = vector.broadcast %3 : vector<1x128xf32> to vector<16x128xf32>
    %5 = arith.addf %2, %4 : vector<16x128xf32>
    %cst_5 = arith.constant dense<0.000000e+00> : vector<16xf32>
    %6 = vector.multi_reduction <add>, %5, %cst_5 [1] : vector<16x128xf32> to vector<16xf32>
    %7 = vector.shape_cast %6 : vector<16xf32> to vector<16x1xf32>
    %cst_6 = arith.constant 1.280000e+02 : f32
    %8 = vector.broadcast %cst_6 : f32 to vector<16x1xf32>
    %9 = arith.divf %7, %8 : vector<16x1xf32>
    %10 = vector.broadcast %9 : vector<16x1xf32> to vector<16x128xf32>
    %11 = arith.subf %5, %10 : vector<16x128xf32>
    %12 = arith.mulf %11, %11 : vector<16x128xf32>
    %cst_7 = arith.constant dense<0.000000e+00> : vector<16xf32>
    %13 = vector.multi_reduction <add>, %12, %cst_7 [1] : vector<16x128xf32> to vector<16xf32>
    %14 = vector.shape_cast %13 : vector<16xf32> to vector<16x1xf32>
    %cst_8 = arith.constant 1.280000e+02 : f32
    %15 = vector.broadcast %cst_8 : f32 to vector<16x1xf32>
    %16 = arith.divf %14, %15 : vector<16x1xf32>
    %17 = vector.broadcast %9 : vector<16x1xf32> to vector<16x128xf32>
    %18 = arith.subf %5, %17 : vector<16x128xf32>
    %cst_9 = arith.constant 9.99999974E-6 : f32
    %19 = vector.broadcast %cst_9 : f32 to vector<16x1xf32>
    %20 = arith.addf %16, %19 : vector<16x1xf32>
    %21 = math.rsqrt %20 : vector<16x1xf32>
    %22 = vector.broadcast %21 : vector<16x1xf32> to vector<16x128xf32>
    %23 = arith.mulf %18, %22 : vector<16x128xf32>
    %cst_10 = arith.constant 0.000000e+00 : f32
    %24 = vector.broadcast %cst_10 : f32 to vector<16x128xf32>
    %25 = arith.maximumf %23, %24 : vector<16x128xf32>
    %26 = arith.truncf %25 : vector<16x128xf32> to vector<16x128xbf16>
    %c0_11 = arith.constant 0 : index
    %c0_12 = arith.constant 0 : index
    %27 = vector.load %arg4[%c0_11, %c0_12] : memref<128x128xbf16, #tpu.memory_space<vmem>>, vector<128x128xbf16>
    %cst_13 = arith.constant dense<0.000000e+00> : vector<16x128xf32>
    %28 = tpu.matmul %26, %27, %cst_13 {dimension_numbers = #tpu.dot_dimension_numbers<[1], [0], [0], [1], [0, 0, 1, 1], [], []>} : vector<16x128xbf16>, vector<128x128xbf16>, vector<16x128xf32> -> vector<16x128xf32>
    %c0_14 = arith.constant 0 : index
    %c0_15 = arith.constant 0 : index
    %29 = vector.load %arg5[%c0_14, %c0_15] : memref<1x128xf32, #tpu.memory_space<vmem>>, vector<1x128xf32>
    %30 = vector.broadcast %29 : vector<1x128xf32> to vector<16x128xf32>
    %31 = arith.addf %28, %30 : vector<16x128xf32>
    %c0_16 = arith.constant 0 : index
    %c0_17 = arith.constant 0 : index
    %32 = vector.load %arg6[%c0_16, %c0_17] : memref<16x128xf32, #tpu.memory_space<vmem>>, vector<16x128xf32>
    tpu.vector_store %arg6[%c0_16, %c0_17], %31 {strides = array<i32>} : memref<16x128xf32, #tpu.memory_space<vmem>>, vector<16x128xf32>,
    return
  }
  func.func @transform_0(%arg0: i32) -> (i32, i32) {
    %c0_i32 = arith.constant 0 : i32
    %c0_i32_0 = arith.constant 0 : i32
    return %arg0, %c0_i32 : i32, i32
  }
  func.func @transform_1(%arg0: i32) -> (i32, i32) {
    %c0_i32 = arith.constant 0 : i32
    %c0_i32_0 = arith.constant 0 : i32
    %c0_i32_1 = arith.constant 0 : i32
    return %c0_i32, %c0_i32_0 : i32, i32
  }
  func.func @transform_2(%arg0: i32) -> (i32, i32) {
    %c0_i32 = arith.constant 0 : i32
    %c0_i32_0 = arith.constant 0 : i32
    %c0_i32_1 = arith.constant 0 : i32
    return %c0_i32, %c0_i32_0 : i32, i32
  }
  func.func @transform_3(%arg0: i32) -> (i32, i32) {
    %c0_i32 = arith.constant 0 : i32
    %c0_i32_0 = arith.constant 0 : i32
    %c0_i32_1 = arith.constant 0 : i32
    return %c0_i32, %c0_i32_0 : i32, i32
  }
  func.func @transform_4(%arg0: i32) -> (i32, i32) {
    %c0_i32 = arith.constant 0 : i32
    %c0_i32_0 = arith.constant 0 : i32
    %c0_i32_1 = arith.constant 0 : i32
    return %c0_i32, %c0_i32_0 : i32, i32
  }
  func.func @transform_5(%arg0: i32) -> (i32, i32) {
    %c0_i32 = arith.constant 0 : i32
    %c0_i32_0 = arith.constant 0 : i32
    return %arg0, %c0_i32 : i32, i32
  }
}

module attributes {stable_mosaic.version = 11 : i64} {
  func.func @_bilstm_layer_kernel(%arg0: i32, %arg1: memref<1x16x128xbf16, #tpu.memory_space<vmem>>, %arg2: memref<128x512xbf16, #tpu.memory_space<vmem>>, %arg3: memref<1x512xf32, #tpu.memory_space<vmem>>, %arg4: memref<128x512xbf16, #tpu.memory_space<vmem>>, %arg5: memref<1x16x128xbf16, #tpu.memory_space<vmem>>, %arg6: memref<1x16x128xf32, #tpu.memory_space<vmem>>) attributes {dimension_semantics = [#tpu.dimension_semantics<parallel>], iteration_bounds = array<i64: 2>, scalar_prefetch = 0 : i64, scratch_operands = 1 : i64, tpu.core_type = #tpu.core_type<tc>, window_params = [{transform_indices = @transform_0, window_bounds = array<i64: 1, 16, 128>}, {pipeline_mode = #tpu.pipeline_mode<synchronous>, transform_indices = @transform_1, window_bounds = array<i64: 128, 512>}, {pipeline_mode = #tpu.pipeline_mode<synchronous>, transform_indices = @transform_2, window_bounds = array<i64: 1, 512>}, {pipeline_mode = #tpu.pipeline_mode<synchronous>, transform_indices = @transform_3, window_bounds = array<i64: 128, 512>}, {transform_indices = @transform_4, window_bounds = array<i64: 1, 16, 128>}]} {
    %c0 = arith.constant 0 : index
    %c0_0 = arith.constant 0 : index
    %c0_1 = arith.constant 0 : index
    %0 = vector.load %arg1[%c0, %c0_0, %c0_1] : memref<1x16x128xbf16, #tpu.memory_space<vmem>>, vector<1x16x128xbf16>
    %1 = vector.shape_cast %0 : vector<1x16x128xbf16> to vector<16x128xbf16>
    %c0_2 = arith.constant 0 : index
    %c0_3 = arith.constant 0 : index
    %2 = vector.load %arg2[%c0_2, %c0_3] : memref<128x512xbf16, #tpu.memory_space<vmem>>, vector<128x512xbf16>
    %cst = arith.constant dense<0.000000e+00> : vector<16x512xf32>
    %3 = tpu.matmul %1, %2, %cst {dimension_numbers = #tpu.dot_dimension_numbers<[1], [0], [0], [1], [0, 0, 1, 1], [], []>} : vector<16x128xbf16>, vector<128x512xbf16>, vector<16x512xf32> -> vector<16x512xf32>
    %c0_4 = arith.constant 0 : index
    %c0_5 = arith.constant 0 : index
    %4 = vector.load %arg3[%c0_4, %c0_5] : memref<1x512xf32, #tpu.memory_space<vmem>>, vector<1x512xf32>
    %5 = vector.broadcast %4 : vector<1x512xf32> to vector<16x512xf32>
    %6 = arith.addf %3, %5 : vector<16x512xf32>
    %7 = vector.shape_cast %6 : vector<16x512xf32> to vector<1x16x512xf32>
    %8 = tpu.iota {dimensions = array<i32: 1>} : vector<1x512xi32>
    %c128_i32 = arith.constant 128 : i32
    %c0_i32 = arith.constant 0 : i32
    %9 = arith.cmpi eq, %c128_i32, %c0_i32 : i32
    %c1_i32 = arith.constant 1 : i32
    %10 = arith.select %9, %c1_i32, %c128_i32 : i32
    %11 = vector.broadcast %10 : i32 to vector<1x512xi32>
    %12 = arith.remsi %8, %11 : vector<1x512xi32>
    %c0_i32_6 = arith.constant 0 : i32
    %13 = vector.broadcast %c0_i32_6 : i32 to vector<1x512xi32>
    %14 = arith.cmpi ne, %12, %13 : vector<1x512xi32>
    %c0_i32_7 = arith.constant 0 : i32
    %15 = vector.broadcast %c0_i32_7 : i32 to vector<1x512xi32>
    %16 = arith.cmpi slt, %12, %15 : vector<1x512xi32>
    %c0_i32_8 = arith.constant 0 : i32
    %17 = arith.cmpi slt, %10, %c0_i32_8 : i32
    %18 = vector.broadcast %17 : i1 to vector<1x512xi1>
    %19 = vector.broadcast %18 : vector<1x512xi1> to vector<1x512xi1>
    %20 = arith.xori %16, %19 : vector<1x512xi1>
    %21 = arith.andi %20, %14 : vector<1x512xi1>
    %22 = vector.broadcast %10 : i32 to vector<1x512xi32>
    %23 = arith.addi %12, %22 : vector<1x512xi32>
    %24 = arith.select %21, %23, %12 : vector<1x512xi1>, vector<1x512xi32>
    %c64_i32 = arith.constant 64 : i32
    %25 = vector.broadcast %c64_i32 : i32 to vector<1x512xi32>
    %26 = arith.cmpi slt, %24, %25 : vector<1x512xi32>
    %c0_9 = arith.constant 0 : index
    %c0_10 = arith.constant 0 : index
    %27 = vector.load %arg4[%c0_9, %c0_10] : memref<128x512xbf16, #tpu.memory_space<vmem>>, vector<128x512xbf16>
    %cst_11 = arith.constant 0.000000e+00 : f32
    %28 = vector.broadcast %cst_11 : f32 to vector<1x128xf32>
    %cst_12 = arith.constant 0.000000e+00 : f32
    %29 = vector.broadcast %cst_12 : f32 to vector<1x128xf32>
    %30 = vector.extract_strided_slice %7 {offsets = [0, 0, 0], sizes = [1, 1, 512], strides = [1, 1, 1]} : vector<1x16x512xf32> to vector<1x1x512xf32>
    %31 = vector.shape_cast %30 : vector<1x1x512xf32> to vector<1x512xf32>
    %32 = vector.extract_strided_slice %7 {offsets = [0, 15, 0], sizes = [1, 1, 512], strides = [1, 1, 1]} : vector<1x16x512xf32> to vector<1x1x512xf32>
    %33 = vector.shape_cast %32 : vector<1x1x512xf32> to vector<1x512xf32>
    %34 = arith.select %26, %31, %33 : vector<1x512xi1>, vector<1x512xf32>
    %35 = arith.truncf %28 : vector<1x128xf32> to vector<1x128xbf16>
    %cst_13 = arith.constant dense<0.000000e+00> : vector<1x512xf32>
    %36 = tpu.matmul %35, %27, %cst_13 {dimension_numbers = #tpu.dot_dimension_numbers<[1], [0], [0], [1], [0, 0, 1, 1], [], []>} : vector<1x128xbf16>, vector<128x512xbf16>, vector<1x512xf32> -> vector<1x512xf32>
    %37 = arith.addf %34, %36 : vector<1x512xf32>
    %38 = vector.extract_strided_slice %37 {offsets = [0, 0], sizes = [1, 128], strides = [1, 1]} : vector<1x512xf32> to vector<1x128xf32>
    %39 = arith.negf %38 : vector<1x128xf32>
    %40 = math.exp %39 : vector<1x128xf32>
    %cst_14 = arith.constant 1.000000e+00 : f32
    %41 = vector.broadcast %cst_14 : f32 to vector<1x128xf32>
    %42 = arith.addf %41, %40 : vector<1x128xf32>
    %43 = arith.divf %41, %42 : vector<1x128xf32>
    %44 = vector.extract_strided_slice %37 {offsets = [0, 128], sizes = [1, 128], strides = [1, 1]} : vector<1x512xf32> to vector<1x128xf32>
    %45 = arith.negf %44 : vector<1x128xf32>
    %46 = math.exp %45 : vector<1x128xf32>
    %cst_15 = arith.constant 1.000000e+00 : f32
    %47 = vector.broadcast %cst_15 : f32 to vector<1x128xf32>
    %48 = arith.addf %47, %46 : vector<1x128xf32>
    %49 = arith.divf %47, %48 : vector<1x128xf32>
    %50 = vector.extract_strided_slice %37 {offsets = [0, 256], sizes = [1, 128], strides = [1, 1]} : vector<1x512xf32> to vector<1x128xf32>
    %51 = math.tanh %50 : vector<1x128xf32>
    %52 = vector.extract_strided_slice %37 {offsets = [0, 384], sizes = [1, 128], strides = [1, 1]} : vector<1x512xf32> to vector<1x128xf32>
    %53 = arith.negf %52 : vector<1x128xf32>
    %54 = math.exp %53 : vector<1x128xf32>
    %cst_16 = arith.constant 1.000000e+00 : f32
    %55 = vector.broadcast %cst_16 : f32 to vector<1x128xf32>
    %56 = arith.addf %55, %54 : vector<1x128xf32>
    %57 = arith.divf %55, %56 : vector<1x128xf32>
    %58 = arith.mulf %49, %29 : vector<1x128xf32>
    %59 = arith.mulf %43, %51 : vector<1x128xf32>
    %60 = arith.addf %58, %59 : vector<1x128xf32>
    %61 = math.tanh %60 : vector<1x128xf32>
    %62 = arith.mulf %57, %61 : vector<1x128xf32>
    %63 = vector.extract_strided_slice %62 {offsets = [0, 0], sizes = [1, 64], strides = [1, 1]} : vector<1x128xf32> to vector<1x64xf32>
    %c0_17 = arith.constant 0 : index
    %c0_18 = arith.constant 0 : index
    %c0_19 = arith.constant 0 : index
    %64 = vector.load %arg6[%c0_17, %c0_18, %c0_19] : memref<1x16x128xf32, #tpu.memory_space<vmem>>, vector<1x1x64xf32>
    %65 = vector.shape_cast %64 : vector<1x1x64xf32> to vector<1x64xf32>
    %66 = vector.shape_cast %63 : vector<1x64xf32> to vector<1x1x64xf32>
    tpu.vector_store %arg6[%c0_17, %c0_18, %c0_19], %66 {strides = array<i32>} : memref<1x16x128xf32, #tpu.memory_space<vmem>>, vector<1x1x64xf32>,
    %67 = vector.extract_strided_slice %62 {offsets = [0, 64], sizes = [1, 64], strides = [1, 1]} : vector<1x128xf32> to vector<1x64xf32>
    %c0_20 = arith.constant 0 : index
    %c15 = arith.constant 15 : index
    %c64 = arith.constant 64 : index
    %68 = vector.load %arg6[%c0_20, %c15, %c64] : memref<1x16x128xf32, #tpu.memory_space<vmem>>, vector<1x1x64xf32>
    %69 = vector.shape_cast %68 : vector<1x1x64xf32> to vector<1x64xf32>
    %70 = vector.shape_cast %67 : vector<1x64xf32> to vector<1x1x64xf32>
    tpu.vector_store %arg6[%c0_20, %c15, %c64], %70 {strides = array<i32>} : memref<1x16x128xf32, #tpu.memory_space<vmem>>, vector<1x1x64xf32>,
    %71 = vector.extract_strided_slice %7 {offsets = [0, 1, 0], sizes = [1, 1, 512], strides = [1, 1, 1]} : vector<1x16x512xf32> to vector<1x1x512xf32>
    %72 = vector.shape_cast %71 : vector<1x1x512xf32> to vector<1x512xf32>
    %73 = vector.extract_strided_slice %7 {offsets = [0, 14, 0], sizes = [1, 1, 512], strides = [1, 1, 1]} : vector<1x16x512xf32> to vector<1x1x512xf32>
    %74 = vector.shape_cast %73 : vector<1x1x512xf32> to vector<1x512xf32>
    %75 = arith.select %26, %72, %74 : vector<1x512xi1>, vector<1x512xf32>
    %76 = arith.truncf %62 : vector<1x128xf32> to vector<1x128xbf16>
    %cst_21 = arith.constant dense<0.000000e+00> : vector<1x512xf32>
    %77 = tpu.matmul %76, %27, %cst_21 {dimension_numbers = #tpu.dot_dimension_numbers<[1], [0], [0], [1], [0, 0, 1, 1], [], []>} : vector<1x128xbf16>, vector<128x512xbf16>, vector<1x512xf32> -> vector<1x512xf32>
    %78 = arith.addf %75, %77 : vector<1x512xf32>
    %79 = vector.extract_strided_slice %78 {offsets = [0, 0], sizes = [1, 128], strides = [1, 1]} : vector<1x512xf32> to vector<1x128xf32>
    %80 = arith.negf %79 : vector<1x128xf32>
    %81 = math.exp %80 : vector<1x128xf32>
    %cst_22 = arith.constant 1.000000e+00 : f32
    %82 = vector.broadcast %cst_22 : f32 to vector<1x128xf32>
    %83 = arith.addf %82, %81 : vector<1x128xf32>
    %84 = arith.divf %82, %83 : vector<1x128xf32>
    %85 = vector.extract_strided_slice %78 {offsets = [0, 128], sizes = [1, 128], strides = [1, 1]} : vector<1x512xf32> to vector<1x128xf32>
    %86 = arith.negf %85 : vector<1x128xf32>
    %87 = math.exp %86 : vector<1x128xf32>
    %cst_23 = arith.constant 1.000000e+00 : f32
    %88 = vector.broadcast %cst_23 : f32 to vector<1x128xf32>
    %89 = arith.addf %88, %87 : vector<1x128xf32>
    %90 = arith.divf %88, %89 : vector<1x128xf32>
    %91 = vector.extract_strided_slice %78 {offsets = [0, 256], sizes = [1, 128], strides = [1, 1]} : vector<1x512xf32> to vector<1x128xf32>
    %92 = math.tanh %91 : vector<1x128xf32>
    %93 = vector.extract_strided_slice %78 {offsets = [0, 384], sizes = [1, 128], strides = [1, 1]} : vector<1x512xf32> to vector<1x128xf32>
    %94 = arith.negf %93 : vector<1x128xf32>
    %95 = math.exp %94 : vector<1x128xf32>
    %cst_24 = arith.constant 1.000000e+00 : f32
    %96 = vector.broadcast %cst_24 : f32 to vector<1x128xf32>
    %97 = arith.addf %96, %95 : vector<1x128xf32>
    %98 = arith.divf %96, %97 : vector<1x128xf32>
    %99 = arith.mulf %90, %60 : vector<1x128xf32>
    %100 = arith.mulf %84, %92 : vector<1x128xf32>
    %101 = arith.addf %99, %100 : vector<1x128xf32>
    %102 = math.tanh %101 : vector<1x128xf32>
    %103 = arith.mulf %98, %102 : vector<1x128xf32>
    %104 = vector.extract_strided_slice %103 {offsets = [0, 0], sizes = [1, 64], strides = [1, 1]} : vector<1x128xf32> to vector<1x64xf32>
    %c0_25 = arith.constant 0 : index
    %c1 = arith.constant 1 : index
    %c0_26 = arith.constant 0 : index
    %105 = vector.load %arg6[%c0_25, %c1, %c0_26] : memref<1x16x128xf32, #tpu.memory_space<vmem>>, vector<1x1x64xf32>
    %106 = vector.shape_cast %105 : vector<1x1x64xf32> to vector<1x64xf32>
    %107 = vector.shape_cast %104 : vector<1x64xf32> to vector<1x1x64xf32>
    tpu.vector_store %arg6[%c0_25, %c1, %c0_26], %107 {strides = array<i32>} : memref<1x16x128xf32, #tpu.memory_space<vmem>>, vector<1x1x64xf32>,
    %108 = vector.extract_strided_slice %103 {offsets = [0, 64], sizes = [1, 64], strides = [1, 1]} : vector<1x128xf32> to vector<1x64xf32>
    %c0_27 = arith.constant 0 : index
    %c14 = arith.constant 14 : index
    %c64_28 = arith.constant 64 : index
    %109 = vector.load %arg6[%c0_27, %c14, %c64_28] : memref<1x16x128xf32, #tpu.memory_space<vmem>>, vector<1x1x64xf32>
    %110 = vector.shape_cast %109 : vector<1x1x64xf32> to vector<1x64xf32>
    %111 = vector.shape_cast %108 : vector<1x64xf32> to vector<1x1x64xf32>
    tpu.vector_store %arg6[%c0_27, %c14, %c64_28], %111 {strides = array<i32>} : memref<1x16x128xf32, #tpu.memory_space<vmem>>, vector<1x1x64xf32>,
    %112 = vector.extract_strided_slice %7 {offsets = [0, 2, 0], sizes = [1, 1, 512], strides = [1, 1, 1]} : vector<1x16x512xf32> to vector<1x1x512xf32>
    %113 = vector.shape_cast %112 : vector<1x1x512xf32> to vector<1x512xf32>
    %114 = vector.extract_strided_slice %7 {offsets = [0, 13, 0], sizes = [1, 1, 512], strides = [1, 1, 1]} : vector<1x16x512xf32> to vector<1x1x512xf32>
    %115 = vector.shape_cast %114 : vector<1x1x512xf32> to vector<1x512xf32>
    %116 = arith.select %26, %113, %115 : vector<1x512xi1>, vector<1x512xf32>
    %117 = arith.truncf %103 : vector<1x128xf32> to vector<1x128xbf16>
    %cst_29 = arith.constant dense<0.000000e+00> : vector<1x512xf32>
    %118 = tpu.matmul %117, %27, %cst_29 {dimension_numbers = #tpu.dot_dimension_numbers<[1], [0], [0], [1], [0, 0, 1, 1], [], []>} : vector<1x128xbf16>, vector<128x512xbf16>, vector<1x512xf32> -> vector<1x512xf32>
    %119 = arith.addf %116, %118 : vector<1x512xf32>
    %120 = vector.extract_strided_slice %119 {offsets = [0, 0], sizes = [1, 128], strides = [1, 1]} : vector<1x512xf32> to vector<1x128xf32>
    %121 = arith.negf %120 : vector<1x128xf32>
    %122 = math.exp %121 : vector<1x128xf32>
    %cst_30 = arith.constant 1.000000e+00 : f32
    %123 = vector.broadcast %cst_30 : f32 to vector<1x128xf32>
    %124 = arith.addf %123, %122 : vector<1x128xf32>
    %125 = arith.divf %123, %124 : vector<1x128xf32>
    %126 = vector.extract_strided_slice %119 {offsets = [0, 128], sizes = [1, 128], strides = [1, 1]} : vector<1x512xf32> to vector<1x128xf32>
    %127 = arith.negf %126 : vector<1x128xf32>
    %128 = math.exp %127 : vector<1x128xf32>
    %cst_31 = arith.constant 1.000000e+00 : f32
    %129 = vector.broadcast %cst_31 : f32 to vector<1x128xf32>
    %130 = arith.addf %129, %128 : vector<1x128xf32>
    %131 = arith.divf %129, %130 : vector<1x128xf32>
    %132 = vector.extract_strided_slice %119 {offsets = [0, 256], sizes = [1, 128], strides = [1, 1]} : vector<1x512xf32> to vector<1x128xf32>
    %133 = math.tanh %132 : vector<1x128xf32>
    %134 = vector.extract_strided_slice %119 {offsets = [0, 384], sizes = [1, 128], strides = [1, 1]} : vector<1x512xf32> to vector<1x128xf32>
    %135 = arith.negf %134 : vector<1x128xf32>
    %136 = math.exp %135 : vector<1x128xf32>
    %cst_32 = arith.constant 1.000000e+00 : f32
    %137 = vector.broadcast %cst_32 : f32 to vector<1x128xf32>
    %138 = arith.addf %137, %136 : vector<1x128xf32>
    %139 = arith.divf %137, %138 : vector<1x128xf32>
    %140 = arith.mulf %131, %101 : vector<1x128xf32>
    %141 = arith.mulf %125, %133 : vector<1x128xf32>
    %142 = arith.addf %140, %141 : vector<1x128xf32>
    %143 = math.tanh %142 : vector<1x128xf32>
    %144 = arith.mulf %139, %143 : vector<1x128xf32>
    %145 = vector.extract_strided_slice %144 {offsets = [0, 0], sizes = [1, 64], strides = [1, 1]} : vector<1x128xf32> to vector<1x64xf32>
    %c0_33 = arith.constant 0 : index
    %c2 = arith.constant 2 : index
    %c0_34 = arith.constant 0 : index
    %146 = vector.load %arg6[%c0_33, %c2, %c0_34] : memref<1x16x128xf32, #tpu.memory_space<vmem>>, vector<1x1x64xf32>
    %147 = vector.shape_cast %146 : vector<1x1x64xf32> to vector<1x64xf32>
    %148 = vector.shape_cast %145 : vector<1x64xf32> to vector<1x1x64xf32>
    tpu.vector_store %arg6[%c0_33, %c2, %c0_34], %148 {strides = array<i32>} : memref<1x16x128xf32, #tpu.memory_space<vmem>>, vector<1x1x64xf32>,
    %149 = vector.extract_strided_slice %144 {offsets = [0, 64], sizes = [1, 64], strides = [1, 1]} : vector<1x128xf32> to vector<1x64xf32>
    %c0_35 = arith.constant 0 : index
    %c13 = arith.constant 13 : index
    %c64_36 = arith.constant 64 : index
    %150 = vector.load %arg6[%c0_35, %c13, %c64_36] : memref<1x16x128xf32, #tpu.memory_space<vmem>>, vector<1x1x64xf32>
    %151 = vector.shape_cast %150 : vector<1x1x64xf32> to vector<1x64xf32>
    %152 = vector.shape_cast %149 : vector<1x64xf32> to vector<1x1x64xf32>
    tpu.vector_store %arg6[%c0_35, %c13, %c64_36], %152 {strides = array<i32>} : memref<1x16x128xf32, #tpu.memory_space<vmem>>, vector<1x1x64xf32>,
    %153 = vector.extract_strided_slice %7 {offsets = [0, 3, 0], sizes = [1, 1, 512], strides = [1, 1, 1]} : vector<1x16x512xf32> to vector<1x1x512xf32>
    %154 = vector.shape_cast %153 : vector<1x1x512xf32> to vector<1x512xf32>
    %155 = vector.extract_strided_slice %7 {offsets = [0, 12, 0], sizes = [1, 1, 512], strides = [1, 1, 1]} : vector<1x16x512xf32> to vector<1x1x512xf32>
    %156 = vector.shape_cast %155 : vector<1x1x512xf32> to vector<1x512xf32>
    %157 = arith.select %26, %154, %156 : vector<1x512xi1>, vector<1x512xf32>
    %158 = arith.truncf %144 : vector<1x128xf32> to vector<1x128xbf16>
    %cst_37 = arith.constant dense<0.000000e+00> : vector<1x512xf32>
    %159 = tpu.matmul %158, %27, %cst_37 {dimension_numbers = #tpu.dot_dimension_numbers<[1], [0], [0], [1], [0, 0, 1, 1], [], []>} : vector<1x128xbf16>, vector<128x512xbf16>, vector<1x512xf32> -> vector<1x512xf32>
    %160 = arith.addf %157, %159 : vector<1x512xf32>
    %161 = vector.extract_strided_slice %160 {offsets = [0, 0], sizes = [1, 128], strides = [1, 1]} : vector<1x512xf32> to vector<1x128xf32>
    %162 = arith.negf %161 : vector<1x128xf32>
    %163 = math.exp %162 : vector<1x128xf32>
    %cst_38 = arith.constant 1.000000e+00 : f32
    %164 = vector.broadcast %cst_38 : f32 to vector<1x128xf32>
    %165 = arith.addf %164, %163 : vector<1x128xf32>
    %166 = arith.divf %164, %165 : vector<1x128xf32>
    %167 = vector.extract_strided_slice %160 {offsets = [0, 128], sizes = [1, 128], strides = [1, 1]} : vector<1x512xf32> to vector<1x128xf32>
    %168 = arith.negf %167 : vector<1x128xf32>
    %169 = math.exp %168 : vector<1x128xf32>
    %cst_39 = arith.constant 1.000000e+00 : f32
    %170 = vector.broadcast %cst_39 : f32 to vector<1x128xf32>
    %171 = arith.addf %170, %169 : vector<1x128xf32>
    %172 = arith.divf %170, %171 : vector<1x128xf32>
    %173 = vector.extract_strided_slice %160 {offsets = [0, 256], sizes = [1, 128], strides = [1, 1]} : vector<1x512xf32> to vector<1x128xf32>
    %174 = math.tanh %173 : vector<1x128xf32>
    %175 = vector.extract_strided_slice %160 {offsets = [0, 384], sizes = [1, 128], strides = [1, 1]} : vector<1x512xf32> to vector<1x128xf32>
    %176 = arith.negf %175 : vector<1x128xf32>
    %177 = math.exp %176 : vector<1x128xf32>
    %cst_40 = arith.constant 1.000000e+00 : f32
    %178 = vector.broadcast %cst_40 : f32 to vector<1x128xf32>
    %179 = arith.addf %178, %177 : vector<1x128xf32>
    %180 = arith.divf %178, %179 : vector<1x128xf32>
    %181 = arith.mulf %172, %142 : vector<1x128xf32>
    %182 = arith.mulf %166, %174 : vector<1x128xf32>
    %183 = arith.addf %181, %182 : vector<1x128xf32>
    %184 = math.tanh %183 : vector<1x128xf32>
    %185 = arith.mulf %180, %184 : vector<1x128xf32>
    %186 = vector.extract_strided_slice %185 {offsets = [0, 0], sizes = [1, 64], strides = [1, 1]} : vector<1x128xf32> to vector<1x64xf32>
    %c0_41 = arith.constant 0 : index
    %c3 = arith.constant 3 : index
    %c0_42 = arith.constant 0 : index
    %187 = vector.load %arg6[%c0_41, %c3, %c0_42] : memref<1x16x128xf32, #tpu.memory_space<vmem>>, vector<1x1x64xf32>
    %188 = vector.shape_cast %187 : vector<1x1x64xf32> to vector<1x64xf32>
    %189 = vector.shape_cast %186 : vector<1x64xf32> to vector<1x1x64xf32>
    tpu.vector_store %arg6[%c0_41, %c3, %c0_42], %189 {strides = array<i32>} : memref<1x16x128xf32, #tpu.memory_space<vmem>>, vector<1x1x64xf32>,
    %190 = vector.extract_strided_slice %185 {offsets = [0, 64], sizes = [1, 64], strides = [1, 1]} : vector<1x128xf32> to vector<1x64xf32>
    %c0_43 = arith.constant 0 : index
    %c12 = arith.constant 12 : index
    %c64_44 = arith.constant 64 : index
    %191 = vector.load %arg6[%c0_43, %c12, %c64_44] : memref<1x16x128xf32, #tpu.memory_space<vmem>>, vector<1x1x64xf32>
    %192 = vector.shape_cast %191 : vector<1x1x64xf32> to vector<1x64xf32>
    %193 = vector.shape_cast %190 : vector<1x64xf32> to vector<1x1x64xf32>
    tpu.vector_store %arg6[%c0_43, %c12, %c64_44], %193 {strides = array<i32>} : memref<1x16x128xf32, #tpu.memory_space<vmem>>, vector<1x1x64xf32>,
    %194 = vector.extract_strided_slice %7 {offsets = [0, 4, 0], sizes = [1, 1, 512], strides = [1, 1, 1]} : vector<1x16x512xf32> to vector<1x1x512xf32>
    %195 = vector.shape_cast %194 : vector<1x1x512xf32> to vector<1x512xf32>
    %196 = vector.extract_strided_slice %7 {offsets = [0, 11, 0], sizes = [1, 1, 512], strides = [1, 1, 1]} : vector<1x16x512xf32> to vector<1x1x512xf32>
    %197 = vector.shape_cast %196 : vector<1x1x512xf32> to vector<1x512xf32>
    %198 = arith.select %26, %195, %197 : vector<1x512xi1>, vector<1x512xf32>
    %199 = arith.truncf %185 : vector<1x128xf32> to vector<1x128xbf16>
    %cst_45 = arith.constant dense<0.000000e+00> : vector<1x512xf32>
    %200 = tpu.matmul %199, %27, %cst_45 {dimension_numbers = #tpu.dot_dimension_numbers<[1], [0], [0], [1], [0, 0, 1, 1], [], []>} : vector<1x128xbf16>, vector<128x512xbf16>, vector<1x512xf32> -> vector<1x512xf32>
    %201 = arith.addf %198, %200 : vector<1x512xf32>
    %202 = vector.extract_strided_slice %201 {offsets = [0, 0], sizes = [1, 128], strides = [1, 1]} : vector<1x512xf32> to vector<1x128xf32>
    %203 = arith.negf %202 : vector<1x128xf32>
    %204 = math.exp %203 : vector<1x128xf32>
    %cst_46 = arith.constant 1.000000e+00 : f32
    %205 = vector.broadcast %cst_46 : f32 to vector<1x128xf32>
    %206 = arith.addf %205, %204 : vector<1x128xf32>
    %207 = arith.divf %205, %206 : vector<1x128xf32>
    %208 = vector.extract_strided_slice %201 {offsets = [0, 128], sizes = [1, 128], strides = [1, 1]} : vector<1x512xf32> to vector<1x128xf32>
    %209 = arith.negf %208 : vector<1x128xf32>
    %210 = math.exp %209 : vector<1x128xf32>
    %cst_47 = arith.constant 1.000000e+00 : f32
    %211 = vector.broadcast %cst_47 : f32 to vector<1x128xf32>
    %212 = arith.addf %211, %210 : vector<1x128xf32>
    %213 = arith.divf %211, %212 : vector<1x128xf32>
    %214 = vector.extract_strided_slice %201 {offsets = [0, 256], sizes = [1, 128], strides = [1, 1]} : vector<1x512xf32> to vector<1x128xf32>
    %215 = math.tanh %214 : vector<1x128xf32>
    %216 = vector.extract_strided_slice %201 {offsets = [0, 384], sizes = [1, 128], strides = [1, 1]} : vector<1x512xf32> to vector<1x128xf32>
    %217 = arith.negf %216 : vector<1x128xf32>
    %218 = math.exp %217 : vector<1x128xf32>
    %cst_48 = arith.constant 1.000000e+00 : f32
    %219 = vector.broadcast %cst_48 : f32 to vector<1x128xf32>
    %220 = arith.addf %219, %218 : vector<1x128xf32>
    %221 = arith.divf %219, %220 : vector<1x128xf32>
    %222 = arith.mulf %213, %183 : vector<1x128xf32>
    %223 = arith.mulf %207, %215 : vector<1x128xf32>
    %224 = arith.addf %222, %223 : vector<1x128xf32>
    %225 = math.tanh %224 : vector<1x128xf32>
    %226 = arith.mulf %221, %225 : vector<1x128xf32>
    %227 = vector.extract_strided_slice %226 {offsets = [0, 0], sizes = [1, 64], strides = [1, 1]} : vector<1x128xf32> to vector<1x64xf32>
    %c0_49 = arith.constant 0 : index
    %c4 = arith.constant 4 : index
    %c0_50 = arith.constant 0 : index
    %228 = vector.load %arg6[%c0_49, %c4, %c0_50] : memref<1x16x128xf32, #tpu.memory_space<vmem>>, vector<1x1x64xf32>
    %229 = vector.shape_cast %228 : vector<1x1x64xf32> to vector<1x64xf32>
    %230 = vector.shape_cast %227 : vector<1x64xf32> to vector<1x1x64xf32>
    tpu.vector_store %arg6[%c0_49, %c4, %c0_50], %230 {strides = array<i32>} : memref<1x16x128xf32, #tpu.memory_space<vmem>>, vector<1x1x64xf32>,
    %231 = vector.extract_strided_slice %226 {offsets = [0, 64], sizes = [1, 64], strides = [1, 1]} : vector<1x128xf32> to vector<1x64xf32>
    %c0_51 = arith.constant 0 : index
    %c11 = arith.constant 11 : index
    %c64_52 = arith.constant 64 : index
    %232 = vector.load %arg6[%c0_51, %c11, %c64_52] : memref<1x16x128xf32, #tpu.memory_space<vmem>>, vector<1x1x64xf32>
    %233 = vector.shape_cast %232 : vector<1x1x64xf32> to vector<1x64xf32>
    %234 = vector.shape_cast %231 : vector<1x64xf32> to vector<1x1x64xf32>
    tpu.vector_store %arg6[%c0_51, %c11, %c64_52], %234 {strides = array<i32>} : memref<1x16x128xf32, #tpu.memory_space<vmem>>, vector<1x1x64xf32>,
    %235 = vector.extract_strided_slice %7 {offsets = [0, 5, 0], sizes = [1, 1, 512], strides = [1, 1, 1]} : vector<1x16x512xf32> to vector<1x1x512xf32>
    %236 = vector.shape_cast %235 : vector<1x1x512xf32> to vector<1x512xf32>
    %237 = vector.extract_strided_slice %7 {offsets = [0, 10, 0], sizes = [1, 1, 512], strides = [1, 1, 1]} : vector<1x16x512xf32> to vector<1x1x512xf32>
    %238 = vector.shape_cast %237 : vector<1x1x512xf32> to vector<1x512xf32>
    %239 = arith.select %26, %236, %238 : vector<1x512xi1>, vector<1x512xf32>
    %240 = arith.truncf %226 : vector<1x128xf32> to vector<1x128xbf16>
    %cst_53 = arith.constant dense<0.000000e+00> : vector<1x512xf32>
    %241 = tpu.matmul %240, %27, %cst_53 {dimension_numbers = #tpu.dot_dimension_numbers<[1], [0], [0], [1], [0, 0, 1, 1], [], []>} : vector<1x128xbf16>, vector<128x512xbf16>, vector<1x512xf32> -> vector<1x512xf32>
    %242 = arith.addf %239, %241 : vector<1x512xf32>
    %243 = vector.extract_strided_slice %242 {offsets = [0, 0], sizes = [1, 128], strides = [1, 1]} : vector<1x512xf32> to vector<1x128xf32>
    %244 = arith.negf %243 : vector<1x128xf32>
    %245 = math.exp %244 : vector<1x128xf32>
    %cst_54 = arith.constant 1.000000e+00 : f32
    %246 = vector.broadcast %cst_54 : f32 to vector<1x128xf32>
    %247 = arith.addf %246, %245 : vector<1x128xf32>
    %248 = arith.divf %246, %247 : vector<1x128xf32>
    %249 = vector.extract_strided_slice %242 {offsets = [0, 128], sizes = [1, 128], strides = [1, 1]} : vector<1x512xf32> to vector<1x128xf32>
    %250 = arith.negf %249 : vector<1x128xf32>
    %251 = math.exp %250 : vector<1x128xf32>
    %cst_55 = arith.constant 1.000000e+00 : f32
    %252 = vector.broadcast %cst_55 : f32 to vector<1x128xf32>
    %253 = arith.addf %252, %251 : vector<1x128xf32>
    %254 = arith.divf %252, %253 : vector<1x128xf32>
    %255 = vector.extract_strided_slice %242 {offsets = [0, 256], sizes = [1, 128], strides = [1, 1]} : vector<1x512xf32> to vector<1x128xf32>
    %256 = math.tanh %255 : vector<1x128xf32>
    %257 = vector.extract_strided_slice %242 {offsets = [0, 384], sizes = [1, 128], strides = [1, 1]} : vector<1x512xf32> to vector<1x128xf32>
    %258 = arith.negf %257 : vector<1x128xf32>
    %259 = math.exp %258 : vector<1x128xf32>
    %cst_56 = arith.constant 1.000000e+00 : f32
    %260 = vector.broadcast %cst_56 : f32 to vector<1x128xf32>
    %261 = arith.addf %260, %259 : vector<1x128xf32>
    %262 = arith.divf %260, %261 : vector<1x128xf32>
    %263 = arith.mulf %254, %224 : vector<1x128xf32>
    %264 = arith.mulf %248, %256 : vector<1x128xf32>
    %265 = arith.addf %263, %264 : vector<1x128xf32>
    %266 = math.tanh %265 : vector<1x128xf32>
    %267 = arith.mulf %262, %266 : vector<1x128xf32>
    %268 = vector.extract_strided_slice %267 {offsets = [0, 0], sizes = [1, 64], strides = [1, 1]} : vector<1x128xf32> to vector<1x64xf32>
    %c0_57 = arith.constant 0 : index
    %c5 = arith.constant 5 : index
    %c0_58 = arith.constant 0 : index
    %269 = vector.load %arg6[%c0_57, %c5, %c0_58] : memref<1x16x128xf32, #tpu.memory_space<vmem>>, vector<1x1x64xf32>
    %270 = vector.shape_cast %269 : vector<1x1x64xf32> to vector<1x64xf32>
    %271 = vector.shape_cast %268 : vector<1x64xf32> to vector<1x1x64xf32>
    tpu.vector_store %arg6[%c0_57, %c5, %c0_58], %271 {strides = array<i32>} : memref<1x16x128xf32, #tpu.memory_space<vmem>>, vector<1x1x64xf32>,
    %272 = vector.extract_strided_slice %267 {offsets = [0, 64], sizes = [1, 64], strides = [1, 1]} : vector<1x128xf32> to vector<1x64xf32>
    %c0_59 = arith.constant 0 : index
    %c10 = arith.constant 10 : index
    %c64_60 = arith.constant 64 : index
    %273 = vector.load %arg6[%c0_59, %c10, %c64_60] : memref<1x16x128xf32, #tpu.memory_space<vmem>>, vector<1x1x64xf32>
    %274 = vector.shape_cast %273 : vector<1x1x64xf32> to vector<1x64xf32>
    %275 = vector.shape_cast %272 : vector<1x64xf32> to vector<1x1x64xf32>
    tpu.vector_store %arg6[%c0_59, %c10, %c64_60], %275 {strides = array<i32>} : memref<1x16x128xf32, #tpu.memory_space<vmem>>, vector<1x1x64xf32>,
    %276 = vector.extract_strided_slice %7 {offsets = [0, 6, 0], sizes = [1, 1, 512], strides = [1, 1, 1]} : vector<1x16x512xf32> to vector<1x1x512xf32>
    %277 = vector.shape_cast %276 : vector<1x1x512xf32> to vector<1x512xf32>
    %278 = vector.extract_strided_slice %7 {offsets = [0, 9, 0], sizes = [1, 1, 512], strides = [1, 1, 1]} : vector<1x16x512xf32> to vector<1x1x512xf32>
    %279 = vector.shape_cast %278 : vector<1x1x512xf32> to vector<1x512xf32>
    %280 = arith.select %26, %277, %279 : vector<1x512xi1>, vector<1x512xf32>
    %281 = arith.truncf %267 : vector<1x128xf32> to vector<1x128xbf16>
    %cst_61 = arith.constant dense<0.000000e+00> : vector<1x512xf32>
    %282 = tpu.matmul %281, %27, %cst_61 {dimension_numbers = #tpu.dot_dimension_numbers<[1], [0], [0], [1], [0, 0, 1, 1], [], []>} : vector<1x128xbf16>, vector<128x512xbf16>, vector<1x512xf32> -> vector<1x512xf32>
    %283 = arith.addf %280, %282 : vector<1x512xf32>
    %284 = vector.extract_strided_slice %283 {offsets = [0, 0], sizes = [1, 128], strides = [1, 1]} : vector<1x512xf32> to vector<1x128xf32>
    %285 = arith.negf %284 : vector<1x128xf32>
    %286 = math.exp %285 : vector<1x128xf32>
    %cst_62 = arith.constant 1.000000e+00 : f32
    %287 = vector.broadcast %cst_62 : f32 to vector<1x128xf32>
    %288 = arith.addf %287, %286 : vector<1x128xf32>
    %289 = arith.divf %287, %288 : vector<1x128xf32>
    %290 = vector.extract_strided_slice %283 {offsets = [0, 128], sizes = [1, 128], strides = [1, 1]} : vector<1x512xf32> to vector<1x128xf32>
    %291 = arith.negf %290 : vector<1x128xf32>
    %292 = math.exp %291 : vector<1x128xf32>
    %cst_63 = arith.constant 1.000000e+00 : f32
    %293 = vector.broadcast %cst_63 : f32 to vector<1x128xf32>
    %294 = arith.addf %293, %292 : vector<1x128xf32>
    %295 = arith.divf %293, %294 : vector<1x128xf32>
    %296 = vector.extract_strided_slice %283 {offsets = [0, 256], sizes = [1, 128], strides = [1, 1]} : vector<1x512xf32> to vector<1x128xf32>
    %297 = math.tanh %296 : vector<1x128xf32>
    %298 = vector.extract_strided_slice %283 {offsets = [0, 384], sizes = [1, 128], strides = [1, 1]} : vector<1x512xf32> to vector<1x128xf32>
    %299 = arith.negf %298 : vector<1x128xf32>
    %300 = math.exp %299 : vector<1x128xf32>
    %cst_64 = arith.constant 1.000000e+00 : f32
    %301 = vector.broadcast %cst_64 : f32 to vector<1x128xf32>
    %302 = arith.addf %301, %300 : vector<1x128xf32>
    %303 = arith.divf %301, %302 : vector<1x128xf32>
    %304 = arith.mulf %295, %265 : vector<1x128xf32>
    %305 = arith.mulf %289, %297 : vector<1x128xf32>
    %306 = arith.addf %304, %305 : vector<1x128xf32>
    %307 = math.tanh %306 : vector<1x128xf32>
    %308 = arith.mulf %303, %307 : vector<1x128xf32>
    %309 = vector.extract_strided_slice %308 {offsets = [0, 0], sizes = [1, 64], strides = [1, 1]} : vector<1x128xf32> to vector<1x64xf32>
    %c0_65 = arith.constant 0 : index
    %c6 = arith.constant 6 : index
    %c0_66 = arith.constant 0 : index
    %310 = vector.load %arg6[%c0_65, %c6, %c0_66] : memref<1x16x128xf32, #tpu.memory_space<vmem>>, vector<1x1x64xf32>
    %311 = vector.shape_cast %310 : vector<1x1x64xf32> to vector<1x64xf32>
    %312 = vector.shape_cast %309 : vector<1x64xf32> to vector<1x1x64xf32>
    tpu.vector_store %arg6[%c0_65, %c6, %c0_66], %312 {strides = array<i32>} : memref<1x16x128xf32, #tpu.memory_space<vmem>>, vector<1x1x64xf32>,
    %313 = vector.extract_strided_slice %308 {offsets = [0, 64], sizes = [1, 64], strides = [1, 1]} : vector<1x128xf32> to vector<1x64xf32>
    %c0_67 = arith.constant 0 : index
    %c9 = arith.constant 9 : index
    %c64_68 = arith.constant 64 : index
    %314 = vector.load %arg6[%c0_67, %c9, %c64_68] : memref<1x16x128xf32, #tpu.memory_space<vmem>>, vector<1x1x64xf32>
    %315 = vector.shape_cast %314 : vector<1x1x64xf32> to vector<1x64xf32>
    %316 = vector.shape_cast %313 : vector<1x64xf32> to vector<1x1x64xf32>
    tpu.vector_store %arg6[%c0_67, %c9, %c64_68], %316 {strides = array<i32>} : memref<1x16x128xf32, #tpu.memory_space<vmem>>, vector<1x1x64xf32>,
    %317 = vector.extract_strided_slice %7 {offsets = [0, 7, 0], sizes = [1, 1, 512], strides = [1, 1, 1]} : vector<1x16x512xf32> to vector<1x1x512xf32>
    %318 = vector.shape_cast %317 : vector<1x1x512xf32> to vector<1x512xf32>
    %319 = vector.extract_strided_slice %7 {offsets = [0, 8, 0], sizes = [1, 1, 512], strides = [1, 1, 1]} : vector<1x16x512xf32> to vector<1x1x512xf32>
    %320 = vector.shape_cast %319 : vector<1x1x512xf32> to vector<1x512xf32>
    %321 = arith.select %26, %318, %320 : vector<1x512xi1>, vector<1x512xf32>
    %322 = arith.truncf %308 : vector<1x128xf32> to vector<1x128xbf16>
    %cst_69 = arith.constant dense<0.000000e+00> : vector<1x512xf32>
    %323 = tpu.matmul %322, %27, %cst_69 {dimension_numbers = #tpu.dot_dimension_numbers<[1], [0], [0], [1], [0, 0, 1, 1], [], []>} : vector<1x128xbf16>, vector<128x512xbf16>, vector<1x512xf32> -> vector<1x512xf32>
    %324 = arith.addf %321, %323 : vector<1x512xf32>
    %325 = vector.extract_strided_slice %324 {offsets = [0, 0], sizes = [1, 128], strides = [1, 1]} : vector<1x512xf32> to vector<1x128xf32>
    %326 = arith.negf %325 : vector<1x128xf32>
    %327 = math.exp %326 : vector<1x128xf32>
    %cst_70 = arith.constant 1.000000e+00 : f32
    %328 = vector.broadcast %cst_70 : f32 to vector<1x128xf32>
    %329 = arith.addf %328, %327 : vector<1x128xf32>
    %330 = arith.divf %328, %329 : vector<1x128xf32>
    %331 = vector.extract_strided_slice %324 {offsets = [0, 128], sizes = [1, 128], strides = [1, 1]} : vector<1x512xf32> to vector<1x128xf32>
    %332 = arith.negf %331 : vector<1x128xf32>
    %333 = math.exp %332 : vector<1x128xf32>
    %cst_71 = arith.constant 1.000000e+00 : f32
    %334 = vector.broadcast %cst_71 : f32 to vector<1x128xf32>
    %335 = arith.addf %334, %333 : vector<1x128xf32>
    %336 = arith.divf %334, %335 : vector<1x128xf32>
    %337 = vector.extract_strided_slice %324 {offsets = [0, 256], sizes = [1, 128], strides = [1, 1]} : vector<1x512xf32> to vector<1x128xf32>
    %338 = math.tanh %337 : vector<1x128xf32>
    %339 = vector.extract_strided_slice %324 {offsets = [0, 384], sizes = [1, 128], strides = [1, 1]} : vector<1x512xf32> to vector<1x128xf32>
    %340 = arith.negf %339 : vector<1x128xf32>
    %341 = math.exp %340 : vector<1x128xf32>
    %cst_72 = arith.constant 1.000000e+00 : f32
    %342 = vector.broadcast %cst_72 : f32 to vector<1x128xf32>
    %343 = arith.addf %342, %341 : vector<1x128xf32>
    %344 = arith.divf %342, %343 : vector<1x128xf32>
    %345 = arith.mulf %336, %306 : vector<1x128xf32>
    %346 = arith.mulf %330, %338 : vector<1x128xf32>
    %347 = arith.addf %345, %346 : vector<1x128xf32>
    %348 = math.tanh %347 : vector<1x128xf32>
    %349 = arith.mulf %344, %348 : vector<1x128xf32>
    %350 = vector.extract_strided_slice %349 {offsets = [0, 0], sizes = [1, 64], strides = [1, 1]} : vector<1x128xf32> to vector<1x64xf32>
    %c0_73 = arith.constant 0 : index
    %c7 = arith.constant 7 : index
    %c0_74 = arith.constant 0 : index
    %351 = vector.load %arg6[%c0_73, %c7, %c0_74] : memref<1x16x128xf32, #tpu.memory_space<vmem>>, vector<1x1x64xf32>
    %352 = vector.shape_cast %351 : vector<1x1x64xf32> to vector<1x64xf32>
    %353 = vector.shape_cast %350 : vector<1x64xf32> to vector<1x1x64xf32>
    tpu.vector_store %arg6[%c0_73, %c7, %c0_74], %353 {strides = array<i32>} : memref<1x16x128xf32, #tpu.memory_space<vmem>>, vector<1x1x64xf32>,
    %354 = vector.extract_strided_slice %349 {offsets = [0, 64], sizes = [1, 64], strides = [1, 1]} : vector<1x128xf32> to vector<1x64xf32>
    %c0_75 = arith.constant 0 : index
    %c8 = arith.constant 8 : index
    %c64_76 = arith.constant 64 : index
    %355 = vector.load %arg6[%c0_75, %c8, %c64_76] : memref<1x16x128xf32, #tpu.memory_space<vmem>>, vector<1x1x64xf32>
    %356 = vector.shape_cast %355 : vector<1x1x64xf32> to vector<1x64xf32>
    %357 = vector.shape_cast %354 : vector<1x64xf32> to vector<1x1x64xf32>
    tpu.vector_store %arg6[%c0_75, %c8, %c64_76], %357 {strides = array<i32>} : memref<1x16x128xf32, #tpu.memory_space<vmem>>, vector<1x1x64xf32>,
    %358 = vector.extract_strided_slice %7 {offsets = [0, 8, 0], sizes = [1, 1, 512], strides = [1, 1, 1]} : vector<1x16x512xf32> to vector<1x1x512xf32>
    %359 = vector.shape_cast %358 : vector<1x1x512xf32> to vector<1x512xf32>
    %360 = vector.extract_strided_slice %7 {offsets = [0, 7, 0], sizes = [1, 1, 512], strides = [1, 1, 1]} : vector<1x16x512xf32> to vector<1x1x512xf32>
    %361 = vector.shape_cast %360 : vector<1x1x512xf32> to vector<1x512xf32>
    %362 = arith.select %26, %359, %361 : vector<1x512xi1>, vector<1x512xf32>
    %363 = arith.truncf %349 : vector<1x128xf32> to vector<1x128xbf16>
    %cst_77 = arith.constant dense<0.000000e+00> : vector<1x512xf32>
    %364 = tpu.matmul %363, %27, %cst_77 {dimension_numbers = #tpu.dot_dimension_numbers<[1], [0], [0], [1], [0, 0, 1, 1], [], []>} : vector<1x128xbf16>, vector<128x512xbf16>, vector<1x512xf32> -> vector<1x512xf32>
    %365 = arith.addf %362, %364 : vector<1x512xf32>
    %366 = vector.extract_strided_slice %365 {offsets = [0, 0], sizes = [1, 128], strides = [1, 1]} : vector<1x512xf32> to vector<1x128xf32>
    %367 = arith.negf %366 : vector<1x128xf32>
    %368 = math.exp %367 : vector<1x128xf32>
    %cst_78 = arith.constant 1.000000e+00 : f32
    %369 = vector.broadcast %cst_78 : f32 to vector<1x128xf32>
    %370 = arith.addf %369, %368 : vector<1x128xf32>
    %371 = arith.divf %369, %370 : vector<1x128xf32>
    %372 = vector.extract_strided_slice %365 {offsets = [0, 128], sizes = [1, 128], strides = [1, 1]} : vector<1x512xf32> to vector<1x128xf32>
    %373 = arith.negf %372 : vector<1x128xf32>
    %374 = math.exp %373 : vector<1x128xf32>
    %cst_79 = arith.constant 1.000000e+00 : f32
    %375 = vector.broadcast %cst_79 : f32 to vector<1x128xf32>
    %376 = arith.addf %375, %374 : vector<1x128xf32>
    %377 = arith.divf %375, %376 : vector<1x128xf32>
    %378 = vector.extract_strided_slice %365 {offsets = [0, 256], sizes = [1, 128], strides = [1, 1]} : vector<1x512xf32> to vector<1x128xf32>
    %379 = math.tanh %378 : vector<1x128xf32>
    %380 = vector.extract_strided_slice %365 {offsets = [0, 384], sizes = [1, 128], strides = [1, 1]} : vector<1x512xf32> to vector<1x128xf32>
    %381 = arith.negf %380 : vector<1x128xf32>
    %382 = math.exp %381 : vector<1x128xf32>
    %cst_80 = arith.constant 1.000000e+00 : f32
    %383 = vector.broadcast %cst_80 : f32 to vector<1x128xf32>
    %384 = arith.addf %383, %382 : vector<1x128xf32>
    %385 = arith.divf %383, %384 : vector<1x128xf32>
    %386 = arith.mulf %377, %347 : vector<1x128xf32>
    %387 = arith.mulf %371, %379 : vector<1x128xf32>
    %388 = arith.addf %386, %387 : vector<1x128xf32>
    %389 = math.tanh %388 : vector<1x128xf32>
    %390 = arith.mulf %385, %389 : vector<1x128xf32>
    %391 = vector.extract_strided_slice %390 {offsets = [0, 0], sizes = [1, 64], strides = [1, 1]} : vector<1x128xf32> to vector<1x64xf32>
    %c0_81 = arith.constant 0 : index
    %c8_82 = arith.constant 8 : index
    %c0_83 = arith.constant 0 : index
    %392 = vector.load %arg6[%c0_81, %c8_82, %c0_83] : memref<1x16x128xf32, #tpu.memory_space<vmem>>, vector<1x1x64xf32>
    %393 = vector.shape_cast %392 : vector<1x1x64xf32> to vector<1x64xf32>
    %394 = vector.shape_cast %391 : vector<1x64xf32> to vector<1x1x64xf32>
    tpu.vector_store %arg6[%c0_81, %c8_82, %c0_83], %394 {strides = array<i32>} : memref<1x16x128xf32, #tpu.memory_space<vmem>>, vector<1x1x64xf32>,
    %395 = vector.extract_strided_slice %390 {offsets = [0, 64], sizes = [1, 64], strides = [1, 1]} : vector<1x128xf32> to vector<1x64xf32>
    %c0_84 = arith.constant 0 : index
    %c7_85 = arith.constant 7 : index
    %c64_86 = arith.constant 64 : index
    %396 = vector.load %arg6[%c0_84, %c7_85, %c64_86] : memref<1x16x128xf32, #tpu.memory_space<vmem>>, vector<1x1x64xf32>
    %397 = vector.shape_cast %396 : vector<1x1x64xf32> to vector<1x64xf32>
    %398 = vector.shape_cast %395 : vector<1x64xf32> to vector<1x1x64xf32>
    tpu.vector_store %arg6[%c0_84, %c7_85, %c64_86], %398 {strides = array<i32>} : memref<1x16x128xf32, #tpu.memory_space<vmem>>, vector<1x1x64xf32>,
    %399 = vector.extract_strided_slice %7 {offsets = [0, 9, 0], sizes = [1, 1, 512], strides = [1, 1, 1]} : vector<1x16x512xf32> to vector<1x1x512xf32>
    %400 = vector.shape_cast %399 : vector<1x1x512xf32> to vector<1x512xf32>
    %401 = vector.extract_strided_slice %7 {offsets = [0, 6, 0], sizes = [1, 1, 512], strides = [1, 1, 1]} : vector<1x16x512xf32> to vector<1x1x512xf32>
    %402 = vector.shape_cast %401 : vector<1x1x512xf32> to vector<1x512xf32>
    %403 = arith.select %26, %400, %402 : vector<1x512xi1>, vector<1x512xf32>
    %404 = arith.truncf %390 : vector<1x128xf32> to vector<1x128xbf16>
    %cst_87 = arith.constant dense<0.000000e+00> : vector<1x512xf32>
    %405 = tpu.matmul %404, %27, %cst_87 {dimension_numbers = #tpu.dot_dimension_numbers<[1], [0], [0], [1], [0, 0, 1, 1], [], []>} : vector<1x128xbf16>, vector<128x512xbf16>, vector<1x512xf32> -> vector<1x512xf32>
    %406 = arith.addf %403, %405 : vector<1x512xf32>
    %407 = vector.extract_strided_slice %406 {offsets = [0, 0], sizes = [1, 128], strides = [1, 1]} : vector<1x512xf32> to vector<1x128xf32>
    %408 = arith.negf %407 : vector<1x128xf32>
    %409 = math.exp %408 : vector<1x128xf32>
    %cst_88 = arith.constant 1.000000e+00 : f32
    %410 = vector.broadcast %cst_88 : f32 to vector<1x128xf32>
    %411 = arith.addf %410, %409 : vector<1x128xf32>
    %412 = arith.divf %410, %411 : vector<1x128xf32>
    %413 = vector.extract_strided_slice %406 {offsets = [0, 128], sizes = [1, 128], strides = [1, 1]} : vector<1x512xf32> to vector<1x128xf32>
    %414 = arith.negf %413 : vector<1x128xf32>
    %415 = math.exp %414 : vector<1x128xf32>
    %cst_89 = arith.constant 1.000000e+00 : f32
    %416 = vector.broadcast %cst_89 : f32 to vector<1x128xf32>
    %417 = arith.addf %416, %415 : vector<1x128xf32>
    %418 = arith.divf %416, %417 : vector<1x128xf32>
    %419 = vector.extract_strided_slice %406 {offsets = [0, 256], sizes = [1, 128], strides = [1, 1]} : vector<1x512xf32> to vector<1x128xf32>
    %420 = math.tanh %419 : vector<1x128xf32>
    %421 = vector.extract_strided_slice %406 {offsets = [0, 384], sizes = [1, 128], strides = [1, 1]} : vector<1x512xf32> to vector<1x128xf32>
    %422 = arith.negf %421 : vector<1x128xf32>
    %423 = math.exp %422 : vector<1x128xf32>
    %cst_90 = arith.constant 1.000000e+00 : f32
    %424 = vector.broadcast %cst_90 : f32 to vector<1x128xf32>
    %425 = arith.addf %424, %423 : vector<1x128xf32>
    %426 = arith.divf %424, %425 : vector<1x128xf32>
    %427 = arith.mulf %418, %388 : vector<1x128xf32>
    %428 = arith.mulf %412, %420 : vector<1x128xf32>
    %429 = arith.addf %427, %428 : vector<1x128xf32>
    %430 = math.tanh %429 : vector<1x128xf32>
    %431 = arith.mulf %426, %430 : vector<1x128xf32>
    %432 = vector.extract_strided_slice %431 {offsets = [0, 0], sizes = [1, 64], strides = [1, 1]} : vector<1x128xf32> to vector<1x64xf32>
    %c0_91 = arith.constant 0 : index
    %c9_92 = arith.constant 9 : index
    %c0_93 = arith.constant 0 : index
    %433 = vector.load %arg6[%c0_91, %c9_92, %c0_93] : memref<1x16x128xf32, #tpu.memory_space<vmem>>, vector<1x1x64xf32>
    %434 = vector.shape_cast %433 : vector<1x1x64xf32> to vector<1x64xf32>
    %435 = vector.shape_cast %432 : vector<1x64xf32> to vector<1x1x64xf32>
    tpu.vector_store %arg6[%c0_91, %c9_92, %c0_93], %435 {strides = array<i32>} : memref<1x16x128xf32, #tpu.memory_space<vmem>>, vector<1x1x64xf32>,
    %436 = vector.extract_strided_slice %431 {offsets = [0, 64], sizes = [1, 64], strides = [1, 1]} : vector<1x128xf32> to vector<1x64xf32>
    %c0_94 = arith.constant 0 : index
    %c6_95 = arith.constant 6 : index
    %c64_96 = arith.constant 64 : index
    %437 = vector.load %arg6[%c0_94, %c6_95, %c64_96] : memref<1x16x128xf32, #tpu.memory_space<vmem>>, vector<1x1x64xf32>
    %438 = vector.shape_cast %437 : vector<1x1x64xf32> to vector<1x64xf32>
    %439 = vector.shape_cast %436 : vector<1x64xf32> to vector<1x1x64xf32>
    tpu.vector_store %arg6[%c0_94, %c6_95, %c64_96], %439 {strides = array<i32>} : memref<1x16x128xf32, #tpu.memory_space<vmem>>, vector<1x1x64xf32>,
    %440 = vector.extract_strided_slice %7 {offsets = [0, 10, 0], sizes = [1, 1, 512], strides = [1, 1, 1]} : vector<1x16x512xf32> to vector<1x1x512xf32>
    %441 = vector.shape_cast %440 : vector<1x1x512xf32> to vector<1x512xf32>
    %442 = vector.extract_strided_slice %7 {offsets = [0, 5, 0], sizes = [1, 1, 512], strides = [1, 1, 1]} : vector<1x16x512xf32> to vector<1x1x512xf32>
    %443 = vector.shape_cast %442 : vector<1x1x512xf32> to vector<1x512xf32>
    %444 = arith.select %26, %441, %443 : vector<1x512xi1>, vector<1x512xf32>
    %445 = arith.truncf %431 : vector<1x128xf32> to vector<1x128xbf16>
    %cst_97 = arith.constant dense<0.000000e+00> : vector<1x512xf32>
    %446 = tpu.matmul %445, %27, %cst_97 {dimension_numbers = #tpu.dot_dimension_numbers<[1], [0], [0], [1], [0, 0, 1, 1], [], []>} : vector<1x128xbf16>, vector<128x512xbf16>, vector<1x512xf32> -> vector<1x512xf32>
    %447 = arith.addf %444, %446 : vector<1x512xf32>
    %448 = vector.extract_strided_slice %447 {offsets = [0, 0], sizes = [1, 128], strides = [1, 1]} : vector<1x512xf32> to vector<1x128xf32>
    %449 = arith.negf %448 : vector<1x128xf32>
    %450 = math.exp %449 : vector<1x128xf32>
    %cst_98 = arith.constant 1.000000e+00 : f32
    %451 = vector.broadcast %cst_98 : f32 to vector<1x128xf32>
    %452 = arith.addf %451, %450 : vector<1x128xf32>
    %453 = arith.divf %451, %452 : vector<1x128xf32>
    %454 = vector.extract_strided_slice %447 {offsets = [0, 128], sizes = [1, 128], strides = [1, 1]} : vector<1x512xf32> to vector<1x128xf32>
    %455 = arith.negf %454 : vector<1x128xf32>
    %456 = math.exp %455 : vector<1x128xf32>
    %cst_99 = arith.constant 1.000000e+00 : f32
    %457 = vector.broadcast %cst_99 : f32 to vector<1x128xf32>
    %458 = arith.addf %457, %456 : vector<1x128xf32>
    %459 = arith.divf %457, %458 : vector<1x128xf32>
    %460 = vector.extract_strided_slice %447 {offsets = [0, 256], sizes = [1, 128], strides = [1, 1]} : vector<1x512xf32> to vector<1x128xf32>
    %461 = math.tanh %460 : vector<1x128xf32>
    %462 = vector.extract_strided_slice %447 {offsets = [0, 384], sizes = [1, 128], strides = [1, 1]} : vector<1x512xf32> to vector<1x128xf32>
    %463 = arith.negf %462 : vector<1x128xf32>
    %464 = math.exp %463 : vector<1x128xf32>
    %cst_100 = arith.constant 1.000000e+00 : f32
    %465 = vector.broadcast %cst_100 : f32 to vector<1x128xf32>
    %466 = arith.addf %465, %464 : vector<1x128xf32>
    %467 = arith.divf %465, %466 : vector<1x128xf32>
    %468 = arith.mulf %459, %429 : vector<1x128xf32>
    %469 = arith.mulf %453, %461 : vector<1x128xf32>
    %470 = arith.addf %468, %469 : vector<1x128xf32>
    %471 = math.tanh %470 : vector<1x128xf32>
    %472 = arith.mulf %467, %471 : vector<1x128xf32>
    %473 = vector.extract_strided_slice %472 {offsets = [0, 0], sizes = [1, 64], strides = [1, 1]} : vector<1x128xf32> to vector<1x64xf32>
    %c0_101 = arith.constant 0 : index
    %c10_102 = arith.constant 10 : index
    %c0_103 = arith.constant 0 : index
    %474 = vector.load %arg6[%c0_101, %c10_102, %c0_103] : memref<1x16x128xf32, #tpu.memory_space<vmem>>, vector<1x1x64xf32>
    %475 = vector.shape_cast %474 : vector<1x1x64xf32> to vector<1x64xf32>
    %476 = vector.shape_cast %473 : vector<1x64xf32> to vector<1x1x64xf32>
    tpu.vector_store %arg6[%c0_101, %c10_102, %c0_103], %476 {strides = array<i32>} : memref<1x16x128xf32, #tpu.memory_space<vmem>>, vector<1x1x64xf32>,
    %477 = vector.extract_strided_slice %472 {offsets = [0, 64], sizes = [1, 64], strides = [1, 1]} : vector<1x128xf32> to vector<1x64xf32>
    %c0_104 = arith.constant 0 : index
    %c5_105 = arith.constant 5 : index
    %c64_106 = arith.constant 64 : index
    %478 = vector.load %arg6[%c0_104, %c5_105, %c64_106] : memref<1x16x128xf32, #tpu.memory_space<vmem>>, vector<1x1x64xf32>
    %479 = vector.shape_cast %478 : vector<1x1x64xf32> to vector<1x64xf32>
    %480 = vector.shape_cast %477 : vector<1x64xf32> to vector<1x1x64xf32>
    tpu.vector_store %arg6[%c0_104, %c5_105, %c64_106], %480 {strides = array<i32>} : memref<1x16x128xf32, #tpu.memory_space<vmem>>, vector<1x1x64xf32>,
    %481 = vector.extract_strided_slice %7 {offsets = [0, 11, 0], sizes = [1, 1, 512], strides = [1, 1, 1]} : vector<1x16x512xf32> to vector<1x1x512xf32>
    %482 = vector.shape_cast %481 : vector<1x1x512xf32> to vector<1x512xf32>
    %483 = vector.extract_strided_slice %7 {offsets = [0, 4, 0], sizes = [1, 1, 512], strides = [1, 1, 1]} : vector<1x16x512xf32> to vector<1x1x512xf32>
    %484 = vector.shape_cast %483 : vector<1x1x512xf32> to vector<1x512xf32>
    %485 = arith.select %26, %482, %484 : vector<1x512xi1>, vector<1x512xf32>
    %486 = arith.truncf %472 : vector<1x128xf32> to vector<1x128xbf16>
    %cst_107 = arith.constant dense<0.000000e+00> : vector<1x512xf32>
    %487 = tpu.matmul %486, %27, %cst_107 {dimension_numbers = #tpu.dot_dimension_numbers<[1], [0], [0], [1], [0, 0, 1, 1], [], []>} : vector<1x128xbf16>, vector<128x512xbf16>, vector<1x512xf32> -> vector<1x512xf32>
    %488 = arith.addf %485, %487 : vector<1x512xf32>
    %489 = vector.extract_strided_slice %488 {offsets = [0, 0], sizes = [1, 128], strides = [1, 1]} : vector<1x512xf32> to vector<1x128xf32>
    %490 = arith.negf %489 : vector<1x128xf32>
    %491 = math.exp %490 : vector<1x128xf32>
    %cst_108 = arith.constant 1.000000e+00 : f32
    %492 = vector.broadcast %cst_108 : f32 to vector<1x128xf32>
    %493 = arith.addf %492, %491 : vector<1x128xf32>
    %494 = arith.divf %492, %493 : vector<1x128xf32>
    %495 = vector.extract_strided_slice %488 {offsets = [0, 128], sizes = [1, 128], strides = [1, 1]} : vector<1x512xf32> to vector<1x128xf32>
    %496 = arith.negf %495 : vector<1x128xf32>
    %497 = math.exp %496 : vector<1x128xf32>
    %cst_109 = arith.constant 1.000000e+00 : f32
    %498 = vector.broadcast %cst_109 : f32 to vector<1x128xf32>
    %499 = arith.addf %498, %497 : vector<1x128xf32>
    %500 = arith.divf %498, %499 : vector<1x128xf32>
    %501 = vector.extract_strided_slice %488 {offsets = [0, 256], sizes = [1, 128], strides = [1, 1]} : vector<1x512xf32> to vector<1x128xf32>
    %502 = math.tanh %501 : vector<1x128xf32>
    %503 = vector.extract_strided_slice %488 {offsets = [0, 384], sizes = [1, 128], strides = [1, 1]} : vector<1x512xf32> to vector<1x128xf32>
    %504 = arith.negf %503 : vector<1x128xf32>
    %505 = math.exp %504 : vector<1x128xf32>
    %cst_110 = arith.constant 1.000000e+00 : f32
    %506 = vector.broadcast %cst_110 : f32 to vector<1x128xf32>
    %507 = arith.addf %506, %505 : vector<1x128xf32>
    %508 = arith.divf %506, %507 : vector<1x128xf32>
    %509 = arith.mulf %500, %470 : vector<1x128xf32>
    %510 = arith.mulf %494, %502 : vector<1x128xf32>
    %511 = arith.addf %509, %510 : vector<1x128xf32>
    %512 = math.tanh %511 : vector<1x128xf32>
    %513 = arith.mulf %508, %512 : vector<1x128xf32>
    %514 = vector.extract_strided_slice %513 {offsets = [0, 0], sizes = [1, 64], strides = [1, 1]} : vector<1x128xf32> to vector<1x64xf32>
    %c0_111 = arith.constant 0 : index
    %c11_112 = arith.constant 11 : index
    %c0_113 = arith.constant 0 : index
    %515 = vector.load %arg6[%c0_111, %c11_112, %c0_113] : memref<1x16x128xf32, #tpu.memory_space<vmem>>, vector<1x1x64xf32>
    %516 = vector.shape_cast %515 : vector<1x1x64xf32> to vector<1x64xf32>
    %517 = vector.shape_cast %514 : vector<1x64xf32> to vector<1x1x64xf32>
    tpu.vector_store %arg6[%c0_111, %c11_112, %c0_113], %517 {strides = array<i32>} : memref<1x16x128xf32, #tpu.memory_space<vmem>>, vector<1x1x64xf32>,
    %518 = vector.extract_strided_slice %513 {offsets = [0, 64], sizes = [1, 64], strides = [1, 1]} : vector<1x128xf32> to vector<1x64xf32>
    %c0_114 = arith.constant 0 : index
    %c4_115 = arith.constant 4 : index
    %c64_116 = arith.constant 64 : index
    %519 = vector.load %arg6[%c0_114, %c4_115, %c64_116] : memref<1x16x128xf32, #tpu.memory_space<vmem>>, vector<1x1x64xf32>
    %520 = vector.shape_cast %519 : vector<1x1x64xf32> to vector<1x64xf32>
    %521 = vector.shape_cast %518 : vector<1x64xf32> to vector<1x1x64xf32>
    tpu.vector_store %arg6[%c0_114, %c4_115, %c64_116], %521 {strides = array<i32>} : memref<1x16x128xf32, #tpu.memory_space<vmem>>, vector<1x1x64xf32>,
    %522 = vector.extract_strided_slice %7 {offsets = [0, 12, 0], sizes = [1, 1, 512], strides = [1, 1, 1]} : vector<1x16x512xf32> to vector<1x1x512xf32>
    %523 = vector.shape_cast %522 : vector<1x1x512xf32> to vector<1x512xf32>
    %524 = vector.extract_strided_slice %7 {offsets = [0, 3, 0], sizes = [1, 1, 512], strides = [1, 1, 1]} : vector<1x16x512xf32> to vector<1x1x512xf32>
    %525 = vector.shape_cast %524 : vector<1x1x512xf32> to vector<1x512xf32>
    %526 = arith.select %26, %523, %525 : vector<1x512xi1>, vector<1x512xf32>
    %527 = arith.truncf %513 : vector<1x128xf32> to vector<1x128xbf16>
    %cst_117 = arith.constant dense<0.000000e+00> : vector<1x512xf32>
    %528 = tpu.matmul %527, %27, %cst_117 {dimension_numbers = #tpu.dot_dimension_numbers<[1], [0], [0], [1], [0, 0, 1, 1], [], []>} : vector<1x128xbf16>, vector<128x512xbf16>, vector<1x512xf32> -> vector<1x512xf32>
    %529 = arith.addf %526, %528 : vector<1x512xf32>
    %530 = vector.extract_strided_slice %529 {offsets = [0, 0], sizes = [1, 128], strides = [1, 1]} : vector<1x512xf32> to vector<1x128xf32>
    %531 = arith.negf %530 : vector<1x128xf32>
    %532 = math.exp %531 : vector<1x128xf32>
    %cst_118 = arith.constant 1.000000e+00 : f32
    %533 = vector.broadcast %cst_118 : f32 to vector<1x128xf32>
    %534 = arith.addf %533, %532 : vector<1x128xf32>
    %535 = arith.divf %533, %534 : vector<1x128xf32>
    %536 = vector.extract_strided_slice %529 {offsets = [0, 128], sizes = [1, 128], strides = [1, 1]} : vector<1x512xf32> to vector<1x128xf32>
    %537 = arith.negf %536 : vector<1x128xf32>
    %538 = math.exp %537 : vector<1x128xf32>
    %cst_119 = arith.constant 1.000000e+00 : f32
    %539 = vector.broadcast %cst_119 : f32 to vector<1x128xf32>
    %540 = arith.addf %539, %538 : vector<1x128xf32>
    %541 = arith.divf %539, %540 : vector<1x128xf32>
    %542 = vector.extract_strided_slice %529 {offsets = [0, 256], sizes = [1, 128], strides = [1, 1]} : vector<1x512xf32> to vector<1x128xf32>
    %543 = math.tanh %542 : vector<1x128xf32>
    %544 = vector.extract_strided_slice %529 {offsets = [0, 384], sizes = [1, 128], strides = [1, 1]} : vector<1x512xf32> to vector<1x128xf32>
    %545 = arith.negf %544 : vector<1x128xf32>
    %546 = math.exp %545 : vector<1x128xf32>
    %cst_120 = arith.constant 1.000000e+00 : f32
    %547 = vector.broadcast %cst_120 : f32 to vector<1x128xf32>
    %548 = arith.addf %547, %546 : vector<1x128xf32>
    %549 = arith.divf %547, %548 : vector<1x128xf32>
    %550 = arith.mulf %541, %511 : vector<1x128xf32>
    %551 = arith.mulf %535, %543 : vector<1x128xf32>
    %552 = arith.addf %550, %551 : vector<1x128xf32>
    %553 = math.tanh %552 : vector<1x128xf32>
    %554 = arith.mulf %549, %553 : vector<1x128xf32>
    %555 = vector.extract_strided_slice %554 {offsets = [0, 0], sizes = [1, 64], strides = [1, 1]} : vector<1x128xf32> to vector<1x64xf32>
    %c0_121 = arith.constant 0 : index
    %c12_122 = arith.constant 12 : index
    %c0_123 = arith.constant 0 : index
    %556 = vector.load %arg6[%c0_121, %c12_122, %c0_123] : memref<1x16x128xf32, #tpu.memory_space<vmem>>, vector<1x1x64xf32>
    %557 = vector.shape_cast %556 : vector<1x1x64xf32> to vector<1x64xf32>
    %558 = vector.shape_cast %555 : vector<1x64xf32> to vector<1x1x64xf32>
    tpu.vector_store %arg6[%c0_121, %c12_122, %c0_123], %558 {strides = array<i32>} : memref<1x16x128xf32, #tpu.memory_space<vmem>>, vector<1x1x64xf32>,
    %559 = vector.extract_strided_slice %554 {offsets = [0, 64], sizes = [1, 64], strides = [1, 1]} : vector<1x128xf32> to vector<1x64xf32>
    %c0_124 = arith.constant 0 : index
    %c3_125 = arith.constant 3 : index
    %c64_126 = arith.constant 64 : index
    %560 = vector.load %arg6[%c0_124, %c3_125, %c64_126] : memref<1x16x128xf32, #tpu.memory_space<vmem>>, vector<1x1x64xf32>
    %561 = vector.shape_cast %560 : vector<1x1x64xf32> to vector<1x64xf32>
    %562 = vector.shape_cast %559 : vector<1x64xf32> to vector<1x1x64xf32>
    tpu.vector_store %arg6[%c0_124, %c3_125, %c64_126], %562 {strides = array<i32>} : memref<1x16x128xf32, #tpu.memory_space<vmem>>, vector<1x1x64xf32>,
    %563 = vector.extract_strided_slice %7 {offsets = [0, 13, 0], sizes = [1, 1, 512], strides = [1, 1, 1]} : vector<1x16x512xf32> to vector<1x1x512xf32>
    %564 = vector.shape_cast %563 : vector<1x1x512xf32> to vector<1x512xf32>
    %565 = vector.extract_strided_slice %7 {offsets = [0, 2, 0], sizes = [1, 1, 512], strides = [1, 1, 1]} : vector<1x16x512xf32> to vector<1x1x512xf32>
    %566 = vector.shape_cast %565 : vector<1x1x512xf32> to vector<1x512xf32>
    %567 = arith.select %26, %564, %566 : vector<1x512xi1>, vector<1x512xf32>
    %568 = arith.truncf %554 : vector<1x128xf32> to vector<1x128xbf16>
    %cst_127 = arith.constant dense<0.000000e+00> : vector<1x512xf32>
    %569 = tpu.matmul %568, %27, %cst_127 {dimension_numbers = #tpu.dot_dimension_numbers<[1], [0], [0], [1], [0, 0, 1, 1], [], []>} : vector<1x128xbf16>, vector<128x512xbf16>, vector<1x512xf32> -> vector<1x512xf32>
    %570 = arith.addf %567, %569 : vector<1x512xf32>
    %571 = vector.extract_strided_slice %570 {offsets = [0, 0], sizes = [1, 128], strides = [1, 1]} : vector<1x512xf32> to vector<1x128xf32>
    %572 = arith.negf %571 : vector<1x128xf32>
    %573 = math.exp %572 : vector<1x128xf32>
    %cst_128 = arith.constant 1.000000e+00 : f32
    %574 = vector.broadcast %cst_128 : f32 to vector<1x128xf32>
    %575 = arith.addf %574, %573 : vector<1x128xf32>
    %576 = arith.divf %574, %575 : vector<1x128xf32>
    %577 = vector.extract_strided_slice %570 {offsets = [0, 128], sizes = [1, 128], strides = [1, 1]} : vector<1x512xf32> to vector<1x128xf32>
    %578 = arith.negf %577 : vector<1x128xf32>
    %579 = math.exp %578 : vector<1x128xf32>
    %cst_129 = arith.constant 1.000000e+00 : f32
    %580 = vector.broadcast %cst_129 : f32 to vector<1x128xf32>
    %581 = arith.addf %580, %579 : vector<1x128xf32>
    %582 = arith.divf %580, %581 : vector<1x128xf32>
    %583 = vector.extract_strided_slice %570 {offsets = [0, 256], sizes = [1, 128], strides = [1, 1]} : vector<1x512xf32> to vector<1x128xf32>
    %584 = math.tanh %583 : vector<1x128xf32>
    %585 = vector.extract_strided_slice %570 {offsets = [0, 384], sizes = [1, 128], strides = [1, 1]} : vector<1x512xf32> to vector<1x128xf32>
    %586 = arith.negf %585 : vector<1x128xf32>
    %587 = math.exp %586 : vector<1x128xf32>
    %cst_130 = arith.constant 1.000000e+00 : f32
    %588 = vector.broadcast %cst_130 : f32 to vector<1x128xf32>
    %589 = arith.addf %588, %587 : vector<1x128xf32>
    %590 = arith.divf %588, %589 : vector<1x128xf32>
    %591 = arith.mulf %582, %552 : vector<1x128xf32>
    %592 = arith.mulf %576, %584 : vector<1x128xf32>
    %593 = arith.addf %591, %592 : vector<1x128xf32>
    %594 = math.tanh %593 : vector<1x128xf32>
    %595 = arith.mulf %590, %594 : vector<1x128xf32>
    %596 = vector.extract_strided_slice %595 {offsets = [0, 0], sizes = [1, 64], strides = [1, 1]} : vector<1x128xf32> to vector<1x64xf32>
    %c0_131 = arith.constant 0 : index
    %c13_132 = arith.constant 13 : index
    %c0_133 = arith.constant 0 : index
    %597 = vector.load %arg6[%c0_131, %c13_132, %c0_133] : memref<1x16x128xf32, #tpu.memory_space<vmem>>, vector<1x1x64xf32>
    %598 = vector.shape_cast %597 : vector<1x1x64xf32> to vector<1x64xf32>
    %599 = vector.shape_cast %596 : vector<1x64xf32> to vector<1x1x64xf32>
    tpu.vector_store %arg6[%c0_131, %c13_132, %c0_133], %599 {strides = array<i32>} : memref<1x16x128xf32, #tpu.memory_space<vmem>>, vector<1x1x64xf32>,
    %600 = vector.extract_strided_slice %595 {offsets = [0, 64], sizes = [1, 64], strides = [1, 1]} : vector<1x128xf32> to vector<1x64xf32>
    %c0_134 = arith.constant 0 : index
    %c2_135 = arith.constant 2 : index
    %c64_136 = arith.constant 64 : index
    %601 = vector.load %arg6[%c0_134, %c2_135, %c64_136] : memref<1x16x128xf32, #tpu.memory_space<vmem>>, vector<1x1x64xf32>
    %602 = vector.shape_cast %601 : vector<1x1x64xf32> to vector<1x64xf32>
    %603 = vector.shape_cast %600 : vector<1x64xf32> to vector<1x1x64xf32>
    tpu.vector_store %arg6[%c0_134, %c2_135, %c64_136], %603 {strides = array<i32>} : memref<1x16x128xf32, #tpu.memory_space<vmem>>, vector<1x1x64xf32>,
    %604 = vector.extract_strided_slice %7 {offsets = [0, 14, 0], sizes = [1, 1, 512], strides = [1, 1, 1]} : vector<1x16x512xf32> to vector<1x1x512xf32>
    %605 = vector.shape_cast %604 : vector<1x1x512xf32> to vector<1x512xf32>
    %606 = vector.extract_strided_slice %7 {offsets = [0, 1, 0], sizes = [1, 1, 512], strides = [1, 1, 1]} : vector<1x16x512xf32> to vector<1x1x512xf32>
    %607 = vector.shape_cast %606 : vector<1x1x512xf32> to vector<1x512xf32>
    %608 = arith.select %26, %605, %607 : vector<1x512xi1>, vector<1x512xf32>
    %609 = arith.truncf %595 : vector<1x128xf32> to vector<1x128xbf16>
    %cst_137 = arith.constant dense<0.000000e+00> : vector<1x512xf32>
    %610 = tpu.matmul %609, %27, %cst_137 {dimension_numbers = #tpu.dot_dimension_numbers<[1], [0], [0], [1], [0, 0, 1, 1], [], []>} : vector<1x128xbf16>, vector<128x512xbf16>, vector<1x512xf32> -> vector<1x512xf32>
    %611 = arith.addf %608, %610 : vector<1x512xf32>
    %612 = vector.extract_strided_slice %611 {offsets = [0, 0], sizes = [1, 128], strides = [1, 1]} : vector<1x512xf32> to vector<1x128xf32>
    %613 = arith.negf %612 : vector<1x128xf32>
    %614 = math.exp %613 : vector<1x128xf32>
    %cst_138 = arith.constant 1.000000e+00 : f32
    %615 = vector.broadcast %cst_138 : f32 to vector<1x128xf32>
    %616 = arith.addf %615, %614 : vector<1x128xf32>
    %617 = arith.divf %615, %616 : vector<1x128xf32>
    %618 = vector.extract_strided_slice %611 {offsets = [0, 128], sizes = [1, 128], strides = [1, 1]} : vector<1x512xf32> to vector<1x128xf32>
    %619 = arith.negf %618 : vector<1x128xf32>
    %620 = math.exp %619 : vector<1x128xf32>
    %cst_139 = arith.constant 1.000000e+00 : f32
    %621 = vector.broadcast %cst_139 : f32 to vector<1x128xf32>
    %622 = arith.addf %621, %620 : vector<1x128xf32>
    %623 = arith.divf %621, %622 : vector<1x128xf32>
    %624 = vector.extract_strided_slice %611 {offsets = [0, 256], sizes = [1, 128], strides = [1, 1]} : vector<1x512xf32> to vector<1x128xf32>
    %625 = math.tanh %624 : vector<1x128xf32>
    %626 = vector.extract_strided_slice %611 {offsets = [0, 384], sizes = [1, 128], strides = [1, 1]} : vector<1x512xf32> to vector<1x128xf32>
    %627 = arith.negf %626 : vector<1x128xf32>
    %628 = math.exp %627 : vector<1x128xf32>
    %cst_140 = arith.constant 1.000000e+00 : f32
    %629 = vector.broadcast %cst_140 : f32 to vector<1x128xf32>
    %630 = arith.addf %629, %628 : vector<1x128xf32>
    %631 = arith.divf %629, %630 : vector<1x128xf32>
    %632 = arith.mulf %623, %593 : vector<1x128xf32>
    %633 = arith.mulf %617, %625 : vector<1x128xf32>
    %634 = arith.addf %632, %633 : vector<1x128xf32>
    %635 = math.tanh %634 : vector<1x128xf32>
    %636 = arith.mulf %631, %635 : vector<1x128xf32>
    %637 = vector.extract_strided_slice %636 {offsets = [0, 0], sizes = [1, 64], strides = [1, 1]} : vector<1x128xf32> to vector<1x64xf32>
    %c0_141 = arith.constant 0 : index
    %c14_142 = arith.constant 14 : index
    %c0_143 = arith.constant 0 : index
    %638 = vector.load %arg6[%c0_141, %c14_142, %c0_143] : memref<1x16x128xf32, #tpu.memory_space<vmem>>, vector<1x1x64xf32>
    %639 = vector.shape_cast %638 : vector<1x1x64xf32> to vector<1x64xf32>
    %640 = vector.shape_cast %637 : vector<1x64xf32> to vector<1x1x64xf32>
    tpu.vector_store %arg6[%c0_141, %c14_142, %c0_143], %640 {strides = array<i32>} : memref<1x16x128xf32, #tpu.memory_space<vmem>>, vector<1x1x64xf32>,
    %641 = vector.extract_strided_slice %636 {offsets = [0, 64], sizes = [1, 64], strides = [1, 1]} : vector<1x128xf32> to vector<1x64xf32>
    %c0_144 = arith.constant 0 : index
    %c1_145 = arith.constant 1 : index
    %c64_146 = arith.constant 64 : index
    %642 = vector.load %arg6[%c0_144, %c1_145, %c64_146] : memref<1x16x128xf32, #tpu.memory_space<vmem>>, vector<1x1x64xf32>
    %643 = vector.shape_cast %642 : vector<1x1x64xf32> to vector<1x64xf32>
    %644 = vector.shape_cast %641 : vector<1x64xf32> to vector<1x1x64xf32>
    tpu.vector_store %arg6[%c0_144, %c1_145, %c64_146], %644 {strides = array<i32>} : memref<1x16x128xf32, #tpu.memory_space<vmem>>, vector<1x1x64xf32>,
    %645 = vector.extract_strided_slice %7 {offsets = [0, 15, 0], sizes = [1, 1, 512], strides = [1, 1, 1]} : vector<1x16x512xf32> to vector<1x1x512xf32>
    %646 = vector.shape_cast %645 : vector<1x1x512xf32> to vector<1x512xf32>
    %647 = vector.extract_strided_slice %7 {offsets = [0, 0, 0], sizes = [1, 1, 512], strides = [1, 1, 1]} : vector<1x16x512xf32> to vector<1x1x512xf32>
    %648 = vector.shape_cast %647 : vector<1x1x512xf32> to vector<1x512xf32>
    %649 = arith.select %26, %646, %648 : vector<1x512xi1>, vector<1x512xf32>
    %650 = arith.truncf %636 : vector<1x128xf32> to vector<1x128xbf16>
    %cst_147 = arith.constant dense<0.000000e+00> : vector<1x512xf32>
    %651 = tpu.matmul %650, %27, %cst_147 {dimension_numbers = #tpu.dot_dimension_numbers<[1], [0], [0], [1], [0, 0, 1, 1], [], []>} : vector<1x128xbf16>, vector<128x512xbf16>, vector<1x512xf32> -> vector<1x512xf32>
    %652 = arith.addf %649, %651 : vector<1x512xf32>
    %653 = vector.extract_strided_slice %652 {offsets = [0, 0], sizes = [1, 128], strides = [1, 1]} : vector<1x512xf32> to vector<1x128xf32>
    %654 = arith.negf %653 : vector<1x128xf32>
    %655 = math.exp %654 : vector<1x128xf32>
    %cst_148 = arith.constant 1.000000e+00 : f32
    %656 = vector.broadcast %cst_148 : f32 to vector<1x128xf32>
    %657 = arith.addf %656, %655 : vector<1x128xf32>
    %658 = arith.divf %656, %657 : vector<1x128xf32>
    %659 = vector.extract_strided_slice %652 {offsets = [0, 128], sizes = [1, 128], strides = [1, 1]} : vector<1x512xf32> to vector<1x128xf32>
    %660 = arith.negf %659 : vector<1x128xf32>
    %661 = math.exp %660 : vector<1x128xf32>
    %cst_149 = arith.constant 1.000000e+00 : f32
    %662 = vector.broadcast %cst_149 : f32 to vector<1x128xf32>
    %663 = arith.addf %662, %661 : vector<1x128xf32>
    %664 = arith.divf %662, %663 : vector<1x128xf32>
    %665 = vector.extract_strided_slice %652 {offsets = [0, 256], sizes = [1, 128], strides = [1, 1]} : vector<1x512xf32> to vector<1x128xf32>
    %666 = math.tanh %665 : vector<1x128xf32>
    %667 = vector.extract_strided_slice %652 {offsets = [0, 384], sizes = [1, 128], strides = [1, 1]} : vector<1x512xf32> to vector<1x128xf32>
    %668 = arith.negf %667 : vector<1x128xf32>
    %669 = math.exp %668 : vector<1x128xf32>
    %cst_150 = arith.constant 1.000000e+00 : f32
    %670 = vector.broadcast %cst_150 : f32 to vector<1x128xf32>
    %671 = arith.addf %670, %669 : vector<1x128xf32>
    %672 = arith.divf %670, %671 : vector<1x128xf32>
    %673 = arith.mulf %664, %634 : vector<1x128xf32>
    %674 = arith.mulf %658, %666 : vector<1x128xf32>
    %675 = arith.addf %673, %674 : vector<1x128xf32>
    %676 = math.tanh %675 : vector<1x128xf32>
    %677 = arith.mulf %672, %676 : vector<1x128xf32>
    %678 = vector.extract_strided_slice %677 {offsets = [0, 0], sizes = [1, 64], strides = [1, 1]} : vector<1x128xf32> to vector<1x64xf32>
    %c0_151 = arith.constant 0 : index
    %c15_152 = arith.constant 15 : index
    %c0_153 = arith.constant 0 : index
    %679 = vector.load %arg6[%c0_151, %c15_152, %c0_153] : memref<1x16x128xf32, #tpu.memory_space<vmem>>, vector<1x1x64xf32>
    %680 = vector.shape_cast %679 : vector<1x1x64xf32> to vector<1x64xf32>
    %681 = vector.shape_cast %678 : vector<1x64xf32> to vector<1x1x64xf32>
    tpu.vector_store %arg6[%c0_151, %c15_152, %c0_153], %681 {strides = array<i32>} : memref<1x16x128xf32, #tpu.memory_space<vmem>>, vector<1x1x64xf32>,
    %682 = vector.extract_strided_slice %677 {offsets = [0, 64], sizes = [1, 64], strides = [1, 1]} : vector<1x128xf32> to vector<1x64xf32>
    %c0_154 = arith.constant 0 : index
    %c0_155 = arith.constant 0 : index
    %c64_156 = arith.constant 64 : index
    %683 = vector.load %arg6[%c0_154, %c0_155, %c64_156] : memref<1x16x128xf32, #tpu.memory_space<vmem>>, vector<1x1x64xf32>
    %684 = vector.shape_cast %683 : vector<1x1x64xf32> to vector<1x64xf32>
    %685 = vector.shape_cast %682 : vector<1x64xf32> to vector<1x1x64xf32>
    tpu.vector_store %arg6[%c0_154, %c0_155, %c64_156], %685 {strides = array<i32>} : memref<1x16x128xf32, #tpu.memory_space<vmem>>, vector<1x1x64xf32>,
    %c0_157 = arith.constant 0 : index
    %c0_158 = arith.constant 0 : index
    %c0_159 = arith.constant 0 : index
    %686 = vector.load %arg6[%c0_157, %c0_158, %c0_159] : memref<1x16x128xf32, #tpu.memory_space<vmem>>, vector<1x16x128xf32>
    %687 = arith.truncf %686 : vector<1x16x128xf32> to vector<1x16x128xbf16>
    %c0_160 = arith.constant 0 : index
    %c0_161 = arith.constant 0 : index
    %c0_162 = arith.constant 0 : index
    %688 = vector.load %arg5[%c0_160, %c0_161, %c0_162] : memref<1x16x128xbf16, #tpu.memory_space<vmem>>, vector<1x16x128xbf16>
    tpu.vector_store %arg5[%c0_160, %c0_161, %c0_162], %687 {strides = array<i32>} : memref<1x16x128xbf16, #tpu.memory_space<vmem>>, vector<1x16x128xbf16>,
    return
  }
  func.func @transform_0(%arg0: i32) -> (i32, i32, i32) {
    %c0_i32 = arith.constant 0 : i32
    %c0_i32_0 = arith.constant 0 : i32
    %c0_i32_1 = arith.constant 0 : i32
    return %arg0, %c0_i32, %c0_i32_0 : i32, i32, i32
  }
  func.func @transform_1(%arg0: i32) -> (i32, i32) {
    %c0_i32 = arith.constant 0 : i32
    %c0_i32_0 = arith.constant 0 : i32
    %c0_i32_1 = arith.constant 0 : i32
    return %c0_i32, %c0_i32_0 : i32, i32
  }
  func.func @transform_2(%arg0: i32) -> (i32, i32) {
    %c0_i32 = arith.constant 0 : i32
    %c0_i32_0 = arith.constant 0 : i32
    %c0_i32_1 = arith.constant 0 : i32
    return %c0_i32, %c0_i32_0 : i32, i32
  }
  func.func @transform_3(%arg0: i32) -> (i32, i32) {
    %c0_i32 = arith.constant 0 : i32
    %c0_i32_0 = arith.constant 0 : i32
    %c0_i32_1 = arith.constant 0 : i32
    return %c0_i32, %c0_i32_0 : i32, i32
  }
  func.func @transform_4(%arg0: i32) -> (i32, i32, i32) {
    %c0_i32 = arith.constant 0 : i32
    %c0_i32_0 = arith.constant 0 : i32
    %c0_i32_1 = arith.constant 0 : i32
    return %arg0, %c0_i32, %c0_i32_0 : i32, i32, i32
  }
}

module attributes {stable_mosaic.version = 11 : i64} {
  func.func @_bilstm_layer_kernel(%arg0: i32, %arg1: memref<1x16x64xbf16, #tpu.memory_space<vmem>>, %arg2: memref<64x512xbf16, #tpu.memory_space<vmem>>, %arg3: memref<1x512xf32, #tpu.memory_space<vmem>>, %arg4: memref<128x512xbf16, #tpu.memory_space<vmem>>, %arg5: memref<1x16x128xbf16, #tpu.memory_space<vmem>>, %arg6: memref<1x16x128xf32, #tpu.memory_space<vmem>>) attributes {dimension_semantics = [#tpu.dimension_semantics<parallel>], iteration_bounds = array<i64: 2>, scalar_prefetch = 0 : i64, scratch_operands = 1 : i64, tpu.core_type = #tpu.core_type<tc>, window_params = [{transform_indices = @transform_0, window_bounds = array<i64: 1, 16, 64>}, {pipeline_mode = #tpu.pipeline_mode<synchronous>, transform_indices = @transform_1, window_bounds = array<i64: 64, 512>}, {pipeline_mode = #tpu.pipeline_mode<synchronous>, transform_indices = @transform_2, window_bounds = array<i64: 1, 512>}, {pipeline_mode = #tpu.pipeline_mode<synchronous>, transform_indices = @transform_3, window_bounds = array<i64: 128, 512>}, {transform_indices = @transform_4, window_bounds = array<i64: 1, 16, 128>}]} {
    %c0 = arith.constant 0 : index
    %c0_0 = arith.constant 0 : index
    %c0_1 = arith.constant 0 : index
    %0 = vector.load %arg1[%c0, %c0_0, %c0_1] : memref<1x16x64xbf16, #tpu.memory_space<vmem>>, vector<1x16x64xbf16>
    %1 = vector.shape_cast %0 : vector<1x16x64xbf16> to vector<16x64xbf16>
    %c0_2 = arith.constant 0 : index
    %c0_3 = arith.constant 0 : index
    %2 = vector.load %arg2[%c0_2, %c0_3] : memref<64x512xbf16, #tpu.memory_space<vmem>>, vector<64x512xbf16>
    %cst = arith.constant dense<0.000000e+00> : vector<16x512xf32>
    %3 = tpu.matmul %1, %2, %cst {dimension_numbers = #tpu.dot_dimension_numbers<[1], [0], [0], [1], [0, 0, 1, 1], [], []>} : vector<16x64xbf16>, vector<64x512xbf16>, vector<16x512xf32> -> vector<16x512xf32>
    %c0_4 = arith.constant 0 : index
    %c0_5 = arith.constant 0 : index
    %4 = vector.load %arg3[%c0_4, %c0_5] : memref<1x512xf32, #tpu.memory_space<vmem>>, vector<1x512xf32>
    %5 = vector.broadcast %4 : vector<1x512xf32> to vector<16x512xf32>
    %6 = arith.addf %3, %5 : vector<16x512xf32>
    %7 = vector.shape_cast %6 : vector<16x512xf32> to vector<1x16x512xf32>
    %8 = tpu.iota {dimensions = array<i32: 1>} : vector<1x512xi32>
    %c128_i32 = arith.constant 128 : i32
    %c0_i32 = arith.constant 0 : i32
    %9 = arith.cmpi eq, %c128_i32, %c0_i32 : i32
    %c1_i32 = arith.constant 1 : i32
    %10 = arith.select %9, %c1_i32, %c128_i32 : i32
    %11 = vector.broadcast %10 : i32 to vector<1x512xi32>
    %12 = arith.remsi %8, %11 : vector<1x512xi32>
    %c0_i32_6 = arith.constant 0 : i32
    %13 = vector.broadcast %c0_i32_6 : i32 to vector<1x512xi32>
    %14 = arith.cmpi ne, %12, %13 : vector<1x512xi32>
    %c0_i32_7 = arith.constant 0 : i32
    %15 = vector.broadcast %c0_i32_7 : i32 to vector<1x512xi32>
    %16 = arith.cmpi slt, %12, %15 : vector<1x512xi32>
    %c0_i32_8 = arith.constant 0 : i32
    %17 = arith.cmpi slt, %10, %c0_i32_8 : i32
    %18 = vector.broadcast %17 : i1 to vector<1x512xi1>
    %19 = vector.broadcast %18 : vector<1x512xi1> to vector<1x512xi1>
    %20 = arith.xori %16, %19 : vector<1x512xi1>
    %21 = arith.andi %20, %14 : vector<1x512xi1>
    %22 = vector.broadcast %10 : i32 to vector<1x512xi32>
    %23 = arith.addi %12, %22 : vector<1x512xi32>
    %24 = arith.select %21, %23, %12 : vector<1x512xi1>, vector<1x512xi32>
    %c64_i32 = arith.constant 64 : i32
    %25 = vector.broadcast %c64_i32 : i32 to vector<1x512xi32>
    %26 = arith.cmpi slt, %24, %25 : vector<1x512xi32>
    %c0_9 = arith.constant 0 : index
    %c0_10 = arith.constant 0 : index
    %27 = vector.load %arg4[%c0_9, %c0_10] : memref<128x512xbf16, #tpu.memory_space<vmem>>, vector<128x512xbf16>
    %cst_11 = arith.constant 0.000000e+00 : f32
    %28 = vector.broadcast %cst_11 : f32 to vector<1x128xf32>
    %cst_12 = arith.constant 0.000000e+00 : f32
    %29 = vector.broadcast %cst_12 : f32 to vector<1x128xf32>
    %30 = vector.extract_strided_slice %7 {offsets = [0, 0, 0], sizes = [1, 1, 512], strides = [1, 1, 1]} : vector<1x16x512xf32> to vector<1x1x512xf32>
    %31 = vector.shape_cast %30 : vector<1x1x512xf32> to vector<1x512xf32>
    %32 = vector.extract_strided_slice %7 {offsets = [0, 15, 0], sizes = [1, 1, 512], strides = [1, 1, 1]} : vector<1x16x512xf32> to vector<1x1x512xf32>
    %33 = vector.shape_cast %32 : vector<1x1x512xf32> to vector<1x512xf32>
    %34 = arith.select %26, %31, %33 : vector<1x512xi1>, vector<1x512xf32>
    %35 = arith.truncf %28 : vector<1x128xf32> to vector<1x128xbf16>
    %cst_13 = arith.constant dense<0.000000e+00> : vector<1x512xf32>
    %36 = tpu.matmul %35, %27, %cst_13 {dimension_numbers = #tpu.dot_dimension_numbers<[1], [0], [0], [1], [0, 0, 1, 1], [], []>} : vector<1x128xbf16>, vector<128x512xbf16>, vector<1x512xf32> -> vector<1x512xf32>
    %37 = arith.addf %34, %36 : vector<1x512xf32>
    %38 = vector.extract_strided_slice %37 {offsets = [0, 0], sizes = [1, 128], strides = [1, 1]} : vector<1x512xf32> to vector<1x128xf32>
    %39 = arith.negf %38 : vector<1x128xf32>
    %40 = math.exp %39 : vector<1x128xf32>
    %cst_14 = arith.constant 1.000000e+00 : f32
    %41 = vector.broadcast %cst_14 : f32 to vector<1x128xf32>
    %42 = arith.addf %41, %40 : vector<1x128xf32>
    %43 = arith.divf %41, %42 : vector<1x128xf32>
    %44 = vector.extract_strided_slice %37 {offsets = [0, 128], sizes = [1, 128], strides = [1, 1]} : vector<1x512xf32> to vector<1x128xf32>
    %45 = arith.negf %44 : vector<1x128xf32>
    %46 = math.exp %45 : vector<1x128xf32>
    %cst_15 = arith.constant 1.000000e+00 : f32
    %47 = vector.broadcast %cst_15 : f32 to vector<1x128xf32>
    %48 = arith.addf %47, %46 : vector<1x128xf32>
    %49 = arith.divf %47, %48 : vector<1x128xf32>
    %50 = vector.extract_strided_slice %37 {offsets = [0, 256], sizes = [1, 128], strides = [1, 1]} : vector<1x512xf32> to vector<1x128xf32>
    %51 = math.tanh %50 : vector<1x128xf32>
    %52 = vector.extract_strided_slice %37 {offsets = [0, 384], sizes = [1, 128], strides = [1, 1]} : vector<1x512xf32> to vector<1x128xf32>
    %53 = arith.negf %52 : vector<1x128xf32>
    %54 = math.exp %53 : vector<1x128xf32>
    %cst_16 = arith.constant 1.000000e+00 : f32
    %55 = vector.broadcast %cst_16 : f32 to vector<1x128xf32>
    %56 = arith.addf %55, %54 : vector<1x128xf32>
    %57 = arith.divf %55, %56 : vector<1x128xf32>
    %58 = arith.mulf %49, %29 : vector<1x128xf32>
    %59 = arith.mulf %43, %51 : vector<1x128xf32>
    %60 = arith.addf %58, %59 : vector<1x128xf32>
    %61 = math.tanh %60 : vector<1x128xf32>
    %62 = arith.mulf %57, %61 : vector<1x128xf32>
    %63 = vector.extract_strided_slice %62 {offsets = [0, 0], sizes = [1, 64], strides = [1, 1]} : vector<1x128xf32> to vector<1x64xf32>
    %c0_17 = arith.constant 0 : index
    %c0_18 = arith.constant 0 : index
    %c0_19 = arith.constant 0 : index
    %64 = vector.load %arg6[%c0_17, %c0_18, %c0_19] : memref<1x16x128xf32, #tpu.memory_space<vmem>>, vector<1x1x64xf32>
    %65 = vector.shape_cast %64 : vector<1x1x64xf32> to vector<1x64xf32>
    %66 = vector.shape_cast %63 : vector<1x64xf32> to vector<1x1x64xf32>
    tpu.vector_store %arg6[%c0_17, %c0_18, %c0_19], %66 {strides = array<i32>} : memref<1x16x128xf32, #tpu.memory_space<vmem>>, vector<1x1x64xf32>,
    %67 = vector.extract_strided_slice %62 {offsets = [0, 64], sizes = [1, 64], strides = [1, 1]} : vector<1x128xf32> to vector<1x64xf32>
    %c0_20 = arith.constant 0 : index
    %c15 = arith.constant 15 : index
    %c64 = arith.constant 64 : index
    %68 = vector.load %arg6[%c0_20, %c15, %c64] : memref<1x16x128xf32, #tpu.memory_space<vmem>>, vector<1x1x64xf32>
    %69 = vector.shape_cast %68 : vector<1x1x64xf32> to vector<1x64xf32>
    %70 = vector.shape_cast %67 : vector<1x64xf32> to vector<1x1x64xf32>
    tpu.vector_store %arg6[%c0_20, %c15, %c64], %70 {strides = array<i32>} : memref<1x16x128xf32, #tpu.memory_space<vmem>>, vector<1x1x64xf32>,
    %71 = vector.extract_strided_slice %7 {offsets = [0, 1, 0], sizes = [1, 1, 512], strides = [1, 1, 1]} : vector<1x16x512xf32> to vector<1x1x512xf32>
    %72 = vector.shape_cast %71 : vector<1x1x512xf32> to vector<1x512xf32>
    %73 = vector.extract_strided_slice %7 {offsets = [0, 14, 0], sizes = [1, 1, 512], strides = [1, 1, 1]} : vector<1x16x512xf32> to vector<1x1x512xf32>
    %74 = vector.shape_cast %73 : vector<1x1x512xf32> to vector<1x512xf32>
    %75 = arith.select %26, %72, %74 : vector<1x512xi1>, vector<1x512xf32>
    %76 = arith.truncf %62 : vector<1x128xf32> to vector<1x128xbf16>
    %cst_21 = arith.constant dense<0.000000e+00> : vector<1x512xf32>
    %77 = tpu.matmul %76, %27, %cst_21 {dimension_numbers = #tpu.dot_dimension_numbers<[1], [0], [0], [1], [0, 0, 1, 1], [], []>} : vector<1x128xbf16>, vector<128x512xbf16>, vector<1x512xf32> -> vector<1x512xf32>
    %78 = arith.addf %75, %77 : vector<1x512xf32>
    %79 = vector.extract_strided_slice %78 {offsets = [0, 0], sizes = [1, 128], strides = [1, 1]} : vector<1x512xf32> to vector<1x128xf32>
    %80 = arith.negf %79 : vector<1x128xf32>
    %81 = math.exp %80 : vector<1x128xf32>
    %cst_22 = arith.constant 1.000000e+00 : f32
    %82 = vector.broadcast %cst_22 : f32 to vector<1x128xf32>
    %83 = arith.addf %82, %81 : vector<1x128xf32>
    %84 = arith.divf %82, %83 : vector<1x128xf32>
    %85 = vector.extract_strided_slice %78 {offsets = [0, 128], sizes = [1, 128], strides = [1, 1]} : vector<1x512xf32> to vector<1x128xf32>
    %86 = arith.negf %85 : vector<1x128xf32>
    %87 = math.exp %86 : vector<1x128xf32>
    %cst_23 = arith.constant 1.000000e+00 : f32
    %88 = vector.broadcast %cst_23 : f32 to vector<1x128xf32>
    %89 = arith.addf %88, %87 : vector<1x128xf32>
    %90 = arith.divf %88, %89 : vector<1x128xf32>
    %91 = vector.extract_strided_slice %78 {offsets = [0, 256], sizes = [1, 128], strides = [1, 1]} : vector<1x512xf32> to vector<1x128xf32>
    %92 = math.tanh %91 : vector<1x128xf32>
    %93 = vector.extract_strided_slice %78 {offsets = [0, 384], sizes = [1, 128], strides = [1, 1]} : vector<1x512xf32> to vector<1x128xf32>
    %94 = arith.negf %93 : vector<1x128xf32>
    %95 = math.exp %94 : vector<1x128xf32>
    %cst_24 = arith.constant 1.000000e+00 : f32
    %96 = vector.broadcast %cst_24 : f32 to vector<1x128xf32>
    %97 = arith.addf %96, %95 : vector<1x128xf32>
    %98 = arith.divf %96, %97 : vector<1x128xf32>
    %99 = arith.mulf %90, %60 : vector<1x128xf32>
    %100 = arith.mulf %84, %92 : vector<1x128xf32>
    %101 = arith.addf %99, %100 : vector<1x128xf32>
    %102 = math.tanh %101 : vector<1x128xf32>
    %103 = arith.mulf %98, %102 : vector<1x128xf32>
    %104 = vector.extract_strided_slice %103 {offsets = [0, 0], sizes = [1, 64], strides = [1, 1]} : vector<1x128xf32> to vector<1x64xf32>
    %c0_25 = arith.constant 0 : index
    %c1 = arith.constant 1 : index
    %c0_26 = arith.constant 0 : index
    %105 = vector.load %arg6[%c0_25, %c1, %c0_26] : memref<1x16x128xf32, #tpu.memory_space<vmem>>, vector<1x1x64xf32>
    %106 = vector.shape_cast %105 : vector<1x1x64xf32> to vector<1x64xf32>
    %107 = vector.shape_cast %104 : vector<1x64xf32> to vector<1x1x64xf32>
    tpu.vector_store %arg6[%c0_25, %c1, %c0_26], %107 {strides = array<i32>} : memref<1x16x128xf32, #tpu.memory_space<vmem>>, vector<1x1x64xf32>,
    %108 = vector.extract_strided_slice %103 {offsets = [0, 64], sizes = [1, 64], strides = [1, 1]} : vector<1x128xf32> to vector<1x64xf32>
    %c0_27 = arith.constant 0 : index
    %c14 = arith.constant 14 : index
    %c64_28 = arith.constant 64 : index
    %109 = vector.load %arg6[%c0_27, %c14, %c64_28] : memref<1x16x128xf32, #tpu.memory_space<vmem>>, vector<1x1x64xf32>
    %110 = vector.shape_cast %109 : vector<1x1x64xf32> to vector<1x64xf32>
    %111 = vector.shape_cast %108 : vector<1x64xf32> to vector<1x1x64xf32>
    tpu.vector_store %arg6[%c0_27, %c14, %c64_28], %111 {strides = array<i32>} : memref<1x16x128xf32, #tpu.memory_space<vmem>>, vector<1x1x64xf32>,
    %112 = vector.extract_strided_slice %7 {offsets = [0, 2, 0], sizes = [1, 1, 512], strides = [1, 1, 1]} : vector<1x16x512xf32> to vector<1x1x512xf32>
    %113 = vector.shape_cast %112 : vector<1x1x512xf32> to vector<1x512xf32>
    %114 = vector.extract_strided_slice %7 {offsets = [0, 13, 0], sizes = [1, 1, 512], strides = [1, 1, 1]} : vector<1x16x512xf32> to vector<1x1x512xf32>
    %115 = vector.shape_cast %114 : vector<1x1x512xf32> to vector<1x512xf32>
    %116 = arith.select %26, %113, %115 : vector<1x512xi1>, vector<1x512xf32>
    %117 = arith.truncf %103 : vector<1x128xf32> to vector<1x128xbf16>
    %cst_29 = arith.constant dense<0.000000e+00> : vector<1x512xf32>
    %118 = tpu.matmul %117, %27, %cst_29 {dimension_numbers = #tpu.dot_dimension_numbers<[1], [0], [0], [1], [0, 0, 1, 1], [], []>} : vector<1x128xbf16>, vector<128x512xbf16>, vector<1x512xf32> -> vector<1x512xf32>
    %119 = arith.addf %116, %118 : vector<1x512xf32>
    %120 = vector.extract_strided_slice %119 {offsets = [0, 0], sizes = [1, 128], strides = [1, 1]} : vector<1x512xf32> to vector<1x128xf32>
    %121 = arith.negf %120 : vector<1x128xf32>
    %122 = math.exp %121 : vector<1x128xf32>
    %cst_30 = arith.constant 1.000000e+00 : f32
    %123 = vector.broadcast %cst_30 : f32 to vector<1x128xf32>
    %124 = arith.addf %123, %122 : vector<1x128xf32>
    %125 = arith.divf %123, %124 : vector<1x128xf32>
    %126 = vector.extract_strided_slice %119 {offsets = [0, 128], sizes = [1, 128], strides = [1, 1]} : vector<1x512xf32> to vector<1x128xf32>
    %127 = arith.negf %126 : vector<1x128xf32>
    %128 = math.exp %127 : vector<1x128xf32>
    %cst_31 = arith.constant 1.000000e+00 : f32
    %129 = vector.broadcast %cst_31 : f32 to vector<1x128xf32>
    %130 = arith.addf %129, %128 : vector<1x128xf32>
    %131 = arith.divf %129, %130 : vector<1x128xf32>
    %132 = vector.extract_strided_slice %119 {offsets = [0, 256], sizes = [1, 128], strides = [1, 1]} : vector<1x512xf32> to vector<1x128xf32>
    %133 = math.tanh %132 : vector<1x128xf32>
    %134 = vector.extract_strided_slice %119 {offsets = [0, 384], sizes = [1, 128], strides = [1, 1]} : vector<1x512xf32> to vector<1x128xf32>
    %135 = arith.negf %134 : vector<1x128xf32>
    %136 = math.exp %135 : vector<1x128xf32>
    %cst_32 = arith.constant 1.000000e+00 : f32
    %137 = vector.broadcast %cst_32 : f32 to vector<1x128xf32>
    %138 = arith.addf %137, %136 : vector<1x128xf32>
    %139 = arith.divf %137, %138 : vector<1x128xf32>
    %140 = arith.mulf %131, %101 : vector<1x128xf32>
    %141 = arith.mulf %125, %133 : vector<1x128xf32>
    %142 = arith.addf %140, %141 : vector<1x128xf32>
    %143 = math.tanh %142 : vector<1x128xf32>
    %144 = arith.mulf %139, %143 : vector<1x128xf32>
    %145 = vector.extract_strided_slice %144 {offsets = [0, 0], sizes = [1, 64], strides = [1, 1]} : vector<1x128xf32> to vector<1x64xf32>
    %c0_33 = arith.constant 0 : index
    %c2 = arith.constant 2 : index
    %c0_34 = arith.constant 0 : index
    %146 = vector.load %arg6[%c0_33, %c2, %c0_34] : memref<1x16x128xf32, #tpu.memory_space<vmem>>, vector<1x1x64xf32>
    %147 = vector.shape_cast %146 : vector<1x1x64xf32> to vector<1x64xf32>
    %148 = vector.shape_cast %145 : vector<1x64xf32> to vector<1x1x64xf32>
    tpu.vector_store %arg6[%c0_33, %c2, %c0_34], %148 {strides = array<i32>} : memref<1x16x128xf32, #tpu.memory_space<vmem>>, vector<1x1x64xf32>,
    %149 = vector.extract_strided_slice %144 {offsets = [0, 64], sizes = [1, 64], strides = [1, 1]} : vector<1x128xf32> to vector<1x64xf32>
    %c0_35 = arith.constant 0 : index
    %c13 = arith.constant 13 : index
    %c64_36 = arith.constant 64 : index
    %150 = vector.load %arg6[%c0_35, %c13, %c64_36] : memref<1x16x128xf32, #tpu.memory_space<vmem>>, vector<1x1x64xf32>
    %151 = vector.shape_cast %150 : vector<1x1x64xf32> to vector<1x64xf32>
    %152 = vector.shape_cast %149 : vector<1x64xf32> to vector<1x1x64xf32>
    tpu.vector_store %arg6[%c0_35, %c13, %c64_36], %152 {strides = array<i32>} : memref<1x16x128xf32, #tpu.memory_space<vmem>>, vector<1x1x64xf32>,
    %153 = vector.extract_strided_slice %7 {offsets = [0, 3, 0], sizes = [1, 1, 512], strides = [1, 1, 1]} : vector<1x16x512xf32> to vector<1x1x512xf32>
    %154 = vector.shape_cast %153 : vector<1x1x512xf32> to vector<1x512xf32>
    %155 = vector.extract_strided_slice %7 {offsets = [0, 12, 0], sizes = [1, 1, 512], strides = [1, 1, 1]} : vector<1x16x512xf32> to vector<1x1x512xf32>
    %156 = vector.shape_cast %155 : vector<1x1x512xf32> to vector<1x512xf32>
    %157 = arith.select %26, %154, %156 : vector<1x512xi1>, vector<1x512xf32>
    %158 = arith.truncf %144 : vector<1x128xf32> to vector<1x128xbf16>
    %cst_37 = arith.constant dense<0.000000e+00> : vector<1x512xf32>
    %159 = tpu.matmul %158, %27, %cst_37 {dimension_numbers = #tpu.dot_dimension_numbers<[1], [0], [0], [1], [0, 0, 1, 1], [], []>} : vector<1x128xbf16>, vector<128x512xbf16>, vector<1x512xf32> -> vector<1x512xf32>
    %160 = arith.addf %157, %159 : vector<1x512xf32>
    %161 = vector.extract_strided_slice %160 {offsets = [0, 0], sizes = [1, 128], strides = [1, 1]} : vector<1x512xf32> to vector<1x128xf32>
    %162 = arith.negf %161 : vector<1x128xf32>
    %163 = math.exp %162 : vector<1x128xf32>
    %cst_38 = arith.constant 1.000000e+00 : f32
    %164 = vector.broadcast %cst_38 : f32 to vector<1x128xf32>
    %165 = arith.addf %164, %163 : vector<1x128xf32>
    %166 = arith.divf %164, %165 : vector<1x128xf32>
    %167 = vector.extract_strided_slice %160 {offsets = [0, 128], sizes = [1, 128], strides = [1, 1]} : vector<1x512xf32> to vector<1x128xf32>
    %168 = arith.negf %167 : vector<1x128xf32>
    %169 = math.exp %168 : vector<1x128xf32>
    %cst_39 = arith.constant 1.000000e+00 : f32
    %170 = vector.broadcast %cst_39 : f32 to vector<1x128xf32>
    %171 = arith.addf %170, %169 : vector<1x128xf32>
    %172 = arith.divf %170, %171 : vector<1x128xf32>
    %173 = vector.extract_strided_slice %160 {offsets = [0, 256], sizes = [1, 128], strides = [1, 1]} : vector<1x512xf32> to vector<1x128xf32>
    %174 = math.tanh %173 : vector<1x128xf32>
    %175 = vector.extract_strided_slice %160 {offsets = [0, 384], sizes = [1, 128], strides = [1, 1]} : vector<1x512xf32> to vector<1x128xf32>
    %176 = arith.negf %175 : vector<1x128xf32>
    %177 = math.exp %176 : vector<1x128xf32>
    %cst_40 = arith.constant 1.000000e+00 : f32
    %178 = vector.broadcast %cst_40 : f32 to vector<1x128xf32>
    %179 = arith.addf %178, %177 : vector<1x128xf32>
    %180 = arith.divf %178, %179 : vector<1x128xf32>
    %181 = arith.mulf %172, %142 : vector<1x128xf32>
    %182 = arith.mulf %166, %174 : vector<1x128xf32>
    %183 = arith.addf %181, %182 : vector<1x128xf32>
    %184 = math.tanh %183 : vector<1x128xf32>
    %185 = arith.mulf %180, %184 : vector<1x128xf32>
    %186 = vector.extract_strided_slice %185 {offsets = [0, 0], sizes = [1, 64], strides = [1, 1]} : vector<1x128xf32> to vector<1x64xf32>
    %c0_41 = arith.constant 0 : index
    %c3 = arith.constant 3 : index
    %c0_42 = arith.constant 0 : index
    %187 = vector.load %arg6[%c0_41, %c3, %c0_42] : memref<1x16x128xf32, #tpu.memory_space<vmem>>, vector<1x1x64xf32>
    %188 = vector.shape_cast %187 : vector<1x1x64xf32> to vector<1x64xf32>
    %189 = vector.shape_cast %186 : vector<1x64xf32> to vector<1x1x64xf32>
    tpu.vector_store %arg6[%c0_41, %c3, %c0_42], %189 {strides = array<i32>} : memref<1x16x128xf32, #tpu.memory_space<vmem>>, vector<1x1x64xf32>,
    %190 = vector.extract_strided_slice %185 {offsets = [0, 64], sizes = [1, 64], strides = [1, 1]} : vector<1x128xf32> to vector<1x64xf32>
    %c0_43 = arith.constant 0 : index
    %c12 = arith.constant 12 : index
    %c64_44 = arith.constant 64 : index
    %191 = vector.load %arg6[%c0_43, %c12, %c64_44] : memref<1x16x128xf32, #tpu.memory_space<vmem>>, vector<1x1x64xf32>
    %192 = vector.shape_cast %191 : vector<1x1x64xf32> to vector<1x64xf32>
    %193 = vector.shape_cast %190 : vector<1x64xf32> to vector<1x1x64xf32>
    tpu.vector_store %arg6[%c0_43, %c12, %c64_44], %193 {strides = array<i32>} : memref<1x16x128xf32, #tpu.memory_space<vmem>>, vector<1x1x64xf32>,
    %194 = vector.extract_strided_slice %7 {offsets = [0, 4, 0], sizes = [1, 1, 512], strides = [1, 1, 1]} : vector<1x16x512xf32> to vector<1x1x512xf32>
    %195 = vector.shape_cast %194 : vector<1x1x512xf32> to vector<1x512xf32>
    %196 = vector.extract_strided_slice %7 {offsets = [0, 11, 0], sizes = [1, 1, 512], strides = [1, 1, 1]} : vector<1x16x512xf32> to vector<1x1x512xf32>
    %197 = vector.shape_cast %196 : vector<1x1x512xf32> to vector<1x512xf32>
    %198 = arith.select %26, %195, %197 : vector<1x512xi1>, vector<1x512xf32>
    %199 = arith.truncf %185 : vector<1x128xf32> to vector<1x128xbf16>
    %cst_45 = arith.constant dense<0.000000e+00> : vector<1x512xf32>
    %200 = tpu.matmul %199, %27, %cst_45 {dimension_numbers = #tpu.dot_dimension_numbers<[1], [0], [0], [1], [0, 0, 1, 1], [], []>} : vector<1x128xbf16>, vector<128x512xbf16>, vector<1x512xf32> -> vector<1x512xf32>
    %201 = arith.addf %198, %200 : vector<1x512xf32>
    %202 = vector.extract_strided_slice %201 {offsets = [0, 0], sizes = [1, 128], strides = [1, 1]} : vector<1x512xf32> to vector<1x128xf32>
    %203 = arith.negf %202 : vector<1x128xf32>
    %204 = math.exp %203 : vector<1x128xf32>
    %cst_46 = arith.constant 1.000000e+00 : f32
    %205 = vector.broadcast %cst_46 : f32 to vector<1x128xf32>
    %206 = arith.addf %205, %204 : vector<1x128xf32>
    %207 = arith.divf %205, %206 : vector<1x128xf32>
    %208 = vector.extract_strided_slice %201 {offsets = [0, 128], sizes = [1, 128], strides = [1, 1]} : vector<1x512xf32> to vector<1x128xf32>
    %209 = arith.negf %208 : vector<1x128xf32>
    %210 = math.exp %209 : vector<1x128xf32>
    %cst_47 = arith.constant 1.000000e+00 : f32
    %211 = vector.broadcast %cst_47 : f32 to vector<1x128xf32>
    %212 = arith.addf %211, %210 : vector<1x128xf32>
    %213 = arith.divf %211, %212 : vector<1x128xf32>
    %214 = vector.extract_strided_slice %201 {offsets = [0, 256], sizes = [1, 128], strides = [1, 1]} : vector<1x512xf32> to vector<1x128xf32>
    %215 = math.tanh %214 : vector<1x128xf32>
    %216 = vector.extract_strided_slice %201 {offsets = [0, 384], sizes = [1, 128], strides = [1, 1]} : vector<1x512xf32> to vector<1x128xf32>
    %217 = arith.negf %216 : vector<1x128xf32>
    %218 = math.exp %217 : vector<1x128xf32>
    %cst_48 = arith.constant 1.000000e+00 : f32
    %219 = vector.broadcast %cst_48 : f32 to vector<1x128xf32>
    %220 = arith.addf %219, %218 : vector<1x128xf32>
    %221 = arith.divf %219, %220 : vector<1x128xf32>
    %222 = arith.mulf %213, %183 : vector<1x128xf32>
    %223 = arith.mulf %207, %215 : vector<1x128xf32>
    %224 = arith.addf %222, %223 : vector<1x128xf32>
    %225 = math.tanh %224 : vector<1x128xf32>
    %226 = arith.mulf %221, %225 : vector<1x128xf32>
    %227 = vector.extract_strided_slice %226 {offsets = [0, 0], sizes = [1, 64], strides = [1, 1]} : vector<1x128xf32> to vector<1x64xf32>
    %c0_49 = arith.constant 0 : index
    %c4 = arith.constant 4 : index
    %c0_50 = arith.constant 0 : index
    %228 = vector.load %arg6[%c0_49, %c4, %c0_50] : memref<1x16x128xf32, #tpu.memory_space<vmem>>, vector<1x1x64xf32>
    %229 = vector.shape_cast %228 : vector<1x1x64xf32> to vector<1x64xf32>
    %230 = vector.shape_cast %227 : vector<1x64xf32> to vector<1x1x64xf32>
    tpu.vector_store %arg6[%c0_49, %c4, %c0_50], %230 {strides = array<i32>} : memref<1x16x128xf32, #tpu.memory_space<vmem>>, vector<1x1x64xf32>,
    %231 = vector.extract_strided_slice %226 {offsets = [0, 64], sizes = [1, 64], strides = [1, 1]} : vector<1x128xf32> to vector<1x64xf32>
    %c0_51 = arith.constant 0 : index
    %c11 = arith.constant 11 : index
    %c64_52 = arith.constant 64 : index
    %232 = vector.load %arg6[%c0_51, %c11, %c64_52] : memref<1x16x128xf32, #tpu.memory_space<vmem>>, vector<1x1x64xf32>
    %233 = vector.shape_cast %232 : vector<1x1x64xf32> to vector<1x64xf32>
    %234 = vector.shape_cast %231 : vector<1x64xf32> to vector<1x1x64xf32>
    tpu.vector_store %arg6[%c0_51, %c11, %c64_52], %234 {strides = array<i32>} : memref<1x16x128xf32, #tpu.memory_space<vmem>>, vector<1x1x64xf32>,
    %235 = vector.extract_strided_slice %7 {offsets = [0, 5, 0], sizes = [1, 1, 512], strides = [1, 1, 1]} : vector<1x16x512xf32> to vector<1x1x512xf32>
    %236 = vector.shape_cast %235 : vector<1x1x512xf32> to vector<1x512xf32>
    %237 = vector.extract_strided_slice %7 {offsets = [0, 10, 0], sizes = [1, 1, 512], strides = [1, 1, 1]} : vector<1x16x512xf32> to vector<1x1x512xf32>
    %238 = vector.shape_cast %237 : vector<1x1x512xf32> to vector<1x512xf32>
    %239 = arith.select %26, %236, %238 : vector<1x512xi1>, vector<1x512xf32>
    %240 = arith.truncf %226 : vector<1x128xf32> to vector<1x128xbf16>
    %cst_53 = arith.constant dense<0.000000e+00> : vector<1x512xf32>
    %241 = tpu.matmul %240, %27, %cst_53 {dimension_numbers = #tpu.dot_dimension_numbers<[1], [0], [0], [1], [0, 0, 1, 1], [], []>} : vector<1x128xbf16>, vector<128x512xbf16>, vector<1x512xf32> -> vector<1x512xf32>
    %242 = arith.addf %239, %241 : vector<1x512xf32>
    %243 = vector.extract_strided_slice %242 {offsets = [0, 0], sizes = [1, 128], strides = [1, 1]} : vector<1x512xf32> to vector<1x128xf32>
    %244 = arith.negf %243 : vector<1x128xf32>
    %245 = math.exp %244 : vector<1x128xf32>
    %cst_54 = arith.constant 1.000000e+00 : f32
    %246 = vector.broadcast %cst_54 : f32 to vector<1x128xf32>
    %247 = arith.addf %246, %245 : vector<1x128xf32>
    %248 = arith.divf %246, %247 : vector<1x128xf32>
    %249 = vector.extract_strided_slice %242 {offsets = [0, 128], sizes = [1, 128], strides = [1, 1]} : vector<1x512xf32> to vector<1x128xf32>
    %250 = arith.negf %249 : vector<1x128xf32>
    %251 = math.exp %250 : vector<1x128xf32>
    %cst_55 = arith.constant 1.000000e+00 : f32
    %252 = vector.broadcast %cst_55 : f32 to vector<1x128xf32>
    %253 = arith.addf %252, %251 : vector<1x128xf32>
    %254 = arith.divf %252, %253 : vector<1x128xf32>
    %255 = vector.extract_strided_slice %242 {offsets = [0, 256], sizes = [1, 128], strides = [1, 1]} : vector<1x512xf32> to vector<1x128xf32>
    %256 = math.tanh %255 : vector<1x128xf32>
    %257 = vector.extract_strided_slice %242 {offsets = [0, 384], sizes = [1, 128], strides = [1, 1]} : vector<1x512xf32> to vector<1x128xf32>
    %258 = arith.negf %257 : vector<1x128xf32>
    %259 = math.exp %258 : vector<1x128xf32>
    %cst_56 = arith.constant 1.000000e+00 : f32
    %260 = vector.broadcast %cst_56 : f32 to vector<1x128xf32>
    %261 = arith.addf %260, %259 : vector<1x128xf32>
    %262 = arith.divf %260, %261 : vector<1x128xf32>
    %263 = arith.mulf %254, %224 : vector<1x128xf32>
    %264 = arith.mulf %248, %256 : vector<1x128xf32>
    %265 = arith.addf %263, %264 : vector<1x128xf32>
    %266 = math.tanh %265 : vector<1x128xf32>
    %267 = arith.mulf %262, %266 : vector<1x128xf32>
    %268 = vector.extract_strided_slice %267 {offsets = [0, 0], sizes = [1, 64], strides = [1, 1]} : vector<1x128xf32> to vector<1x64xf32>
    %c0_57 = arith.constant 0 : index
    %c5 = arith.constant 5 : index
    %c0_58 = arith.constant 0 : index
    %269 = vector.load %arg6[%c0_57, %c5, %c0_58] : memref<1x16x128xf32, #tpu.memory_space<vmem>>, vector<1x1x64xf32>
    %270 = vector.shape_cast %269 : vector<1x1x64xf32> to vector<1x64xf32>
    %271 = vector.shape_cast %268 : vector<1x64xf32> to vector<1x1x64xf32>
    tpu.vector_store %arg6[%c0_57, %c5, %c0_58], %271 {strides = array<i32>} : memref<1x16x128xf32, #tpu.memory_space<vmem>>, vector<1x1x64xf32>,
    %272 = vector.extract_strided_slice %267 {offsets = [0, 64], sizes = [1, 64], strides = [1, 1]} : vector<1x128xf32> to vector<1x64xf32>
    %c0_59 = arith.constant 0 : index
    %c10 = arith.constant 10 : index
    %c64_60 = arith.constant 64 : index
    %273 = vector.load %arg6[%c0_59, %c10, %c64_60] : memref<1x16x128xf32, #tpu.memory_space<vmem>>, vector<1x1x64xf32>
    %274 = vector.shape_cast %273 : vector<1x1x64xf32> to vector<1x64xf32>
    %275 = vector.shape_cast %272 : vector<1x64xf32> to vector<1x1x64xf32>
    tpu.vector_store %arg6[%c0_59, %c10, %c64_60], %275 {strides = array<i32>} : memref<1x16x128xf32, #tpu.memory_space<vmem>>, vector<1x1x64xf32>,
    %276 = vector.extract_strided_slice %7 {offsets = [0, 6, 0], sizes = [1, 1, 512], strides = [1, 1, 1]} : vector<1x16x512xf32> to vector<1x1x512xf32>
    %277 = vector.shape_cast %276 : vector<1x1x512xf32> to vector<1x512xf32>
    %278 = vector.extract_strided_slice %7 {offsets = [0, 9, 0], sizes = [1, 1, 512], strides = [1, 1, 1]} : vector<1x16x512xf32> to vector<1x1x512xf32>
    %279 = vector.shape_cast %278 : vector<1x1x512xf32> to vector<1x512xf32>
    %280 = arith.select %26, %277, %279 : vector<1x512xi1>, vector<1x512xf32>
    %281 = arith.truncf %267 : vector<1x128xf32> to vector<1x128xbf16>
    %cst_61 = arith.constant dense<0.000000e+00> : vector<1x512xf32>
    %282 = tpu.matmul %281, %27, %cst_61 {dimension_numbers = #tpu.dot_dimension_numbers<[1], [0], [0], [1], [0, 0, 1, 1], [], []>} : vector<1x128xbf16>, vector<128x512xbf16>, vector<1x512xf32> -> vector<1x512xf32>
    %283 = arith.addf %280, %282 : vector<1x512xf32>
    %284 = vector.extract_strided_slice %283 {offsets = [0, 0], sizes = [1, 128], strides = [1, 1]} : vector<1x512xf32> to vector<1x128xf32>
    %285 = arith.negf %284 : vector<1x128xf32>
    %286 = math.exp %285 : vector<1x128xf32>
    %cst_62 = arith.constant 1.000000e+00 : f32
    %287 = vector.broadcast %cst_62 : f32 to vector<1x128xf32>
    %288 = arith.addf %287, %286 : vector<1x128xf32>
    %289 = arith.divf %287, %288 : vector<1x128xf32>
    %290 = vector.extract_strided_slice %283 {offsets = [0, 128], sizes = [1, 128], strides = [1, 1]} : vector<1x512xf32> to vector<1x128xf32>
    %291 = arith.negf %290 : vector<1x128xf32>
    %292 = math.exp %291 : vector<1x128xf32>
    %cst_63 = arith.constant 1.000000e+00 : f32
    %293 = vector.broadcast %cst_63 : f32 to vector<1x128xf32>
    %294 = arith.addf %293, %292 : vector<1x128xf32>
    %295 = arith.divf %293, %294 : vector<1x128xf32>
    %296 = vector.extract_strided_slice %283 {offsets = [0, 256], sizes = [1, 128], strides = [1, 1]} : vector<1x512xf32> to vector<1x128xf32>
    %297 = math.tanh %296 : vector<1x128xf32>
    %298 = vector.extract_strided_slice %283 {offsets = [0, 384], sizes = [1, 128], strides = [1, 1]} : vector<1x512xf32> to vector<1x128xf32>
    %299 = arith.negf %298 : vector<1x128xf32>
    %300 = math.exp %299 : vector<1x128xf32>
    %cst_64 = arith.constant 1.000000e+00 : f32
    %301 = vector.broadcast %cst_64 : f32 to vector<1x128xf32>
    %302 = arith.addf %301, %300 : vector<1x128xf32>
    %303 = arith.divf %301, %302 : vector<1x128xf32>
    %304 = arith.mulf %295, %265 : vector<1x128xf32>
    %305 = arith.mulf %289, %297 : vector<1x128xf32>
    %306 = arith.addf %304, %305 : vector<1x128xf32>
    %307 = math.tanh %306 : vector<1x128xf32>
    %308 = arith.mulf %303, %307 : vector<1x128xf32>
    %309 = vector.extract_strided_slice %308 {offsets = [0, 0], sizes = [1, 64], strides = [1, 1]} : vector<1x128xf32> to vector<1x64xf32>
    %c0_65 = arith.constant 0 : index
    %c6 = arith.constant 6 : index
    %c0_66 = arith.constant 0 : index
    %310 = vector.load %arg6[%c0_65, %c6, %c0_66] : memref<1x16x128xf32, #tpu.memory_space<vmem>>, vector<1x1x64xf32>
    %311 = vector.shape_cast %310 : vector<1x1x64xf32> to vector<1x64xf32>
    %312 = vector.shape_cast %309 : vector<1x64xf32> to vector<1x1x64xf32>
    tpu.vector_store %arg6[%c0_65, %c6, %c0_66], %312 {strides = array<i32>} : memref<1x16x128xf32, #tpu.memory_space<vmem>>, vector<1x1x64xf32>,
    %313 = vector.extract_strided_slice %308 {offsets = [0, 64], sizes = [1, 64], strides = [1, 1]} : vector<1x128xf32> to vector<1x64xf32>
    %c0_67 = arith.constant 0 : index
    %c9 = arith.constant 9 : index
    %c64_68 = arith.constant 64 : index
    %314 = vector.load %arg6[%c0_67, %c9, %c64_68] : memref<1x16x128xf32, #tpu.memory_space<vmem>>, vector<1x1x64xf32>
    %315 = vector.shape_cast %314 : vector<1x1x64xf32> to vector<1x64xf32>
    %316 = vector.shape_cast %313 : vector<1x64xf32> to vector<1x1x64xf32>
    tpu.vector_store %arg6[%c0_67, %c9, %c64_68], %316 {strides = array<i32>} : memref<1x16x128xf32, #tpu.memory_space<vmem>>, vector<1x1x64xf32>,
    %317 = vector.extract_strided_slice %7 {offsets = [0, 7, 0], sizes = [1, 1, 512], strides = [1, 1, 1]} : vector<1x16x512xf32> to vector<1x1x512xf32>
    %318 = vector.shape_cast %317 : vector<1x1x512xf32> to vector<1x512xf32>
    %319 = vector.extract_strided_slice %7 {offsets = [0, 8, 0], sizes = [1, 1, 512], strides = [1, 1, 1]} : vector<1x16x512xf32> to vector<1x1x512xf32>
    %320 = vector.shape_cast %319 : vector<1x1x512xf32> to vector<1x512xf32>
    %321 = arith.select %26, %318, %320 : vector<1x512xi1>, vector<1x512xf32>
    %322 = arith.truncf %308 : vector<1x128xf32> to vector<1x128xbf16>
    %cst_69 = arith.constant dense<0.000000e+00> : vector<1x512xf32>
    %323 = tpu.matmul %322, %27, %cst_69 {dimension_numbers = #tpu.dot_dimension_numbers<[1], [0], [0], [1], [0, 0, 1, 1], [], []>} : vector<1x128xbf16>, vector<128x512xbf16>, vector<1x512xf32> -> vector<1x512xf32>
    %324 = arith.addf %321, %323 : vector<1x512xf32>
    %325 = vector.extract_strided_slice %324 {offsets = [0, 0], sizes = [1, 128], strides = [1, 1]} : vector<1x512xf32> to vector<1x128xf32>
    %326 = arith.negf %325 : vector<1x128xf32>
    %327 = math.exp %326 : vector<1x128xf32>
    %cst_70 = arith.constant 1.000000e+00 : f32
    %328 = vector.broadcast %cst_70 : f32 to vector<1x128xf32>
    %329 = arith.addf %328, %327 : vector<1x128xf32>
    %330 = arith.divf %328, %329 : vector<1x128xf32>
    %331 = vector.extract_strided_slice %324 {offsets = [0, 128], sizes = [1, 128], strides = [1, 1]} : vector<1x512xf32> to vector<1x128xf32>
    %332 = arith.negf %331 : vector<1x128xf32>
    %333 = math.exp %332 : vector<1x128xf32>
    %cst_71 = arith.constant 1.000000e+00 : f32
    %334 = vector.broadcast %cst_71 : f32 to vector<1x128xf32>
    %335 = arith.addf %334, %333 : vector<1x128xf32>
    %336 = arith.divf %334, %335 : vector<1x128xf32>
    %337 = vector.extract_strided_slice %324 {offsets = [0, 256], sizes = [1, 128], strides = [1, 1]} : vector<1x512xf32> to vector<1x128xf32>
    %338 = math.tanh %337 : vector<1x128xf32>
    %339 = vector.extract_strided_slice %324 {offsets = [0, 384], sizes = [1, 128], strides = [1, 1]} : vector<1x512xf32> to vector<1x128xf32>
    %340 = arith.negf %339 : vector<1x128xf32>
    %341 = math.exp %340 : vector<1x128xf32>
    %cst_72 = arith.constant 1.000000e+00 : f32
    %342 = vector.broadcast %cst_72 : f32 to vector<1x128xf32>
    %343 = arith.addf %342, %341 : vector<1x128xf32>
    %344 = arith.divf %342, %343 : vector<1x128xf32>
    %345 = arith.mulf %336, %306 : vector<1x128xf32>
    %346 = arith.mulf %330, %338 : vector<1x128xf32>
    %347 = arith.addf %345, %346 : vector<1x128xf32>
    %348 = math.tanh %347 : vector<1x128xf32>
    %349 = arith.mulf %344, %348 : vector<1x128xf32>
    %350 = vector.extract_strided_slice %349 {offsets = [0, 0], sizes = [1, 64], strides = [1, 1]} : vector<1x128xf32> to vector<1x64xf32>
    %c0_73 = arith.constant 0 : index
    %c7 = arith.constant 7 : index
    %c0_74 = arith.constant 0 : index
    %351 = vector.load %arg6[%c0_73, %c7, %c0_74] : memref<1x16x128xf32, #tpu.memory_space<vmem>>, vector<1x1x64xf32>
    %352 = vector.shape_cast %351 : vector<1x1x64xf32> to vector<1x64xf32>
    %353 = vector.shape_cast %350 : vector<1x64xf32> to vector<1x1x64xf32>
    tpu.vector_store %arg6[%c0_73, %c7, %c0_74], %353 {strides = array<i32>} : memref<1x16x128xf32, #tpu.memory_space<vmem>>, vector<1x1x64xf32>,
    %354 = vector.extract_strided_slice %349 {offsets = [0, 64], sizes = [1, 64], strides = [1, 1]} : vector<1x128xf32> to vector<1x64xf32>
    %c0_75 = arith.constant 0 : index
    %c8 = arith.constant 8 : index
    %c64_76 = arith.constant 64 : index
    %355 = vector.load %arg6[%c0_75, %c8, %c64_76] : memref<1x16x128xf32, #tpu.memory_space<vmem>>, vector<1x1x64xf32>
    %356 = vector.shape_cast %355 : vector<1x1x64xf32> to vector<1x64xf32>
    %357 = vector.shape_cast %354 : vector<1x64xf32> to vector<1x1x64xf32>
    tpu.vector_store %arg6[%c0_75, %c8, %c64_76], %357 {strides = array<i32>} : memref<1x16x128xf32, #tpu.memory_space<vmem>>, vector<1x1x64xf32>,
    %358 = vector.extract_strided_slice %7 {offsets = [0, 8, 0], sizes = [1, 1, 512], strides = [1, 1, 1]} : vector<1x16x512xf32> to vector<1x1x512xf32>
    %359 = vector.shape_cast %358 : vector<1x1x512xf32> to vector<1x512xf32>
    %360 = vector.extract_strided_slice %7 {offsets = [0, 7, 0], sizes = [1, 1, 512], strides = [1, 1, 1]} : vector<1x16x512xf32> to vector<1x1x512xf32>
    %361 = vector.shape_cast %360 : vector<1x1x512xf32> to vector<1x512xf32>
    %362 = arith.select %26, %359, %361 : vector<1x512xi1>, vector<1x512xf32>
    %363 = arith.truncf %349 : vector<1x128xf32> to vector<1x128xbf16>
    %cst_77 = arith.constant dense<0.000000e+00> : vector<1x512xf32>
    %364 = tpu.matmul %363, %27, %cst_77 {dimension_numbers = #tpu.dot_dimension_numbers<[1], [0], [0], [1], [0, 0, 1, 1], [], []>} : vector<1x128xbf16>, vector<128x512xbf16>, vector<1x512xf32> -> vector<1x512xf32>
    %365 = arith.addf %362, %364 : vector<1x512xf32>
    %366 = vector.extract_strided_slice %365 {offsets = [0, 0], sizes = [1, 128], strides = [1, 1]} : vector<1x512xf32> to vector<1x128xf32>
    %367 = arith.negf %366 : vector<1x128xf32>
    %368 = math.exp %367 : vector<1x128xf32>
    %cst_78 = arith.constant 1.000000e+00 : f32
    %369 = vector.broadcast %cst_78 : f32 to vector<1x128xf32>
    %370 = arith.addf %369, %368 : vector<1x128xf32>
    %371 = arith.divf %369, %370 : vector<1x128xf32>
    %372 = vector.extract_strided_slice %365 {offsets = [0, 128], sizes = [1, 128], strides = [1, 1]} : vector<1x512xf32> to vector<1x128xf32>
    %373 = arith.negf %372 : vector<1x128xf32>
    %374 = math.exp %373 : vector<1x128xf32>
    %cst_79 = arith.constant 1.000000e+00 : f32
    %375 = vector.broadcast %cst_79 : f32 to vector<1x128xf32>
    %376 = arith.addf %375, %374 : vector<1x128xf32>
    %377 = arith.divf %375, %376 : vector<1x128xf32>
    %378 = vector.extract_strided_slice %365 {offsets = [0, 256], sizes = [1, 128], strides = [1, 1]} : vector<1x512xf32> to vector<1x128xf32>
    %379 = math.tanh %378 : vector<1x128xf32>
    %380 = vector.extract_strided_slice %365 {offsets = [0, 384], sizes = [1, 128], strides = [1, 1]} : vector<1x512xf32> to vector<1x128xf32>
    %381 = arith.negf %380 : vector<1x128xf32>
    %382 = math.exp %381 : vector<1x128xf32>
    %cst_80 = arith.constant 1.000000e+00 : f32
    %383 = vector.broadcast %cst_80 : f32 to vector<1x128xf32>
    %384 = arith.addf %383, %382 : vector<1x128xf32>
    %385 = arith.divf %383, %384 : vector<1x128xf32>
    %386 = arith.mulf %377, %347 : vector<1x128xf32>
    %387 = arith.mulf %371, %379 : vector<1x128xf32>
    %388 = arith.addf %386, %387 : vector<1x128xf32>
    %389 = math.tanh %388 : vector<1x128xf32>
    %390 = arith.mulf %385, %389 : vector<1x128xf32>
    %391 = vector.extract_strided_slice %390 {offsets = [0, 0], sizes = [1, 64], strides = [1, 1]} : vector<1x128xf32> to vector<1x64xf32>
    %c0_81 = arith.constant 0 : index
    %c8_82 = arith.constant 8 : index
    %c0_83 = arith.constant 0 : index
    %392 = vector.load %arg6[%c0_81, %c8_82, %c0_83] : memref<1x16x128xf32, #tpu.memory_space<vmem>>, vector<1x1x64xf32>
    %393 = vector.shape_cast %392 : vector<1x1x64xf32> to vector<1x64xf32>
    %394 = vector.shape_cast %391 : vector<1x64xf32> to vector<1x1x64xf32>
    tpu.vector_store %arg6[%c0_81, %c8_82, %c0_83], %394 {strides = array<i32>} : memref<1x16x128xf32, #tpu.memory_space<vmem>>, vector<1x1x64xf32>,
    %395 = vector.extract_strided_slice %390 {offsets = [0, 64], sizes = [1, 64], strides = [1, 1]} : vector<1x128xf32> to vector<1x64xf32>
    %c0_84 = arith.constant 0 : index
    %c7_85 = arith.constant 7 : index
    %c64_86 = arith.constant 64 : index
    %396 = vector.load %arg6[%c0_84, %c7_85, %c64_86] : memref<1x16x128xf32, #tpu.memory_space<vmem>>, vector<1x1x64xf32>
    %397 = vector.shape_cast %396 : vector<1x1x64xf32> to vector<1x64xf32>
    %398 = vector.shape_cast %395 : vector<1x64xf32> to vector<1x1x64xf32>
    tpu.vector_store %arg6[%c0_84, %c7_85, %c64_86], %398 {strides = array<i32>} : memref<1x16x128xf32, #tpu.memory_space<vmem>>, vector<1x1x64xf32>,
    %399 = vector.extract_strided_slice %7 {offsets = [0, 9, 0], sizes = [1, 1, 512], strides = [1, 1, 1]} : vector<1x16x512xf32> to vector<1x1x512xf32>
    %400 = vector.shape_cast %399 : vector<1x1x512xf32> to vector<1x512xf32>
    %401 = vector.extract_strided_slice %7 {offsets = [0, 6, 0], sizes = [1, 1, 512], strides = [1, 1, 1]} : vector<1x16x512xf32> to vector<1x1x512xf32>
    %402 = vector.shape_cast %401 : vector<1x1x512xf32> to vector<1x512xf32>
    %403 = arith.select %26, %400, %402 : vector<1x512xi1>, vector<1x512xf32>
    %404 = arith.truncf %390 : vector<1x128xf32> to vector<1x128xbf16>
    %cst_87 = arith.constant dense<0.000000e+00> : vector<1x512xf32>
    %405 = tpu.matmul %404, %27, %cst_87 {dimension_numbers = #tpu.dot_dimension_numbers<[1], [0], [0], [1], [0, 0, 1, 1], [], []>} : vector<1x128xbf16>, vector<128x512xbf16>, vector<1x512xf32> -> vector<1x512xf32>
    %406 = arith.addf %403, %405 : vector<1x512xf32>
    %407 = vector.extract_strided_slice %406 {offsets = [0, 0], sizes = [1, 128], strides = [1, 1]} : vector<1x512xf32> to vector<1x128xf32>
    %408 = arith.negf %407 : vector<1x128xf32>
    %409 = math.exp %408 : vector<1x128xf32>
    %cst_88 = arith.constant 1.000000e+00 : f32
    %410 = vector.broadcast %cst_88 : f32 to vector<1x128xf32>
    %411 = arith.addf %410, %409 : vector<1x128xf32>
    %412 = arith.divf %410, %411 : vector<1x128xf32>
    %413 = vector.extract_strided_slice %406 {offsets = [0, 128], sizes = [1, 128], strides = [1, 1]} : vector<1x512xf32> to vector<1x128xf32>
    %414 = arith.negf %413 : vector<1x128xf32>
    %415 = math.exp %414 : vector<1x128xf32>
    %cst_89 = arith.constant 1.000000e+00 : f32
    %416 = vector.broadcast %cst_89 : f32 to vector<1x128xf32>
    %417 = arith.addf %416, %415 : vector<1x128xf32>
    %418 = arith.divf %416, %417 : vector<1x128xf32>
    %419 = vector.extract_strided_slice %406 {offsets = [0, 256], sizes = [1, 128], strides = [1, 1]} : vector<1x512xf32> to vector<1x128xf32>
    %420 = math.tanh %419 : vector<1x128xf32>
    %421 = vector.extract_strided_slice %406 {offsets = [0, 384], sizes = [1, 128], strides = [1, 1]} : vector<1x512xf32> to vector<1x128xf32>
    %422 = arith.negf %421 : vector<1x128xf32>
    %423 = math.exp %422 : vector<1x128xf32>
    %cst_90 = arith.constant 1.000000e+00 : f32
    %424 = vector.broadcast %cst_90 : f32 to vector<1x128xf32>
    %425 = arith.addf %424, %423 : vector<1x128xf32>
    %426 = arith.divf %424, %425 : vector<1x128xf32>
    %427 = arith.mulf %418, %388 : vector<1x128xf32>
    %428 = arith.mulf %412, %420 : vector<1x128xf32>
    %429 = arith.addf %427, %428 : vector<1x128xf32>
    %430 = math.tanh %429 : vector<1x128xf32>
    %431 = arith.mulf %426, %430 : vector<1x128xf32>
    %432 = vector.extract_strided_slice %431 {offsets = [0, 0], sizes = [1, 64], strides = [1, 1]} : vector<1x128xf32> to vector<1x64xf32>
    %c0_91 = arith.constant 0 : index
    %c9_92 = arith.constant 9 : index
    %c0_93 = arith.constant 0 : index
    %433 = vector.load %arg6[%c0_91, %c9_92, %c0_93] : memref<1x16x128xf32, #tpu.memory_space<vmem>>, vector<1x1x64xf32>
    %434 = vector.shape_cast %433 : vector<1x1x64xf32> to vector<1x64xf32>
    %435 = vector.shape_cast %432 : vector<1x64xf32> to vector<1x1x64xf32>
    tpu.vector_store %arg6[%c0_91, %c9_92, %c0_93], %435 {strides = array<i32>} : memref<1x16x128xf32, #tpu.memory_space<vmem>>, vector<1x1x64xf32>,
    %436 = vector.extract_strided_slice %431 {offsets = [0, 64], sizes = [1, 64], strides = [1, 1]} : vector<1x128xf32> to vector<1x64xf32>
    %c0_94 = arith.constant 0 : index
    %c6_95 = arith.constant 6 : index
    %c64_96 = arith.constant 64 : index
    %437 = vector.load %arg6[%c0_94, %c6_95, %c64_96] : memref<1x16x128xf32, #tpu.memory_space<vmem>>, vector<1x1x64xf32>
    %438 = vector.shape_cast %437 : vector<1x1x64xf32> to vector<1x64xf32>
    %439 = vector.shape_cast %436 : vector<1x64xf32> to vector<1x1x64xf32>
    tpu.vector_store %arg6[%c0_94, %c6_95, %c64_96], %439 {strides = array<i32>} : memref<1x16x128xf32, #tpu.memory_space<vmem>>, vector<1x1x64xf32>,
    %440 = vector.extract_strided_slice %7 {offsets = [0, 10, 0], sizes = [1, 1, 512], strides = [1, 1, 1]} : vector<1x16x512xf32> to vector<1x1x512xf32>
    %441 = vector.shape_cast %440 : vector<1x1x512xf32> to vector<1x512xf32>
    %442 = vector.extract_strided_slice %7 {offsets = [0, 5, 0], sizes = [1, 1, 512], strides = [1, 1, 1]} : vector<1x16x512xf32> to vector<1x1x512xf32>
    %443 = vector.shape_cast %442 : vector<1x1x512xf32> to vector<1x512xf32>
    %444 = arith.select %26, %441, %443 : vector<1x512xi1>, vector<1x512xf32>
    %445 = arith.truncf %431 : vector<1x128xf32> to vector<1x128xbf16>
    %cst_97 = arith.constant dense<0.000000e+00> : vector<1x512xf32>
    %446 = tpu.matmul %445, %27, %cst_97 {dimension_numbers = #tpu.dot_dimension_numbers<[1], [0], [0], [1], [0, 0, 1, 1], [], []>} : vector<1x128xbf16>, vector<128x512xbf16>, vector<1x512xf32> -> vector<1x512xf32>
    %447 = arith.addf %444, %446 : vector<1x512xf32>
    %448 = vector.extract_strided_slice %447 {offsets = [0, 0], sizes = [1, 128], strides = [1, 1]} : vector<1x512xf32> to vector<1x128xf32>
    %449 = arith.negf %448 : vector<1x128xf32>
    %450 = math.exp %449 : vector<1x128xf32>
    %cst_98 = arith.constant 1.000000e+00 : f32
    %451 = vector.broadcast %cst_98 : f32 to vector<1x128xf32>
    %452 = arith.addf %451, %450 : vector<1x128xf32>
    %453 = arith.divf %451, %452 : vector<1x128xf32>
    %454 = vector.extract_strided_slice %447 {offsets = [0, 128], sizes = [1, 128], strides = [1, 1]} : vector<1x512xf32> to vector<1x128xf32>
    %455 = arith.negf %454 : vector<1x128xf32>
    %456 = math.exp %455 : vector<1x128xf32>
    %cst_99 = arith.constant 1.000000e+00 : f32
    %457 = vector.broadcast %cst_99 : f32 to vector<1x128xf32>
    %458 = arith.addf %457, %456 : vector<1x128xf32>
    %459 = arith.divf %457, %458 : vector<1x128xf32>
    %460 = vector.extract_strided_slice %447 {offsets = [0, 256], sizes = [1, 128], strides = [1, 1]} : vector<1x512xf32> to vector<1x128xf32>
    %461 = math.tanh %460 : vector<1x128xf32>
    %462 = vector.extract_strided_slice %447 {offsets = [0, 384], sizes = [1, 128], strides = [1, 1]} : vector<1x512xf32> to vector<1x128xf32>
    %463 = arith.negf %462 : vector<1x128xf32>
    %464 = math.exp %463 : vector<1x128xf32>
    %cst_100 = arith.constant 1.000000e+00 : f32
    %465 = vector.broadcast %cst_100 : f32 to vector<1x128xf32>
    %466 = arith.addf %465, %464 : vector<1x128xf32>
    %467 = arith.divf %465, %466 : vector<1x128xf32>
    %468 = arith.mulf %459, %429 : vector<1x128xf32>
    %469 = arith.mulf %453, %461 : vector<1x128xf32>
    %470 = arith.addf %468, %469 : vector<1x128xf32>
    %471 = math.tanh %470 : vector<1x128xf32>
    %472 = arith.mulf %467, %471 : vector<1x128xf32>
    %473 = vector.extract_strided_slice %472 {offsets = [0, 0], sizes = [1, 64], strides = [1, 1]} : vector<1x128xf32> to vector<1x64xf32>
    %c0_101 = arith.constant 0 : index
    %c10_102 = arith.constant 10 : index
    %c0_103 = arith.constant 0 : index
    %474 = vector.load %arg6[%c0_101, %c10_102, %c0_103] : memref<1x16x128xf32, #tpu.memory_space<vmem>>, vector<1x1x64xf32>
    %475 = vector.shape_cast %474 : vector<1x1x64xf32> to vector<1x64xf32>
    %476 = vector.shape_cast %473 : vector<1x64xf32> to vector<1x1x64xf32>
    tpu.vector_store %arg6[%c0_101, %c10_102, %c0_103], %476 {strides = array<i32>} : memref<1x16x128xf32, #tpu.memory_space<vmem>>, vector<1x1x64xf32>,
    %477 = vector.extract_strided_slice %472 {offsets = [0, 64], sizes = [1, 64], strides = [1, 1]} : vector<1x128xf32> to vector<1x64xf32>
    %c0_104 = arith.constant 0 : index
    %c5_105 = arith.constant 5 : index
    %c64_106 = arith.constant 64 : index
    %478 = vector.load %arg6[%c0_104, %c5_105, %c64_106] : memref<1x16x128xf32, #tpu.memory_space<vmem>>, vector<1x1x64xf32>
    %479 = vector.shape_cast %478 : vector<1x1x64xf32> to vector<1x64xf32>
    %480 = vector.shape_cast %477 : vector<1x64xf32> to vector<1x1x64xf32>
    tpu.vector_store %arg6[%c0_104, %c5_105, %c64_106], %480 {strides = array<i32>} : memref<1x16x128xf32, #tpu.memory_space<vmem>>, vector<1x1x64xf32>,
    %481 = vector.extract_strided_slice %7 {offsets = [0, 11, 0], sizes = [1, 1, 512], strides = [1, 1, 1]} : vector<1x16x512xf32> to vector<1x1x512xf32>
    %482 = vector.shape_cast %481 : vector<1x1x512xf32> to vector<1x512xf32>
    %483 = vector.extract_strided_slice %7 {offsets = [0, 4, 0], sizes = [1, 1, 512], strides = [1, 1, 1]} : vector<1x16x512xf32> to vector<1x1x512xf32>
    %484 = vector.shape_cast %483 : vector<1x1x512xf32> to vector<1x512xf32>
    %485 = arith.select %26, %482, %484 : vector<1x512xi1>, vector<1x512xf32>
    %486 = arith.truncf %472 : vector<1x128xf32> to vector<1x128xbf16>
    %cst_107 = arith.constant dense<0.000000e+00> : vector<1x512xf32>
    %487 = tpu.matmul %486, %27, %cst_107 {dimension_numbers = #tpu.dot_dimension_numbers<[1], [0], [0], [1], [0, 0, 1, 1], [], []>} : vector<1x128xbf16>, vector<128x512xbf16>, vector<1x512xf32> -> vector<1x512xf32>
    %488 = arith.addf %485, %487 : vector<1x512xf32>
    %489 = vector.extract_strided_slice %488 {offsets = [0, 0], sizes = [1, 128], strides = [1, 1]} : vector<1x512xf32> to vector<1x128xf32>
    %490 = arith.negf %489 : vector<1x128xf32>
    %491 = math.exp %490 : vector<1x128xf32>
    %cst_108 = arith.constant 1.000000e+00 : f32
    %492 = vector.broadcast %cst_108 : f32 to vector<1x128xf32>
    %493 = arith.addf %492, %491 : vector<1x128xf32>
    %494 = arith.divf %492, %493 : vector<1x128xf32>
    %495 = vector.extract_strided_slice %488 {offsets = [0, 128], sizes = [1, 128], strides = [1, 1]} : vector<1x512xf32> to vector<1x128xf32>
    %496 = arith.negf %495 : vector<1x128xf32>
    %497 = math.exp %496 : vector<1x128xf32>
    %cst_109 = arith.constant 1.000000e+00 : f32
    %498 = vector.broadcast %cst_109 : f32 to vector<1x128xf32>
    %499 = arith.addf %498, %497 : vector<1x128xf32>
    %500 = arith.divf %498, %499 : vector<1x128xf32>
    %501 = vector.extract_strided_slice %488 {offsets = [0, 256], sizes = [1, 128], strides = [1, 1]} : vector<1x512xf32> to vector<1x128xf32>
    %502 = math.tanh %501 : vector<1x128xf32>
    %503 = vector.extract_strided_slice %488 {offsets = [0, 384], sizes = [1, 128], strides = [1, 1]} : vector<1x512xf32> to vector<1x128xf32>
    %504 = arith.negf %503 : vector<1x128xf32>
    %505 = math.exp %504 : vector<1x128xf32>
    %cst_110 = arith.constant 1.000000e+00 : f32
    %506 = vector.broadcast %cst_110 : f32 to vector<1x128xf32>
    %507 = arith.addf %506, %505 : vector<1x128xf32>
    %508 = arith.divf %506, %507 : vector<1x128xf32>
    %509 = arith.mulf %500, %470 : vector<1x128xf32>
    %510 = arith.mulf %494, %502 : vector<1x128xf32>
    %511 = arith.addf %509, %510 : vector<1x128xf32>
    %512 = math.tanh %511 : vector<1x128xf32>
    %513 = arith.mulf %508, %512 : vector<1x128xf32>
    %514 = vector.extract_strided_slice %513 {offsets = [0, 0], sizes = [1, 64], strides = [1, 1]} : vector<1x128xf32> to vector<1x64xf32>
    %c0_111 = arith.constant 0 : index
    %c11_112 = arith.constant 11 : index
    %c0_113 = arith.constant 0 : index
    %515 = vector.load %arg6[%c0_111, %c11_112, %c0_113] : memref<1x16x128xf32, #tpu.memory_space<vmem>>, vector<1x1x64xf32>
    %516 = vector.shape_cast %515 : vector<1x1x64xf32> to vector<1x64xf32>
    %517 = vector.shape_cast %514 : vector<1x64xf32> to vector<1x1x64xf32>
    tpu.vector_store %arg6[%c0_111, %c11_112, %c0_113], %517 {strides = array<i32>} : memref<1x16x128xf32, #tpu.memory_space<vmem>>, vector<1x1x64xf32>,
    %518 = vector.extract_strided_slice %513 {offsets = [0, 64], sizes = [1, 64], strides = [1, 1]} : vector<1x128xf32> to vector<1x64xf32>
    %c0_114 = arith.constant 0 : index
    %c4_115 = arith.constant 4 : index
    %c64_116 = arith.constant 64 : index
    %519 = vector.load %arg6[%c0_114, %c4_115, %c64_116] : memref<1x16x128xf32, #tpu.memory_space<vmem>>, vector<1x1x64xf32>
    %520 = vector.shape_cast %519 : vector<1x1x64xf32> to vector<1x64xf32>
    %521 = vector.shape_cast %518 : vector<1x64xf32> to vector<1x1x64xf32>
    tpu.vector_store %arg6[%c0_114, %c4_115, %c64_116], %521 {strides = array<i32>} : memref<1x16x128xf32, #tpu.memory_space<vmem>>, vector<1x1x64xf32>,
    %522 = vector.extract_strided_slice %7 {offsets = [0, 12, 0], sizes = [1, 1, 512], strides = [1, 1, 1]} : vector<1x16x512xf32> to vector<1x1x512xf32>
    %523 = vector.shape_cast %522 : vector<1x1x512xf32> to vector<1x512xf32>
    %524 = vector.extract_strided_slice %7 {offsets = [0, 3, 0], sizes = [1, 1, 512], strides = [1, 1, 1]} : vector<1x16x512xf32> to vector<1x1x512xf32>
    %525 = vector.shape_cast %524 : vector<1x1x512xf32> to vector<1x512xf32>
    %526 = arith.select %26, %523, %525 : vector<1x512xi1>, vector<1x512xf32>
    %527 = arith.truncf %513 : vector<1x128xf32> to vector<1x128xbf16>
    %cst_117 = arith.constant dense<0.000000e+00> : vector<1x512xf32>
    %528 = tpu.matmul %527, %27, %cst_117 {dimension_numbers = #tpu.dot_dimension_numbers<[1], [0], [0], [1], [0, 0, 1, 1], [], []>} : vector<1x128xbf16>, vector<128x512xbf16>, vector<1x512xf32> -> vector<1x512xf32>
    %529 = arith.addf %526, %528 : vector<1x512xf32>
    %530 = vector.extract_strided_slice %529 {offsets = [0, 0], sizes = [1, 128], strides = [1, 1]} : vector<1x512xf32> to vector<1x128xf32>
    %531 = arith.negf %530 : vector<1x128xf32>
    %532 = math.exp %531 : vector<1x128xf32>
    %cst_118 = arith.constant 1.000000e+00 : f32
    %533 = vector.broadcast %cst_118 : f32 to vector<1x128xf32>
    %534 = arith.addf %533, %532 : vector<1x128xf32>
    %535 = arith.divf %533, %534 : vector<1x128xf32>
    %536 = vector.extract_strided_slice %529 {offsets = [0, 128], sizes = [1, 128], strides = [1, 1]} : vector<1x512xf32> to vector<1x128xf32>
    %537 = arith.negf %536 : vector<1x128xf32>
    %538 = math.exp %537 : vector<1x128xf32>
    %cst_119 = arith.constant 1.000000e+00 : f32
    %539 = vector.broadcast %cst_119 : f32 to vector<1x128xf32>
    %540 = arith.addf %539, %538 : vector<1x128xf32>
    %541 = arith.divf %539, %540 : vector<1x128xf32>
    %542 = vector.extract_strided_slice %529 {offsets = [0, 256], sizes = [1, 128], strides = [1, 1]} : vector<1x512xf32> to vector<1x128xf32>
    %543 = math.tanh %542 : vector<1x128xf32>
    %544 = vector.extract_strided_slice %529 {offsets = [0, 384], sizes = [1, 128], strides = [1, 1]} : vector<1x512xf32> to vector<1x128xf32>
    %545 = arith.negf %544 : vector<1x128xf32>
    %546 = math.exp %545 : vector<1x128xf32>
    %cst_120 = arith.constant 1.000000e+00 : f32
    %547 = vector.broadcast %cst_120 : f32 to vector<1x128xf32>
    %548 = arith.addf %547, %546 : vector<1x128xf32>
    %549 = arith.divf %547, %548 : vector<1x128xf32>
    %550 = arith.mulf %541, %511 : vector<1x128xf32>
    %551 = arith.mulf %535, %543 : vector<1x128xf32>
    %552 = arith.addf %550, %551 : vector<1x128xf32>
    %553 = math.tanh %552 : vector<1x128xf32>
    %554 = arith.mulf %549, %553 : vector<1x128xf32>
    %555 = vector.extract_strided_slice %554 {offsets = [0, 0], sizes = [1, 64], strides = [1, 1]} : vector<1x128xf32> to vector<1x64xf32>
    %c0_121 = arith.constant 0 : index
    %c12_122 = arith.constant 12 : index
    %c0_123 = arith.constant 0 : index
    %556 = vector.load %arg6[%c0_121, %c12_122, %c0_123] : memref<1x16x128xf32, #tpu.memory_space<vmem>>, vector<1x1x64xf32>
    %557 = vector.shape_cast %556 : vector<1x1x64xf32> to vector<1x64xf32>
    %558 = vector.shape_cast %555 : vector<1x64xf32> to vector<1x1x64xf32>
    tpu.vector_store %arg6[%c0_121, %c12_122, %c0_123], %558 {strides = array<i32>} : memref<1x16x128xf32, #tpu.memory_space<vmem>>, vector<1x1x64xf32>,
    %559 = vector.extract_strided_slice %554 {offsets = [0, 64], sizes = [1, 64], strides = [1, 1]} : vector<1x128xf32> to vector<1x64xf32>
    %c0_124 = arith.constant 0 : index
    %c3_125 = arith.constant 3 : index
    %c64_126 = arith.constant 64 : index
    %560 = vector.load %arg6[%c0_124, %c3_125, %c64_126] : memref<1x16x128xf32, #tpu.memory_space<vmem>>, vector<1x1x64xf32>
    %561 = vector.shape_cast %560 : vector<1x1x64xf32> to vector<1x64xf32>
    %562 = vector.shape_cast %559 : vector<1x64xf32> to vector<1x1x64xf32>
    tpu.vector_store %arg6[%c0_124, %c3_125, %c64_126], %562 {strides = array<i32>} : memref<1x16x128xf32, #tpu.memory_space<vmem>>, vector<1x1x64xf32>,
    %563 = vector.extract_strided_slice %7 {offsets = [0, 13, 0], sizes = [1, 1, 512], strides = [1, 1, 1]} : vector<1x16x512xf32> to vector<1x1x512xf32>
    %564 = vector.shape_cast %563 : vector<1x1x512xf32> to vector<1x512xf32>
    %565 = vector.extract_strided_slice %7 {offsets = [0, 2, 0], sizes = [1, 1, 512], strides = [1, 1, 1]} : vector<1x16x512xf32> to vector<1x1x512xf32>
    %566 = vector.shape_cast %565 : vector<1x1x512xf32> to vector<1x512xf32>
    %567 = arith.select %26, %564, %566 : vector<1x512xi1>, vector<1x512xf32>
    %568 = arith.truncf %554 : vector<1x128xf32> to vector<1x128xbf16>
    %cst_127 = arith.constant dense<0.000000e+00> : vector<1x512xf32>
    %569 = tpu.matmul %568, %27, %cst_127 {dimension_numbers = #tpu.dot_dimension_numbers<[1], [0], [0], [1], [0, 0, 1, 1], [], []>} : vector<1x128xbf16>, vector<128x512xbf16>, vector<1x512xf32> -> vector<1x512xf32>
    %570 = arith.addf %567, %569 : vector<1x512xf32>
    %571 = vector.extract_strided_slice %570 {offsets = [0, 0], sizes = [1, 128], strides = [1, 1]} : vector<1x512xf32> to vector<1x128xf32>
    %572 = arith.negf %571 : vector<1x128xf32>
    %573 = math.exp %572 : vector<1x128xf32>
    %cst_128 = arith.constant 1.000000e+00 : f32
    %574 = vector.broadcast %cst_128 : f32 to vector<1x128xf32>
    %575 = arith.addf %574, %573 : vector<1x128xf32>
    %576 = arith.divf %574, %575 : vector<1x128xf32>
    %577 = vector.extract_strided_slice %570 {offsets = [0, 128], sizes = [1, 128], strides = [1, 1]} : vector<1x512xf32> to vector<1x128xf32>
    %578 = arith.negf %577 : vector<1x128xf32>
    %579 = math.exp %578 : vector<1x128xf32>
    %cst_129 = arith.constant 1.000000e+00 : f32
    %580 = vector.broadcast %cst_129 : f32 to vector<1x128xf32>
    %581 = arith.addf %580, %579 : vector<1x128xf32>
    %582 = arith.divf %580, %581 : vector<1x128xf32>
    %583 = vector.extract_strided_slice %570 {offsets = [0, 256], sizes = [1, 128], strides = [1, 1]} : vector<1x512xf32> to vector<1x128xf32>
    %584 = math.tanh %583 : vector<1x128xf32>
    %585 = vector.extract_strided_slice %570 {offsets = [0, 384], sizes = [1, 128], strides = [1, 1]} : vector<1x512xf32> to vector<1x128xf32>
    %586 = arith.negf %585 : vector<1x128xf32>
    %587 = math.exp %586 : vector<1x128xf32>
    %cst_130 = arith.constant 1.000000e+00 : f32
    %588 = vector.broadcast %cst_130 : f32 to vector<1x128xf32>
    %589 = arith.addf %588, %587 : vector<1x128xf32>
    %590 = arith.divf %588, %589 : vector<1x128xf32>
    %591 = arith.mulf %582, %552 : vector<1x128xf32>
    %592 = arith.mulf %576, %584 : vector<1x128xf32>
    %593 = arith.addf %591, %592 : vector<1x128xf32>
    %594 = math.tanh %593 : vector<1x128xf32>
    %595 = arith.mulf %590, %594 : vector<1x128xf32>
    %596 = vector.extract_strided_slice %595 {offsets = [0, 0], sizes = [1, 64], strides = [1, 1]} : vector<1x128xf32> to vector<1x64xf32>
    %c0_131 = arith.constant 0 : index
    %c13_132 = arith.constant 13 : index
    %c0_133 = arith.constant 0 : index
    %597 = vector.load %arg6[%c0_131, %c13_132, %c0_133] : memref<1x16x128xf32, #tpu.memory_space<vmem>>, vector<1x1x64xf32>
    %598 = vector.shape_cast %597 : vector<1x1x64xf32> to vector<1x64xf32>
    %599 = vector.shape_cast %596 : vector<1x64xf32> to vector<1x1x64xf32>
    tpu.vector_store %arg6[%c0_131, %c13_132, %c0_133], %599 {strides = array<i32>} : memref<1x16x128xf32, #tpu.memory_space<vmem>>, vector<1x1x64xf32>,
    %600 = vector.extract_strided_slice %595 {offsets = [0, 64], sizes = [1, 64], strides = [1, 1]} : vector<1x128xf32> to vector<1x64xf32>
    %c0_134 = arith.constant 0 : index
    %c2_135 = arith.constant 2 : index
    %c64_136 = arith.constant 64 : index
    %601 = vector.load %arg6[%c0_134, %c2_135, %c64_136] : memref<1x16x128xf32, #tpu.memory_space<vmem>>, vector<1x1x64xf32>
    %602 = vector.shape_cast %601 : vector<1x1x64xf32> to vector<1x64xf32>
    %603 = vector.shape_cast %600 : vector<1x64xf32> to vector<1x1x64xf32>
    tpu.vector_store %arg6[%c0_134, %c2_135, %c64_136], %603 {strides = array<i32>} : memref<1x16x128xf32, #tpu.memory_space<vmem>>, vector<1x1x64xf32>,
    %604 = vector.extract_strided_slice %7 {offsets = [0, 14, 0], sizes = [1, 1, 512], strides = [1, 1, 1]} : vector<1x16x512xf32> to vector<1x1x512xf32>
    %605 = vector.shape_cast %604 : vector<1x1x512xf32> to vector<1x512xf32>
    %606 = vector.extract_strided_slice %7 {offsets = [0, 1, 0], sizes = [1, 1, 512], strides = [1, 1, 1]} : vector<1x16x512xf32> to vector<1x1x512xf32>
    %607 = vector.shape_cast %606 : vector<1x1x512xf32> to vector<1x512xf32>
    %608 = arith.select %26, %605, %607 : vector<1x512xi1>, vector<1x512xf32>
    %609 = arith.truncf %595 : vector<1x128xf32> to vector<1x128xbf16>
    %cst_137 = arith.constant dense<0.000000e+00> : vector<1x512xf32>
    %610 = tpu.matmul %609, %27, %cst_137 {dimension_numbers = #tpu.dot_dimension_numbers<[1], [0], [0], [1], [0, 0, 1, 1], [], []>} : vector<1x128xbf16>, vector<128x512xbf16>, vector<1x512xf32> -> vector<1x512xf32>
    %611 = arith.addf %608, %610 : vector<1x512xf32>
    %612 = vector.extract_strided_slice %611 {offsets = [0, 0], sizes = [1, 128], strides = [1, 1]} : vector<1x512xf32> to vector<1x128xf32>
    %613 = arith.negf %612 : vector<1x128xf32>
    %614 = math.exp %613 : vector<1x128xf32>
    %cst_138 = arith.constant 1.000000e+00 : f32
    %615 = vector.broadcast %cst_138 : f32 to vector<1x128xf32>
    %616 = arith.addf %615, %614 : vector<1x128xf32>
    %617 = arith.divf %615, %616 : vector<1x128xf32>
    %618 = vector.extract_strided_slice %611 {offsets = [0, 128], sizes = [1, 128], strides = [1, 1]} : vector<1x512xf32> to vector<1x128xf32>
    %619 = arith.negf %618 : vector<1x128xf32>
    %620 = math.exp %619 : vector<1x128xf32>
    %cst_139 = arith.constant 1.000000e+00 : f32
    %621 = vector.broadcast %cst_139 : f32 to vector<1x128xf32>
    %622 = arith.addf %621, %620 : vector<1x128xf32>
    %623 = arith.divf %621, %622 : vector<1x128xf32>
    %624 = vector.extract_strided_slice %611 {offsets = [0, 256], sizes = [1, 128], strides = [1, 1]} : vector<1x512xf32> to vector<1x128xf32>
    %625 = math.tanh %624 : vector<1x128xf32>
    %626 = vector.extract_strided_slice %611 {offsets = [0, 384], sizes = [1, 128], strides = [1, 1]} : vector<1x512xf32> to vector<1x128xf32>
    %627 = arith.negf %626 : vector<1x128xf32>
    %628 = math.exp %627 : vector<1x128xf32>
    %cst_140 = arith.constant 1.000000e+00 : f32
    %629 = vector.broadcast %cst_140 : f32 to vector<1x128xf32>
    %630 = arith.addf %629, %628 : vector<1x128xf32>
    %631 = arith.divf %629, %630 : vector<1x128xf32>
    %632 = arith.mulf %623, %593 : vector<1x128xf32>
    %633 = arith.mulf %617, %625 : vector<1x128xf32>
    %634 = arith.addf %632, %633 : vector<1x128xf32>
    %635 = math.tanh %634 : vector<1x128xf32>
    %636 = arith.mulf %631, %635 : vector<1x128xf32>
    %637 = vector.extract_strided_slice %636 {offsets = [0, 0], sizes = [1, 64], strides = [1, 1]} : vector<1x128xf32> to vector<1x64xf32>
    %c0_141 = arith.constant 0 : index
    %c14_142 = arith.constant 14 : index
    %c0_143 = arith.constant 0 : index
    %638 = vector.load %arg6[%c0_141, %c14_142, %c0_143] : memref<1x16x128xf32, #tpu.memory_space<vmem>>, vector<1x1x64xf32>
    %639 = vector.shape_cast %638 : vector<1x1x64xf32> to vector<1x64xf32>
    %640 = vector.shape_cast %637 : vector<1x64xf32> to vector<1x1x64xf32>
    tpu.vector_store %arg6[%c0_141, %c14_142, %c0_143], %640 {strides = array<i32>} : memref<1x16x128xf32, #tpu.memory_space<vmem>>, vector<1x1x64xf32>,
    %641 = vector.extract_strided_slice %636 {offsets = [0, 64], sizes = [1, 64], strides = [1, 1]} : vector<1x128xf32> to vector<1x64xf32>
    %c0_144 = arith.constant 0 : index
    %c1_145 = arith.constant 1 : index
    %c64_146 = arith.constant 64 : index
    %642 = vector.load %arg6[%c0_144, %c1_145, %c64_146] : memref<1x16x128xf32, #tpu.memory_space<vmem>>, vector<1x1x64xf32>
    %643 = vector.shape_cast %642 : vector<1x1x64xf32> to vector<1x64xf32>
    %644 = vector.shape_cast %641 : vector<1x64xf32> to vector<1x1x64xf32>
    tpu.vector_store %arg6[%c0_144, %c1_145, %c64_146], %644 {strides = array<i32>} : memref<1x16x128xf32, #tpu.memory_space<vmem>>, vector<1x1x64xf32>,
    %645 = vector.extract_strided_slice %7 {offsets = [0, 15, 0], sizes = [1, 1, 512], strides = [1, 1, 1]} : vector<1x16x512xf32> to vector<1x1x512xf32>
    %646 = vector.shape_cast %645 : vector<1x1x512xf32> to vector<1x512xf32>
    %647 = vector.extract_strided_slice %7 {offsets = [0, 0, 0], sizes = [1, 1, 512], strides = [1, 1, 1]} : vector<1x16x512xf32> to vector<1x1x512xf32>
    %648 = vector.shape_cast %647 : vector<1x1x512xf32> to vector<1x512xf32>
    %649 = arith.select %26, %646, %648 : vector<1x512xi1>, vector<1x512xf32>
    %650 = arith.truncf %636 : vector<1x128xf32> to vector<1x128xbf16>
    %cst_147 = arith.constant dense<0.000000e+00> : vector<1x512xf32>
    %651 = tpu.matmul %650, %27, %cst_147 {dimension_numbers = #tpu.dot_dimension_numbers<[1], [0], [0], [1], [0, 0, 1, 1], [], []>} : vector<1x128xbf16>, vector<128x512xbf16>, vector<1x512xf32> -> vector<1x512xf32>
    %652 = arith.addf %649, %651 : vector<1x512xf32>
    %653 = vector.extract_strided_slice %652 {offsets = [0, 0], sizes = [1, 128], strides = [1, 1]} : vector<1x512xf32> to vector<1x128xf32>
    %654 = arith.negf %653 : vector<1x128xf32>
    %655 = math.exp %654 : vector<1x128xf32>
    %cst_148 = arith.constant 1.000000e+00 : f32
    %656 = vector.broadcast %cst_148 : f32 to vector<1x128xf32>
    %657 = arith.addf %656, %655 : vector<1x128xf32>
    %658 = arith.divf %656, %657 : vector<1x128xf32>
    %659 = vector.extract_strided_slice %652 {offsets = [0, 128], sizes = [1, 128], strides = [1, 1]} : vector<1x512xf32> to vector<1x128xf32>
    %660 = arith.negf %659 : vector<1x128xf32>
    %661 = math.exp %660 : vector<1x128xf32>
    %cst_149 = arith.constant 1.000000e+00 : f32
    %662 = vector.broadcast %cst_149 : f32 to vector<1x128xf32>
    %663 = arith.addf %662, %661 : vector<1x128xf32>
    %664 = arith.divf %662, %663 : vector<1x128xf32>
    %665 = vector.extract_strided_slice %652 {offsets = [0, 256], sizes = [1, 128], strides = [1, 1]} : vector<1x512xf32> to vector<1x128xf32>
    %666 = math.tanh %665 : vector<1x128xf32>
    %667 = vector.extract_strided_slice %652 {offsets = [0, 384], sizes = [1, 128], strides = [1, 1]} : vector<1x512xf32> to vector<1x128xf32>
    %668 = arith.negf %667 : vector<1x128xf32>
    %669 = math.exp %668 : vector<1x128xf32>
    %cst_150 = arith.constant 1.000000e+00 : f32
    %670 = vector.broadcast %cst_150 : f32 to vector<1x128xf32>
    %671 = arith.addf %670, %669 : vector<1x128xf32>
    %672 = arith.divf %670, %671 : vector<1x128xf32>
    %673 = arith.mulf %664, %634 : vector<1x128xf32>
    %674 = arith.mulf %658, %666 : vector<1x128xf32>
    %675 = arith.addf %673, %674 : vector<1x128xf32>
    %676 = math.tanh %675 : vector<1x128xf32>
    %677 = arith.mulf %672, %676 : vector<1x128xf32>
    %678 = vector.extract_strided_slice %677 {offsets = [0, 0], sizes = [1, 64], strides = [1, 1]} : vector<1x128xf32> to vector<1x64xf32>
    %c0_151 = arith.constant 0 : index
    %c15_152 = arith.constant 15 : index
    %c0_153 = arith.constant 0 : index
    %679 = vector.load %arg6[%c0_151, %c15_152, %c0_153] : memref<1x16x128xf32, #tpu.memory_space<vmem>>, vector<1x1x64xf32>
    %680 = vector.shape_cast %679 : vector<1x1x64xf32> to vector<1x64xf32>
    %681 = vector.shape_cast %678 : vector<1x64xf32> to vector<1x1x64xf32>
    tpu.vector_store %arg6[%c0_151, %c15_152, %c0_153], %681 {strides = array<i32>} : memref<1x16x128xf32, #tpu.memory_space<vmem>>, vector<1x1x64xf32>,
    %682 = vector.extract_strided_slice %677 {offsets = [0, 64], sizes = [1, 64], strides = [1, 1]} : vector<1x128xf32> to vector<1x64xf32>
    %c0_154 = arith.constant 0 : index
    %c0_155 = arith.constant 0 : index
    %c64_156 = arith.constant 64 : index
    %683 = vector.load %arg6[%c0_154, %c0_155, %c64_156] : memref<1x16x128xf32, #tpu.memory_space<vmem>>, vector<1x1x64xf32>
    %684 = vector.shape_cast %683 : vector<1x1x64xf32> to vector<1x64xf32>
    %685 = vector.shape_cast %682 : vector<1x64xf32> to vector<1x1x64xf32>
    tpu.vector_store %arg6[%c0_154, %c0_155, %c64_156], %685 {strides = array<i32>} : memref<1x16x128xf32, #tpu.memory_space<vmem>>, vector<1x1x64xf32>,
    %c0_157 = arith.constant 0 : index
    %c0_158 = arith.constant 0 : index
    %c0_159 = arith.constant 0 : index
    %686 = vector.load %arg6[%c0_157, %c0_158, %c0_159] : memref<1x16x128xf32, #tpu.memory_space<vmem>>, vector<1x16x128xf32>
    %687 = arith.truncf %686 : vector<1x16x128xf32> to vector<1x16x128xbf16>
    %c0_160 = arith.constant 0 : index
    %c0_161 = arith.constant 0 : index
    %c0_162 = arith.constant 0 : index
    %688 = vector.load %arg5[%c0_160, %c0_161, %c0_162] : memref<1x16x128xbf16, #tpu.memory_space<vmem>>, vector<1x16x128xbf16>
    tpu.vector_store %arg5[%c0_160, %c0_161, %c0_162], %687 {strides = array<i32>} : memref<1x16x128xbf16, #tpu.memory_space<vmem>>, vector<1x16x128xbf16>,
    return
  }
  func.func @transform_0(%arg0: i32) -> (i32, i32, i32) {
    %c0_i32 = arith.constant 0 : i32
    %c0_i32_0 = arith.constant 0 : i32
    %c0_i32_1 = arith.constant 0 : i32
    return %arg0, %c0_i32, %c0_i32_0 : i32, i32, i32
  }
  func.func @transform_1(%arg0: i32) -> (i32, i32) {
    %c0_i32 = arith.constant 0 : i32
    %c0_i32_0 = arith.constant 0 : i32
    %c0_i32_1 = arith.constant 0 : i32
    return %c0_i32, %c0_i32_0 : i32, i32
  }
  func.func @transform_2(%arg0: i32) -> (i32, i32) {
    %c0_i32 = arith.constant 0 : i32
    %c0_i32_0 = arith.constant 0 : i32
    %c0_i32_1 = arith.constant 0 : i32
    return %c0_i32, %c0_i32_0 : i32, i32
  }
  func.func @transform_3(%arg0: i32) -> (i32, i32) {
    %c0_i32 = arith.constant 0 : i32
    %c0_i32_0 = arith.constant 0 : i32
    %c0_i32_1 = arith.constant 0 : i32
    return %c0_i32, %c0_i32_0 : i32, i32
  }
  func.func @transform_4(%arg0: i32) -> (i32, i32, i32) {
    %c0_i32 = arith.constant 0 : i32
    %c0_i32_0 = arith.constant 0 : i32
    %c0_i32_1 = arith.constant 0 : i32
    return %arg0, %c0_i32, %c0_i32_0 : i32, i32, i32
  }
}

</mosaic_0001>

<llo_original>
// kernel: forward.7
$region0: #{forward.7}
  #allocation0 [shape = 'u32[]', space=smem, size = 0x4, offset = 0x4, fixed_abs, tag = 'smem constant byte address 0x4 - core index']
  #allocation1 [shape = 'u32[144,128]{1,0:T(1,128)}', space=vmem, size = 0x12000, scoped, tag = 'internal scratch']
  %s0 = inlined_call_operand.vmem [shape: bf16[32,128], index: 0, kind: input, shape index: {}]
  %s1 = inlined_call_operand.vmem [shape: bf16[128,128], index: 1, kind: input, shape index: {}]
  %s2 = inlined_call_operand.vmem [shape: f32[1,128], index: 2, kind: input, shape index: {}]
  %s3 = inlined_call_operand.vmem [shape: bf16[128,128], index: 3, kind: input, shape index: {}]
  %s4 = inlined_call_operand.vmem [shape: f32[1,128], index: 4, kind: input, shape index: {}]
  %s5 = inlined_call_operand.vmem [shape: f32[32,128], index: 5, kind: output, shape index: {}]
  %s6 = sld [smem:[#allocation0]]
  $region53: #{forward.7} parent=0
    _
  %s8 = ssub.s32 1, %s6
  %s9 = scalar_select 0, %s8, %s6
  loop: start=0, step=1, limit=4
  $region2: #{forward.7} parent=0 // loop_pre_header
    _
  $region3: #{forward.7} parent=0 // loop_header
    %s11 = sphi 0, %s15
    %p12 = scmp.ge.s32.totalorder %s11, 4
    %s21 = sphi 0, %s23
    %s24 = sphi 0, %s21
    %s25 = sphi 0, %s24
    %s41 = sphi 0, %s25
    %s45 = sphi 0, %s45
    %s47 = sphi 0, %s45
    %s48 = sphi 0, %s47
    %s62 = sphi 0, %s48
    %s66 = sphi 0, %s66
    %s68 = sphi 0, %s66
    %s69 = sphi 0, %s68
    %s83 = sphi 0, %s69
    %s87 = sphi 0, %s87
    %s89 = sphi 0, %s87
    %s90 = sphi 0, %s89
    %s104 = sphi 0, %s90
    %s108 = sphi 0, %s108
    %s110 = sphi 0, %s108
    %s111 = sphi 0, %s110
    %s125 = sphi 0, %s111
    %s131 = sphi 0, %s133
    %s134 = sphi 0, %s131
    %s135 = sphi 0, %s134
    %s151 = sphi 0, %s135
  $region4: #{forward.7} parent=0 // loop_header_branch
    %14 = sbr.rel (%p12) target = $region8
  $region5: #{forward.7} parent=0 // loop_body
    %s16 = ssub.s32 %s11, 1
    %s17 = ssub.s32 %s11, 2
    %s18 = sadd.s32 %s11, 1
    %s19 = ssub.s32 %s11, %s18
    %p20 = scmp.eq.s32.totalorder %s19, 0
    %s22 = sadd.s32 %s21, 1
    %s23 = scalar_select %p20, %s21, %s22
    %p26 = pneg %p20
    %p27 = scmp.eq.s32.totalorder %s11, 1
    %p28 = por %p26, %p27
    %p29 = scmp.ne.s32.totalorder %s21, %s24
    %p30 = scmp.eq.s32.totalorder %s11, 0
    %p31 = por %p29, %p30
    %p32 = scmp.ne.s32.totalorder %s21, %s24
    %p33 = scmp.eq.s32.totalorder %s16, 1
    %p34 = por %p32, %p33
    %p35 = scmp.ne.s32.totalorder %s24, %s25
    %p36 = scmp.eq.s32.totalorder %s16, 0
    %p37 = por %p35, %p36
    %p38 = scmp.ne.s32.totalorder %s24, %s25
    %p39 = scmp.eq.s32.totalorder %s17, 1
    %p40 = por %p38, %p39
    %p42 = scmp.ne.s32.totalorder %s25, %s41
    %p43 = scmp.eq.s32.totalorder %s17, 0
    %p44 = por %p42, %p43
    %s46 = sadd.s32 %s45, 1
    %p49 = scmp.eq.s32.totalorder %s11, 1
    %p50 = scmp.ne.s32.totalorder %s45, %s47
    %p51 = scmp.eq.s32.totalorder %s11, 0
    %p52 = por %p50, %p51
    %p53 = scmp.ne.s32.totalorder %s45, %s47
    %p54 = scmp.eq.s32.totalorder %s16, 1
    %p55 = por %p53, %p54
    %p56 = scmp.ne.s32.totalorder %s47, %s48
    %p57 = scmp.eq.s32.totalorder %s16, 0
    %p58 = por %p56, %p57
    %p59 = scmp.ne.s32.totalorder %s47, %s48
    %p60 = scmp.eq.s32.totalorder %s17, 1
    %p61 = por %p59, %p60
    %p63 = scmp.ne.s32.totalorder %s48, %s62
    %p64 = scmp.eq.s32.totalorder %s17, 0
    %p65 = por %p63, %p64
    %s67 = sadd.s32 %s66, 1
    %p70 = scmp.eq.s32.totalorder %s11, 1
    %p71 = scmp.ne.s32.totalorder %s66, %s68
    %p72 = scmp.eq.s32.totalorder %s11, 0
    %p73 = por %p71, %p72
    %p74 = scmp.ne.s32.totalorder %s66, %s68
    %p75 = scmp.eq.s32.totalorder %s16, 1
    %p76 = por %p74, %p75
    %p77 = scmp.ne.s32.totalorder %s68, %s69
    %p78 = scmp.eq.s32.totalorder %s16, 0
    %p79 = por %p77, %p78
    %p80 = scmp.ne.s32.totalorder %s68, %s69
    %p81 = scmp.eq.s32.totalorder %s17, 1
    %p82 = por %p80, %p81
    %p84 = scmp.ne.s32.totalorder %s69, %s83
    %p85 = scmp.eq.s32.totalorder %s17, 0
    %p86 = por %p84, %p85
    %s88 = sadd.s32 %s87, 1
    %p91 = scmp.eq.s32.totalorder %s11, 1
    %p92 = scmp.ne.s32.totalorder %s87, %s89
    %p93 = scmp.eq.s32.totalorder %s11, 0
    %p94 = por %p92, %p93
    %p95 = scmp.ne.s32.totalorder %s87, %s89
    %p96 = scmp.eq.s32.totalorder %s16, 1
    %p97 = por %p95, %p96
    %p98 = scmp.ne.s32.totalorder %s89, %s90
    %p99 = scmp.eq.s32.totalorder %s16, 0
    %p100 = por %p98, %p99
    %p101 = scmp.ne.s32.totalorder %s89, %s90
    %p102 = scmp.eq.s32.totalorder %s17, 1
    %p103 = por %p101, %p102
    %p105 = scmp.ne.s32.totalorder %s90, %s104
    %p106 = scmp.eq.s32.totalorder %s17, 0
    %p107 = por %p105, %p106
    %s109 = sadd.s32 %s108, 1
    %p112 = scmp.eq.s32.totalorder %s11, 1
    %p113 = scmp.ne.s32.totalorder %s108, %s110
    %p114 = scmp.eq.s32.totalorder %s11, 0
    %p115 = por %p113, %p114
    %p116 = scmp.ne.s32.totalorder %s108, %s110
    %p117 = scmp.eq.s32.totalorder %s16, 1
    %p118 = por %p116, %p117
    %p119 = scmp.ne.s32.totalorder %s110, %s111
    %p120 = scmp.eq.s32.totalorder %s16, 0
    %p121 = por %p119, %p120
    %p122 = scmp.ne.s32.totalorder %s110, %s111
    %p123 = scmp.eq.s32.totalorder %s17, 1
    %p124 = por %p122, %p123
    %p126 = scmp.ne.s32.totalorder %s111, %s125
    %p127 = scmp.eq.s32.totalorder %s17, 0
    %p128 = por %p126, %p127
    %s129 = ssub.s32 %s11, %s18
    %p130 = scmp.eq.s32.totalorder %s129, 0
    %s132 = sadd.s32 %s131, 1
    %s133 = scalar_select %p130, %s131, %s132
    %p136 = pneg %p130
    %p137 = scmp.eq.s32.totalorder %s11, 1
    %p138 = por %p136, %p137
    %p139 = scmp.ne.s32.totalorder %s131, %s134
    %p140 = scmp.eq.s32.totalorder %s11, 0
    %p141 = por %p139, %p140
    %p142 = scmp.ne.s32.totalorder %s131, %s134
    %p143 = scmp.eq.s32.totalorder %s16, 1
    %p144 = por %p142, %p143
    %p145 = scmp.ne.s32.totalorder %s134, %s135
    %p146 = scmp.eq.s32.totalorder %s16, 0
    %p147 = por %p145, %p146
    %p148 = scmp.ne.s32.totalorder %s134, %s135
    %p149 = scmp.eq.s32.totalorder %s17, 1
    %p150 = por %p148, %p149
    %p152 = scmp.ne.s32.totalorder %s135, %s151
    %p153 = scmp.eq.s32.totalorder %s17, 0
    %p154 = por %p152, %p153
    %p155 = scmp.le.s32.totalorder 1, %s11
    %p156 = scmp.lt.s32.totalorder %s11, 3
    %p157 = pnand %p155, %p156
    %p158 = pneg %p157
    // Predicated region
    $region9: #{forward.7} parent=5 // pred_check
      _
    $region10: #{forward.7} parent=5 // pred_check_branch
      %160 = sbr.rel (%p157) target = $region12
    $region11: #{forward.7} parent=5 // pred_region
      %s161 = ssub.s32 %s11, 1
      // Predicated region
      $region13: #{forward.7} parent=11 // pred_check
        %p162 = pneg %p58
      $region14: #{forward.7} parent=11 // pred_check_branch
        %164 = sbr.rel (%p162) target = $region16
      $region15: #{forward.7} parent=11 // pred_region
        _
      $region16: #{forward.7} parent=11 // pred_fallthru
        _
      // Predicated region
      $region17: #{forward.7} parent=11 // pred_check
        %p165 = pneg %p79
      $region18: #{forward.7} parent=11 // pred_check_branch
        %167 = sbr.rel (%p165) target = $region20
      $region19: #{forward.7} parent=11 // pred_region
        _
      $region20: #{forward.7} parent=11 // pred_fallthru
        _
      // Predicated region
      $region21: #{forward.7} parent=11 // pred_check
        %p168 = pneg %p100
      $region22: #{forward.7} parent=11 // pred_check_branch
        %170 = sbr.rel (%p168) target = $region24
      $region23: #{forward.7} parent=11 // pred_region
        _
      $region24: #{forward.7} parent=11 // pred_fallthru
        _
      // Predicated region
      $region25: #{forward.7} parent=11 // pred_check
        %p171 = pneg %p121
      $region26: #{forward.7} parent=11 // pred_check_branch
        %173 = sbr.rel (%p171) target = $region28
      $region27: #{forward.7} parent=11 // pred_region
        _
      $region28: #{forward.7} parent=11 // pred_fallthru
        _
    $region12: #{forward.7} parent=5 // pred_fallthru
      _
    %p174 = scmp.lt.s32.totalorder %s11, 2
    // Predicated region
    $region29: #{forward.7} parent=5 // pred_check
      %p175 = pneg %p174
    $region30: #{forward.7} parent=5 // pred_check_branch
      %177 = sbr.rel (%p175) target = $region32
    $region31: #{forward.7} parent=5 // pred_region
      // Predicated region
      $region33: #{forward.7} parent=31 // pred_check
        %p178 = pneg %p31
      $region34: #{forward.7} parent=31 // pred_check_branch
        %180 = sbr.rel (%p178) target = $region36
      $region35: #{forward.7} parent=31 // pred_region
        %s181 = smul.u32 2, %s11
        %p182 = scmp.lt.s32.totalorder %s181, 3
        %s183 = scalar_select %p182, %s181, 3
        %s184 = smul.addr %s183, 4
        %s185 = scalar_lea.vmem %s0, %s184
        %s186 = smul.u32 2, %s11
      $region36: #{forward.7} parent=31 // pred_fallthru
        _
    $region32: #{forward.7} parent=5 // pred_fallthru
      _
    %p187 = scmp.le.s32.totalorder 1, %s11
    %p188 = scmp.lt.s32.totalorder %s11, 3
    %p189 = pnand %p187, %p188
    %p190 = pneg %p189
    // Predicated region
    $region37: #{forward.7} parent=5 // pred_check
      _
    $region38: #{forward.7} parent=5 // pred_check_branch
      %192 = sbr.rel (%p189) target = $region40
    $region39: #{forward.7} parent=5 // pred_region
      %s193 = ssub.s32 %s11, 1
      %s194 = smul.u32 2, %s16
      %p195 = scmp.lt.s32.totalorder %s194, 3
      %s196 = scalar_select %p195, %s194, 3
      %s197 = smul.addr %s196, 4
      %s198 = scalar_lea.vmem %s0, %s197
      %p199 = pneg %p37
      %p200 = pneg %p34
      %p201 = pneg %p58
      %p202 = pneg %p55
      %p203 = pneg %p79
      %p204 = pneg %p76
      %p205 = pneg %p100
      %p206 = pneg %p97
      %p207 = pneg %p121
      %p208 = pneg %p118
      %p209 = pneg %p147
      %p210 = pneg %p144
      %s211 = smul.u32 2, %s16
      %p212 = scmp.lt.s32.totalorder %s211, 3
      %s213 = scalar_select %p212, %s211, 3
      %s214 = smul.addr %s213, 8
      %s215 = scalar_lea.vmem %s5, %s214
      %s216 = smul.u32 2, %s16
      %p217 = scmp.lt.s32.totalorder %s216, 3
      %s218 = scalar_select %p217, %s216, 3
      %s219 = smul.addr %s218, 4
      %s220 = scalar_lea.vmem %s0, %s219
      %s221 = smul.u32 2, %s16
      %s222 = smul.u32 2, %s16
      %p223 = scmp.lt.s32.totalorder %s222, 3
      %s224 = scalar_select %p223, %s222, 3
      %s225 = smul.addr %s224, 8
      %s226 = scalar_lea.vmem %s5, %s225
      %s227 = smul.u32 2, %s16
      %v229 = vld [vmem:[%s220] sm:$0xf]
      %v230 = vld [vmem:[%s220 + $0x4] sm:$0xf]
      %v231 = vld [vmem:[%s1] sm:$0xf]
      %v232 = vld [vmem:[%s1 + $0x4] sm:$0xf]
      %v233 = vld [vmem:[%s1 + $0x8] sm:$0xf]
      %v234 = vld [vmem:[%s1 + $0xc] sm:$0xf]
      %v235 = vld [vmem:[%s1 + $0x10] sm:$0xf]
      %v236 = vld [vmem:[%s1 + $0x14] sm:$0xf]
      %v237 = vld [vmem:[%s1 + $0x18] sm:$0xf]
      %v238 = vld [vmem:[%s1 + $0x1c] sm:$0xf]
      %v239 = vld [vmem:[%s1 + $0x20] sm:$0xf]
      %v240 = vld [vmem:[%s1 + $0x24] sm:$0xf]
      %v241 = vld [vmem:[%s1 + $0x28] sm:$0xf]
      %v242 = vld [vmem:[%s1 + $0x2c] sm:$0xf]
      %v243 = vld [vmem:[%s1 + $0x30] sm:$0xf]
      %v244 = vld [vmem:[%s1 + $0x34] sm:$0xf]
      %v245 = vld [vmem:[%s1 + $0x38] sm:$0xf]
      %v246 = vld [vmem:[%s1 + $0x3c] sm:$0xf]
      %v247 = vld [vmem:[%s2] sm:$0x1]
      %v249 = vlaneseq
      %v250 = vshrl.u32 %v249, 7
      %v251 = vsub.s32 0, %v250
      %v252 = vrot.slane %v247, %v251
      %v256 = vunpack.c.l.b16 %v229
      %v257 = vunpack.c.l.b16 %v230
      %v258 = vpack.c.b16 %v257, %v256
      %v276 = vunpack.c.l.b16 %v231
      %v277 = vunpack.c.l.b16 %v232
      %v278 = vunpack.c.l.b16 %v233
      %v279 = vunpack.c.l.b16 %v234
      %v280 = vunpack.c.l.b16 %v235
      %v281 = vunpack.c.l.b16 %v236
      %v282 = vunpack.c.l.b16 %v237
      %v283 = vunpack.c.l.b16 %v238
      %v284 = vunpack.c.l.b16 %v239
      %v285 = vunpack.c.l.b16 %v240
      %v286 = vunpack.c.l.b16 %v241
      %v287 = vunpack.c.l.b16 %v242
      %v288 = vunpack.c.l.b16 %v243
      %v289 = vunpack.c.l.b16 %v244
      %v290 = vunpack.c.l.b16 %v245
      %v291 = vunpack.c.l.b16 %v246
      %v292 = vpack.c.b16 %v277, %v276
      %v293 = vpack.c.b16 %v279, %v278
      %v294 = vpack.c.b16 %v281, %v280
      %v295 = vpack.c.b16 %v283, %v282
      %v296 = vpack.c.b16 %v285, %v284
      %v297 = vpack.c.b16 %v287, %v286
      %v298 = vpack.c.b16 %v289, %v288
      %v299 = vpack.c.b16 %v291, %v290
      %308 = vmatprep.subr.bf16.mxu0 0
      %309 = vmatpush1.bf16.msra.mxu0 %v292
      %310 = vmatprep.subr.bf16.mxu0 0
      %311 = vmatpush1.bf16.msra.mxu0 %v293
      %312 = vmatprep.subr.bf16.mxu0 0
      %313 = vmatpush1.bf16.msra.mxu0 %v294
      %314 = vmatprep.subr.bf16.mxu0 0
      %315 = vmatpush1.bf16.msra.mxu0 %v295
      %316 = vmatprep.subr.bf16.mxu0 0
      %317 = vmatpush1.bf16.msra.mxu0 %v296
      %318 = vmatprep.subr.bf16.mxu0 0
      %319 = vmatpush1.bf16.msra.mxu0 %v297
      %320 = vmatprep.subr.bf16.mxu0 0
      %321 = vmatpush1.bf16.msra.mxu0 %v298
      %322 = vmatprep.subr.bf16.mxu0 0
      %323 = vmatpush1.bf16.msra.mxu0 %v299
      %324 = vmatprep.subr.bf16.mxu0 0
      %325 = vmatpush1.bf16.msra.mxu0 0
      %326 = vmatprep.subr.bf16.mxu0 0
      %327 = vmatpush1.bf16.msra.mxu0 0
      %328 = vmatprep.subr.bf16.mxu0 0
      %329 = vmatpush1.bf16.msra.mxu0 0
      %330 = vmatprep.subr.bf16.mxu0 0
      %331 = vmatpush1.bf16.msra.mxu0 0
      %332 = vmatprep.subr.bf16.mxu0 0
      %333 = vmatpush1.bf16.msra.mxu0 0
      %334 = vmatprep.subr.bf16.mxu0 0
      %335 = vmatpush1.bf16.msra.mxu0 0
      %336 = vmatprep.subr.bf16.mxu0 0
      %337 = vmatpush1.bf16.msra.mxu0 0
      %338 = vmatprep.subr.bf16.mxu0 0
      %339 = vmatpush1.bf16.msra.mxu0 0
      %340 = vmatprep.mubr.bf16.mxu0 0
      %341 = vmatmul.mubr.bf16.gmra.mrb[0].mxu0 %v258
      %v342 = vpop.f32.mrb[0].mxu0
      %v343 = vadd.f32 %v252, %v342
      %v344 = vpop.f32.mrb[0].mxu0
      %v345 = vpop.f32.mrb[0].mxu0
      %v346 = vadd.f32 %v252, %v345
      %v347 = vpop.f32.mrb[0].mxu0
      %348 = vdwg.mxu0
      %349 = vadd.xlane.f32.xlu0 %v343
      %v350 = vpop.xlane.xlu0 %349
      %351 = vadd.xlane.f32.xlu0 %v346
      %v352 = vpop.xlane.xlu0 %351
      %v353 = vrcp.pop 128.0
      %v354 = vmul.f32 %v350, %v353
      %v355 = vmul.f32 %v352, %v353
      %v356 = vsub.f32 %v343, %v354
      %v357 = vsub.f32 %v346, %v355
      %v358 = vmul.f32 %v356, %v356
      %v359 = vmul.f32 %v357, %v357
      %360 = vadd.xlane.f32.xlu0 %v358
      %v361 = vpop.xlane.xlu0 %360
      %362 = vadd.xlane.f32.xlu0 %v359
      %v363 = vpop.xlane.xlu0 %362
      %v364 = vmul.f32 %v361, %v353
      %v365 = vmul.f32 %v363, %v353
      %v366 = vadd.f32 %v364, 1e-05
      %v367 = vadd.f32 %v365, 1e-05
      %v368 = vrsqrt.pop %v366
      %v369 = vrsqrt.pop %v367
      %v370 = vmul.f32 %v356, %v368
      %v371 = vmul.f32 %v357, %v369
      %v372 = vmax.f32 %v370, 0.0
      %v373 = vmax.f32 %v371, 0.0
      %v374 = vpack.c.bf16 %v373, %v372
      %v375 = vld [vmem:[%s3] sm:$0xf]
      %v376 = vld [vmem:[%s3 + $0x4] sm:$0xf]
      %v377 = vld [vmem:[%s3 + $0x8] sm:$0xf]
      %v378 = vld [vmem:[%s3 + $0xc] sm:$0xf]
      %v379 = vld [vmem:[%s3 + $0x10] sm:$0xf]
      %v380 = vld [vmem:[%s3 + $0x14] sm:$0xf]
      %v381 = vld [vmem:[%s3 + $0x18] sm:$0xf]
      %v382 = vld [vmem:[%s3 + $0x1c] sm:$0xf]
      %v383 = vld [vmem:[%s3 + $0x20] sm:$0xf]
      %v384 = vld [vmem:[%s3 + $0x24] sm:$0xf]
      %v385 = vld [vmem:[%s3 + $0x28] sm:$0xf]
      %v386 = vld [vmem:[%s3 + $0x2c] sm:$0xf]
      %v387 = vld [vmem:[%s3 + $0x30] sm:$0xf]
      %v388 = vld [vmem:[%s3 + $0x34] sm:$0xf]
      %v389 = vld [vmem:[%s3 + $0x38] sm:$0xf]
      %v390 = vld [vmem:[%s3 + $0x3c] sm:$0xf]
      %v391 = vld [vmem:[%s4] sm:$0x1]
      %v393 = vlaneseq
      %v394 = vshrl.u32 %v393, 7
      %v395 = vsub.s32 0, %v394
      %v396 = vrot.slane %v391, %v395
      %v414 = vunpack.c.l.b16 %v375
      %v415 = vunpack.c.l.b16 %v376
      %v416 = vunpack.c.l.b16 %v377
      %v417 = vunpack.c.l.b16 %v378
      %v418 = vunpack.c.l.b16 %v379
      %v419 = vunpack.c.l.b16 %v380
      %v420 = vunpack.c.l.b16 %v381
      %v421 = vunpack.c.l.b16 %v382
      %v422 = vunpack.c.l.b16 %v383
      %v423 = vunpack.c.l.b16 %v384
      %v424 = vunpack.c.l.b16 %v385
      %v425 = vunpack.c.l.b16 %v386
      %v426 = vunpack.c.l.b16 %v387
      %v427 = vunpack.c.l.b16 %v388
      %v428 = vunpack.c.l.b16 %v389
      %v429 = vunpack.c.l.b16 %v390
      %v430 = vpack.c.b16 %v415, %v414
      %v431 = vpack.c.b16 %v417, %v416
      %v432 = vpack.c.b16 %v419, %v418
      %v433 = vpack.c.b16 %v421, %v420
      %v434 = vpack.c.b16 %v423, %v422
      %v435 = vpack.c.b16 %v425, %v424
      %v436 = vpack.c.b16 %v427, %v426
      %v437 = vpack.c.b16 %v429, %v428
      %446 = vmatprep.subr.bf16.mxu0 0
      %447 = vmatpush1.bf16.msra.mxu0 %v430
      %448 = vmatprep.subr.bf16.mxu0 0
      %449 = vmatpush1.bf16.msra.mxu0 %v431
      %450 = vmatprep.subr.bf16.mxu0 0
      %451 = vmatpush1.bf16.msra.mxu0 %v432
      %452 = vmatprep.subr.bf16.mxu0 0
      %453 = vmatpush1.bf16.msra.mxu0 %v433
      %454 = vmatprep.subr.bf16.mxu0 0
      %455 = vmatpush1.bf16.msra.mxu0 %v434
      %456 = vmatprep.subr.bf16.mxu0 0
      %457 = vmatpush1.bf16.msra.mxu0 %v435
      %458 = vmatprep.subr.bf16.mxu0 0
      %459 = vmatpush1.bf16.msra.mxu0 %v436
      %460 = vmatprep.subr.bf16.mxu0 0
      %461 = vmatpush1.bf16.msra.mxu0 %v437
      %462 = vmatprep.subr.bf16.mxu0 0
      %463 = vmatpush1.bf16.msra.mxu0 0
      %464 = vmatprep.subr.bf16.mxu0 0
      %465 = vmatpush1.bf16.msra.mxu0 0
      %466 = vmatprep.subr.bf16.mxu0 0
      %467 = vmatpush1.bf16.msra.mxu0 0
      %468 = vmatprep.subr.bf16.mxu0 0
      %469 = vmatpush1.bf16.msra.mxu0 0
      %470 = vmatprep.subr.bf16.mxu0 0
      %471 = vmatpush1.bf16.msra.mxu0 0
      %472 = vmatprep.subr.bf16.mxu0 0
      %473 = vmatpush1.bf16.msra.mxu0 0
      %474 = vmatprep.subr.bf16.mxu0 0
      %475 = vmatpush1.bf16.msra.mxu0 0
      %476 = vmatprep.subr.bf16.mxu0 0
      %477 = vmatpush1.bf16.msra.mxu0 0
      %478 = vmatprep.mubr.bf16.mxu0 0
      %479 = vmatmul.mubr.bf16.gmra.mrb[0].mxu0 %v374
      %v480 = vpop.f32.mrb[0].mxu0
      %v481 = vadd.f32 %v396, %v480
      %v482 = vpop.f32.mrb[0].mxu0
      %v483 = vpop.f32.mrb[0].mxu0
      %v484 = vadd.f32 %v396, %v483
      %v485 = vpop.f32.mrb[0].mxu0
      %486 = vdwg.mxu0
      %487 = vst [vmem:[%s226] sm:$0xff] %v481
      %488 = vst [vmem:[%s226 + $0x8] sm:$0xff] %v484
      %s489 = smul.u32 2, %s16
      %p490 = scmp.lt.s32.totalorder %s489, 3
      %s491 = scalar_select %p490, %s489, 3
      %s492 = smul.addr %s491, 8
      %s493 = scalar_lea.vmem %s5, %s492
      // Predicated region
      $region41: #{forward.7} parent=39 // pred_check
        %p494 = pneg %p144
      $region42: #{forward.7} parent=39 // pred_check_branch
        %496 = sbr.rel (%p494) target = $region44
      $region43: #{forward.7} parent=39 // pred_region
        %s497 = smul.u32 2, %s16
      $region44: #{forward.7} parent=39 // pred_fallthru
        _
    $region40: #{forward.7} parent=5 // pred_fallthru
      _
    %p498 = scmp.le.s32.totalorder 2, %s11
    // Predicated region
    $region45: #{forward.7} parent=5 // pred_check
      %p499 = pneg %p498
    $region46: #{forward.7} parent=5 // pred_check_branch
      %501 = sbr.rel (%p499) target = $region48
    $region47: #{forward.7} parent=5 // pred_region
      %s502 = ssub.s32 %s11, 2
      // Predicated region
      $region49: #{forward.7} parent=47 // pred_check
        %p503 = pneg %p150
      $region50: #{forward.7} parent=47 // pred_check_branch
        %505 = sbr.rel (%p503) target = $region52
      $region51: #{forward.7} parent=47 // pred_region
        %s506 = smul.u32 2, %s17
        %p507 = scmp.lt.s32.totalorder %s506, 3
        %s508 = scalar_select %p507, %s506, 3
        %s509 = smul.addr %s508, 8
        %s510 = scalar_lea.vmem %s5, %s509
      $region52: #{forward.7} parent=47 // pred_fallthru
        _
    $region48: #{forward.7} parent=5 // pred_fallthru
      _
  $region6: #{forward.7} parent=0 // loop_footer
    %s15 = sadd.s32 1, %s11
  $region7: #{forward.7} parent=0 // loop_footer_branch
    %10 = sbr.rel target = $region3
  $region8: #{forward.7} parent=0 // loop_exit
    _

// kernel: forward.4
$region0: #{forward.4}
  #allocation0 [shape = 'u32[]', space=smem, size = 0x4, offset = 0x4, fixed_abs, tag = 'smem constant byte address 0x4 - core index']
  #allocation1 [shape = 'u32[144,128]{1,0:T(1,128)}', space=vmem, size = 0x12000, scoped, tag = 'internal scratch']
  %s0 = inlined_call_operand.hbm [shape: f32[32,256], index: 0, kind: input, shape index: {}]
  %s1 = inlined_call_operand.vmem [shape: bf16[256,128], index: 1, kind: input, shape index: {}]
  %s2 = inlined_call_operand.vmem [shape: f32[1,128], index: 2, kind: input, shape index: {}]
  %s3 = inlined_call_operand.vmem [shape: bf16[128,64], index: 3, kind: input, shape index: {}]
  %s4 = inlined_call_operand.vmem [shape: f32[1,64], index: 4, kind: input, shape index: {}]
  %s5 = inlined_call_operand.hbm [shape: bf16[64,64], index: 5, kind: input, shape index: {}]
  %s6 = inlined_call_operand.vmem [shape: f32[1,64], index: 6, kind: input, shape index: {}]
  %s7 = inlined_call_operand.vmem [shape: bf16[32,64], index: 7, kind: output, shape index: {}]
  %s8 = sld [smem:[#allocation0]]
  $region69: #{forward.4} parent=0
    _
  %s10 = ssub.s32 1, %s8
  %s11 = scalar_select 0, %s10, %s8
  $region1: #{forward.4} parent=0
    #allocation2 [shape = 'u8[32768]{0}', space=vmem, size = 0x8000, scoped, tag = 'input window, operand 0']
    #allocation3 [shape = 's32[2]{0}', space=sflag, size = 0x8, scoped, tag = 'scoped memory for forward.4']
    #allocation4 [shape = 'u8[16384]{0}', space=vmem, size = 0x4000, scoped, tag = 'input window, operand 5, single buffered']
    #allocation5 [shape = 's32[1]{0}', space=sflag, size = 0x4, scoped, tag = 'scoped memory for forward.4']
    %12 = vsyncpa [#allocation3], 0
    %s13 = scalar_lea.sflag [#allocation3], 1
    %14 = vsyncpa %s13, 0
    %15 = vsyncpa [#allocation5], 0
    loop: start=0, step=1, limit=4
    $region2: #{forward.4} parent=1 // loop_pre_header
      _
    $region3: #{forward.4} parent=1 // loop_header
      %s17 = sphi 0, %s21
      %p18 = scmp.ge.s32.totalorder %s17, 4
      %s27 = sphi 0, %s29
      %s30 = sphi 0, %s27
      %s31 = sphi 0, %s30
      %s47 = sphi 0, %s31
      %s51 = sphi 0, %s51
      %s53 = sphi 0, %s51
      %s54 = sphi 0, %s53
      %s68 = sphi 0, %s54
      %s72 = sphi 0, %s72
      %s74 = sphi 0, %s72
      %s75 = sphi 0, %s74
      %s89 = sphi 0, %s75
      %s93 = sphi 0, %s93
      %s95 = sphi 0, %s93
      %s96 = sphi 0, %s95
      %s110 = sphi 0, %s96
      %s114 = sphi 0, %s114
      %s116 = sphi 0, %s114
      %s117 = sphi 0, %s116
      %s131 = sphi 0, %s117
      %s135 = sphi 0, %s135
      %s137 = sphi 0, %s135
      %s138 = sphi 0, %s137
      %s152 = sphi 0, %s138
      %s156 = sphi 0, %s156
      %s158 = sphi 0, %s156
      %s159 = sphi 0, %s158
      %s173 = sphi 0, %s159
      %s179 = sphi 0, %s181
      %s182 = sphi 0, %s179
      %s183 = sphi 0, %s182
      %s199 = sphi 0, %s183
    $region4: #{forward.4} parent=1 // loop_header_branch
      %20 = sbr.rel (%p18) target = $region8
    $region5: #{forward.4} parent=1 // loop_body
      %s22 = ssub.s32 %s17, 1
      %s23 = ssub.s32 %s17, 2
      %s24 = sadd.s32 %s17, 1
      %s25 = ssub.s32 %s17, %s24
      %p26 = scmp.eq.s32.totalorder %s25, 0
      %s28 = sadd.s32 %s27, 1
      %s29 = scalar_select %p26, %s27, %s28
      %p32 = pneg %p26
      %p33 = scmp.eq.s32.totalorder %s17, 1
      %p34 = por %p32, %p33
      %p35 = scmp.ne.s32.totalorder %s27, %s30
      %p36 = scmp.eq.s32.totalorder %s17, 0
      %p37 = por %p35, %p36
      %p38 = scmp.ne.s32.totalorder %s27, %s30
      %p39 = scmp.eq.s32.totalorder %s22, 1
      %p40 = por %p38, %p39
      %p41 = scmp.ne.s32.totalorder %s30, %s31
      %p42 = scmp.eq.s32.totalorder %s22, 0
      %p43 = por %p41, %p42
      %p44 = scmp.ne.s32.totalorder %s30, %s31
      %p45 = scmp.eq.s32.totalorder %s23, 1
      %p46 = por %p44, %p45
      %p48 = scmp.ne.s32.totalorder %s31, %s47
      %p49 = scmp.eq.s32.totalorder %s23, 0
      %p50 = por %p48, %p49
      %s52 = sadd.s32 %s51, 1
      %p55 = scmp.eq.s32.totalorder %s17, 1
      %p56 = scmp.ne.s32.totalorder %s51, %s53
      %p57 = scmp.eq.s32.totalorder %s17, 0
      %p58 = por %p56, %p57
      %p59 = scmp.ne.s32.totalorder %s51, %s53
      %p60 = scmp.eq.s32.totalorder %s22, 1
      %p61 = por %p59, %p60
      %p62 = scmp.ne.s32.totalorder %s53, %s54
      %p63 = scmp.eq.s32.totalorder %s22, 0
      %p64 = por %p62, %p63
      %p65 = scmp.ne.s32.totalorder %s53, %s54
      %p66 = scmp.eq.s32.totalorder %s23, 1
      %p67 = por %p65, %p66
      %p69 = scmp.ne.s32.totalorder %s54, %s68
      %p70 = scmp.eq.s32.totalorder %s23, 0
      %p71 = por %p69, %p70
      %s73 = sadd.s32 %s72, 1
      %p76 = scmp.eq.s32.totalorder %s17, 1
      %p77 = scmp.ne.s32.totalorder %s72, %s74
      %p78 = scmp.eq.s32.totalorder %s17, 0
      %p79 = por %p77, %p78
      %p80 = scmp.ne.s32.totalorder %s72, %s74
      %p81 = scmp.eq.s32.totalorder %s22, 1
      %p82 = por %p80, %p81
      %p83 = scmp.ne.s32.totalorder %s74, %s75
      %p84 = scmp.eq.s32.totalorder %s22, 0
      %p85 = por %p83, %p84
      %p86 = scmp.ne.s32.totalorder %s74, %s75
      %p87 = scmp.eq.s32.totalorder %s23, 1
      %p88 = por %p86, %p87
      %p90 = scmp.ne.s32.totalorder %s75, %s89
      %p91 = scmp.eq.s32.totalorder %s23, 0
      %p92 = por %p90, %p91
      %s94 = sadd.s32 %s93, 1
      %p97 = scmp.eq.s32.totalorder %s17, 1
      %p98 = scmp.ne.s32.totalorder %s93, %s95
      %p99 = scmp.eq.s32.totalorder %s17, 0
      %p100 = por %p98, %p99
      %p101 = scmp.ne.s32.totalorder %s93, %s95
      %p102 = scmp.eq.s32.totalorder %s22, 1
      %p103 = por %p101, %p102
      %p104 = scmp.ne.s32.totalorder %s95, %s96
      %p105 = scmp.eq.s32.totalorder %s22, 0
      %p106 = por %p104, %p105
      %p107 = scmp.ne.s32.totalorder %s95, %s96
      %p108 = scmp.eq.s32.totalorder %s23, 1
      %p109 = por %p107, %p108
      %p111 = scmp.ne.s32.totalorder %s96, %s110
      %p112 = scmp.eq.s32.totalorder %s23, 0
      %p113 = por %p111, %p112
      %s115 = sadd.s32 %s114, 1
      %p118 = scmp.eq.s32.totalorder %s17, 1
      %p119 = scmp.ne.s32.totalorder %s114, %s116
      %p120 = scmp.eq.s32.totalorder %s17, 0
      %p121 = por %p119, %p120
      %p122 = scmp.ne.s32.totalorder %s114, %s116
      %p123 = scmp.eq.s32.totalorder %s22, 1
      %p124 = por %p122, %p123
      %p125 = scmp.ne.s32.totalorder %s116, %s117
      %p126 = scmp.eq.s32.totalorder %s22, 0
      %p127 = por %p125, %p126
      %p128 = scmp.ne.s32.totalorder %s116, %s117
      %p129 = scmp.eq.s32.totalorder %s23, 1
      %p130 = por %p128, %p129
      %p132 = scmp.ne.s32.totalorder %s117, %s131
      %p133 = scmp.eq.s32.totalorder %s23, 0
      %p134 = por %p132, %p133
      %s136 = sadd.s32 %s135, 1
      %p139 = scmp.eq.s32.totalorder %s17, 1
      %p140 = scmp.ne.s32.totalorder %s135, %s137
      %p141 = scmp.eq.s32.totalorder %s17, 0
      %p142 = por %p140, %p141
      %p143 = scmp.ne.s32.totalorder %s135, %s137
      %p144 = scmp.eq.s32.totalorder %s22, 1
      %p145 = por %p143, %p144
      %p146 = scmp.ne.s32.totalorder %s137, %s138
      %p147 = scmp.eq.s32.totalorder %s22, 0
      %p148 = por %p146, %p147
      %p149 = scmp.ne.s32.totalorder %s137, %s138
      %p150 = scmp.eq.s32.totalorder %s23, 1
      %p151 = por %p149, %p150
      %p153 = scmp.ne.s32.totalorder %s138, %s152
      %p154 = scmp.eq.s32.totalorder %s23, 0
      %p155 = por %p153, %p154
      %s157 = sadd.s32 %s156, 1
      %p160 = scmp.eq.s32.totalorder %s17, 1
      %p161 = scmp.ne.s32.totalorder %s156, %s158
      %p162 = scmp.eq.s32.totalorder %s17, 0
      %p163 = por %p161, %p162
      %p164 = scmp.ne.s32.totalorder %s156, %s158
      %p165 = scmp.eq.s32.totalorder %s22, 1
      %p166 = por %p164, %p165
      %p167 = scmp.ne.s32.totalorder %s158, %s159
      %p168 = scmp.eq.s32.totalorder %s22, 0
      %p169 = por %p167, %p168
      %p170 = scmp.ne.s32.totalorder %s158, %s159
      %p171 = scmp.eq.s32.totalorder %s23, 1
      %p172 = por %p170, %p171
      %p174 = scmp.ne.s32.totalorder %s159, %s173
      %p175 = scmp.eq.s32.totalorder %s23, 0
      %p176 = por %p174, %p175
      %s177 = ssub.s32 %s17, %s24
      %p178 = scmp.eq.s32.totalorder %s177, 0
      %s180 = sadd.s32 %s179, 1
      %s181 = scalar_select %p178, %s179, %s180
      %p184 = pneg %p178
      %p185 = scmp.eq.s32.totalorder %s17, 1
      %p186 = por %p184, %p185
      %p187 = scmp.ne.s32.totalorder %s179, %s182
      %p188 = scmp.eq.s32.totalorder %s17, 0
      %p189 = por %p187, %p188
      %p190 = scmp.ne.s32.totalorder %s179, %s182
      %p191 = scmp.eq.s32.totalorder %s22, 1
      %p192 = por %p190, %p191
      %p193 = scmp.ne.s32.totalorder %s182, %s183
      %p194 = scmp.eq.s32.totalorder %s22, 0
      %p195 = por %p193, %p194
      %p196 = scmp.ne.s32.totalorder %s182, %s183
      %p197 = scmp.eq.s32.totalorder %s23, 1
      %p198 = por %p196, %p197
      %p200 = scmp.ne.s32.totalorder %s183, %s199
      %p201 = scmp.eq.s32.totalorder %s23, 0
      %p202 = por %p200, %p201
      %p203 = scmp.le.s32.totalorder 1, %s17
      %p204 = scmp.lt.s32.totalorder %s17, 3
      %p205 = pnand %p203, %p204
      %p206 = pneg %p205
      // Predicated region
      $region9: #{forward.4} parent=5 // pred_check
        _
      $region10: #{forward.4} parent=5 // pred_check_branch
        %208 = sbr.rel (%p205) target = $region12
      $region11: #{forward.4} parent=5 // pred_region
        %s209 = ssub.s32 %s17, 1
        // Predicated region
        $region13: #{forward.4} parent=11 // pred_check
          %p210 = pneg %p64
        $region14: #{forward.4} parent=11 // pred_check_branch
          %212 = sbr.rel (%p210) target = $region16
        $region15: #{forward.4} parent=11 // pred_region
          _
        $region16: #{forward.4} parent=11 // pred_fallthru
          _
        // Predicated region
        $region17: #{forward.4} parent=11 // pred_check
          %p213 = pneg %p85
        $region18: #{forward.4} parent=11 // pred_check_branch
          %215 = sbr.rel (%p213) target = $region20
        $region19: #{forward.4} parent=11 // pred_region
          _
        $region20: #{forward.4} parent=11 // pred_fallthru
          _
        // Predicated region
        $region21: #{forward.4} parent=11 // pred_check
          %p216 = pneg %p106
        $region22: #{forward.4} parent=11 // pred_check_branch
          %218 = sbr.rel (%p216) target = $region24
        $region23: #{forward.4} parent=11 // pred_region
          _
        $region24: #{forward.4} parent=11 // pred_fallthru
          _
        // Predicated region
        $region25: #{forward.4} parent=11 // pred_check
          %p219 = pneg %p127
        $region26: #{forward.4} parent=11 // pred_check_branch
          %221 = sbr.rel (%p219) target = $region28
        $region27: #{forward.4} parent=11 // pred_region
          _
        $region28: #{forward.4} parent=11 // pred_fallthru
          _
        // Predicated region
        $region29: #{forward.4} parent=11 // pred_check
          %p222 = pneg %p148
        $region30: #{forward.4} parent=11 // pred_check_branch
          %224 = sbr.rel (%p222) target = $region32
        $region31: #{forward.4} parent=11 // pred_region
          %s226 = ssub.s32 512, 512
          %227 = vsyncadd [#allocation5], %s226
          %s228 = sshll.u32 [#allocation4], 4
          %s229 = int_to_ptr.vmem [resolvable:$true] %s228
          %234 = dma.hbm_to_vmem [thread:$0]  %s5, 512, %s229, [#allocation5], 64, 64, 4
        $region32: #{forward.4} parent=11 // pred_fallthru
          _
        // Predicated region
        $region33: #{forward.4} parent=11 // pred_check
          %p235 = pneg %p169
        $region34: #{forward.4} parent=11 // pred_check_branch
          %237 = sbr.rel (%p235) target = $region36
        $region35: #{forward.4} parent=11 // pred_region
          _
        $region36: #{forward.4} parent=11 // pred_fallthru
          _
      $region12: #{forward.4} parent=5 // pred_fallthru
        _
      %p238 = scmp.lt.s32.totalorder %s17, 2
      // Predicated region
      $region37: #{forward.4} parent=5 // pred_check
        %p239 = pneg %p238
      $region38: #{forward.4} parent=5 // pred_check_branch
        %241 = sbr.rel (%p239) target = $region40
      $region39: #{forward.4} parent=5 // pred_region
        // Predicated region
        $region41: #{forward.4} parent=39 // pred_check
          %p242 = pneg %p37
        $region42: #{forward.4} parent=39 // pred_check_branch
          %244 = sbr.rel (%p242) target = $region44
        $region43: #{forward.4} parent=39 // pred_region
          %s245 = sand.u32 %s27, 1
          %s246 = scalar_lea.sflag [#allocation3], %s245
          %s247 = sand.u32 %s27, 1
          %s248 = smul.addr %s247, 32
          %s249 = scalar_lea.vmem [#allocation2], %s248
          %s250 = smul.u32 2, %s17
          %s252 = ssub.s32 512, 512
          %253 = vsyncadd %s246, %s252
          %s254 = smul.addr %s250, 2
          %s255 = smul.addr %s254, 128
          %s256 = scalar_lea.hbm %s0, %s255
          %s257 = sshll.u32 %s249, 4
          %s258 = int_to_ptr.vmem [resolvable:$true] %s257
          %263 = dma.hbm_to_vmem [thread:$0]  %s256, 512, %s258, %s246, 256, 256, 16
        $region44: #{forward.4} parent=39 // pred_fallthru
          _
      $region40: #{forward.4} parent=5 // pred_fallthru
        _
      %p264 = scmp.le.s32.totalorder 1, %s17
      %p265 = scmp.lt.s32.totalorder %s17, 3
      %p266 = pnand %p264, %p265
      %p267 = pneg %p266
      // Predicated region
      $region45: #{forward.4} parent=5 // pred_check
        _
      $region46: #{forward.4} parent=5 // pred_check_branch
        %269 = sbr.rel (%p266) target = $region48
      $region47: #{forward.4} parent=5 // pred_region
        %s270 = ssub.s32 %s17, 1
        %s271 = sand.u32 %s30, 1
        %s272 = scalar_lea.sflag [#allocation3], %s271
        %s273 = sand.u32 %s30, 1
        %s274 = smul.addr %s273, 32
        %s275 = scalar_lea.vmem [#allocation2], %s274
        // Predicated region
        $region49: #{forward.4} parent=47 // pred_check
          %p276 = pneg %p43
        $region50: #{forward.4} parent=47 // pred_check_branch
          %278 = sbr.rel (%p276) target = $region52
        $region51: #{forward.4} parent=47 // pred_region
          %279 = dma.done %s272, 512
        $region52: #{forward.4} parent=47 // pred_fallthru
          _
        // Predicated region
        $region53: #{forward.4} parent=47 // pred_check
          %p280 = pneg %p148
        $region54: #{forward.4} parent=47 // pred_check_branch
          %282 = sbr.rel (%p280) target = $region56
        $region55: #{forward.4} parent=47 // pred_region
          %283 = dma.done [#allocation5], 512
        $region56: #{forward.4} parent=47 // pred_fallthru
          _
        %s284 = sand.u32 %s30, 1
        %s285 = scalar_lea.sflag [#allocation3], %s284
        %s286 = sand.u32 %s30, 1
        %s287 = smul.addr %s286, 32
        %s288 = scalar_lea.vmem [#allocation2], %s287
        %p289 = pneg %p43
        %p290 = pneg %p40
        %p291 = pneg %p64
        %p292 = pneg %p61
        %p293 = pneg %p85
        %p294 = pneg %p82
        %p295 = pneg %p106
        %p296 = pneg %p103
        %p297 = pneg %p127
        %p298 = pneg %p124
        %p299 = pneg %p148
        %p300 = pneg %p145
        %p301 = pneg %p169
        %p302 = pneg %p166
        %p303 = pneg %p195
        %p304 = pneg %p192
        %s305 = smul.u32 2, %s22
        %p306 = scmp.lt.s32.totalorder %s305, 3
        %s307 = scalar_select %p306, %s305, 3
        %s308 = smul.addr %s307, 4
        %s309 = scalar_lea.vmem %s7, %s308
        %s310 = smul.u32 2, %s22
        %s311 = smul.u32 2, %s22
        %p312 = scmp.lt.s32.totalorder %s311, 3
        %s313 = scalar_select %p312, %s311, 3
        %s314 = smul.addr %s313, 4
        %s315 = scalar_lea.vmem %s7, %s314
        %s316 = smul.u32 2, %s22
        %v318 = vld [vmem:[%s275] sm:$0xff]
        %v319 = vld [vmem:[%s275 + $0x8] sm:$0xff]
        %v320 = vld [vmem:[%s275 + $0x10] sm:$0xff]
        %v321 = vld [vmem:[%s275 + $0x18] sm:$0xff]
        %v322 = vpack.c.bf16 %v320, %v318
        %v323 = vpack.c.bf16 %v321, %v319
        %v324 = vld [vmem:[%s1] sm:$0xf]
        %v325 = vld [vmem:[%s1 + $0x4] sm:$0xf]
        %v326 = vld [vmem:[%s1 + $0x8] sm:$0xf]
        %v327 = vld [vmem:[%s1 + $0xc] sm:$0xf]
        %v328 = vld [vmem:[%s1 + $0x10] sm:$0xf]
        %v329 = vld [vmem:[%s1 + $0x14] sm:$0xf]
        %v330 = vld [vmem:[%s1 + $0x18] sm:$0xf]
        %v331 = vld [vmem:[%s1 + $0x1c] sm:$0xf]
        %v332 = vld [vmem:[%s1 + $0x20] sm:$0xf]
        %v333 = vld [vmem:[%s1 + $0x24] sm:$0xf]
        %v334 = vld [vmem:[%s1 + $0x28] sm:$0xf]
        %v335 = vld [vmem:[%s1 + $0x2c] sm:$0xf]
        %v336 = vld [vmem:[%s1 + $0x30] sm:$0xf]
        %v337 = vld [vmem:[%s1 + $0x34] sm:$0xf]
        %v338 = vld [vmem:[%s1 + $0x38] sm:$0xf]
        %v339 = vld [vmem:[%s1 + $0x3c] sm:$0xf]
        %v340 = vld [vmem:[%s1 + $0x40] sm:$0xf]
        %v341 = vld [vmem:[%s1 + $0x44] sm:$0xf]
        %v342 = vld [vmem:[%s1 + $0x48] sm:$0xf]
        %v343 = vld [vmem:[%s1 + $0x4c] sm:$0xf]
        %v344 = vld [vmem:[%s1 + $0x50] sm:$0xf]
        %v345 = vld [vmem:[%s1 + $0x54] sm:$0xf]
        %v346 = vld [vmem:[%s1 + $0x58] sm:$0xf]
        %v347 = vld [vmem:[%s1 + $0x5c] sm:$0xf]
        %v348 = vld [vmem:[%s1 + $0x60] sm:$0xf]
        %v349 = vld [vmem:[%s1 + $0x64] sm:$0xf]
        %v350 = vld [vmem:[%s1 + $0x68] sm:$0xf]
        %v351 = vld [vmem:[%s1 + $0x6c] sm:$0xf]
        %v352 = vld [vmem:[%s1 + $0x70] sm:$0xf]
        %v353 = vld [vmem:[%s1 + $0x74] sm:$0xf]
        %v354 = vld [vmem:[%s1 + $0x78] sm:$0xf]
        %v355 = vld [vmem:[%s1 + $0x7c] sm:$0xf]
        %v356 = vld [vmem:[%s2] sm:$0x1]
        %v358 = vlaneseq
        %v359 = vshrl.u32 %v358, 7
        %v360 = vsub.s32 0, %v359
        %v361 = vrot.slane %v356, %v360
        %v395 = vunpack.c.l.b16 %v324
        %v396 = vunpack.c.l.b16 %v325
        %v397 = vunpack.c.l.b16 %v326
        %v398 = vunpack.c.l.b16 %v327
        %v399 = vunpack.c.l.b16 %v328
        %v400 = vunpack.c.l.b16 %v329
        %v401 = vunpack.c.l.b16 %v330
        %v402 = vunpack.c.l.b16 %v331
        %v403 = vunpack.c.l.b16 %v332
        %v404 = vunpack.c.l.b16 %v333
        %v405 = vunpack.c.l.b16 %v334
        %v406 = vunpack.c.l.b16 %v335
        %v407 = vunpack.c.l.b16 %v336
        %v408 = vunpack.c.l.b16 %v337
        %v409 = vunpack.c.l.b16 %v338
        %v410 = vunpack.c.l.b16 %v339
        %v411 = vunpack.c.l.b16 %v340
        %v412 = vunpack.c.l.b16 %v341
        %v413 = vunpack.c.l.b16 %v342
        %v414 = vunpack.c.l.b16 %v343
        %v415 = vunpack.c.l.b16 %v344
        %v416 = vunpack.c.l.b16 %v345
        %v417 = vunpack.c.l.b16 %v346
        %v418 = vunpack.c.l.b16 %v347
        %v419 = vunpack.c.l.b16 %v348
        %v420 = vunpack.c.l.b16 %v349
        %v421 = vunpack.c.l.b16 %v350
        %v422 = vunpack.c.l.b16 %v351
        %v423 = vunpack.c.l.b16 %v352
        %v424 = vunpack.c.l.b16 %v353
        %v425 = vunpack.c.l.b16 %v354
        %v426 = vunpack.c.l.b16 %v355
        %v427 = vpack.c.b16 %v396, %v395
        %v428 = vpack.c.b16 %v398, %v397
        %v429 = vpack.c.b16 %v400, %v399
        %v430 = vpack.c.b16 %v402, %v401
        %v431 = vpack.c.b16 %v404, %v403
        %v432 = vpack.c.b16 %v406, %v405
        %v433 = vpack.c.b16 %v408, %v407
        %v434 = vpack.c.b16 %v410, %v409
        %v435 = vpack.c.b16 %v412, %v411
        %v436 = vpack.c.b16 %v414, %v413
        %v437 = vpack.c.b16 %v416, %v415
        %v438 = vpack.c.b16 %v418, %v417
        %v439 = vpack.c.b16 %v420, %v419
        %v440 = vpack.c.b16 %v422, %v421
        %v441 = vpack.c.b16 %v424, %v423
        %v442 = vpack.c.b16 %v426, %v425
        %459 = vmatprep.subr.bf16.mxu0 0
        %460 = vmatpush1.bf16.msra.mxu0 %v427
        %461 = vmatprep.subr.bf16.mxu0 0
        %462 = vmatpush1.bf16.msra.mxu0 %v428
        %463 = vmatprep.subr.bf16.mxu0 0
        %464 = vmatpush1.bf16.msra.mxu0 %v429
        %465 = vmatprep.subr.bf16.mxu0 0
        %466 = vmatpush1.bf16.msra.mxu0 %v430
        %467 = vmatprep.subr.bf16.mxu0 0
        %468 = vmatpush1.bf16.msra.mxu0 %v431
        %469 = vmatprep.subr.bf16.mxu0 0
        %470 = vmatpush1.bf16.msra.mxu0 %v432
        %471 = vmatprep.subr.bf16.mxu0 0
        %472 = vmatpush1.bf16.msra.mxu0 %v433
        %473 = vmatprep.subr.bf16.mxu0 0
        %474 = vmatpush1.bf16.msra.mxu0 %v434
        %475 = vmatprep.subr.bf16.mxu0 0
        %476 = vmatpush1.bf16.msra.mxu0 %v435
        %477 = vmatprep.subr.bf16.mxu0 0
        %478 = vmatpush1.bf16.msra.mxu0 %v436
        %479 = vmatprep.subr.bf16.mxu0 0
        %480 = vmatpush1.bf16.msra.mxu0 %v437
        %481 = vmatprep.subr.bf16.mxu0 0
        %482 = vmatpush1.bf16.msra.mxu0 %v438
        %483 = vmatprep.subr.bf16.mxu0 0
        %484 = vmatpush1.bf16.msra.mxu0 %v439
        %485 = vmatprep.subr.bf16.mxu0 0
        %486 = vmatpush1.bf16.msra.mxu0 %v440
        %487 = vmatprep.subr.bf16.mxu0 0
        %488 = vmatpush1.bf16.msra.mxu0 %v441
        %489 = vmatprep.subr.bf16.mxu0 0
        %490 = vmatpush1.bf16.msra.mxu0 %v442
        %491 = vmatprep.mubr.bf16.mxu0 %v323
        %492 = vmatmul.mubr.bf16.gmra.mrb[0].mxu0 %v322
        %v493 = vpop.f32.mrb[0].mxu0
        %v494 = vadd.f32 %v361, %v493
        %v495 = vpop.f32.mrb[0].mxu0
        %v496 = vpop.f32.mrb[0].mxu0
        %v497 = vadd.f32 %v361, %v496
        %v498 = vpop.f32.mrb[0].mxu0
        %499 = vdwg.mxu0
        %500 = vadd.xlane.f32.xlu0 %v494
        %v501 = vpop.xlane.xlu0 %500
        %502 = vadd.xlane.f32.xlu0 %v497
        %v503 = vpop.xlane.xlu0 %502
        %v504 = vrcp.pop 128.0
        %v505 = vmul.f32 %v501, %v504
        %v506 = vmul.f32 %v503, %v504
        %v507 = vsub.f32 %v494, %v505
        %v508 = vsub.f32 %v497, %v506
        %v509 = vmul.f32 %v507, %v507
        %v510 = vmul.f32 %v508, %v508
        %511 = vadd.xlane.f32.xlu0 %v509
        %v512 = vpop.xlane.xlu0 %511
        %513 = vadd.xlane.f32.xlu0 %v510
        %v514 = vpop.xlane.xlu0 %513
        %v515 = vmul.f32 %v512, %v504
        %v516 = vmul.f32 %v514, %v504
        %v517 = vadd.f32 %v515, 1e-05
        %v518 = vadd.f32 %v516, 1e-05
        %v519 = vrsqrt.pop %v517
        %v520 = vrsqrt.pop %v518
        %v521 = vmul.f32 %v507, %v519
        %v522 = vmul.f32 %v508, %v520
        %v523 = vmax.f32 %v521, 0.0
        %v524 = vmax.f32 %v522, 0.0
        %v525 = vpack.c.bf16 %v524, %v523
        %v526 = vld [vmem:[%s3] sm:$0xf]
        %v527 = vld [vmem:[%s3 + $0x4] sm:$0xf]
        %v528 = vld [vmem:[%s3 + $0x8] sm:$0xf]
        %v529 = vld [vmem:[%s3 + $0xc] sm:$0xf]
        %v530 = vld [vmem:[%s3 + $0x10] sm:$0xf]
        %v531 = vld [vmem:[%s3 + $0x14] sm:$0xf]
        %v532 = vld [vmem:[%s3 + $0x18] sm:$0xf]
        %v533 = vld [vmem:[%s3 + $0x1c] sm:$0xf]
        %v534 = vld [vmem:[%s3 + $0x20] sm:$0xf]
        %v535 = vld [vmem:[%s3 + $0x24] sm:$0xf]
        %v536 = vld [vmem:[%s3 + $0x28] sm:$0xf]
        %v537 = vld [vmem:[%s3 + $0x2c] sm:$0xf]
        %v538 = vld [vmem:[%s3 + $0x30] sm:$0xf]
        %v539 = vld [vmem:[%s3 + $0x34] sm:$0xf]
        %v540 = vld [vmem:[%s3 + $0x38] sm:$0xf]
        %v541 = vld [vmem:[%s3 + $0x3c] sm:$0xf]
        %v542 = vld [vmem:[%s4] sm:$0x1]
        %v544 = vlaneseq
        %v545 = vshrl.u32 %v544, 7
        %v546 = vsub.s32 0, %v545
        %v547 = vrot.slane %v542, %v546
        %v565 = vunpack.c.l.b16 %v526
        %v566 = vunpack.c.l.b16 %v527
        %v567 = vunpack.c.l.b16 %v528
        %v568 = vunpack.c.l.b16 %v529
        %v569 = vunpack.c.l.b16 %v530
        %v570 = vunpack.c.l.b16 %v531
        %v571 = vunpack.c.l.b16 %v532
        %v572 = vunpack.c.l.b16 %v533
        %v573 = vunpack.c.l.b16 %v534
        %v574 = vunpack.c.l.b16 %v535
        %v575 = vunpack.c.l.b16 %v536
        %v576 = vunpack.c.l.b16 %v537
        %v577 = vunpack.c.l.b16 %v538
        %v578 = vunpack.c.l.b16 %v539
        %v579 = vunpack.c.l.b16 %v540
        %v580 = vunpack.c.l.b16 %v541
        %v581 = vpack.c.b16 %v566, %v565
        %v582 = vpack.c.b16 %v568, %v567
        %v583 = vpack.c.b16 %v570, %v569
        %v584 = vpack.c.b16 %v572, %v571
        %v585 = vpack.c.b16 %v574, %v573
        %v586 = vpack.c.b16 %v576, %v575
        %v587 = vpack.c.b16 %v578, %v577
        %v588 = vpack.c.b16 %v580, %v579
        %597 = vmatprep.subr.bf16.mxu0 0
        %598 = vmatpush1.bf16.msra.mxu0 %v581
        %599 = vmatprep.subr.bf16.mxu0 0
        %600 = vmatpush1.bf16.msra.mxu0 %v582
        %601 = vmatprep.subr.bf16.mxu0 0
        %602 = vmatpush1.bf16.msra.mxu0 %v583
        %603 = vmatprep.subr.bf16.mxu0 0
        %604 = vmatpush1.bf16.msra.mxu0 %v584
        %605 = vmatprep.subr.bf16.mxu0 0
        %606 = vmatpush1.bf16.msra.mxu0 %v585
        %607 = vmatprep.subr.bf16.mxu0 0
        %608 = vmatpush1.bf16.msra.mxu0 %v586
        %609 = vmatprep.subr.bf16.mxu0 0
        %610 = vmatpush1.bf16.msra.mxu0 %v587
        %611 = vmatprep.subr.bf16.mxu0 0
        %612 = vmatpush1.bf16.msra.mxu0 %v588
        %613 = vmatprep.subr.bf16.mxu0 0
        %614 = vmatpush1.bf16.msra.mxu0 0
        %615 = vmatprep.subr.bf16.mxu0 0
        %616 = vmatpush1.bf16.msra.mxu0 0
        %617 = vmatprep.subr.bf16.mxu0 0
        %618 = vmatpush1.bf16.msra.mxu0 0
        %619 = vmatprep.subr.bf16.mxu0 0
        %620 = vmatpush1.bf16.msra.mxu0 0
        %621 = vmatprep.subr.bf16.mxu0 0
        %622 = vmatpush1.bf16.msra.mxu0 0
        %623 = vmatprep.subr.bf16.mxu0 0
        %624 = vmatpush1.bf16.msra.mxu0 0
        %625 = vmatprep.subr.bf16.mxu0 0
        %626 = vmatpush1.bf16.msra.mxu0 0
        %627 = vmatprep.subr.bf16.mxu0 0
        %628 = vmatpush1.bf16.msra.mxu0 0
        %629 = vmatprep.mubr.bf16.mxu0 0
        %630 = vmatmul.mubr.bf16.gmra.mrb[0].mxu0 %v525
        %v631 = vpop.f32.mrb[0].mxu0
        %v632 = vadd.f32 %v547, %v631
        %v633 = vpop.f32.mrb[0].mxu0
        %v634 = vpop.f32.mrb[0].mxu0
        %v635 = vadd.f32 %v547, %v634
        %v636 = vpop.f32.mrb[0].mxu0
        %637 = vdwg.mxu0
        %vm638 = vcmask 523264
        %v639 = vsel %vm638, %v632, 0.0
        %640 = vadd.xlane.f32.xlu0 %v639
        %v641 = vpop.xlane.xlu0 %640
        %v642 = vsel %vm638, %v635, 0.0
        %643 = vadd.xlane.f32.xlu0 %v642
        %v644 = vpop.xlane.xlu0 %643
        %v645 = vrcp.pop 64.0
        %v646 = vmul.f32 %v641, %v645
        %v647 = vmul.f32 %v644, %v645
        %v648 = vsub.f32 %v632, %v646
        %v649 = vsub.f32 %v635, %v647
        %v650 = vmul.f32 %v648, %v648
        %v651 = vmul.f32 %v649, %v649
        %v652 = vsel %vm638, %v650, 0.0
        %653 = vadd.xlane.f32.xlu0 %v652
        %v654 = vpop.xlane.xlu0 %653
        %v655 = vsel %vm638, %v651, 0.0
        %656 = vadd.xlane.f32.xlu0 %v655
        %v657 = vpop.xlane.xlu0 %656
        %v658 = vmul.f32 %v654, %v645
        %v659 = vmul.f32 %v657, %v645
        %v660 = vadd.f32 %v658, 1e-05
        %v661 = vadd.f32 %v659, 1e-05
        %v662 = vrsqrt.pop %v660
        %v663 = vrsqrt.pop %v661
        %v664 = vmul.f32 %v648, %v662
        %v665 = vmul.f32 %v649, %v663
        %v666 = vmax.f32 %v664, 0.0
        %v667 = vmax.f32 %v665, 0.0
        %v668 = vpack.c.bf16 %v667, %v666
        %v669 = vld [vmem:[#allocation4] sm:$0xf]
        %v670 = vld [vmem:[#allocation4 + $0x4] sm:$0xf]
        %v671 = vld [vmem:[#allocation4 + $0x8] sm:$0xf]
        %v672 = vld [vmem:[#allocation4 + $0xc] sm:$0xf]
        %v673 = vld [vmem:[#allocation4 + $0x10] sm:$0xf]
        %v674 = vld [vmem:[#allocation4 + $0x14] sm:$0xf]
        %v675 = vld [vmem:[#allocation4 + $0x18] sm:$0xf]
        %v676 = vld [vmem:[#allocation4 + $0x1c] sm:$0xf]
        %v677 = vld [vmem:[%s6] sm:$0x1]
        %v679 = vlaneseq
        %v680 = vshrl.u32 %v679, 7
        %v681 = vsub.s32 0, %v680
        %v682 = vrot.slane %v677, %v681
        %v692 = vunpack.c.l.b16 %v669
        %v693 = vunpack.c.l.b16 %v670
        %v694 = vunpack.c.l.b16 %v671
        %v695 = vunpack.c.l.b16 %v672
        %v696 = vunpack.c.l.b16 %v673
        %v697 = vunpack.c.l.b16 %v674
        %v698 = vunpack.c.l.b16 %v675
        %v699 = vunpack.c.l.b16 %v676
        %v700 = vpack.c.b16 %v693, %v692
        %v701 = vpack.c.b16 %v695, %v694
        %v702 = vpack.c.b16 %v697, %v696
        %v703 = vpack.c.b16 %v699, %v698
        %v709 = vsel %vm638, %v668, 0
        %711 = vmatprep.subr.bf16.mxu0 0
        %712 = vmatpush1.bf16.msra.mxu0 %v700
        %713 = vmatprep.subr.bf16.mxu0 0
        %714 = vmatpush1.bf16.msra.mxu0 %v701
        %715 = vmatprep.subr.bf16.mxu0 0
        %716 = vmatpush1.bf16.msra.mxu0 %v702
        %717 = vmatprep.subr.bf16.mxu0 0
        %718 = vmatpush1.bf16.msra.mxu0 %v703
        %719 = vmatprep.subr.bf16.mxu0 0
        %720 = vmatpush1.bf16.msra.mxu0 0
        %721 = vmatprep.subr.bf16.mxu0 0
        %722 = vmatpush1.bf16.msra.mxu0 0
        %723 = vmatprep.subr.bf16.mxu0 0
        %724 = vmatpush1.bf16.msra.mxu0 0
        %725 = vmatprep.subr.bf16.mxu0 0
        %726 = vmatpush1.bf16.msra.mxu0 0
        %727 = vmatprep.subr.bf16.mxu0 0
        %728 = vmatpush1.bf16.msra.mxu0 0
        %729 = vmatprep.subr.bf16.mxu0 0
        %730 = vmatpush1.bf16.msra.mxu0 0
        %731 = vmatprep.subr.bf16.mxu0 0
        %732 = vmatpush1.bf16.msra.mxu0 0
        %733 = vmatprep.subr.bf16.mxu0 0
        %734 = vmatpush1.bf16.msra.mxu0 0
        %735 = vmatprep.subr.bf16.mxu0 0
        %736 = vmatpush1.bf16.msra.mxu0 0
        %737 = vmatprep.subr.bf16.mxu0 0
        %738 = vmatpush1.bf16.msra.mxu0 0
        %739 = vmatprep.subr.bf16.mxu0 0
        %740 = vmatpush1.bf16.msra.mxu0 0
        %741 = vmatprep.subr.bf16.mxu0 0
        %742 = vmatpush1.bf16.msra.mxu0 0
        %743 = vmatprep.mubr.bf16.mxu0 0
        %744 = vmatmul.mubr.bf16.gmra.mrb[0].mxu0 %v709
        %v745 = vpop.f32.mrb[0].mxu0
        %v746 = vadd.f32 %v682, %v745
        %v747 = vpop.f32.mrb[0].mxu0
        %v748 = vpop.f32.mrb[0].mxu0
        %v749 = vadd.f32 %v682, %v748
        %v750 = vpop.f32.mrb[0].mxu0
        %751 = vdwg.mxu0
        %v752 = vpack.c.bf16 %v749, %v746
        %v754 = vunpack.c.l.b16 %v752
        %v755 = vunpack.c.h.b16 %v752
        %v756 = vpack.c.b16 %v754, %v754
        %v757 = vpack.c.b16 %v755, %v755
        %vm760 = vcmask 519168
        %761 = vst.msk [vmem:[%s315] sm:$0xf] %vm760, %v756
        %762 = vst.msk [vmem:[%s315 + $0x4] sm:$0xf] %vm760, %v757
        %s763 = smul.u32 2, %s22
        %p764 = scmp.lt.s32.totalorder %s763, 3
        %s765 = scalar_select %p764, %s763, 3
        %s766 = smul.addr %s765, 4
        %s767 = scalar_lea.vmem %s7, %s766
        // Predicated region
        $region57: #{forward.4} parent=47 // pred_check
          %p768 = pneg %p192
        $region58: #{forward.4} parent=47 // pred_check_branch
          %770 = sbr.rel (%p768) target = $region60
        $region59: #{forward.4} parent=47 // pred_region
          %s771 = smul.u32 2, %s22
        $region60: #{forward.4} parent=47 // pred_fallthru
          _
      $region48: #{forward.4} parent=5 // pred_fallthru
        _
      %p772 = scmp.le.s32.totalorder 2, %s17
      // Predicated region
      $region61: #{forward.4} parent=5 // pred_check
        %p773 = pneg %p772
      $region62: #{forward.4} parent=5 // pred_check_branch
        %775 = sbr.rel (%p773) target = $region64
      $region63: #{forward.4} parent=5 // pred_region
        %s776 = ssub.s32 %s17, 2
        // Predicated region
        $region65: #{forward.4} parent=63 // pred_check
          %p777 = pneg %p198
        $region66: #{forward.4} parent=63 // pred_check_branch
          %779 = sbr.rel (%p777) target = $region68
        $region67: #{forward.4} parent=63 // pred_region
          %s780 = smul.u32 2, %s23
          %p781 = scmp.lt.s32.totalorder %s780, 3
          %s782 = scalar_select %p781, %s780, 3
          %s783 = smul.addr %s782, 4
          %s784 = scalar_lea.vmem %s7, %s783
        $region68: #{forward.4} parent=63 // pred_fallthru
          _
      $region64: #{forward.4} parent=5 // pred_fallthru
        _
    $region6: #{forward.4} parent=1 // loop_footer
      %s21 = sadd.s32 1, %s17
    $region7: #{forward.4} parent=1 // loop_footer_branch
      %16 = sbr.rel target = $region3
    $region8: #{forward.4} parent=1 // loop_exit
      _
    %785 = vsyncpa [#allocation3], 1
    %s786 = scalar_lea.sflag [#allocation3], 1
    %787 = vsyncpa %s786, 1
    %788 = vsyncpa [#allocation5], 1

// kernel: forward.6
$region0: #{forward.6}
  #allocation0 [shape = 'u32[]', space=smem, size = 0x4, offset = 0x4, fixed_abs, tag = 'smem constant byte address 0x4 - core index']
  #allocation1 [shape = 'u32[144,128]{1,0:T(1,128)}', space=vmem, size = 0x12000, scoped, tag = 'internal scratch']
  #allocation2 [shape = 'f32[1,16,128]{2,1,0:T(8,128)}', space=vmem, size = 0x2000, scoped, tag = 'scratch operand']
  %s0 = inlined_call_operand.vmem [shape: bf16[2,16,128], index: 0, kind: input, shape index: {}]
  %s1 = inlined_call_operand.vmem [shape: bf16[128,512], index: 1, kind: input, shape index: {}]
  %s2 = inlined_call_operand.hbm [shape: f32[1,512], index: 2, kind: input, shape index: {}]
  %s3 = inlined_call_operand.vmem [shape: bf16[128,512], index: 3, kind: input, shape index: {}]
  %s4 = inlined_call_operand.vmem [shape: bf16[2,16,128], index: 4, kind: output, shape index: {}]
  %s5 = sld [smem:[#allocation0]]
  $region53: #{forward.6} parent=0
    _
  %s7 = ssub.s32 1, %s5
  %s8 = scalar_select 0, %s7, %s5
  $region1: #{forward.6} parent=0
    #allocation3 [shape = 'u8[2048]{0}', space=vmem, size = 0x800, scoped, tag = 'input window, operand 2, single buffered']
    #allocation4 [shape = 's32[2]{0}', space=sflag, size = 0x8, scoped, tag = 'scoped memory for forward.6']
    %9 = vsyncpa [#allocation4], 0
    loop: start=0, step=1, limit=4
    $region2: #{forward.6} parent=1 // loop_pre_header
      _
    $region3: #{forward.6} parent=1 // loop_header
      %s11 = sphi 0, %s15
      %p12 = scmp.ge.s32.totalorder %s11, 4
      %s21 = sphi 0, %s23
      %s24 = sphi 0, %s21
      %s25 = sphi 0, %s24
      %s41 = sphi 0, %s25
      %s45 = sphi 0, %s45
      %s47 = sphi 0, %s45
      %s48 = sphi 0, %s47
      %s62 = sphi 0, %s48
      %s66 = sphi 0, %s66
      %s68 = sphi 0, %s66
      %s69 = sphi 0, %s68
      %s83 = sphi 0, %s69
      %s87 = sphi 0, %s87
      %s89 = sphi 0, %s87
      %s90 = sphi 0, %s89
      %s104 = sphi 0, %s90
      %s110 = sphi 0, %s112
      %s113 = sphi 0, %s110
      %s114 = sphi 0, %s113
      %s130 = sphi 0, %s114
    $region4: #{forward.6} parent=1 // loop_header_branch
      %14 = sbr.rel (%p12) target = $region8
    $region5: #{forward.6} parent=1 // loop_body
      %s16 = ssub.s32 %s11, 1
      %s17 = ssub.s32 %s11, 2
      %s18 = sadd.s32 %s11, 1
      %s19 = ssub.s32 %s11, %s18
      %p20 = scmp.eq.s32.totalorder %s19, 0
      %s22 = sadd.s32 %s21, 1
      %s23 = scalar_select %p20, %s21, %s22
      %p26 = pneg %p20
      %p27 = scmp.eq.s32.totalorder %s11, 1
      %p28 = por %p26, %p27
      %p29 = scmp.ne.s32.totalorder %s21, %s24
      %p30 = scmp.eq.s32.totalorder %s11, 0
      %p31 = por %p29, %p30
      %p32 = scmp.ne.s32.totalorder %s21, %s24
      %p33 = scmp.eq.s32.totalorder %s16, 1
      %p34 = por %p32, %p33
      %p35 = scmp.ne.s32.totalorder %s24, %s25
      %p36 = scmp.eq.s32.totalorder %s16, 0
      %p37 = por %p35, %p36
      %p38 = scmp.ne.s32.totalorder %s24, %s25
      %p39 = scmp.eq.s32.totalorder %s17, 1
      %p40 = por %p38, %p39
      %p42 = scmp.ne.s32.totalorder %s25, %s41
      %p43 = scmp.eq.s32.totalorder %s17, 0
      %p44 = por %p42, %p43
      %s46 = sadd.s32 %s45, 1
      %p49 = scmp.eq.s32.totalorder %s11, 1
      %p50 = scmp.ne.s32.totalorder %s45, %s47
      %p51 = scmp.eq.s32.totalorder %s11, 0
      %p52 = por %p50, %p51
      %p53 = scmp.ne.s32.totalorder %s45, %s47
      %p54 = scmp.eq.s32.totalorder %s16, 1
      %p55 = por %p53, %p54
      %p56 = scmp.ne.s32.totalorder %s47, %s48
      %p57 = scmp.eq.s32.totalorder %s16, 0
      %p58 = por %p56, %p57
      %p59 = scmp.ne.s32.totalorder %s47, %s48
      %p60 = scmp.eq.s32.totalorder %s17, 1
      %p61 = por %p59, %p60
      %p63 = scmp.ne.s32.totalorder %s48, %s62
      %p64 = scmp.eq.s32.totalorder %s17, 0
      %p65 = por %p63, %p64
      %s67 = sadd.s32 %s66, 1
      %p70 = scmp.eq.s32.totalorder %s11, 1
      %p71 = scmp.ne.s32.totalorder %s66, %s68
      %p72 = scmp.eq.s32.totalorder %s11, 0
      %p73 = por %p71, %p72
      %p74 = scmp.ne.s32.totalorder %s66, %s68
      %p75 = scmp.eq.s32.totalorder %s16, 1
      %p76 = por %p74, %p75
      %p77 = scmp.ne.s32.totalorder %s68, %s69
      %p78 = scmp.eq.s32.totalorder %s16, 0
      %p79 = por %p77, %p78
      %p80 = scmp.ne.s32.totalorder %s68, %s69
      %p81 = scmp.eq.s32.totalorder %s17, 1
      %p82 = por %p80, %p81
      %p84 = scmp.ne.s32.totalorder %s69, %s83
      %p85 = scmp.eq.s32.totalorder %s17, 0
      %p86 = por %p84, %p85
      %s88 = sadd.s32 %s87, 1
      %p91 = scmp.eq.s32.totalorder %s11, 1
      %p92 = scmp.ne.s32.totalorder %s87, %s89
      %p93 = scmp.eq.s32.totalorder %s11, 0
      %p94 = por %p92, %p93
      %p95 = scmp.ne.s32.totalorder %s87, %s89
      %p96 = scmp.eq.s32.totalorder %s16, 1
      %p97 = por %p95, %p96
      %p98 = scmp.ne.s32.totalorder %s89, %s90
      %p99 = scmp.eq.s32.totalorder %s16, 0
      %p100 = por %p98, %p99
      %p101 = scmp.ne.s32.totalorder %s89, %s90
      %p102 = scmp.eq.s32.totalorder %s17, 1
      %p103 = por %p101, %p102
      %p105 = scmp.ne.s32.totalorder %s90, %s104
      %p106 = scmp.eq.s32.totalorder %s17, 0
      %p107 = por %p105, %p106
      %s108 = ssub.s32 %s11, %s18
      %p109 = scmp.eq.s32.totalorder %s108, 0
      %s111 = sadd.s32 %s110, 1
      %s112 = scalar_select %p109, %s110, %s111
      %p115 = pneg %p109
      %p116 = scmp.eq.s32.totalorder %s11, 1
      %p117 = por %p115, %p116
      %p118 = scmp.ne.s32.totalorder %s110, %s113
      %p119 = scmp.eq.s32.totalorder %s11, 0
      %p120 = por %p118, %p119
      %p121 = scmp.ne.s32.totalorder %s110, %s113
      %p122 = scmp.eq.s32.totalorder %s16, 1
      %p123 = por %p121, %p122
      %p124 = scmp.ne.s32.totalorder %s113, %s114
      %p125 = scmp.eq.s32.totalorder %s16, 0
      %p126 = por %p124, %p125
      %p127 = scmp.ne.s32.totalorder %s113, %s114
      %p128 = scmp.eq.s32.totalorder %s17, 1
      %p129 = por %p127, %p128
      %p131 = scmp.ne.s32.totalorder %s114, %s130
      %p132 = scmp.eq.s32.totalorder %s17, 0
      %p133 = por %p131, %p132
      %p134 = scmp.le.s32.totalorder 1, %s11
      %p135 = scmp.lt.s32.totalorder %s11, 3
      %p136 = pnand %p134, %p135
      %p137 = pneg %p136
      // Predicated region
      $region9: #{forward.6} parent=5 // pred_check
        _
      $region10: #{forward.6} parent=5 // pred_check_branch
        %139 = sbr.rel (%p136) target = $region12
      $region11: #{forward.6} parent=5 // pred_region
        %s140 = ssub.s32 %s11, 1
        // Predicated region
        $region13: #{forward.6} parent=11 // pred_check
          %p141 = pneg %p58
        $region14: #{forward.6} parent=11 // pred_check_branch
          %143 = sbr.rel (%p141) target = $region16
        $region15: #{forward.6} parent=11 // pred_region
          _
        $region16: #{forward.6} parent=11 // pred_fallthru
          _
        // Predicated region
        $region17: #{forward.6} parent=11 // pred_check
          %p144 = pneg %p79
        $region18: #{forward.6} parent=11 // pred_check_branch
          %146 = sbr.rel (%p144) target = $region20
        $region19: #{forward.6} parent=11 // pred_region
          %s148 = ssub.s32 64, 64
          %149 = vsyncadd [#allocation4], %s148
          %s151 = sshll.u32 [#allocation3], 4
          %s152 = int_to_ptr.vmem [resolvable:$true] %s151
          %154 = dma.hbm_to_vmem [thread:$0]  %s2, 64, %s152, [#allocation4]
        $region20: #{forward.6} parent=11 // pred_fallthru
          _
        // Predicated region
        $region21: #{forward.6} parent=11 // pred_check
          %p155 = pneg %p100
        $region22: #{forward.6} parent=11 // pred_check_branch
          %157 = sbr.rel (%p155) target = $region24
        $region23: #{forward.6} parent=11 // pred_region
          _
        $region24: #{forward.6} parent=11 // pred_fallthru
          _
      $region12: #{forward.6} parent=5 // pred_fallthru
        _
      %p158 = scmp.lt.s32.totalorder %s11, 2
      // Predicated region
      $region25: #{forward.6} parent=5 // pred_check
        %p159 = pneg %p158
      $region26: #{forward.6} parent=5 // pred_check_branch
        %161 = sbr.rel (%p159) target = $region28
      $region27: #{forward.6} parent=5 // pred_region
        // Predicated region
        $region29: #{forward.6} parent=27 // pred_check
          %p162 = pneg %p31
        $region30: #{forward.6} parent=27 // pred_check_branch
          %164 = sbr.rel (%p162) target = $region32
        $region31: #{forward.6} parent=27 // pred_region
          %p165 = scmp.lt.s32.totalorder %s11, 1
          %s166 = scalar_select %p165, %s11, 1
          %s167 = smul.addr %s166, 2
          %s168 = smul.addr %s167, 4
          %s169 = scalar_lea.vmem %s0, %s168
        $region32: #{forward.6} parent=27 // pred_fallthru
          _
      $region28: #{forward.6} parent=5 // pred_fallthru
        _
      %p170 = scmp.le.s32.totalorder 1, %s11
      %p171 = scmp.lt.s32.totalorder %s11, 3
      %p172 = pnand %p170, %p171
      %p173 = pneg %p172
      // Predicated region
      $region33: #{forward.6} parent=5 // pred_check
        _
      $region34: #{forward.6} parent=5 // pred_check_branch
        %175 = sbr.rel (%p172) target = $region36
      $region35: #{forward.6} parent=5 // pred_region
        %s176 = ssub.s32 %s11, 1
        // Predicated region
        $region37: #{forward.6} parent=35 // pred_check
          %p177 = pneg %p79
        $region38: #{forward.6} parent=35 // pred_check_branch
          %179 = sbr.rel (%p177) target = $region40
        $region39: #{forward.6} parent=35 // pred_region
          %180 = dma.done [#allocation4], 64
        $region40: #{forward.6} parent=35 // pred_fallthru
          _
        %p181 = scmp.lt.s32.totalorder %s16, 1
        %s182 = scalar_select %p181, %s16, 1
        %s183 = smul.addr %s182, 2
        %s184 = smul.addr %s183, 4
        %s185 = scalar_lea.vmem %s0, %s184
        %p186 = pneg %p37
        %p187 = pneg %p34
        %p188 = pneg %p58
        %p189 = pneg %p55
        %p190 = pneg %p79
        %p191 = pneg %p76
        %p192 = pneg %p100
        %p193 = pneg %p97
        %p194 = pneg %p126
        %p195 = pneg %p123
        %p196 = scmp.lt.s32.totalorder %s16, 1
        %s197 = scalar_select %p196, %s16, 1
        %s198 = smul.addr %s197, 2
        %s199 = smul.addr %s198, 4
        %s200 = scalar_lea.vmem %s4, %s199
        %p201 = scmp.lt.s32.totalorder %s16, 1
        %s202 = scalar_select %p201, %s16, 1
        %s203 = smul.addr %s202, 2
        %s204 = smul.addr %s203, 4
        %s205 = scalar_lea.vmem %s0, %s204
        %p206 = scmp.lt.s32.totalorder %s16, 1
        %s207 = scalar_select %p206, %s16, 1
        %s208 = smul.addr %s207, 2
        %s209 = smul.addr %s208, 4
        %s210 = scalar_lea.vmem %s4, %s209
        %v212 = vld [vmem:[%s205] sm:$0xf]
        %v213 = vld [vmem:[%s205 + $0x4] sm:$0xf]
        %v214 = vld [vmem:[%s1] sm:$0xff]
        %v215 = vld [vmem:[%s1 + $0x8] sm:$0xff]
        %v216 = vld [vmem:[%s1 + $0x10] sm:$0xff]
        %v217 = vld [vmem:[%s1 + $0x18] sm:$0xff]
        %v218 = vld [vmem:[%s1 + $0x20] sm:$0xff]
        %v219 = vld [vmem:[%s1 + $0x28] sm:$0xff]
        %v220 = vld [vmem:[%s1 + $0x30] sm:$0xff]
        %v221 = vld [vmem:[%s1 + $0x38] sm:$0xff]
        %v222 = vld [vmem:[%s1 + $0x40] sm:$0xff]
        %v223 = vld [vmem:[%s1 + $0x48] sm:$0xff]
        %v224 = vld [vmem:[%s1 + $0x50] sm:$0xff]
        %v225 = vld [vmem:[%s1 + $0x58] sm:$0xff]
        %v226 = vld [vmem:[%s1 + $0x60] sm:$0xff]
        %v227 = vld [vmem:[%s1 + $0x68] sm:$0xff]
        %v228 = vld [vmem:[%s1 + $0x70] sm:$0xff]
        %v229 = vld [vmem:[%s1 + $0x78] sm:$0xff]
        %v230 = vld [vmem:[%s1 + $0x80] sm:$0xff]
        %v231 = vld [vmem:[%s1 + $0x88] sm:$0xff]
        %v232 = vld [vmem:[%s1 + $0x90] sm:$0xff]
        %v233 = vld [vmem:[%s1 + $0x98] sm:$0xff]
        %v234 = vld [vmem:[%s1 + $0xa0] sm:$0xff]
        %v235 = vld [vmem:[%s1 + $0xa8] sm:$0xff]
        %v236 = vld [vmem:[%s1 + $0xb0] sm:$0xff]
        %v237 = vld [vmem:[%s1 + $0xb8] sm:$0xff]
        %v238 = vld [vmem:[%s1 + $0xc0] sm:$0xff]
        %v239 = vld [vmem:[%s1 + $0xc8] sm:$0xff]
        %v240 = vld [vmem:[%s1 + $0xd0] sm:$0xff]
        %v241 = vld [vmem:[%s1 + $0xd8] sm:$0xff]
        %v242 = vld [vmem:[%s1 + $0xe0] sm:$0xff]
        %v243 = vld [vmem:[%s1 + $0xe8] sm:$0xff]
        %v244 = vld [vmem:[%s1 + $0xf0] sm:$0xff]
        %v245 = vld [vmem:[%s1 + $0xf8] sm:$0xff]
        %v246 = vld [vmem:[#allocation3] sm:$0xf]
        %v248 = vlaneseq
        %v249 = vshrl.u32 %v248, 7
        %v250 = vsub.s32 0, %v249
        %v251 = vrot.slane %v246, %v250
        %v252 = vlaneseq
        %v253 = vshrl.u32 %v252, 7
        %v254 = vsub.s32 1, %v253
        %v255 = vrot.slane %v246, %v254
        %v256 = vlaneseq
        %v257 = vshrl.u32 %v256, 7
        %v258 = vsub.s32 2, %v257
        %v259 = vrot.slane %v246, %v258
        %v260 = vlaneseq
        %v261 = vshrl.u32 %v260, 7
        %v262 = vsub.s32 3, %v261
        %v263 = vrot.slane %v246, %v262
        %v270 = vunpack.c.l.b16 %v212
        %v271 = vunpack.c.l.b16 %v213
        %v272 = vpack.c.b16 %v271, %v270
        %v306 = vunpack.c.l.b16 %v214
        %v307 = vunpack.c.h.b16 %v214
        %v308 = vunpack.c.l.b16 %v215
        %v309 = vunpack.c.h.b16 %v215
        %v310 = vunpack.c.l.b16 %v216
        %v311 = vunpack.c.h.b16 %v216
        %v312 = vunpack.c.l.b16 %v217
        %v313 = vunpack.c.h.b16 %v217
        %v314 = vunpack.c.l.b16 %v218
        %v315 = vunpack.c.h.b16 %v218
        %v316 = vunpack.c.l.b16 %v219
        %v317 = vunpack.c.h.b16 %v219
        %v318 = vunpack.c.l.b16 %v220
        %v319 = vunpack.c.h.b16 %v220
        %v320 = vunpack.c.l.b16 %v221
        %v321 = vunpack.c.h.b16 %v221
        %v322 = vunpack.c.l.b16 %v222
        %v323 = vunpack.c.h.b16 %v222
        %v324 = vunpack.c.l.b16 %v223
        %v325 = vunpack.c.h.b16 %v223
        %v326 = vunpack.c.l.b16 %v224
        %v327 = vunpack.c.h.b16 %v224
        %v328 = vunpack.c.l.b16 %v225
        %v329 = vunpack.c.h.b16 %v225
        %v330 = vunpack.c.l.b16 %v226
        %v331 = vunpack.c.h.b16 %v226
        %v332 = vunpack.c.l.b16 %v227
        %v333 = vunpack.c.h.b16 %v227
        %v334 = vunpack.c.l.b16 %v228
        %v335 = vunpack.c.h.b16 %v228
        %v336 = vunpack.c.l.b16 %v229
        %v337 = vunpack.c.h.b16 %v229
        %v338 = vunpack.c.l.b16 %v230
        %v339 = vunpack.c.h.b16 %v230
        %v340 = vunpack.c.l.b16 %v231
        %v341 = vunpack.c.h.b16 %v231
        %v342 = vunpack.c.l.b16 %v232
        %v343 = vunpack.c.h.b16 %v232
        %v344 = vunpack.c.l.b16 %v233
        %v345 = vunpack.c.h.b16 %v233
        %v346 = vunpack.c.l.b16 %v234
        %v347 = vunpack.c.h.b16 %v234
        %v348 = vunpack.c.l.b16 %v235
        %v349 = vunpack.c.h.b16 %v235
        %v350 = vunpack.c.l.b16 %v236
        %v351 = vunpack.c.h.b16 %v236
        %v352 = vunpack.c.l.b16 %v237
        %v353 = vunpack.c.h.b16 %v237
        %v354 = vunpack.c.l.b16 %v238
        %v355 = vunpack.c.h.b16 %v238
        %v356 = vunpack.c.l.b16 %v239
        %v357 = vunpack.c.h.b16 %v239
        %v358 = vunpack.c.l.b16 %v240
        %v359 = vunpack.c.h.b16 %v240
        %v360 = vunpack.c.l.b16 %v241
        %v361 = vunpack.c.h.b16 %v241
        %v362 = vunpack.c.l.b16 %v242
        %v363 = vunpack.c.h.b16 %v242
        %v364 = vunpack.c.l.b16 %v243
        %v365 = vunpack.c.h.b16 %v243
        %v366 = vunpack.c.l.b16 %v244
        %v367 = vunpack.c.h.b16 %v244
        %v368 = vunpack.c.l.b16 %v245
        %v369 = vunpack.c.h.b16 %v245
        %v370 = vpack.c.b16 %v310, %v306
        %v371 = vpack.c.b16 %v311, %v307
        %v372 = vpack.c.b16 %v312, %v308
        %v373 = vpack.c.b16 %v313, %v309
        %v374 = vpack.c.b16 %v318, %v314
        %v375 = vpack.c.b16 %v319, %v315
        %v376 = vpack.c.b16 %v320, %v316
        %v377 = vpack.c.b16 %v321, %v317
        %v378 = vpack.c.b16 %v326, %v322
        %v379 = vpack.c.b16 %v327, %v323
        %v380 = vpack.c.b16 %v328, %v324
        %v381 = vpack.c.b16 %v329, %v325
        %v382 = vpack.c.b16 %v334, %v330
        %v383 = vpack.c.b16 %v335, %v331
        %v384 = vpack.c.b16 %v336, %v332
        %v385 = vpack.c.b16 %v337, %v333
        %v386 = vpack.c.b16 %v342, %v338
        %v387 = vpack.c.b16 %v343, %v339
        %v388 = vpack.c.b16 %v344, %v340
        %v389 = vpack.c.b16 %v345, %v341
        %v390 = vpack.c.b16 %v350, %v346
        %v391 = vpack.c.b16 %v351, %v347
        %v392 = vpack.c.b16 %v352, %v348
        %v393 = vpack.c.b16 %v353, %v349
        %v394 = vpack.c.b16 %v358, %v354
        %v395 = vpack.c.b16 %v359, %v355
        %v396 = vpack.c.b16 %v360, %v356
        %v397 = vpack.c.b16 %v361, %v357
        %v398 = vpack.c.b16 %v366, %v362
        %v399 = vpack.c.b16 %v367, %v363
        %v400 = vpack.c.b16 %v368, %v364
        %v401 = vpack.c.b16 %v369, %v365
        %434 = vmatprep.subr.bf16.mxu0 %v371
        %435 = vmatpush1.bf16.msra.mxu0 %v370
        %436 = vmatprep.subr.bf16.mxu0 %v375
        %437 = vmatpush1.bf16.msra.mxu0 %v374
        %438 = vmatprep.subr.bf16.mxu0 %v379
        %439 = vmatpush1.bf16.msra.mxu0 %v378
        %440 = vmatprep.subr.bf16.mxu0 %v383
        %441 = vmatpush1.bf16.msra.mxu0 %v382
        %442 = vmatprep.subr.bf16.mxu0 %v387
        %443 = vmatpush1.bf16.msra.mxu0 %v386
        %444 = vmatprep.subr.bf16.mxu0 %v391
        %445 = vmatpush1.bf16.msra.mxu0 %v390
        %446 = vmatprep.subr.bf16.mxu0 %v395
        %447 = vmatpush1.bf16.msra.mxu0 %v394
        %448 = vmatprep.subr.bf16.mxu0 %v399
        %449 = vmatpush1.bf16.msra.mxu0 %v398
        %450 = vmatprep.subr.bf16.mxu0 0
        %451 = vmatpush1.bf16.msra.mxu0 0
        %452 = vmatprep.subr.bf16.mxu0 0
        %453 = vmatpush1.bf16.msra.mxu0 0
        %454 = vmatprep.subr.bf16.mxu0 0
        %455 = vmatpush1.bf16.msra.mxu0 0
        %456 = vmatprep.subr.bf16.mxu0 0
        %457 = vmatpush1.bf16.msra.mxu0 0
        %458 = vmatprep.subr.bf16.mxu0 0
        %459 = vmatpush1.bf16.msra.mxu0 0
        %460 = vmatprep.subr.bf16.mxu0 0
        %461 = vmatpush1.bf16.msra.mxu0 0
        %462 = vmatprep.subr.bf16.mxu0 0
        %463 = vmatpush1.bf16.msra.mxu0 0
        %464 = vmatprep.subr.bf16.mxu0 0
        %465 = vmatpush1.bf16.msra.mxu0 0
        %466 = vmatprep.mubr.bf16.mxu0 0
        %467 = vmatmul.mubr.bf16.gmra.mrb[0].mxu0 %v272
        %v468 = vpop.f32.mrb[0].mxu0
        %v469 = vadd.f32 %v251, %v468
        %v470 = vpop.f32.mrb[0].mxu0
        %v471 = vadd.f32 %v255, %v470
        %v472 = vpop.f32.mrb[0].mxu0
        %v473 = vadd.f32 %v251, %v472
        %v474 = vpop.f32.mrb[0].mxu0
        %v475 = vadd.f32 %v255, %v474
        %476 = vdwg.mxu0
        %477 = vmatprep.subr.bf16.mxu0 %v373
        %478 = vmatpush1.bf16.msra.mxu0 %v372
        %479 = vmatprep.subr.bf16.mxu0 %v377
        %480 = vmatpush1.bf16.msra.mxu0 %v376
        %481 = vmatprep.subr.bf16.mxu0 %v381
        %482 = vmatpush1.bf16.msra.mxu0 %v380
        %483 = vmatprep.subr.bf16.mxu0 %v385
        %484 = vmatpush1.bf16.msra.mxu0 %v384
        %485 = vmatprep.subr.bf16.mxu0 %v389
        %486 = vmatpush1.bf16.msra.mxu0 %v388
        %487 = vmatprep.subr.bf16.mxu0 %v393
        %488 = vmatpush1.bf16.msra.mxu0 %v392
        %489 = vmatprep.subr.bf16.mxu0 %v397
        %490 = vmatpush1.bf16.msra.mxu0 %v396
        %491 = vmatprep.subr.bf16.mxu0 %v401
        %492 = vmatpush1.bf16.msra.mxu0 %v400
        %493 = vmatprep.subr.bf16.mxu0 0
        %494 = vmatpush1.bf16.msra.mxu0 0
        %495 = vmatprep.subr.bf16.mxu0 0
        %496 = vmatpush1.bf16.msra.mxu0 0
        %497 = vmatprep.subr.bf16.mxu0 0
        %498 = vmatpush1.bf16.msra.mxu0 0
        %499 = vmatprep.subr.bf16.mxu0 0
        %500 = vmatpush1.bf16.msra.mxu0 0
        %501 = vmatprep.subr.bf16.mxu0 0
        %502 = vmatpush1.bf16.msra.mxu0 0
        %503 = vmatprep.subr.bf16.mxu0 0
        %504 = vmatpush1.bf16.msra.mxu0 0
        %505 = vmatprep.subr.bf16.mxu0 0
        %506 = vmatpush1.bf16.msra.mxu0 0
        %507 = vmatprep.subr.bf16.mxu0 0
        %508 = vmatpush1.bf16.msra.mxu0 0
        %509 = vmatprep.mubr.bf16.mxu0 0
        %510 = vmatmul.mubr.bf16.gmra.mrb[0].mxu0 %v272
        %v511 = vpop.f32.mrb[0].mxu0
        %v512 = vadd.f32 %v259, %v511
        %v513 = vpop.f32.mrb[0].mxu0
        %v514 = vadd.f32 %v263, %v513
        %v515 = vpop.f32.mrb[0].mxu0
        %v516 = vadd.f32 %v259, %v515
        %v517 = vpop.f32.mrb[0].mxu0
        %v518 = vadd.f32 %v263, %v517
        %519 = vdwg.mxu0
        %v520 = vlaneseq
        %v521 = vand.u32 %v520, 127
        %v522 = vadd.s32 %v521, 128
        %v523 = vadd.s32 %v521, 256
        %v524 = vadd.s32 %v521, 384
        %vm525 = vcmp.lt.s32.totalorder %v521, 0
        %v526 = vsub.s32 0, %v521
        %v527 = vsel %vm525, %v526, %v521
        %v528 = vshrl.u32 %v527, 7
        %v529 = vand.u32 %v527, 127
        %v530 = vsub.s32 0, %v529
        %v531 = vsel %vm525, %v530, %v529
        %vm532 = vcmp.lt.s32.totalorder %v522, 0
        %v533 = vsub.s32 0, %v522
        %v534 = vsel %vm532, %v533, %v522
        %v535 = vshrl.u32 %v534, 7
        %v536 = vand.u32 %v534, 127
        %v537 = vsub.s32 0, %v536
        %v538 = vsel %vm532, %v537, %v536
        %vm539 = vcmp.lt.s32.totalorder %v523, 0
        %v540 = vsub.s32 0, %v523
        %v541 = vsel %vm539, %v540, %v523
        %v542 = vshrl.u32 %v541, 7
        %v543 = vand.u32 %v541, 127
        %v544 = vsub.s32 0, %v543
        %v545 = vsel %vm539, %v544, %v543
        %vm546 = vcmp.lt.s32.totalorder %v524, 0
        %v547 = vsub.s32 0, %v524
        %v548 = vsel %vm546, %v547, %v524
        %v549 = vshrl.u32 %v548, 7
        %v550 = vand.u32 %v548, 127
        %v551 = vsub.s32 0, %v550
        %v552 = vsel %vm546, %v551, %v550
        %vm553 = vcmp.ne.s32.totalorder %v531, 0
        %vm554 = vcmp.ne.s32.totalorder %v538, 0
        %vm555 = vcmp.ne.s32.totalorder %v545, 0
        %vm556 = vcmp.ne.s32.totalorder %v552, 0
        %vm557 = vcmp.lt.s32.totalorder %v531, 0
        %vm558 = vcmp.lt.s32.totalorder %v538, 0
        %vm559 = vcmp.lt.s32.totalorder %v545, 0
        %vm560 = vcmp.lt.s32.totalorder %v552, 0
        %vm561 = vmand %vm557, %vm553
        %vm562 = vmand %vm558, %vm554
        %vm563 = vmand %vm559, %vm555
        %vm564 = vmand %vm560, %vm556
        %v565 = vadd.s32 %v531, 128
        %v566 = vadd.s32 %v538, 128
        %v567 = vadd.s32 %v545, 128
        %v568 = vadd.s32 %v552, 128
        %v569 = vsel %vm561, %v565, %v531
        %v570 = vsel %vm562, %v566, %v538
        %v571 = vsel %vm563, %v567, %v545
        %v572 = vsel %vm564, %v568, %v552
        %vm573 = vcmp.lt.s32.totalorder %v569, 64
        %vm574 = vcmp.lt.s32.totalorder %v570, 64
        %vm575 = vcmp.lt.s32.totalorder %v571, 64
        %vm576 = vcmp.lt.s32.totalorder %v572, 64
        %v577 = vld [vmem:[%s3] sm:$0xff]
        %v578 = vld [vmem:[%s3 + $0x8] sm:$0xff]
        %v579 = vld [vmem:[%s3 + $0x10] sm:$0xff]
        %v580 = vld [vmem:[%s3 + $0x18] sm:$0xff]
        %v581 = vld [vmem:[%s3 + $0x20] sm:$0xff]
        %v582 = vld [vmem:[%s3 + $0x28] sm:$0xff]
        %v583 = vld [vmem:[%s3 + $0x30] sm:$0xff]
        %v584 = vld [vmem:[%s3 + $0x38] sm:$0xff]
        %v585 = vld [vmem:[%s3 + $0x40] sm:$0xff]
        %v586 = vld [vmem:[%s3 + $0x48] sm:$0xff]
        %v587 = vld [vmem:[%s3 + $0x50] sm:$0xff]
        %v588 = vld [vmem:[%s3 + $0x58] sm:$0xff]
        %v589 = vld [vmem:[%s3 + $0x60] sm:$0xff]
        %v590 = vld [vmem:[%s3 + $0x68] sm:$0xff]
        %v591 = vld [vmem:[%s3 + $0x70] sm:$0xff]
        %v592 = vld [vmem:[%s3 + $0x78] sm:$0xff]
        %v593 = vld [vmem:[%s3 + $0x80] sm:$0xff]
        %v594 = vld [vmem:[%s3 + $0x88] sm:$0xff]
        %v595 = vld [vmem:[%s3 + $0x90] sm:$0xff]
        %v596 = vld [vmem:[%s3 + $0x98] sm:$0xff]
        %v597 = vld [vmem:[%s3 + $0xa0] sm:$0xff]
        %v598 = vld [vmem:[%s3 + $0xa8] sm:$0xff]
        %v599 = vld [vmem:[%s3 + $0xb0] sm:$0xff]
        %v600 = vld [vmem:[%s3 + $0xb8] sm:$0xff]
        %v601 = vld [vmem:[%s3 + $0xc0] sm:$0xff]
        %v602 = vld [vmem:[%s3 + $0xc8] sm:$0xff]
        %v603 = vld [vmem:[%s3 + $0xd0] sm:$0xff]
        %v604 = vld [vmem:[%s3 + $0xd8] sm:$0xff]
        %v605 = vld [vmem:[%s3 + $0xe0] sm:$0xff]
        %v606 = vld [vmem:[%s3 + $0xe8] sm:$0xff]
        %v607 = vld [vmem:[%s3 + $0xf0] sm:$0xff]
        %v608 = vld [vmem:[%s3 + $0xf8] sm:$0xff]
        %v613 = vrot.slane %v473, 7
        %v614 = vrot.slane %v475, 7
        %v615 = vrot.slane %v516, 7
        %v616 = vrot.slane %v518, 7
        %v621 = vsel %vm573, %v469, %v613
        %v622 = vsel %vm574, %v471, %v614
        %v623 = vsel %vm575, %v512, %v615
        %v624 = vsel %vm576, %v514, %v616
        %v657 = vunpack.c.l.b16 %v577
        %v658 = vunpack.c.h.b16 %v577
        %v659 = vunpack.c.l.b16 %v578
        %v660 = vunpack.c.h.b16 %v578
        %v661 = vunpack.c.l.b16 %v579
        %v662 = vunpack.c.h.b16 %v579
        %v663 = vunpack.c.l.b16 %v580
        %v664 = vunpack.c.h.b16 %v580
        %v665 = vunpack.c.l.b16 %v581
        %v666 = vunpack.c.h.b16 %v581
        %v667 = vunpack.c.l.b16 %v582
        %v668 = vunpack.c.h.b16 %v582
        %v669 = vunpack.c.l.b16 %v583
        %v670 = vunpack.c.h.b16 %v583
        %v671 = vunpack.c.l.b16 %v584
        %v672 = vunpack.c.h.b16 %v584
        %v673 = vunpack.c.l.b16 %v585
        %v674 = vunpack.c.h.b16 %v585
        %v675 = vunpack.c.l.b16 %v586
        %v676 = vunpack.c.h.b16 %v586
        %v677 = vunpack.c.l.b16 %v587
        %v678 = vunpack.c.h.b16 %v587
        %v679 = vunpack.c.l.b16 %v588
        %v680 = vunpack.c.h.b16 %v588
        %v681 = vunpack.c.l.b16 %v589
        %v682 = vunpack.c.h.b16 %v589
        %v683 = vunpack.c.l.b16 %v590
        %v684 = vunpack.c.h.b16 %v590
        %v685 = vunpack.c.l.b16 %v591
        %v686 = vunpack.c.h.b16 %v591
        %v687 = vunpack.c.l.b16 %v592
        %v688 = vunpack.c.h.b16 %v592
        %v689 = vunpack.c.l.b16 %v593
        %v690 = vunpack.c.h.b16 %v593
        %v691 = vunpack.c.l.b16 %v594
        %v692 = vunpack.c.h.b16 %v594
        %v693 = vunpack.c.l.b16 %v595
        %v694 = vunpack.c.h.b16 %v595
        %v695 = vunpack.c.l.b16 %v596
        %v696 = vunpack.c.h.b16 %v596
        %v697 = vunpack.c.l.b16 %v597
        %v698 = vunpack.c.h.b16 %v597
        %v699 = vunpack.c.l.b16 %v598
        %v700 = vunpack.c.h.b16 %v598
        %v701 = vunpack.c.l.b16 %v599
        %v702 = vunpack.c.h.b16 %v599
        %v703 = vunpack.c.l.b16 %v600
        %v704 = vunpack.c.h.b16 %v600
        %v705 = vunpack.c.l.b16 %v601
        %v706 = vunpack.c.h.b16 %v601
        %v707 = vunpack.c.l.b16 %v602
        %v708 = vunpack.c.h.b16 %v602
        %v709 = vunpack.c.l.b16 %v603
        %v710 = vunpack.c.h.b16 %v603
        %v711 = vunpack.c.l.b16 %v604
        %v712 = vunpack.c.h.b16 %v604
        %v713 = vunpack.c.l.b16 %v605
        %v714 = vunpack.c.h.b16 %v605
        %v715 = vunpack.c.l.b16 %v606
        %v716 = vunpack.c.h.b16 %v606
        %v717 = vunpack.c.l.b16 %v607
        %v718 = vunpack.c.h.b16 %v607
        %v719 = vunpack.c.l.b16 %v608
        %v720 = vunpack.c.h.b16 %v608
        %v721 = vpack.c.b16 %v661, %v657
        %v722 = vpack.c.b16 %v662, %v658
        %v723 = vpack.c.b16 %v663, %v659
        %v724 = vpack.c.b16 %v664, %v660
        %v725 = vpack.c.b16 %v669, %v665
        %v726 = vpack.c.b16 %v670, %v666
        %v727 = vpack.c.b16 %v671, %v667
        %v728 = vpack.c.b16 %v672, %v668
        %v729 = vpack.c.b16 %v677, %v673
        %v730 = vpack.c.b16 %v678, %v674
        %v731 = vpack.c.b16 %v679, %v675
        %v732 = vpack.c.b16 %v680, %v676
        %v733 = vpack.c.b16 %v685, %v681
        %v734 = vpack.c.b16 %v686, %v682
        %v735 = vpack.c.b16 %v687, %v683
        %v736 = vpack.c.b16 %v688, %v684
        %v737 = vpack.c.b16 %v693, %v689
        %v738 = vpack.c.b16 %v694, %v690
        %v739 = vpack.c.b16 %v695, %v691
        %v740 = vpack.c.b16 %v696, %v692
        %v741 = vpack.c.b16 %v701, %v697
        %v742 = vpack.c.b16 %v702, %v698
        %v743 = vpack.c.b16 %v703, %v699
        %v744 = vpack.c.b16 %v704, %v700
        %v745 = vpack.c.b16 %v709, %v705
        %v746 = vpack.c.b16 %v710, %v706
        %v747 = vpack.c.b16 %v711, %v707
        %v748 = vpack.c.b16 %v712, %v708
        %v749 = vpack.c.b16 %v717, %v713
        %v750 = vpack.c.b16 %v718, %v714
        %v751 = vpack.c.b16 %v719, %v715
        %v752 = vpack.c.b16 %v720, %v716
        %785 = vmatprep.subr.bf16.mxu0 %v722
        %786 = vmatpush1.bf16.msra.mxu0 %v721
        %787 = vmatprep.subr.bf16.mxu0 %v726
        %788 = vmatpush1.bf16.msra.mxu0 %v725
        %789 = vmatprep.subr.bf16.mxu0 %v730
        %790 = vmatpush1.bf16.msra.mxu0 %v729
        %791 = vmatprep.subr.bf16.mxu0 %v734
        %792 = vmatpush1.bf16.msra.mxu0 %v733
        %793 = vmatprep.subr.bf16.mxu0 %v738
        %794 = vmatpush1.bf16.msra.mxu0 %v737
        %795 = vmatprep.subr.bf16.mxu0 %v742
        %796 = vmatpush1.bf16.msra.mxu0 %v741
        %797 = vmatprep.subr.bf16.mxu0 %v746
        %798 = vmatpush1.bf16.msra.mxu0 %v745
        %799 = vmatprep.subr.bf16.mxu0 %v750
        %800 = vmatpush1.bf16.msra.mxu0 %v749
        %801 = vmatprep.subr.bf16.mxu0 0
        %802 = vmatpush1.bf16.msra.mxu0 0
        %803 = vmatprep.subr.bf16.mxu0 0
        %804 = vmatpush1.bf16.msra.mxu0 0
        %805 = vmatprep.subr.bf16.mxu0 0
        %806 = vmatpush1.bf16.msra.mxu0 0
        %807 = vmatprep.subr.bf16.mxu0 0
        %808 = vmatpush1.bf16.msra.mxu0 0
        %809 = vmatprep.subr.bf16.mxu0 0
        %810 = vmatpush1.bf16.msra.mxu0 0
        %811 = vmatprep.subr.bf16.mxu0 0
        %812 = vmatpush1.bf16.msra.mxu0 0
        %813 = vmatprep.subr.bf16.mxu0 0
        %814 = vmatpush1.bf16.msra.mxu0 0
        %815 = vmatprep.subr.bf16.mxu0 0
        %816 = vmatpush1.bf16.msra.mxu0 0
        %817 = vmatprep.mubr.bf16.mxu0 0
        %818 = vmatmul.mubr.bf16.gmra.mrb[0].mxu0 0
        %v819 = vpop.f32.mrb[0].mxu0
        %v820 = vadd.f32 0.0, %v819
        %v821 = vpop.f32.mrb[0].mxu0
        %v822 = vadd.f32 0.0, %v821
        %v823 = vpop.f32.mrb[0].mxu0
        %v824 = vpop.f32.mrb[0].mxu0
        %825 = vdwg.mxu0
        %826 = vmatprep.subr.bf16.mxu0 %v724
        %827 = vmatpush1.bf16.msra.mxu0 %v723
        %828 = vmatprep.subr.bf16.mxu0 %v728
        %829 = vmatpush1.bf16.msra.mxu0 %v727
        %830 = vmatprep.subr.bf16.mxu0 %v732
        %831 = vmatpush1.bf16.msra.mxu0 %v731
        %832 = vmatprep.subr.bf16.mxu0 %v736
        %833 = vmatpush1.bf16.msra.mxu0 %v735
        %834 = vmatprep.subr.bf16.mxu0 %v740
        %835 = vmatpush1.bf16.msra.mxu0 %v739
        %836 = vmatprep.subr.bf16.mxu0 %v744
        %837 = vmatpush1.bf16.msra.mxu0 %v743
        %838 = vmatprep.subr.bf16.mxu0 %v748
        %839 = vmatpush1.bf16.msra.mxu0 %v747
        %840 = vmatprep.subr.bf16.mxu0 %v752
        %841 = vmatpush1.bf16.msra.mxu0 %v751
        %842 = vmatprep.subr.bf16.mxu0 0
        %843 = vmatpush1.bf16.msra.mxu0 0
        %844 = vmatprep.subr.bf16.mxu0 0
        %845 = vmatpush1.bf16.msra.mxu0 0
        %846 = vmatprep.subr.bf16.mxu0 0
        %847 = vmatpush1.bf16.msra.mxu0 0
        %848 = vmatprep.subr.bf16.mxu0 0
        %849 = vmatpush1.bf16.msra.mxu0 0
        %850 = vmatprep.subr.bf16.mxu0 0
        %851 = vmatpush1.bf16.msra.mxu0 0
        %852 = vmatprep.subr.bf16.mxu0 0
        %853 = vmatpush1.bf16.msra.mxu0 0
        %854 = vmatprep.subr.bf16.mxu0 0
        %855 = vmatpush1.bf16.msra.mxu0 0
        %856 = vmatprep.subr.bf16.mxu0 0
        %857 = vmatpush1.bf16.msra.mxu0 0
        %858 = vmatprep.mubr.bf16.mxu0 0
        %859 = vmatmul.mubr.bf16.gmra.mrb[0].mxu0 0
        %v860 = vpop.f32.mrb[0].mxu0
        %v861 = vadd.f32 0.0, %v860
        %v862 = vpop.f32.mrb[0].mxu0
        %v863 = vadd.f32 0.0, %v862
        %v864 = vpop.f32.mrb[0].mxu0
        %v865 = vpop.f32.mrb[0].mxu0
        %866 = vdwg.mxu0
        %v867 = vadd.f32 %v621, %v820
        %v868 = vadd.f32 %v622, %v822
        %v869 = vadd.f32 %v623, %v861
        %v870 = vadd.f32 %v624, %v863
        %v871 = vxor.u32 %v867, 2147483648
        %v872 = vmul.f32 %v871, 1.442695
        %v873 = vpow.pop %v872
        %v874 = vadd.f32 %v873, 1.0
        %v875 = vrcp.pop %v874
        %v876 = vmul.f32 1.0, %v875
        %v877 = vxor.u32 %v868, 2147483648
        %v878 = vmul.f32 %v877, 1.442695
        %v879 = vpow.pop %v878
        %v880 = vadd.f32 %v879, 1.0
        %v881 = vrcp.pop %v880
        %v882 = vmul.f32 1.0, %v881
        %v883 = vtanh.pop %v869
        %v884 = vxor.u32 %v870, 2147483648
        %v885 = vmul.f32 %v884, 1.442695
        %v886 = vpow.pop %v885
        %v887 = vadd.f32 %v886, 1.0
        %v888 = vrcp.pop %v887
        %v889 = vmul.f32 1.0, %v888
        %v890 = vmul.f32 %v882, 0.0
        %v891 = vmul.f32 %v876, %v883
        %v892 = vadd.f32 %v890, %v891
        %v893 = vtanh.pop %v892
        %v894 = vmul.f32 %v889, %v893
        %vm895 = vcmask 516096
        %896 = vst.msk [vmem:[#allocation2] sm:$0x1] %vm895, %v894
        %vm897 = vcmask 1040896
        %898 = vst.msk [vmem:[#allocation2 + $0xf] sm:$0x1] %vm897, %v894
        %v899 = vrot.slane %v473, 5
        %v900 = vrot.slane %v475, 5
        %v901 = vrot.slane %v516, 5
        %v902 = vrot.slane %v518, 5
        %v907 = vsel %vm573, %v469, %v899
        %v908 = vsel %vm574, %v471, %v900
        %v909 = vsel %vm575, %v512, %v901
        %v910 = vsel %vm576, %v514, %v902
        %v911 = vpack.c.bf16 %v894, %v894
        %912 = vmatprep.subr.bf16.mxu0 %v722
        %913 = vmatpush1.bf16.msra.mxu0 %v721
        %914 = vmatprep.subr.bf16.mxu0 %v726
        %915 = vmatpush1.bf16.msra.mxu0 %v725
        %916 = vmatprep.subr.bf16.mxu0 %v730
        %917 = vmatpush1.bf16.msra.mxu0 %v729
        %918 = vmatprep.subr.bf16.mxu0 %v734
        %919 = vmatpush1.bf16.msra.mxu0 %v733
        %920 = vmatprep.subr.bf16.mxu0 %v738
        %921 = vmatpush1.bf16.msra.mxu0 %v737
        %922 = vmatprep.subr.bf16.mxu0 %v742
        %923 = vmatpush1.bf16.msra.mxu0 %v741
        %924 = vmatprep.subr.bf16.mxu0 %v746
        %925 = vmatpush1.bf16.msra.mxu0 %v745
        %926 = vmatprep.subr.bf16.mxu0 %v750
        %927 = vmatpush1.bf16.msra.mxu0 %v749
        %928 = vmatprep.subr.bf16.mxu0 0
        %929 = vmatpush1.bf16.msra.mxu0 0
        %930 = vmatprep.subr.bf16.mxu0 0
        %931 = vmatpush1.bf16.msra.mxu0 0
        %932 = vmatprep.subr.bf16.mxu0 0
        %933 = vmatpush1.bf16.msra.mxu0 0
        %934 = vmatprep.subr.bf16.mxu0 0
        %935 = vmatpush1.bf16.msra.mxu0 0
        %936 = vmatprep.subr.bf16.mxu0 0
        %937 = vmatpush1.bf16.msra.mxu0 0
        %938 = vmatprep.subr.bf16.mxu0 0
        %939 = vmatpush1.bf16.msra.mxu0 0
        %940 = vmatprep.subr.bf16.mxu0 0
        %941 = vmatpush1.bf16.msra.mxu0 0
        %942 = vmatprep.subr.bf16.mxu0 0
        %943 = vmatpush1.bf16.msra.mxu0 0
        %944 = vmatprep.mubr.bf16.mxu0 0
        %945 = vmatmul.mubr.bf16.gmra.mrb[0].mxu0 %v911
        %v946 = vpop.f32.mrb[0].mxu0
        %v947 = vadd.f32 0.0, %v946
        %v948 = vpop.f32.mrb[0].mxu0
        %v949 = vadd.f32 0.0, %v948
        %v950 = vpop.f32.mrb[0].mxu0
        %v951 = vpop.f32.mrb[0].mxu0
        %952 = vdwg.mxu0
        %953 = vmatprep.subr.bf16.mxu0 %v724
        %954 = vmatpush1.bf16.msra.mxu0 %v723
        %955 = vmatprep.subr.bf16.mxu0 %v728
        %956 = vmatpush1.bf16.msra.mxu0 %v727
        %957 = vmatprep.subr.bf16.mxu0 %v732
        %958 = vmatpush1.bf16.msra.mxu0 %v731
        %959 = vmatprep.subr.bf16.mxu0 %v736
        %960 = vmatpush1.bf16.msra.mxu0 %v735
        %961 = vmatprep.subr.bf16.mxu0 %v740
        %962 = vmatpush1.bf16.msra.mxu0 %v739
        %963 = vmatprep.subr.bf16.mxu0 %v744
        %964 = vmatpush1.bf16.msra.mxu0 %v743
        %965 = vmatprep.subr.bf16.mxu0 %v748
        %966 = vmatpush1.bf16.msra.mxu0 %v747
        %967 = vmatprep.subr.bf16.mxu0 %v752
        %968 = vmatpush1.bf16.msra.mxu0 %v751
        %969 = vmatprep.subr.bf16.mxu0 0
        %970 = vmatpush1.bf16.msra.mxu0 0
        %971 = vmatprep.subr.bf16.mxu0 0
        %972 = vmatpush1.bf16.msra.mxu0 0
        %973 = vmatprep.subr.bf16.mxu0 0
        %974 = vmatpush1.bf16.msra.mxu0 0
        %975 = vmatprep.subr.bf16.mxu0 0
        %976 = vmatpush1.bf16.msra.mxu0 0
        %977 = vmatprep.subr.bf16.mxu0 0
        %978 = vmatpush1.bf16.msra.mxu0 0
        %979 = vmatprep.subr.bf16.mxu0 0
        %980 = vmatpush1.bf16.msra.mxu0 0
        %981 = vmatprep.subr.bf16.mxu0 0
        %982 = vmatpush1.bf16.msra.mxu0 0
        %983 = vmatprep.subr.bf16.mxu0 0
        %984 = vmatpush1.bf16.msra.mxu0 0
        %985 = vmatprep.mubr.bf16.mxu0 0
        %986 = vmatmul.mubr.bf16.gmra.mrb[0].mxu0 %v911
        %v987 = vpop.f32.mrb[0].mxu0
        %v988 = vadd.f32 0.0, %v987
        %v989 = vpop.f32.mrb[0].mxu0
        %v990 = vadd.f32 0.0, %v989
        %v991 = vpop.f32.mrb[0].mxu0
        %v992 = vpop.f32.mrb[0].mxu0
        %993 = vdwg.mxu0
        %v998 = vrot.slane %v947, 7
        %v999 = vrot.slane %v949, 7
        %v1000 = vrot.slane %v988, 7
        %v1001 = vrot.slane %v990, 7
        %v1006 = vadd.f32 %v907, %v998
        %v1007 = vadd.f32 %v908, %v999
        %v1008 = vadd.f32 %v909, %v1000
        %v1009 = vadd.f32 %v910, %v1001
        %v1010 = vxor.u32 %v1006, 2147483648
        %v1011 = vmul.f32 %v1010, 1.442695
        %v1012 = vpow.pop %v1011
        %v1013 = vadd.f32 %v1012, 1.0
        %v1014 = vrcp.pop %v1013
        %v1015 = vmul.f32 1.0, %v1014
        %v1016 = vxor.u32 %v1007, 2147483648
        %v1017 = vmul.f32 %v1016, 1.442695
        %v1018 = vpow.pop %v1017
        %v1019 = vadd.f32 %v1018, 1.0
        %v1020 = vrcp.pop %v1019
        %v1021 = vmul.f32 1.0, %v1020
        %v1022 = vtanh.pop %v1008
        %v1023 = vxor.u32 %v1009, 2147483648
        %v1024 = vmul.f32 %v1023, 1.442695
        %v1025 = vpow.pop %v1024
        %v1026 = vadd.f32 %v1025, 1.0
        %v1027 = vrcp.pop %v1026
        %v1028 = vmul.f32 1.0, %v1027
        %v1030 = vrot.slane %v892, 7
        %v1032 = vmul.f32 %v1021, %v1030
        %v1033 = vmul.f32 %v1015, %v1022
        %v1034 = vadd.f32 %v1032, %v1033
        %v1035 = vtanh.pop %v1034
        %v1036 = vmul.f32 %v1028, %v1035
        %vm1037 = vcmask 517121
        %1038 = vst.msk [vmem:[#allocation2] sm:$0x2] %vm1037, %v1036
        %vm1039 = vcmask 1041921
        %1040 = vst.msk [vmem:[#allocation2 + $0xd] sm:$0x2] %vm1039, %v1036
        %v1041 = vrot.slane %v473, 3
        %v1042 = vrot.slane %v475, 3
        %v1043 = vrot.slane %v516, 3
        %v1044 = vrot.slane %v518, 3
        %v1049 = vsel %vm573, %v469, %v1041
        %v1050 = vsel %vm574, %v471, %v1042
        %v1051 = vsel %vm575, %v512, %v1043
        %v1052 = vsel %vm576, %v514, %v1044
        %v1053 = vpack.c.bf16 %v1036, %v1036
        %v1055 = vshrl.u32 %v1053, 16
        %1058 = vmatprep.subr.bf16.mxu0 %v722
        %1059 = vmatpush1.bf16.msra.mxu0 %v721
        %1060 = vmatprep.subr.bf16.mxu0 %v726
        %1061 = vmatpush1.bf16.msra.mxu0 %v725
        %1062 = vmatprep.subr.bf16.mxu0 %v730
        %1063 = vmatpush1.bf16.msra.mxu0 %v729
        %1064 = vmatprep.subr.bf16.mxu0 %v734
        %1065 = vmatpush1.bf16.msra.mxu0 %v733
        %1066 = vmatprep.subr.bf16.mxu0 %v738
        %1067 = vmatpush1.bf16.msra.mxu0 %v737
        %1068 = vmatprep.subr.bf16.mxu0 %v742
        %1069 = vmatpush1.bf16.msra.mxu0 %v741
        %1070 = vmatprep.subr.bf16.mxu0 %v746
        %1071 = vmatpush1.bf16.msra.mxu0 %v745
        %1072 = vmatprep.subr.bf16.mxu0 %v750
        %1073 = vmatpush1.bf16.msra.mxu0 %v749
        %1074 = vmatprep.subr.bf16.mxu0 0
        %1075 = vmatpush1.bf16.msra.mxu0 0
        %1076 = vmatprep.subr.bf16.mxu0 0
        %1077 = vmatpush1.bf16.msra.mxu0 0
        %1078 = vmatprep.subr.bf16.mxu0 0
        %1079 = vmatpush1.bf16.msra.mxu0 0
        %1080 = vmatprep.subr.bf16.mxu0 0
        %1081 = vmatpush1.bf16.msra.mxu0 0
        %1082 = vmatprep.subr.bf16.mxu0 0
        %1083 = vmatpush1.bf16.msra.mxu0 0
        %1084 = vmatprep.subr.bf16.mxu0 0
        %1085 = vmatpush1.bf16.msra.mxu0 0
        %1086 = vmatprep.subr.bf16.mxu0 0
        %1087 = vmatpush1.bf16.msra.mxu0 0
        %1088 = vmatprep.subr.bf16.mxu0 0
        %1089 = vmatpush1.bf16.msra.mxu0 0
        %1090 = vmatprep.mubr.bf16.mxu0 0
        %1091 = vmatmul.mubr.bf16.gmra.mrb[0].mxu0 %v1055
        %v1092 = vpop.f32.mrb[0].mxu0
        %v1093 = vadd.f32 0.0, %v1092
        %v1094 = vpop.f32.mrb[0].mxu0
        %v1095 = vadd.f32 0.0, %v1094
        %v1096 = vpop.f32.mrb[0].mxu0
        %v1097 = vpop.f32.mrb[0].mxu0
        %1098 = vdwg.mxu0
        %1099 = vmatprep.subr.bf16.mxu0 %v724
        %1100 = vmatpush1.bf16.msra.mxu0 %v723
        %1101 = vmatprep.subr.bf16.mxu0 %v728
        %1102 = vmatpush1.bf16.msra.mxu0 %v727
        %1103 = vmatprep.subr.bf16.mxu0 %v732
        %1104 = vmatpush1.bf16.msra.mxu0 %v731
        %1105 = vmatprep.subr.bf16.mxu0 %v736
        %1106 = vmatpush1.bf16.msra.mxu0 %v735
        %1107 = vmatprep.subr.bf16.mxu0 %v740
        %1108 = vmatpush1.bf16.msra.mxu0 %v739
        %1109 = vmatprep.subr.bf16.mxu0 %v744
        %1110 = vmatpush1.bf16.msra.mxu0 %v743
        %1111 = vmatprep.subr.bf16.mxu0 %v748
        %1112 = vmatpush1.bf16.msra.mxu0 %v747
        %1113 = vmatprep.subr.bf16.mxu0 %v752
        %1114 = vmatpush1.bf16.msra.mxu0 %v751
        %1115 = vmatprep.subr.bf16.mxu0 0
        %1116 = vmatpush1.bf16.msra.mxu0 0
        %1117 = vmatprep.subr.bf16.mxu0 0
        %1118 = vmatpush1.bf16.msra.mxu0 0
        %1119 = vmatprep.subr.bf16.mxu0 0
        %1120 = vmatpush1.bf16.msra.mxu0 0
        %1121 = vmatprep.subr.bf16.mxu0 0
        %1122 = vmatpush1.bf16.msra.mxu0 0
        %1123 = vmatprep.subr.bf16.mxu0 0
        %1124 = vmatpush1.bf16.msra.mxu0 0
        %1125 = vmatprep.subr.bf16.mxu0 0
        %1126 = vmatpush1.bf16.msra.mxu0 0
        %1127 = vmatprep.subr.bf16.mxu0 0
        %1128 = vmatpush1.bf16.msra.mxu0 0
        %1129 = vmatprep.subr.bf16.mxu0 0
        %1130 = vmatpush1.bf16.msra.mxu0 0
        %1131 = vmatprep.mubr.bf16.mxu0 0
        %1132 = vmatmul.mubr.bf16.gmra.mrb[0].mxu0 %v1055
        %v1133 = vpop.f32.mrb[0].mxu0
        %v1134 = vadd.f32 0.0, %v1133
        %v1135 = vpop.f32.mrb[0].mxu0
        %v1136 = vadd.f32 0.0, %v1135
        %v1137 = vpop.f32.mrb[0].mxu0
        %v1138 = vpop.f32.mrb[0].mxu0
        %1139 = vdwg.mxu0
        %v1144 = vrot.slane %v1093, 6
        %v1145 = vrot.slane %v1095, 6
        %v1146 = vrot.slane %v1134, 6
        %v1147 = vrot.slane %v1136, 6
        %v1152 = vadd.f32 %v1049, %v1144
        %v1153 = vadd.f32 %v1050, %v1145
        %v1154 = vadd.f32 %v1051, %v1146
        %v1155 = vadd.f32 %v1052, %v1147
        %v1156 = vxor.u32 %v1152, 2147483648
        %v1157 = vmul.f32 %v1156, 1.442695
        %v1158 = vpow.pop %v1157
        %v1159 = vadd.f32 %v1158, 1.0
        %v1160 = vrcp.pop %v1159
        %v1161 = vmul.f32 1.0, %v1160
        %v1162 = vxor.u32 %v1153, 2147483648
        %v1163 = vmul.f32 %v1162, 1.442695
        %v1164 = vpow.pop %v1163
        %v1165 = vadd.f32 %v1164, 1.0
        %v1166 = vrcp.pop %v1165
        %v1167 = vmul.f32 1.0, %v1166
        %v1168 = vtanh.pop %v1154
        %v1169 = vxor.u32 %v1155, 2147483648
        %v1170 = vmul.f32 %v1169, 1.442695
        %v1171 = vpow.pop %v1170
        %v1172 = vadd.f32 %v1171, 1.0
        %v1173 = vrcp.pop %v1172
        %v1174 = vmul.f32 1.0, %v1173
        %v1176 = vrot.slane %v1034, 7
        %v1178 = vmul.f32 %v1167, %v1176
        %v1179 = vmul.f32 %v1161, %v1168
        %v1180 = vadd.f32 %v1178, %v1179
        %v1181 = vtanh.pop %v1180
        %v1182 = vmul.f32 %v1174, %v1181
        %vm1183 = vcmask 518146
        %1184 = vst.msk [vmem:[#allocation2] sm:$0x4] %vm1183, %v1182
        %vm1185 = vcmask 1042946
        %1186 = vst.msk [vmem:[#allocation2 + $0xb] sm:$0x4] %vm1185, %v1182
        %v1187 = vrot.slane %v473, 1
        %v1188 = vrot.slane %v475, 1
        %v1189 = vrot.slane %v516, 1
        %v1190 = vrot.slane %v518, 1
        %v1195 = vsel %vm573, %v469, %v1187
        %v1196 = vsel %vm574, %v471, %v1188
        %v1197 = vsel %vm575, %v512, %v1189
        %v1198 = vsel %vm576, %v514, %v1190
        %v1199 = vpack.c.bf16 %v1182, %v1182
        %v1201 = vrot.slane %v1199, 1
        %1203 = vmatprep.subr.bf16.mxu0 %v722
        %1204 = vmatpush1.bf16.msra.mxu0 %v721
        %1205 = vmatprep.subr.bf16.mxu0 %v726
        %1206 = vmatpush1.bf16.msra.mxu0 %v725
        %1207 = vmatprep.subr.bf16.mxu0 %v730
        %1208 = vmatpush1.bf16.msra.mxu0 %v729
        %1209 = vmatprep.subr.bf16.mxu0 %v734
        %1210 = vmatpush1.bf16.msra.mxu0 %v733
        %1211 = vmatprep.subr.bf16.mxu0 %v738
        %1212 = vmatpush1.bf16.msra.mxu0 %v737
        %1213 = vmatprep.subr.bf16.mxu0 %v742
        %1214 = vmatpush1.bf16.msra.mxu0 %v741
        %1215 = vmatprep.subr.bf16.mxu0 %v746
        %1216 = vmatpush1.bf16.msra.mxu0 %v745
        %1217 = vmatprep.subr.bf16.mxu0 %v750
        %1218 = vmatpush1.bf16.msra.mxu0 %v749
        %1219 = vmatprep.subr.bf16.mxu0 0
        %1220 = vmatpush1.bf16.msra.mxu0 0
        %1221 = vmatprep.subr.bf16.mxu0 0
        %1222 = vmatpush1.bf16.msra.mxu0 0
        %1223 = vmatprep.subr.bf16.mxu0 0
        %1224 = vmatpush1.bf16.msra.mxu0 0
        %1225 = vmatprep.subr.bf16.mxu0 0
        %1226 = vmatpush1.bf16.msra.mxu0 0
        %1227 = vmatprep.subr.bf16.mxu0 0
        %1228 = vmatpush1.bf16.msra.mxu0 0
        %1229 = vmatprep.subr.bf16.mxu0 0
        %1230 = vmatpush1.bf16.msra.mxu0 0
        %1231 = vmatprep.subr.bf16.mxu0 0
        %1232 = vmatpush1.bf16.msra.mxu0 0
        %1233 = vmatprep.subr.bf16.mxu0 0
        %1234 = vmatpush1.bf16.msra.mxu0 0
        %1235 = vmatprep.mubr.bf16.mxu0 0
        %1236 = vmatmul.mubr.bf16.gmra.mrb[0].mxu0 %v1201
        %v1237 = vpop.f32.mrb[0].mxu0
        %v1238 = vadd.f32 0.0, %v1237
        %v1239 = vpop.f32.mrb[0].mxu0
        %v1240 = vadd.f32 0.0, %v1239
        %v1241 = vpop.f32.mrb[0].mxu0
        %v1242 = vpop.f32.mrb[0].mxu0
        %1243 = vdwg.mxu0
        %1244 = vmatprep.subr.bf16.mxu0 %v724
        %1245 = vmatpush1.bf16.msra.mxu0 %v723
        %1246 = vmatprep.subr.bf16.mxu0 %v728
        %1247 = vmatpush1.bf16.msra.mxu0 %v727
        %1248 = vmatprep.subr.bf16.mxu0 %v732
        %1249 = vmatpush1.bf16.msra.mxu0 %v731
        %1250 = vmatprep.subr.bf16.mxu0 %v736
        %1251 = vmatpush1.bf16.msra.mxu0 %v735
        %1252 = vmatprep.subr.bf16.mxu0 %v740
        %1253 = vmatpush1.bf16.msra.mxu0 %v739
        %1254 = vmatprep.subr.bf16.mxu0 %v744
        %1255 = vmatpush1.bf16.msra.mxu0 %v743
        %1256 = vmatprep.subr.bf16.mxu0 %v748
        %1257 = vmatpush1.bf16.msra.mxu0 %v747
        %1258 = vmatprep.subr.bf16.mxu0 %v752
        %1259 = vmatpush1.bf16.msra.mxu0 %v751
        %1260 = vmatprep.subr.bf16.mxu0 0
        %1261 = vmatpush1.bf16.msra.mxu0 0
        %1262 = vmatprep.subr.bf16.mxu0 0
        %1263 = vmatpush1.bf16.msra.mxu0 0
        %1264 = vmatprep.subr.bf16.mxu0 0
        %1265 = vmatpush1.bf16.msra.mxu0 0
        %1266 = vmatprep.subr.bf16.mxu0 0
        %1267 = vmatpush1.bf16.msra.mxu0 0
        %1268 = vmatprep.subr.bf16.mxu0 0
        %1269 = vmatpush1.bf16.msra.mxu0 0
        %1270 = vmatprep.subr.bf16.mxu0 0
        %1271 = vmatpush1.bf16.msra.mxu0 0
        %1272 = vmatprep.subr.bf16.mxu0 0
        %1273 = vmatpush1.bf16.msra.mxu0 0
        %1274 = vmatprep.subr.bf16.mxu0 0
        %1275 = vmatpush1.bf16.msra.mxu0 0
        %1276 = vmatprep.mubr.bf16.mxu0 0
        %1277 = vmatmul.mubr.bf16.gmra.mrb[0].mxu0 %v1201
        %v1278 = vpop.f32.mrb[0].mxu0
        %v1279 = vadd.f32 0.0, %v1278
        %v1280 = vpop.f32.mrb[0].mxu0
        %v1281 = vadd.f32 0.0, %v1280
        %v1282 = vpop.f32.mrb[0].mxu0
        %v1283 = vpop.f32.mrb[0].mxu0
        %1284 = vdwg.mxu0
        %v1289 = vrot.slane %v1238, 5
        %v1290 = vrot.slane %v1240, 5
        %v1291 = vrot.slane %v1279, 5
        %v1292 = vrot.slane %v1281, 5
        %v1297 = vadd.f32 %v1195, %v1289
        %v1298 = vadd.f32 %v1196, %v1290
        %v1299 = vadd.f32 %v1197, %v1291
        %v1300 = vadd.f32 %v1198, %v1292
        %v1301 = vxor.u32 %v1297, 2147483648
        %v1302 = vmul.f32 %v1301, 1.442695
        %v1303 = vpow.pop %v1302
        %v1304 = vadd.f32 %v1303, 1.0
        %v1305 = vrcp.pop %v1304
        %v1306 = vmul.f32 1.0, %v1305
        %v1307 = vxor.u32 %v1298, 2147483648
        %v1308 = vmul.f32 %v1307, 1.442695
        %v1309 = vpow.pop %v1308
        %v1310 = vadd.f32 %v1309, 1.0
        %v1311 = vrcp.pop %v1310
        %v1312 = vmul.f32 1.0, %v1311
        %v1313 = vtanh.pop %v1299
        %v1314 = vxor.u32 %v1300, 2147483648
        %v1315 = vmul.f32 %v1314, 1.442695
        %v1316 = vpow.pop %v1315
        %v1317 = vadd.f32 %v1316, 1.0
        %v1318 = vrcp.pop %v1317
        %v1319 = vmul.f32 1.0, %v1318
        %v1321 = vrot.slane %v1180, 7
        %v1323 = vmul.f32 %v1312, %v1321
        %v1324 = vmul.f32 %v1306, %v1313
        %v1325 = vadd.f32 %v1323, %v1324
        %v1326 = vtanh.pop %v1325
        %v1327 = vmul.f32 %v1319, %v1326
        %vm1328 = vcmask 519171
        %1329 = vst.msk [vmem:[#allocation2] sm:$0x8] %vm1328, %v1327
        %vm1330 = vcmask 1043971
        %1331 = vst.msk [vmem:[#allocation2 + $0x9] sm:$0x8] %vm1330, %v1327
        %v1332 = vpack.c.bf16 %v1327, %v1327
        %v1334 = vshrl.u32 %v1332, 16
        %v1336 = vrot.slane %v1334, 1
        %1338 = vmatprep.subr.bf16.mxu0 %v722
        %1339 = vmatpush1.bf16.msra.mxu0 %v721
        %1340 = vmatprep.subr.bf16.mxu0 %v726
        %1341 = vmatpush1.bf16.msra.mxu0 %v725
        %1342 = vmatprep.subr.bf16.mxu0 %v730
        %1343 = vmatpush1.bf16.msra.mxu0 %v729
        %1344 = vmatprep.subr.bf16.mxu0 %v734
        %1345 = vmatpush1.bf16.msra.mxu0 %v733
        %1346 = vmatprep.subr.bf16.mxu0 %v738
        %1347 = vmatpush1.bf16.msra.mxu0 %v737
        %1348 = vmatprep.subr.bf16.mxu0 %v742
        %1349 = vmatpush1.bf16.msra.mxu0 %v741
        %1350 = vmatprep.subr.bf16.mxu0 %v746
        %1351 = vmatpush1.bf16.msra.mxu0 %v745
        %1352 = vmatprep.subr.bf16.mxu0 %v750
        %1353 = vmatpush1.bf16.msra.mxu0 %v749
        %1354 = vmatprep.subr.bf16.mxu0 0
        %1355 = vmatpush1.bf16.msra.mxu0 0
        %1356 = vmatprep.subr.bf16.mxu0 0
        %1357 = vmatpush1.bf16.msra.mxu0 0
        %1358 = vmatprep.subr.bf16.mxu0 0
        %1359 = vmatpush1.bf16.msra.mxu0 0
        %1360 = vmatprep.subr.bf16.mxu0 0
        %1361 = vmatpush1.bf16.msra.mxu0 0
        %1362 = vmatprep.subr.bf16.mxu0 0
        %1363 = vmatpush1.bf16.msra.mxu0 0
        %1364 = vmatprep.subr.bf16.mxu0 0
        %1365 = vmatpush1.bf16.msra.mxu0 0
        %1366 = vmatprep.subr.bf16.mxu0 0
        %1367 = vmatpush1.bf16.msra.mxu0 0
        %1368 = vmatprep.subr.bf16.mxu0 0
        %1369 = vmatpush1.bf16.msra.mxu0 0
        %1370 = vmatprep.mubr.bf16.mxu0 0
        %1371 = vmatmul.mubr.bf16.gmra.mrb[0].mxu0 %v1336
        %v1372 = vpop.f32.mrb[0].mxu0
        %v1373 = vadd.f32 0.0, %v1372
        %v1374 = vpop.f32.mrb[0].mxu0
        %v1375 = vadd.f32 0.0, %v1374
        %v1376 = vpop.f32.mrb[0].mxu0
        %v1377 = vpop.f32.mrb[0].mxu0
        %1378 = vdwg.mxu0
        %1379 = vmatprep.subr.bf16.mxu0 %v724
        %1380 = vmatpush1.bf16.msra.mxu0 %v723
        %1381 = vmatprep.subr.bf16.mxu0 %v728
        %1382 = vmatpush1.bf16.msra.mxu0 %v727
        %1383 = vmatprep.subr.bf16.mxu0 %v732
        %1384 = vmatpush1.bf16.msra.mxu0 %v731
        %1385 = vmatprep.subr.bf16.mxu0 %v736
        %1386 = vmatpush1.bf16.msra.mxu0 %v735
        %1387 = vmatprep.subr.bf16.mxu0 %v740
        %1388 = vmatpush1.bf16.msra.mxu0 %v739
        %1389 = vmatprep.subr.bf16.mxu0 %v744
        %1390 = vmatpush1.bf16.msra.mxu0 %v743
        %1391 = vmatprep.subr.bf16.mxu0 %v748
        %1392 = vmatpush1.bf16.msra.mxu0 %v747
        %1393 = vmatprep.subr.bf16.mxu0 %v752
        %1394 = vmatpush1.bf16.msra.mxu0 %v751
        %1395 = vmatprep.subr.bf16.mxu0 0
        %1396 = vmatpush1.bf16.msra.mxu0 0
        %1397 = vmatprep.subr.bf16.mxu0 0
        %1398 = vmatpush1.bf16.msra.mxu0 0
        %1399 = vmatprep.subr.bf16.mxu0 0
        %1400 = vmatpush1.bf16.msra.mxu0 0
        %1401 = vmatprep.subr.bf16.mxu0 0
        %1402 = vmatpush1.bf16.msra.mxu0 0
        %1403 = vmatprep.subr.bf16.mxu0 0
        %1404 = vmatpush1.bf16.msra.mxu0 0
        %1405 = vmatprep.subr.bf16.mxu0 0
        %1406 = vmatpush1.bf16.msra.mxu0 0
        %1407 = vmatprep.subr.bf16.mxu0 0
        %1408 = vmatpush1.bf16.msra.mxu0 0
        %1409 = vmatprep.subr.bf16.mxu0 0
        %1410 = vmatpush1.bf16.msra.mxu0 0
        %1411 = vmatprep.mubr.bf16.mxu0 0
        %1412 = vmatmul.mubr.bf16.gmra.mrb[0].mxu0 %v1336
        %v1413 = vpop.f32.mrb[0].mxu0
        %v1414 = vadd.f32 0.0, %v1413
        %v1415 = vpop.f32.mrb[0].mxu0
        %v1416 = vadd.f32 0.0, %v1415
        %v1417 = vpop.f32.mrb[0].mxu0
        %v1418 = vpop.f32.mrb[0].mxu0
        %1419 = vdwg.mxu0
        %v1424 = vrot.slane %v1373, 4
        %v1425 = vrot.slane %v1375, 4
        %v1426 = vrot.slane %v1414, 4
        %v1427 = vrot.slane %v1416, 4
        %v1432 = vadd.f32 %v621, %v1424
        %v1433 = vadd.f32 %v622, %v1425
        %v1434 = vadd.f32 %v623, %v1426
        %v1435 = vadd.f32 %v624, %v1427
        %v1436 = vxor.u32 %v1432, 2147483648
        %v1437 = vmul.f32 %v1436, 1.442695
        %v1438 = vpow.pop %v1437
        %v1439 = vadd.f32 %v1438, 1.0
        %v1440 = vrcp.pop %v1439
        %v1441 = vmul.f32 1.0, %v1440
        %v1442 = vxor.u32 %v1433, 2147483648
        %v1443 = vmul.f32 %v1442, 1.442695
        %v1444 = vpow.pop %v1443
        %v1445 = vadd.f32 %v1444, 1.0
        %v1446 = vrcp.pop %v1445
        %v1447 = vmul.f32 1.0, %v1446
        %v1448 = vtanh.pop %v1434
        %v1449 = vxor.u32 %v1435, 2147483648
        %v1450 = vmul.f32 %v1449, 1.442695
        %v1451 = vpow.pop %v1450
        %v1452 = vadd.f32 %v1451, 1.0
        %v1453 = vrcp.pop %v1452
        %v1454 = vmul.f32 1.0, %v1453
        %v1456 = vrot.slane %v1325, 7
        %v1458 = vmul.f32 %v1447, %v1456
        %v1459 = vmul.f32 %v1441, %v1448
        %v1460 = vadd.f32 %v1458, %v1459
        %v1461 = vtanh.pop %v1460
        %v1462 = vmul.f32 %v1454, %v1461
        %vm1463 = vcmask 520196
        %1464 = vst.msk [vmem:[#allocation2] sm:$0x10] %vm1463, %v1462
        %vm1465 = vcmask 1044996
        %1466 = vst.msk [vmem:[#allocation2 + $0x7] sm:$0x10] %vm1465, %v1462
        %v1467 = vpack.c.bf16 %v1462, %v1462
        %v1469 = vrot.slane %v1467, 2
        %1471 = vmatprep.subr.bf16.mxu0 %v722
        %1472 = vmatpush1.bf16.msra.mxu0 %v721
        %1473 = vmatprep.subr.bf16.mxu0 %v726
        %1474 = vmatpush1.bf16.msra.mxu0 %v725
        %1475 = vmatprep.subr.bf16.mxu0 %v730
        %1476 = vmatpush1.bf16.msra.mxu0 %v729
        %1477 = vmatprep.subr.bf16.mxu0 %v734
        %1478 = vmatpush1.bf16.msra.mxu0 %v733
        %1479 = vmatprep.subr.bf16.mxu0 %v738
        %1480 = vmatpush1.bf16.msra.mxu0 %v737
        %1481 = vmatprep.subr.bf16.mxu0 %v742
        %1482 = vmatpush1.bf16.msra.mxu0 %v741
        %1483 = vmatprep.subr.bf16.mxu0 %v746
        %1484 = vmatpush1.bf16.msra.mxu0 %v745
        %1485 = vmatprep.subr.bf16.mxu0 %v750
        %1486 = vmatpush1.bf16.msra.mxu0 %v749
        %1487 = vmatprep.subr.bf16.mxu0 0
        %1488 = vmatpush1.bf16.msra.mxu0 0
        %1489 = vmatprep.subr.bf16.mxu0 0
        %1490 = vmatpush1.bf16.msra.mxu0 0
        %1491 = vmatprep.subr.bf16.mxu0 0
        %1492 = vmatpush1.bf16.msra.mxu0 0
        %1493 = vmatprep.subr.bf16.mxu0 0
        %1494 = vmatpush1.bf16.msra.mxu0 0
        %1495 = vmatprep.subr.bf16.mxu0 0
        %1496 = vmatpush1.bf16.msra.mxu0 0
        %1497 = vmatprep.subr.bf16.mxu0 0
        %1498 = vmatpush1.bf16.msra.mxu0 0
        %1499 = vmatprep.subr.bf16.mxu0 0
        %1500 = vmatpush1.bf16.msra.mxu0 0
        %1501 = vmatprep.subr.bf16.mxu0 0
        %1502 = vmatpush1.bf16.msra.mxu0 0
        %1503 = vmatprep.mubr.bf16.mxu0 0
        %1504 = vmatmul.mubr.bf16.gmra.mrb[0].mxu0 %v1469
        %v1505 = vpop.f32.mrb[0].mxu0
        %v1506 = vadd.f32 0.0, %v1505
        %v1507 = vpop.f32.mrb[0].mxu0
        %v1508 = vadd.f32 0.0, %v1507
        %v1509 = vpop.f32.mrb[0].mxu0
        %v1510 = vpop.f32.mrb[0].mxu0
        %1511 = vdwg.mxu0
        %1512 = vmatprep.subr.bf16.mxu0 %v724
        %1513 = vmatpush1.bf16.msra.mxu0 %v723
        %1514 = vmatprep.subr.bf16.mxu0 %v728
        %1515 = vmatpush1.bf16.msra.mxu0 %v727
        %1516 = vmatprep.subr.bf16.mxu0 %v732
        %1517 = vmatpush1.bf16.msra.mxu0 %v731
        %1518 = vmatprep.subr.bf16.mxu0 %v736
        %1519 = vmatpush1.bf16.msra.mxu0 %v735
        %1520 = vmatprep.subr.bf16.mxu0 %v740
        %1521 = vmatpush1.bf16.msra.mxu0 %v739
        %1522 = vmatprep.subr.bf16.mxu0 %v744
        %1523 = vmatpush1.bf16.msra.mxu0 %v743
        %1524 = vmatprep.subr.bf16.mxu0 %v748
        %1525 = vmatpush1.bf16.msra.mxu0 %v747
        %1526 = vmatprep.subr.bf16.mxu0 %v752
        %1527 = vmatpush1.bf16.msra.mxu0 %v751
        %1528 = vmatprep.subr.bf16.mxu0 0
        %1529 = vmatpush1.bf16.msra.mxu0 0
        %1530 = vmatprep.subr.bf16.mxu0 0
        %1531 = vmatpush1.bf16.msra.mxu0 0
        %1532 = vmatprep.subr.bf16.mxu0 0
        %1533 = vmatpush1.bf16.msra.mxu0 0
        %1534 = vmatprep.subr.bf16.mxu0 0
        %1535 = vmatpush1.bf16.msra.mxu0 0
        %1536 = vmatprep.subr.bf16.mxu0 0
        %1537 = vmatpush1.bf16.msra.mxu0 0
        %1538 = vmatprep.subr.bf16.mxu0 0
        %1539 = vmatpush1.bf16.msra.mxu0 0
        %1540 = vmatprep.subr.bf16.mxu0 0
        %1541 = vmatpush1.bf16.msra.mxu0 0
        %1542 = vmatprep.subr.bf16.mxu0 0
        %1543 = vmatpush1.bf16.msra.mxu0 0
        %1544 = vmatprep.mubr.bf16.mxu0 0
        %1545 = vmatmul.mubr.bf16.gmra.mrb[0].mxu0 %v1469
        %v1546 = vpop.f32.mrb[0].mxu0
        %v1547 = vadd.f32 0.0, %v1546
        %v1548 = vpop.f32.mrb[0].mxu0
        %v1549 = vadd.f32 0.0, %v1548
        %v1550 = vpop.f32.mrb[0].mxu0
        %v1551 = vpop.f32.mrb[0].mxu0
        %1552 = vdwg.mxu0
        %v1557 = vrot.slane %v1506, 3
        %v1558 = vrot.slane %v1508, 3
        %v1559 = vrot.slane %v1547, 3
        %v1560 = vrot.slane %v1549, 3
        %v1565 = vadd.f32 %v907, %v1557
        %v1566 = vadd.f32 %v908, %v1558
        %v1567 = vadd.f32 %v909, %v1559
        %v1568 = vadd.f32 %v910, %v1560
        %v1569 = vxor.u32 %v1565, 2147483648
        %v1570 = vmul.f32 %v1569, 1.442695
        %v1571 = vpow.pop %v1570
        %v1572 = vadd.f32 %v1571, 1.0
        %v1573 = vrcp.pop %v1572
        %v1574 = vmul.f32 1.0, %v1573
        %v1575 = vxor.u32 %v1566, 2147483648
        %v1576 = vmul.f32 %v1575, 1.442695
        %v1577 = vpow.pop %v1576
        %v1578 = vadd.f32 %v1577, 1.0
        %v1579 = vrcp.pop %v1578
        %v1580 = vmul.f32 1.0, %v1579
        %v1581 = vtanh.pop %v1567
        %v1582 = vxor.u32 %v1568, 2147483648
        %v1583 = vmul.f32 %v1582, 1.442695
        %v1584 = vpow.pop %v1583
        %v1585 = vadd.f32 %v1584, 1.0
        %v1586 = vrcp.pop %v1585
        %v1587 = vmul.f32 1.0, %v1586
        %v1589 = vrot.slane %v1460, 7
        %v1591 = vmul.f32 %v1580, %v1589
        %v1592 = vmul.f32 %v1574, %v1581
        %v1593 = vadd.f32 %v1591, %v1592
        %v1594 = vtanh.pop %v1593
        %v1595 = vmul.f32 %v1587, %v1594
        %vm1596 = vcmask 521221
        %1597 = vst.msk [vmem:[#allocation2] sm:$0x20] %vm1596, %v1595
        %vm1598 = vcmask 1046021
        %1599 = vst.msk [vmem:[#allocation2 + $0x5] sm:$0x20] %vm1598, %v1595
        %v1600 = vpack.c.bf16 %v1595, %v1595
        %v1602 = vshrl.u32 %v1600, 16
        %v1604 = vrot.slane %v1602, 2
        %1606 = vmatprep.subr.bf16.mxu0 %v722
        %1607 = vmatpush1.bf16.msra.mxu0 %v721
        %1608 = vmatprep.subr.bf16.mxu0 %v726
        %1609 = vmatpush1.bf16.msra.mxu0 %v725
        %1610 = vmatprep.subr.bf16.mxu0 %v730
        %1611 = vmatpush1.bf16.msra.mxu0 %v729
        %1612 = vmatprep.subr.bf16.mxu0 %v734
        %1613 = vmatpush1.bf16.msra.mxu0 %v733
        %1614 = vmatprep.subr.bf16.mxu0 %v738
        %1615 = vmatpush1.bf16.msra.mxu0 %v737
        %1616 = vmatprep.subr.bf16.mxu0 %v742
        %1617 = vmatpush1.bf16.msra.mxu0 %v741
        %1618 = vmatprep.subr.bf16.mxu0 %v746
        %1619 = vmatpush1.bf16.msra.mxu0 %v745
        %1620 = vmatprep.subr.bf16.mxu0 %v750
        %1621 = vmatpush1.bf16.msra.mxu0 %v749
        %1622 = vmatprep.subr.bf16.mxu0 0
        %1623 = vmatpush1.bf16.msra.mxu0 0
        %1624 = vmatprep.subr.bf16.mxu0 0
        %1625 = vmatpush1.bf16.msra.mxu0 0
        %1626 = vmatprep.subr.bf16.mxu0 0
        %1627 = vmatpush1.bf16.msra.mxu0 0
        %1628 = vmatprep.subr.bf16.mxu0 0
        %1629 = vmatpush1.bf16.msra.mxu0 0
        %1630 = vmatprep.subr.bf16.mxu0 0
        %1631 = vmatpush1.bf16.msra.mxu0 0
        %1632 = vmatprep.subr.bf16.mxu0 0
        %1633 = vmatpush1.bf16.msra.mxu0 0
        %1634 = vmatprep.subr.bf16.mxu0 0
        %1635 = vmatpush1.bf16.msra.mxu0 0
        %1636 = vmatprep.subr.bf16.mxu0 0
        %1637 = vmatpush1.bf16.msra.mxu0 0
        %1638 = vmatprep.mubr.bf16.mxu0 0
        %1639 = vmatmul.mubr.bf16.gmra.mrb[0].mxu0 %v1604
        %v1640 = vpop.f32.mrb[0].mxu0
        %v1641 = vadd.f32 0.0, %v1640
        %v1642 = vpop.f32.mrb[0].mxu0
        %v1643 = vadd.f32 0.0, %v1642
        %v1644 = vpop.f32.mrb[0].mxu0
        %v1645 = vpop.f32.mrb[0].mxu0
        %1646 = vdwg.mxu0
        %1647 = vmatprep.subr.bf16.mxu0 %v724
        %1648 = vmatpush1.bf16.msra.mxu0 %v723
        %1649 = vmatprep.subr.bf16.mxu0 %v728
        %1650 = vmatpush1.bf16.msra.mxu0 %v727
        %1651 = vmatprep.subr.bf16.mxu0 %v732
        %1652 = vmatpush1.bf16.msra.mxu0 %v731
        %1653 = vmatprep.subr.bf16.mxu0 %v736
        %1654 = vmatpush1.bf16.msra.mxu0 %v735
        %1655 = vmatprep.subr.bf16.mxu0 %v740
        %1656 = vmatpush1.bf16.msra.mxu0 %v739
        %1657 = vmatprep.subr.bf16.mxu0 %v744
        %1658 = vmatpush1.bf16.msra.mxu0 %v743
        %1659 = vmatprep.subr.bf16.mxu0 %v748
        %1660 = vmatpush1.bf16.msra.mxu0 %v747
        %1661 = vmatprep.subr.bf16.mxu0 %v752
        %1662 = vmatpush1.bf16.msra.mxu0 %v751
        %1663 = vmatprep.subr.bf16.mxu0 0
        %1664 = vmatpush1.bf16.msra.mxu0 0
        %1665 = vmatprep.subr.bf16.mxu0 0
        %1666 = vmatpush1.bf16.msra.mxu0 0
        %1667 = vmatprep.subr.bf16.mxu0 0
        %1668 = vmatpush1.bf16.msra.mxu0 0
        %1669 = vmatprep.subr.bf16.mxu0 0
        %1670 = vmatpush1.bf16.msra.mxu0 0
        %1671 = vmatprep.subr.bf16.mxu0 0
        %1672 = vmatpush1.bf16.msra.mxu0 0
        %1673 = vmatprep.subr.bf16.mxu0 0
        %1674 = vmatpush1.bf16.msra.mxu0 0
        %1675 = vmatprep.subr.bf16.mxu0 0
        %1676 = vmatpush1.bf16.msra.mxu0 0
        %1677 = vmatprep.subr.bf16.mxu0 0
        %1678 = vmatpush1.bf16.msra.mxu0 0
        %1679 = vmatprep.mubr.bf16.mxu0 0
        %1680 = vmatmul.mubr.bf16.gmra.mrb[0].mxu0 %v1604
        %v1681 = vpop.f32.mrb[0].mxu0
        %v1682 = vadd.f32 0.0, %v1681
        %v1683 = vpop.f32.mrb[0].mxu0
        %v1684 = vadd.f32 0.0, %v1683
        %v1685 = vpop.f32.mrb[0].mxu0
        %v1686 = vpop.f32.mrb[0].mxu0
        %1687 = vdwg.mxu0
        %v1692 = vrot.slane %v1641, 2
        %v1693 = vrot.slane %v1643, 2
        %v1694 = vrot.slane %v1682, 2
        %v1695 = vrot.slane %v1684, 2
        %v1700 = vadd.f32 %v1049, %v1692
        %v1701 = vadd.f32 %v1050, %v1693
        %v1702 = vadd.f32 %v1051, %v1694
        %v1703 = vadd.f32 %v1052, %v1695
        %v1704 = vxor.u32 %v1700, 2147483648
        %v1705 = vmul.f32 %v1704, 1.442695
        %v1706 = vpow.pop %v1705
        %v1707 = vadd.f32 %v1706, 1.0
        %v1708 = vrcp.pop %v1707
        %v1709 = vmul.f32 1.0, %v1708
        %v1710 = vxor.u32 %v1701, 2147483648
        %v1711 = vmul.f32 %v1710, 1.442695
        %v1712 = vpow.pop %v1711
        %v1713 = vadd.f32 %v1712, 1.0
        %v1714 = vrcp.pop %v1713
        %v1715 = vmul.f32 1.0, %v1714
        %v1716 = vtanh.pop %v1702
        %v1717 = vxor.u32 %v1703, 2147483648
        %v1718 = vmul.f32 %v1717, 1.442695
        %v1719 = vpow.pop %v1718
        %v1720 = vadd.f32 %v1719, 1.0
        %v1721 = vrcp.pop %v1720
        %v1722 = vmul.f32 1.0, %v1721
        %v1724 = vrot.slane %v1593, 7
        %v1726 = vmul.f32 %v1715, %v1724
        %v1727 = vmul.f32 %v1709, %v1716
        %v1728 = vadd.f32 %v1726, %v1727
        %v1729 = vtanh.pop %v1728
        %v1730 = vmul.f32 %v1722, %v1729
        %vm1731 = vcmask 522246
        %1732 = vst.msk [vmem:[#allocation2] sm:$0x40] %vm1731, %v1730
        %vm1733 = vcmask 1047046
        %1734 = vst.msk [vmem:[#allocation2 + $0x3] sm:$0x40] %vm1733, %v1730
        %v1735 = vpack.c.bf16 %v1730, %v1730
        %v1737 = vrot.slane %v1735, 3
        %1739 = vmatprep.subr.bf16.mxu0 %v722
        %1740 = vmatpush1.bf16.msra.mxu0 %v721
        %1741 = vmatprep.subr.bf16.mxu0 %v726
        %1742 = vmatpush1.bf16.msra.mxu0 %v725
        %1743 = vmatprep.subr.bf16.mxu0 %v730
        %1744 = vmatpush1.bf16.msra.mxu0 %v729
        %1745 = vmatprep.subr.bf16.mxu0 %v734
        %1746 = vmatpush1.bf16.msra.mxu0 %v733
        %1747 = vmatprep.subr.bf16.mxu0 %v738
        %1748 = vmatpush1.bf16.msra.mxu0 %v737
        %1749 = vmatprep.subr.bf16.mxu0 %v742
        %1750 = vmatpush1.bf16.msra.mxu0 %v741
        %1751 = vmatprep.subr.bf16.mxu0 %v746
        %1752 = vmatpush1.bf16.msra.mxu0 %v745
        %1753 = vmatprep.subr.bf16.mxu0 %v750
        %1754 = vmatpush1.bf16.msra.mxu0 %v749
        %1755 = vmatprep.subr.bf16.mxu0 0
        %1756 = vmatpush1.bf16.msra.mxu0 0
        %1757 = vmatprep.subr.bf16.mxu0 0
        %1758 = vmatpush1.bf16.msra.mxu0 0
        %1759 = vmatprep.subr.bf16.mxu0 0
        %1760 = vmatpush1.bf16.msra.mxu0 0
        %1761 = vmatprep.subr.bf16.mxu0 0
        %1762 = vmatpush1.bf16.msra.mxu0 0
        %1763 = vmatprep.subr.bf16.mxu0 0
        %1764 = vmatpush1.bf16.msra.mxu0 0
        %1765 = vmatprep.subr.bf16.mxu0 0
        %1766 = vmatpush1.bf16.msra.mxu0 0
        %1767 = vmatprep.subr.bf16.mxu0 0
        %1768 = vmatpush1.bf16.msra.mxu0 0
        %1769 = vmatprep.subr.bf16.mxu0 0
        %1770 = vmatpush1.bf16.msra.mxu0 0
        %1771 = vmatprep.mubr.bf16.mxu0 0
        %1772 = vmatmul.mubr.bf16.gmra.mrb[0].mxu0 %v1737
        %v1773 = vpop.f32.mrb[0].mxu0
        %v1774 = vadd.f32 0.0, %v1773
        %v1775 = vpop.f32.mrb[0].mxu0
        %v1776 = vadd.f32 0.0, %v1775
        %v1777 = vpop.f32.mrb[0].mxu0
        %v1778 = vpop.f32.mrb[0].mxu0
        %1779 = vdwg.mxu0
        %1780 = vmatprep.subr.bf16.mxu0 %v724
        %1781 = vmatpush1.bf16.msra.mxu0 %v723
        %1782 = vmatprep.subr.bf16.mxu0 %v728
        %1783 = vmatpush1.bf16.msra.mxu0 %v727
        %1784 = vmatprep.subr.bf16.mxu0 %v732
        %1785 = vmatpush1.bf16.msra.mxu0 %v731
        %1786 = vmatprep.subr.bf16.mxu0 %v736
        %1787 = vmatpush1.bf16.msra.mxu0 %v735
        %1788 = vmatprep.subr.bf16.mxu0 %v740
        %1789 = vmatpush1.bf16.msra.mxu0 %v739
        %1790 = vmatprep.subr.bf16.mxu0 %v744
        %1791 = vmatpush1.bf16.msra.mxu0 %v743
        %1792 = vmatprep.subr.bf16.mxu0 %v748
        %1793 = vmatpush1.bf16.msra.mxu0 %v747
        %1794 = vmatprep.subr.bf16.mxu0 %v752
        %1795 = vmatpush1.bf16.msra.mxu0 %v751
        %1796 = vmatprep.subr.bf16.mxu0 0
        %1797 = vmatpush1.bf16.msra.mxu0 0
        %1798 = vmatprep.subr.bf16.mxu0 0
        %1799 = vmatpush1.bf16.msra.mxu0 0
        %1800 = vmatprep.subr.bf16.mxu0 0
        %1801 = vmatpush1.bf16.msra.mxu0 0
        %1802 = vmatprep.subr.bf16.mxu0 0
        %1803 = vmatpush1.bf16.msra.mxu0 0
        %1804 = vmatprep.subr.bf16.mxu0 0
        %1805 = vmatpush1.bf16.msra.mxu0 0
        %1806 = vmatprep.subr.bf16.mxu0 0
        %1807 = vmatpush1.bf16.msra.mxu0 0
        %1808 = vmatprep.subr.bf16.mxu0 0
        %1809 = vmatpush1.bf16.msra.mxu0 0
        %1810 = vmatprep.subr.bf16.mxu0 0
        %1811 = vmatpush1.bf16.msra.mxu0 0
        %1812 = vmatprep.mubr.bf16.mxu0 0
        %1813 = vmatmul.mubr.bf16.gmra.mrb[0].mxu0 %v1737
        %v1814 = vpop.f32.mrb[0].mxu0
        %v1815 = vadd.f32 0.0, %v1814
        %v1816 = vpop.f32.mrb[0].mxu0
        %v1817 = vadd.f32 0.0, %v1816
        %v1818 = vpop.f32.mrb[0].mxu0
        %v1819 = vpop.f32.mrb[0].mxu0
        %1820 = vdwg.mxu0
        %v1825 = vrot.slane %v1774, 1
        %v1826 = vrot.slane %v1776, 1
        %v1827 = vrot.slane %v1815, 1
        %v1828 = vrot.slane %v1817, 1
        %v1833 = vadd.f32 %v1195, %v1825
        %v1834 = vadd.f32 %v1196, %v1826
        %v1835 = vadd.f32 %v1197, %v1827
        %v1836 = vadd.f32 %v1198, %v1828
        %v1837 = vxor.u32 %v1833, 2147483648
        %v1838 = vmul.f32 %v1837, 1.442695
        %v1839 = vpow.pop %v1838
        %v1840 = vadd.f32 %v1839, 1.0
        %v1841 = vrcp.pop %v1840
        %v1842 = vmul.f32 1.0, %v1841
        %v1843 = vxor.u32 %v1834, 2147483648
        %v1844 = vmul.f32 %v1843, 1.442695
        %v1845 = vpow.pop %v1844
        %v1846 = vadd.f32 %v1845, 1.0
        %v1847 = vrcp.pop %v1846
        %v1848 = vmul.f32 1.0, %v1847
        %v1849 = vtanh.pop %v1835
        %v1850 = vxor.u32 %v1836, 2147483648
        %v1851 = vmul.f32 %v1850, 1.442695
        %v1852 = vpow.pop %v1851
        %v1853 = vadd.f32 %v1852, 1.0
        %v1854 = vrcp.pop %v1853
        %v1855 = vmul.f32 1.0, %v1854
        %v1857 = vrot.slane %v1728, 7
        %v1859 = vmul.f32 %v1848, %v1857
        %v1860 = vmul.f32 %v1842, %v1849
        %v1861 = vadd.f32 %v1859, %v1860
        %v1862 = vtanh.pop %v1861
        %v1863 = vmul.f32 %v1855, %v1862
        %vm1864 = vcmask 523271
        %1865 = vst.msk [vmem:[#allocation2] sm:$0x80] %vm1864, %v1863
        %vm1866 = vcmask 1048071
        %1867 = vst.msk [vmem:[#allocation2 + $0x1] sm:$0x80] %vm1866, %v1863
        %v1872 = vrot.slane %v469, 7
        %v1873 = vrot.slane %v471, 7
        %v1874 = vrot.slane %v512, 7
        %v1875 = vrot.slane %v514, 7
        %v1880 = vsel %vm573, %v473, %v1872
        %v1881 = vsel %vm574, %v475, %v1873
        %v1882 = vsel %vm575, %v516, %v1874
        %v1883 = vsel %vm576, %v518, %v1875
        %v1884 = vpack.c.bf16 %v1863, %v1863
        %v1886 = vshrl.u32 %v1884, 16
        %v1888 = vrot.slane %v1886, 3
        %1890 = vmatprep.subr.bf16.mxu0 %v722
        %1891 = vmatpush1.bf16.msra.mxu0 %v721
        %1892 = vmatprep.subr.bf16.mxu0 %v726
        %1893 = vmatpush1.bf16.msra.mxu0 %v725
        %1894 = vmatprep.subr.bf16.mxu0 %v730
        %1895 = vmatpush1.bf16.msra.mxu0 %v729
        %1896 = vmatprep.subr.bf16.mxu0 %v734
        %1897 = vmatpush1.bf16.msra.mxu0 %v733
        %1898 = vmatprep.subr.bf16.mxu0 %v738
        %1899 = vmatpush1.bf16.msra.mxu0 %v737
        %1900 = vmatprep.subr.bf16.mxu0 %v742
        %1901 = vmatpush1.bf16.msra.mxu0 %v741
        %1902 = vmatprep.subr.bf16.mxu0 %v746
        %1903 = vmatpush1.bf16.msra.mxu0 %v745
        %1904 = vmatprep.subr.bf16.mxu0 %v750
        %1905 = vmatpush1.bf16.msra.mxu0 %v749
        %1906 = vmatprep.subr.bf16.mxu0 0
        %1907 = vmatpush1.bf16.msra.mxu0 0
        %1908 = vmatprep.subr.bf16.mxu0 0
        %1909 = vmatpush1.bf16.msra.mxu0 0
        %1910 = vmatprep.subr.bf16.mxu0 0
        %1911 = vmatpush1.bf16.msra.mxu0 0
        %1912 = vmatprep.subr.bf16.mxu0 0
        %1913 = vmatpush1.bf16.msra.mxu0 0
        %1914 = vmatprep.subr.bf16.mxu0 0
        %1915 = vmatpush1.bf16.msra.mxu0 0
        %1916 = vmatprep.subr.bf16.mxu0 0
        %1917 = vmatpush1.bf16.msra.mxu0 0
        %1918 = vmatprep.subr.bf16.mxu0 0
        %1919 = vmatpush1.bf16.msra.mxu0 0
        %1920 = vmatprep.subr.bf16.mxu0 0
        %1921 = vmatpush1.bf16.msra.mxu0 0
        %1922 = vmatprep.mubr.bf16.mxu0 0
        %1923 = vmatmul.mubr.bf16.gmra.mrb[0].mxu0 %v1888
        %v1924 = vpop.f32.mrb[0].mxu0
        %v1925 = vadd.f32 0.0, %v1924
        %v1926 = vpop.f32.mrb[0].mxu0
        %v1927 = vadd.f32 0.0, %v1926
        %v1928 = vpop.f32.mrb[0].mxu0
        %v1929 = vpop.f32.mrb[0].mxu0
        %1930 = vdwg.mxu0
        %1931 = vmatprep.subr.bf16.mxu0 %v724
        %1932 = vmatpush1.bf16.msra.mxu0 %v723
        %1933 = vmatprep.subr.bf16.mxu0 %v728
        %1934 = vmatpush1.bf16.msra.mxu0 %v727
        %1935 = vmatprep.subr.bf16.mxu0 %v732
        %1936 = vmatpush1.bf16.msra.mxu0 %v731
        %1937 = vmatprep.subr.bf16.mxu0 %v736
        %1938 = vmatpush1.bf16.msra.mxu0 %v735
        %1939 = vmatprep.subr.bf16.mxu0 %v740
        %1940 = vmatpush1.bf16.msra.mxu0 %v739
        %1941 = vmatprep.subr.bf16.mxu0 %v744
        %1942 = vmatpush1.bf16.msra.mxu0 %v743
        %1943 = vmatprep.subr.bf16.mxu0 %v748
        %1944 = vmatpush1.bf16.msra.mxu0 %v747
        %1945 = vmatprep.subr.bf16.mxu0 %v752
        %1946 = vmatpush1.bf16.msra.mxu0 %v751
        %1947 = vmatprep.subr.bf16.mxu0 0
        %1948 = vmatpush1.bf16.msra.mxu0 0
        %1949 = vmatprep.subr.bf16.mxu0 0
        %1950 = vmatpush1.bf16.msra.mxu0 0
        %1951 = vmatprep.subr.bf16.mxu0 0
        %1952 = vmatpush1.bf16.msra.mxu0 0
        %1953 = vmatprep.subr.bf16.mxu0 0
        %1954 = vmatpush1.bf16.msra.mxu0 0
        %1955 = vmatprep.subr.bf16.mxu0 0
        %1956 = vmatpush1.bf16.msra.mxu0 0
        %1957 = vmatprep.subr.bf16.mxu0 0
        %1958 = vmatpush1.bf16.msra.mxu0 0
        %1959 = vmatprep.subr.bf16.mxu0 0
        %1960 = vmatpush1.bf16.msra.mxu0 0
        %1961 = vmatprep.subr.bf16.mxu0 0
        %1962 = vmatpush1.bf16.msra.mxu0 0
        %1963 = vmatprep.mubr.bf16.mxu0 0
        %1964 = vmatmul.mubr.bf16.gmra.mrb[0].mxu0 %v1888
        %v1965 = vpop.f32.mrb[0].mxu0
        %v1966 = vadd.f32 0.0, %v1965
        %v1967 = vpop.f32.mrb[0].mxu0
        %v1968 = vadd.f32 0.0, %v1967
        %v1969 = vpop.f32.mrb[0].mxu0
        %v1970 = vpop.f32.mrb[0].mxu0
        %1971 = vdwg.mxu0
        %v1972 = vadd.f32 %v1880, %v1925
        %v1973 = vadd.f32 %v1881, %v1927
        %v1974 = vadd.f32 %v1882, %v1966
        %v1975 = vadd.f32 %v1883, %v1968
        %v1976 = vxor.u32 %v1972, 2147483648
        %v1977 = vmul.f32 %v1976, 1.442695
        %v1978 = vpow.pop %v1977
        %v1979 = vadd.f32 %v1978, 1.0
        %v1980 = vrcp.pop %v1979
        %v1981 = vmul.f32 1.0, %v1980
        %v1982 = vxor.u32 %v1973, 2147483648
        %v1983 = vmul.f32 %v1982, 1.442695
        %v1984 = vpow.pop %v1983
        %v1985 = vadd.f32 %v1984, 1.0
        %v1986 = vrcp.pop %v1985
        %v1987 = vmul.f32 1.0, %v1986
        %v1988 = vtanh.pop %v1974
        %v1989 = vxor.u32 %v1975, 2147483648
        %v1990 = vmul.f32 %v1989, 1.442695
        %v1991 = vpow.pop %v1990
        %v1992 = vadd.f32 %v1991, 1.0
        %v1993 = vrcp.pop %v1992
        %v1994 = vmul.f32 1.0, %v1993
        %v1996 = vrot.slane %v1861, 7
        %v1998 = vmul.f32 %v1987, %v1996
        %v1999 = vmul.f32 %v1981, %v1988
        %v2000 = vadd.f32 %v1998, %v1999
        %v2001 = vtanh.pop %v2000
        %v2002 = vmul.f32 %v1994, %v2001
        %2003 = vst.msk [vmem:[#allocation2 + $0x8] sm:$0x1] %vm895, %v2002
        %2004 = vst.msk [vmem:[#allocation2 + $0x7] sm:$0x1] %vm897, %v2002
        %v2005 = vrot.slane %v469, 5
        %v2006 = vrot.slane %v471, 5
        %v2007 = vrot.slane %v512, 5
        %v2008 = vrot.slane %v514, 5
        %v2013 = vsel %vm573, %v473, %v2005
        %v2014 = vsel %vm574, %v475, %v2006
        %v2015 = vsel %vm575, %v516, %v2007
        %v2016 = vsel %vm576, %v518, %v2008
        %v2017 = vpack.c.bf16 %v2002, %v2002
        %2018 = vmatprep.subr.bf16.mxu0 %v722
        %2019 = vmatpush1.bf16.msra.mxu0 %v721
        %2020 = vmatprep.subr.bf16.mxu0 %v726
        %2021 = vmatpush1.bf16.msra.mxu0 %v725
        %2022 = vmatprep.subr.bf16.mxu0 %v730
        %2023 = vmatpush1.bf16.msra.mxu0 %v729
        %2024 = vmatprep.subr.bf16.mxu0 %v734
        %2025 = vmatpush1.bf16.msra.mxu0 %v733
        %2026 = vmatprep.subr.bf16.mxu0 %v738
        %2027 = vmatpush1.bf16.msra.mxu0 %v737
        %2028 = vmatprep.subr.bf16.mxu0 %v742
        %2029 = vmatpush1.bf16.msra.mxu0 %v741
        %2030 = vmatprep.subr.bf16.mxu0 %v746
        %2031 = vmatpush1.bf16.msra.mxu0 %v745
        %2032 = vmatprep.subr.bf16.mxu0 %v750
        %2033 = vmatpush1.bf16.msra.mxu0 %v749
        %2034 = vmatprep.subr.bf16.mxu0 0
        %2035 = vmatpush1.bf16.msra.mxu0 0
        %2036 = vmatprep.subr.bf16.mxu0 0
        %2037 = vmatpush1.bf16.msra.mxu0 0
        %2038 = vmatprep.subr.bf16.mxu0 0
        %2039 = vmatpush1.bf16.msra.mxu0 0
        %2040 = vmatprep.subr.bf16.mxu0 0
        %2041 = vmatpush1.bf16.msra.mxu0 0
        %2042 = vmatprep.subr.bf16.mxu0 0
        %2043 = vmatpush1.bf16.msra.mxu0 0
        %2044 = vmatprep.subr.bf16.mxu0 0
        %2045 = vmatpush1.bf16.msra.mxu0 0
        %2046 = vmatprep.subr.bf16.mxu0 0
        %2047 = vmatpush1.bf16.msra.mxu0 0
        %2048 = vmatprep.subr.bf16.mxu0 0
        %2049 = vmatpush1.bf16.msra.mxu0 0
        %2050 = vmatprep.mubr.bf16.mxu0 0
        %2051 = vmatmul.mubr.bf16.gmra.mrb[0].mxu0 %v2017
        %v2052 = vpop.f32.mrb[0].mxu0
        %v2053 = vadd.f32 0.0, %v2052
        %v2054 = vpop.f32.mrb[0].mxu0
        %v2055 = vadd.f32 0.0, %v2054
        %v2056 = vpop.f32.mrb[0].mxu0
        %v2057 = vpop.f32.mrb[0].mxu0
        %2058 = vdwg.mxu0
        %2059 = vmatprep.subr.bf16.mxu0 %v724
        %2060 = vmatpush1.bf16.msra.mxu0 %v723
        %2061 = vmatprep.subr.bf16.mxu0 %v728
        %2062 = vmatpush1.bf16.msra.mxu0 %v727
        %2063 = vmatprep.subr.bf16.mxu0 %v732
        %2064 = vmatpush1.bf16.msra.mxu0 %v731
        %2065 = vmatprep.subr.bf16.mxu0 %v736
        %2066 = vmatpush1.bf16.msra.mxu0 %v735
        %2067 = vmatprep.subr.bf16.mxu0 %v740
        %2068 = vmatpush1.bf16.msra.mxu0 %v739
        %2069 = vmatprep.subr.bf16.mxu0 %v744
        %2070 = vmatpush1.bf16.msra.mxu0 %v743
        %2071 = vmatprep.subr.bf16.mxu0 %v748
        %2072 = vmatpush1.bf16.msra.mxu0 %v747
        %2073 = vmatprep.subr.bf16.mxu0 %v752
        %2074 = vmatpush1.bf16.msra.mxu0 %v751
        %2075 = vmatprep.subr.bf16.mxu0 0
        %2076 = vmatpush1.bf16.msra.mxu0 0
        %2077 = vmatprep.subr.bf16.mxu0 0
        %2078 = vmatpush1.bf16.msra.mxu0 0
        %2079 = vmatprep.subr.bf16.mxu0 0
        %2080 = vmatpush1.bf16.msra.mxu0 0
        %2081 = vmatprep.subr.bf16.mxu0 0
        %2082 = vmatpush1.bf16.msra.mxu0 0
        %2083 = vmatprep.subr.bf16.mxu0 0
        %2084 = vmatpush1.bf16.msra.mxu0 0
        %2085 = vmatprep.subr.bf16.mxu0 0
        %2086 = vmatpush1.bf16.msra.mxu0 0
        %2087 = vmatprep.subr.bf16.mxu0 0
        %2088 = vmatpush1.bf16.msra.mxu0 0
        %2089 = vmatprep.subr.bf16.mxu0 0
        %2090 = vmatpush1.bf16.msra.mxu0 0
        %2091 = vmatprep.mubr.bf16.mxu0 0
        %2092 = vmatmul.mubr.bf16.gmra.mrb[0].mxu0 %v2017
        %v2093 = vpop.f32.mrb[0].mxu0
        %v2094 = vadd.f32 0.0, %v2093
        %v2095 = vpop.f32.mrb[0].mxu0
        %v2096 = vadd.f32 0.0, %v2095
        %v2097 = vpop.f32.mrb[0].mxu0
        %v2098 = vpop.f32.mrb[0].mxu0
        %2099 = vdwg.mxu0
        %v2104 = vrot.slane %v2053, 7
        %v2105 = vrot.slane %v2055, 7
        %v2106 = vrot.slane %v2094, 7
        %v2107 = vrot.slane %v2096, 7
        %v2112 = vadd.f32 %v2013, %v2104
        %v2113 = vadd.f32 %v2014, %v2105
        %v2114 = vadd.f32 %v2015, %v2106
        %v2115 = vadd.f32 %v2016, %v2107
        %v2116 = vxor.u32 %v2112, 2147483648
        %v2117 = vmul.f32 %v2116, 1.442695
        %v2118 = vpow.pop %v2117
        %v2119 = vadd.f32 %v2118, 1.0
        %v2120 = vrcp.pop %v2119
        %v2121 = vmul.f32 1.0, %v2120
        %v2122 = vxor.u32 %v2113, 2147483648
        %v2123 = vmul.f32 %v2122, 1.442695
        %v2124 = vpow.pop %v2123
        %v2125 = vadd.f32 %v2124, 1.0
        %v2126 = vrcp.pop %v2125
        %v2127 = vmul.f32 1.0, %v2126
        %v2128 = vtanh.pop %v2114
        %v2129 = vxor.u32 %v2115, 2147483648
        %v2130 = vmul.f32 %v2129, 1.442695
        %v2131 = vpow.pop %v2130
        %v2132 = vadd.f32 %v2131, 1.0
        %v2133 = vrcp.pop %v2132
        %v2134 = vmul.f32 1.0, %v2133
        %v2136 = vrot.slane %v2000, 7
        %v2138 = vmul.f32 %v2127, %v2136
        %v2139 = vmul.f32 %v2121, %v2128
        %v2140 = vadd.f32 %v2138, %v2139
        %v2141 = vtanh.pop %v2140
        %v2142 = vmul.f32 %v2134, %v2141
        %2143 = vst.msk [vmem:[#allocation2 + $0x8] sm:$0x2] %vm1037, %v2142
        %2144 = vst.msk [vmem:[#allocation2 + $0x5] sm:$0x2] %vm1039, %v2142
        %v2145 = vrot.slane %v469, 3
        %v2146 = vrot.slane %v471, 3
        %v2147 = vrot.slane %v512, 3
        %v2148 = vrot.slane %v514, 3
        %v2153 = vsel %vm573, %v473, %v2145
        %v2154 = vsel %vm574, %v475, %v2146
        %v2155 = vsel %vm575, %v516, %v2147
        %v2156 = vsel %vm576, %v518, %v2148
        %v2157 = vpack.c.bf16 %v2142, %v2142
        %v2159 = vshrl.u32 %v2157, 16
        %2162 = vmatprep.subr.bf16.mxu0 %v722
        %2163 = vmatpush1.bf16.msra.mxu0 %v721
        %2164 = vmatprep.subr.bf16.mxu0 %v726
        %2165 = vmatpush1.bf16.msra.mxu0 %v725
        %2166 = vmatprep.subr.bf16.mxu0 %v730
        %2167 = vmatpush1.bf16.msra.mxu0 %v729
        %2168 = vmatprep.subr.bf16.mxu0 %v734
        %2169 = vmatpush1.bf16.msra.mxu0 %v733
        %2170 = vmatprep.subr.bf16.mxu0 %v738
        %2171 = vmatpush1.bf16.msra.mxu0 %v737
        %2172 = vmatprep.subr.bf16.mxu0 %v742
        %2173 = vmatpush1.bf16.msra.mxu0 %v741
        %2174 = vmatprep.subr.bf16.mxu0 %v746
        %2175 = vmatpush1.bf16.msra.mxu0 %v745
        %2176 = vmatprep.subr.bf16.mxu0 %v750
        %2177 = vmatpush1.bf16.msra.mxu0 %v749
        %2178 = vmatprep.subr.bf16.mxu0 0
        %2179 = vmatpush1.bf16.msra.mxu0 0
        %2180 = vmatprep.subr.bf16.mxu0 0
        %2181 = vmatpush1.bf16.msra.mxu0 0
        %2182 = vmatprep.subr.bf16.mxu0 0
        %2183 = vmatpush1.bf16.msra.mxu0 0
        %2184 = vmatprep.subr.bf16.mxu0 0
        %2185 = vmatpush1.bf16.msra.mxu0 0
        %2186 = vmatprep.subr.bf16.mxu0 0
        %2187 = vmatpush1.bf16.msra.mxu0 0
        %2188 = vmatprep.subr.bf16.mxu0 0
        %2189 = vmatpush1.bf16.msra.mxu0 0
        %2190 = vmatprep.subr.bf16.mxu0 0
        %2191 = vmatpush1.bf16.msra.mxu0 0
        %2192 = vmatprep.subr.bf16.mxu0 0
        %2193 = vmatpush1.bf16.msra.mxu0 0
        %2194 = vmatprep.mubr.bf16.mxu0 0
        %2195 = vmatmul.mubr.bf16.gmra.mrb[0].mxu0 %v2159
        %v2196 = vpop.f32.mrb[0].mxu0
        %v2197 = vadd.f32 0.0, %v2196
        %v2198 = vpop.f32.mrb[0].mxu0
        %v2199 = vadd.f32 0.0, %v2198
        %v2200 = vpop.f32.mrb[0].mxu0
        %v2201 = vpop.f32.mrb[0].mxu0
        %2202 = vdwg.mxu0
        %2203 = vmatprep.subr.bf16.mxu0 %v724
        %2204 = vmatpush1.bf16.msra.mxu0 %v723
        %2205 = vmatprep.subr.bf16.mxu0 %v728
        %2206 = vmatpush1.bf16.msra.mxu0 %v727
        %2207 = vmatprep.subr.bf16.mxu0 %v732
        %2208 = vmatpush1.bf16.msra.mxu0 %v731
        %2209 = vmatprep.subr.bf16.mxu0 %v736
        %2210 = vmatpush1.bf16.msra.mxu0 %v735
        %2211 = vmatprep.subr.bf16.mxu0 %v740
        %2212 = vmatpush1.bf16.msra.mxu0 %v739
        %2213 = vmatprep.subr.bf16.mxu0 %v744
        %2214 = vmatpush1.bf16.msra.mxu0 %v743
        %2215 = vmatprep.subr.bf16.mxu0 %v748
        %2216 = vmatpush1.bf16.msra.mxu0 %v747
        %2217 = vmatprep.subr.bf16.mxu0 %v752
        %2218 = vmatpush1.bf16.msra.mxu0 %v751
        %2219 = vmatprep.subr.bf16.mxu0 0
        %2220 = vmatpush1.bf16.msra.mxu0 0
        %2221 = vmatprep.subr.bf16.mxu0 0
        %2222 = vmatpush1.bf16.msra.mxu0 0
        %2223 = vmatprep.subr.bf16.mxu0 0
        %2224 = vmatpush1.bf16.msra.mxu0 0
        %2225 = vmatprep.subr.bf16.mxu0 0
        %2226 = vmatpush1.bf16.msra.mxu0 0
        %2227 = vmatprep.subr.bf16.mxu0 0
        %2228 = vmatpush1.bf16.msra.mxu0 0
        %2229 = vmatprep.subr.bf16.mxu0 0
        %2230 = vmatpush1.bf16.msra.mxu0 0
        %2231 = vmatprep.subr.bf16.mxu0 0
        %2232 = vmatpush1.bf16.msra.mxu0 0
        %2233 = vmatprep.subr.bf16.mxu0 0
        %2234 = vmatpush1.bf16.msra.mxu0 0
        %2235 = vmatprep.mubr.bf16.mxu0 0
        %2236 = vmatmul.mubr.bf16.gmra.mrb[0].mxu0 %v2159
        %v2237 = vpop.f32.mrb[0].mxu0
        %v2238 = vadd.f32 0.0, %v2237
        %v2239 = vpop.f32.mrb[0].mxu0
        %v2240 = vadd.f32 0.0, %v2239
        %v2241 = vpop.f32.mrb[0].mxu0
        %v2242 = vpop.f32.mrb[0].mxu0
        %2243 = vdwg.mxu0
        %v2248 = vrot.slane %v2197, 6
        %v2249 = vrot.slane %v2199, 6
        %v2250 = vrot.slane %v2238, 6
        %v2251 = vrot.slane %v2240, 6
        %v2256 = vadd.f32 %v2153, %v2248
        %v2257 = vadd.f32 %v2154, %v2249
        %v2258 = vadd.f32 %v2155, %v2250
        %v2259 = vadd.f32 %v2156, %v2251
        %v2260 = vxor.u32 %v2256, 2147483648
        %v2261 = vmul.f32 %v2260, 1.442695
        %v2262 = vpow.pop %v2261
        %v2263 = vadd.f32 %v2262, 1.0
        %v2264 = vrcp.pop %v2263
        %v2265 = vmul.f32 1.0, %v2264
        %v2266 = vxor.u32 %v2257, 2147483648
        %v2267 = vmul.f32 %v2266, 1.442695
        %v2268 = vpow.pop %v2267
        %v2269 = vadd.f32 %v2268, 1.0
        %v2270 = vrcp.pop %v2269
        %v2271 = vmul.f32 1.0, %v2270
        %v2272 = vtanh.pop %v2258
        %v2273 = vxor.u32 %v2259, 2147483648
        %v2274 = vmul.f32 %v2273, 1.442695
        %v2275 = vpow.pop %v2274
        %v2276 = vadd.f32 %v2275, 1.0
        %v2277 = vrcp.pop %v2276
        %v2278 = vmul.f32 1.0, %v2277
        %v2280 = vrot.slane %v2140, 7
        %v2282 = vmul.f32 %v2271, %v2280
        %v2283 = vmul.f32 %v2265, %v2272
        %v2284 = vadd.f32 %v2282, %v2283
        %v2285 = vtanh.pop %v2284
        %v2286 = vmul.f32 %v2278, %v2285
        %2287 = vst.msk [vmem:[#allocation2 + $0x8] sm:$0x4] %vm1183, %v2286
        %2288 = vst.msk [vmem:[#allocation2 + $0x3] sm:$0x4] %vm1185, %v2286
        %v2289 = vrot.slane %v469, 1
        %v2290 = vrot.slane %v471, 1
        %v2291 = vrot.slane %v512, 1
        %v2292 = vrot.slane %v514, 1
        %v2297 = vsel %vm573, %v473, %v2289
        %v2298 = vsel %vm574, %v475, %v2290
        %v2299 = vsel %vm575, %v516, %v2291
        %v2300 = vsel %vm576, %v518, %v2292
        %v2301 = vpack.c.bf16 %v2286, %v2286
        %v2303 = vrot.slane %v2301, 1
        %2305 = vmatprep.subr.bf16.mxu0 %v722
        %2306 = vmatpush1.bf16.msra.mxu0 %v721
        %2307 = vmatprep.subr.bf16.mxu0 %v726
        %2308 = vmatpush1.bf16.msra.mxu0 %v725
        %2309 = vmatprep.subr.bf16.mxu0 %v730
        %2310 = vmatpush1.bf16.msra.mxu0 %v729
        %2311 = vmatprep.subr.bf16.mxu0 %v734
        %2312 = vmatpush1.bf16.msra.mxu0 %v733
        %2313 = vmatprep.subr.bf16.mxu0 %v738
        %2314 = vmatpush1.bf16.msra.mxu0 %v737
        %2315 = vmatprep.subr.bf16.mxu0 %v742
        %2316 = vmatpush1.bf16.msra.mxu0 %v741
        %2317 = vmatprep.subr.bf16.mxu0 %v746
        %2318 = vmatpush1.bf16.msra.mxu0 %v745
        %2319 = vmatprep.subr.bf16.mxu0 %v750
        %2320 = vmatpush1.bf16.msra.mxu0 %v749
        %2321 = vmatprep.subr.bf16.mxu0 0
        %2322 = vmatpush1.bf16.msra.mxu0 0
        %2323 = vmatprep.subr.bf16.mxu0 0
        %2324 = vmatpush1.bf16.msra.mxu0 0
        %2325 = vmatprep.subr.bf16.mxu0 0
        %2326 = vmatpush1.bf16.msra.mxu0 0
        %2327 = vmatprep.subr.bf16.mxu0 0
        %2328 = vmatpush1.bf16.msra.mxu0 0
        %2329 = vmatprep.subr.bf16.mxu0 0
        %2330 = vmatpush1.bf16.msra.mxu0 0
        %2331 = vmatprep.subr.bf16.mxu0 0
        %2332 = vmatpush1.bf16.msra.mxu0 0
        %2333 = vmatprep.subr.bf16.mxu0 0
        %2334 = vmatpush1.bf16.msra.mxu0 0
        %2335 = vmatprep.subr.bf16.mxu0 0
        %2336 = vmatpush1.bf16.msra.mxu0 0
        %2337 = vmatprep.mubr.bf16.mxu0 0
        %2338 = vmatmul.mubr.bf16.gmra.mrb[0].mxu0 %v2303
        %v2339 = vpop.f32.mrb[0].mxu0
        %v2340 = vadd.f32 0.0, %v2339
        %v2341 = vpop.f32.mrb[0].mxu0
        %v2342 = vadd.f32 0.0, %v2341
        %v2343 = vpop.f32.mrb[0].mxu0
        %v2344 = vpop.f32.mrb[0].mxu0
        %2345 = vdwg.mxu0
        %2346 = vmatprep.subr.bf16.mxu0 %v724
        %2347 = vmatpush1.bf16.msra.mxu0 %v723
        %2348 = vmatprep.subr.bf16.mxu0 %v728
        %2349 = vmatpush1.bf16.msra.mxu0 %v727
        %2350 = vmatprep.subr.bf16.mxu0 %v732
        %2351 = vmatpush1.bf16.msra.mxu0 %v731
        %2352 = vmatprep.subr.bf16.mxu0 %v736
        %2353 = vmatpush1.bf16.msra.mxu0 %v735
        %2354 = vmatprep.subr.bf16.mxu0 %v740
        %2355 = vmatpush1.bf16.msra.mxu0 %v739
        %2356 = vmatprep.subr.bf16.mxu0 %v744
        %2357 = vmatpush1.bf16.msra.mxu0 %v743
        %2358 = vmatprep.subr.bf16.mxu0 %v748
        %2359 = vmatpush1.bf16.msra.mxu0 %v747
        %2360 = vmatprep.subr.bf16.mxu0 %v752
        %2361 = vmatpush1.bf16.msra.mxu0 %v751
        %2362 = vmatprep.subr.bf16.mxu0 0
        %2363 = vmatpush1.bf16.msra.mxu0 0
        %2364 = vmatprep.subr.bf16.mxu0 0
        %2365 = vmatpush1.bf16.msra.mxu0 0
        %2366 = vmatprep.subr.bf16.mxu0 0
        %2367 = vmatpush1.bf16.msra.mxu0 0
        %2368 = vmatprep.subr.bf16.mxu0 0
        %2369 = vmatpush1.bf16.msra.mxu0 0
        %2370 = vmatprep.subr.bf16.mxu0 0
        %2371 = vmatpush1.bf16.msra.mxu0 0
        %2372 = vmatprep.subr.bf16.mxu0 0
        %2373 = vmatpush1.bf16.msra.mxu0 0
        %2374 = vmatprep.subr.bf16.mxu0 0
        %2375 = vmatpush1.bf16.msra.mxu0 0
        %2376 = vmatprep.subr.bf16.mxu0 0
        %2377 = vmatpush1.bf16.msra.mxu0 0
        %2378 = vmatprep.mubr.bf16.mxu0 0
        %2379 = vmatmul.mubr.bf16.gmra.mrb[0].mxu0 %v2303
        %v2380 = vpop.f32.mrb[0].mxu0
        %v2381 = vadd.f32 0.0, %v2380
        %v2382 = vpop.f32.mrb[0].mxu0
        %v2383 = vadd.f32 0.0, %v2382
        %v2384 = vpop.f32.mrb[0].mxu0
        %v2385 = vpop.f32.mrb[0].mxu0
        %2386 = vdwg.mxu0
        %v2391 = vrot.slane %v2340, 5
        %v2392 = vrot.slane %v2342, 5
        %v2393 = vrot.slane %v2381, 5
        %v2394 = vrot.slane %v2383, 5
        %v2399 = vadd.f32 %v2297, %v2391
        %v2400 = vadd.f32 %v2298, %v2392
        %v2401 = vadd.f32 %v2299, %v2393
        %v2402 = vadd.f32 %v2300, %v2394
        %v2403 = vxor.u32 %v2399, 2147483648
        %v2404 = vmul.f32 %v2403, 1.442695
        %v2405 = vpow.pop %v2404
        %v2406 = vadd.f32 %v2405, 1.0
        %v2407 = vrcp.pop %v2406
        %v2408 = vmul.f32 1.0, %v2407
        %v2409 = vxor.u32 %v2400, 2147483648
        %v2410 = vmul.f32 %v2409, 1.442695
        %v2411 = vpow.pop %v2410
        %v2412 = vadd.f32 %v2411, 1.0
        %v2413 = vrcp.pop %v2412
        %v2414 = vmul.f32 1.0, %v2413
        %v2415 = vtanh.pop %v2401
        %v2416 = vxor.u32 %v2402, 2147483648
        %v2417 = vmul.f32 %v2416, 1.442695
        %v2418 = vpow.pop %v2417
        %v2419 = vadd.f32 %v2418, 1.0
        %v2420 = vrcp.pop %v2419
        %v2421 = vmul.f32 1.0, %v2420
        %v2423 = vrot.slane %v2284, 7
        %v2425 = vmul.f32 %v2414, %v2423
        %v2426 = vmul.f32 %v2408, %v2415
        %v2427 = vadd.f32 %v2425, %v2426
        %v2428 = vtanh.pop %v2427
        %v2429 = vmul.f32 %v2421, %v2428
        %2430 = vst.msk [vmem:[#allocation2 + $0x8] sm:$0x8] %vm1328, %v2429
        %2431 = vst.msk [vmem:[#allocation2 + $0x1] sm:$0x8] %vm1330, %v2429
        %v2432 = vpack.c.bf16 %v2429, %v2429
        %v2434 = vshrl.u32 %v2432, 16
        %v2436 = vrot.slane %v2434, 1
        %2438 = vmatprep.subr.bf16.mxu0 %v722
        %2439 = vmatpush1.bf16.msra.mxu0 %v721
        %2440 = vmatprep.subr.bf16.mxu0 %v726
        %2441 = vmatpush1.bf16.msra.mxu0 %v725
        %2442 = vmatprep.subr.bf16.mxu0 %v730
        %2443 = vmatpush1.bf16.msra.mxu0 %v729
        %2444 = vmatprep.subr.bf16.mxu0 %v734
        %2445 = vmatpush1.bf16.msra.mxu0 %v733
        %2446 = vmatprep.subr.bf16.mxu0 %v738
        %2447 = vmatpush1.bf16.msra.mxu0 %v737
        %2448 = vmatprep.subr.bf16.mxu0 %v742
        %2449 = vmatpush1.bf16.msra.mxu0 %v741
        %2450 = vmatprep.subr.bf16.mxu0 %v746
        %2451 = vmatpush1.bf16.msra.mxu0 %v745
        %2452 = vmatprep.subr.bf16.mxu0 %v750
        %2453 = vmatpush1.bf16.msra.mxu0 %v749
        %2454 = vmatprep.subr.bf16.mxu0 0
        %2455 = vmatpush1.bf16.msra.mxu0 0
        %2456 = vmatprep.subr.bf16.mxu0 0
        %2457 = vmatpush1.bf16.msra.mxu0 0
        %2458 = vmatprep.subr.bf16.mxu0 0
        %2459 = vmatpush1.bf16.msra.mxu0 0
        %2460 = vmatprep.subr.bf16.mxu0 0
        %2461 = vmatpush1.bf16.msra.mxu0 0
        %2462 = vmatprep.subr.bf16.mxu0 0
        %2463 = vmatpush1.bf16.msra.mxu0 0
        %2464 = vmatprep.subr.bf16.mxu0 0
        %2465 = vmatpush1.bf16.msra.mxu0 0
        %2466 = vmatprep.subr.bf16.mxu0 0
        %2467 = vmatpush1.bf16.msra.mxu0 0
        %2468 = vmatprep.subr.bf16.mxu0 0
        %2469 = vmatpush1.bf16.msra.mxu0 0
        %2470 = vmatprep.mubr.bf16.mxu0 0
        %2471 = vmatmul.mubr.bf16.gmra.mrb[0].mxu0 %v2436
        %v2472 = vpop.f32.mrb[0].mxu0
        %v2473 = vadd.f32 0.0, %v2472
        %v2474 = vpop.f32.mrb[0].mxu0
        %v2475 = vadd.f32 0.0, %v2474
        %v2476 = vpop.f32.mrb[0].mxu0
        %v2477 = vpop.f32.mrb[0].mxu0
        %2478 = vdwg.mxu0
        %2479 = vmatprep.subr.bf16.mxu0 %v724
        %2480 = vmatpush1.bf16.msra.mxu0 %v723
        %2481 = vmatprep.subr.bf16.mxu0 %v728
        %2482 = vmatpush1.bf16.msra.mxu0 %v727
        %2483 = vmatprep.subr.bf16.mxu0 %v732
        %2484 = vmatpush1.bf16.msra.mxu0 %v731
        %2485 = vmatprep.subr.bf16.mxu0 %v736
        %2486 = vmatpush1.bf16.msra.mxu0 %v735
        %2487 = vmatprep.subr.bf16.mxu0 %v740
        %2488 = vmatpush1.bf16.msra.mxu0 %v739
        %2489 = vmatprep.subr.bf16.mxu0 %v744
        %2490 = vmatpush1.bf16.msra.mxu0 %v743
        %2491 = vmatprep.subr.bf16.mxu0 %v748
        %2492 = vmatpush1.bf16.msra.mxu0 %v747
        %2493 = vmatprep.subr.bf16.mxu0 %v752
        %2494 = vmatpush1.bf16.msra.mxu0 %v751
        %2495 = vmatprep.subr.bf16.mxu0 0
        %2496 = vmatpush1.bf16.msra.mxu0 0
        %2497 = vmatprep.subr.bf16.mxu0 0
        %2498 = vmatpush1.bf16.msra.mxu0 0
        %2499 = vmatprep.subr.bf16.mxu0 0
        %2500 = vmatpush1.bf16.msra.mxu0 0
        %2501 = vmatprep.subr.bf16.mxu0 0
        %2502 = vmatpush1.bf16.msra.mxu0 0
        %2503 = vmatprep.subr.bf16.mxu0 0
        %2504 = vmatpush1.bf16.msra.mxu0 0
        %2505 = vmatprep.subr.bf16.mxu0 0
        %2506 = vmatpush1.bf16.msra.mxu0 0
        %2507 = vmatprep.subr.bf16.mxu0 0
        %2508 = vmatpush1.bf16.msra.mxu0 0
        %2509 = vmatprep.subr.bf16.mxu0 0
        %2510 = vmatpush1.bf16.msra.mxu0 0
        %2511 = vmatprep.mubr.bf16.mxu0 0
        %2512 = vmatmul.mubr.bf16.gmra.mrb[0].mxu0 %v2436
        %v2513 = vpop.f32.mrb[0].mxu0
        %v2514 = vadd.f32 0.0, %v2513
        %v2515 = vpop.f32.mrb[0].mxu0
        %v2516 = vadd.f32 0.0, %v2515
        %v2517 = vpop.f32.mrb[0].mxu0
        %v2518 = vpop.f32.mrb[0].mxu0
        %2519 = vdwg.mxu0
        %v2524 = vrot.slane %v2473, 4
        %v2525 = vrot.slane %v2475, 4
        %v2526 = vrot.slane %v2514, 4
        %v2527 = vrot.slane %v2516, 4
        %v2532 = vadd.f32 %v1880, %v2524
        %v2533 = vadd.f32 %v1881, %v2525
        %v2534 = vadd.f32 %v1882, %v2526
        %v2535 = vadd.f32 %v1883, %v2527
        %v2536 = vxor.u32 %v2532, 2147483648
        %v2537 = vmul.f32 %v2536, 1.442695
        %v2538 = vpow.pop %v2537
        %v2539 = vadd.f32 %v2538, 1.0
        %v2540 = vrcp.pop %v2539
        %v2541 = vmul.f32 1.0, %v2540
        %v2542 = vxor.u32 %v2533, 2147483648
        %v2543 = vmul.f32 %v2542, 1.442695
        %v2544 = vpow.pop %v2543
        %v2545 = vadd.f32 %v2544, 1.0
        %v2546 = vrcp.pop %v2545
        %v2547 = vmul.f32 1.0, %v2546
        %v2548 = vtanh.pop %v2534
        %v2549 = vxor.u32 %v2535, 2147483648
        %v2550 = vmul.f32 %v2549, 1.442695
        %v2551 = vpow.pop %v2550
        %v2552 = vadd.f32 %v2551, 1.0
        %v2553 = vrcp.pop %v2552
        %v2554 = vmul.f32 1.0, %v2553
        %v2556 = vrot.slane %v2427, 7
        %v2558 = vmul.f32 %v2547, %v2556
        %v2559 = vmul.f32 %v2541, %v2548
        %v2560 = vadd.f32 %v2558, %v2559
        %v2561 = vtanh.pop %v2560
        %v2562 = vmul.f32 %v2554, %v2561
        %2563 = vst.msk [vmem:[#allocation2 + $0x8] sm:$0x10] %vm1463, %v2562
        %2564 = vst.msk [vmem:[#allocation2 - $0x1] sm:$0x10] %vm1465, %v2562
        %v2565 = vpack.c.bf16 %v2562, %v2562
        %v2567 = vrot.slane %v2565, 2
        %2569 = vmatprep.subr.bf16.mxu0 %v722
        %2570 = vmatpush1.bf16.msra.mxu0 %v721
        %2571 = vmatprep.subr.bf16.mxu0 %v726
        %2572 = vmatpush1.bf16.msra.mxu0 %v725
        %2573 = vmatprep.subr.bf16.mxu0 %v730
        %2574 = vmatpush1.bf16.msra.mxu0 %v729
        %2575 = vmatprep.subr.bf16.mxu0 %v734
        %2576 = vmatpush1.bf16.msra.mxu0 %v733
        %2577 = vmatprep.subr.bf16.mxu0 %v738
        %2578 = vmatpush1.bf16.msra.mxu0 %v737
        %2579 = vmatprep.subr.bf16.mxu0 %v742
        %2580 = vmatpush1.bf16.msra.mxu0 %v741
        %2581 = vmatprep.subr.bf16.mxu0 %v746
        %2582 = vmatpush1.bf16.msra.mxu0 %v745
        %2583 = vmatprep.subr.bf16.mxu0 %v750
        %2584 = vmatpush1.bf16.msra.mxu0 %v749
        %2585 = vmatprep.subr.bf16.mxu0 0
        %2586 = vmatpush1.bf16.msra.mxu0 0
        %2587 = vmatprep.subr.bf16.mxu0 0
        %2588 = vmatpush1.bf16.msra.mxu0 0
        %2589 = vmatprep.subr.bf16.mxu0 0
        %2590 = vmatpush1.bf16.msra.mxu0 0
        %2591 = vmatprep.subr.bf16.mxu0 0
        %2592 = vmatpush1.bf16.msra.mxu0 0
        %2593 = vmatprep.subr.bf16.mxu0 0
        %2594 = vmatpush1.bf16.msra.mxu0 0
        %2595 = vmatprep.subr.bf16.mxu0 0
        %2596 = vmatpush1.bf16.msra.mxu0 0
        %2597 = vmatprep.subr.bf16.mxu0 0
        %2598 = vmatpush1.bf16.msra.mxu0 0
        %2599 = vmatprep.subr.bf16.mxu0 0
        %2600 = vmatpush1.bf16.msra.mxu0 0
        %2601 = vmatprep.mubr.bf16.mxu0 0
        %2602 = vmatmul.mubr.bf16.gmra.mrb[0].mxu0 %v2567
        %v2603 = vpop.f32.mrb[0].mxu0
        %v2604 = vadd.f32 0.0, %v2603
        %v2605 = vpop.f32.mrb[0].mxu0
        %v2606 = vadd.f32 0.0, %v2605
        %v2607 = vpop.f32.mrb[0].mxu0
        %v2608 = vpop.f32.mrb[0].mxu0
        %2609 = vdwg.mxu0
        %2610 = vmatprep.subr.bf16.mxu0 %v724
        %2611 = vmatpush1.bf16.msra.mxu0 %v723
        %2612 = vmatprep.subr.bf16.mxu0 %v728
        %2613 = vmatpush1.bf16.msra.mxu0 %v727
        %2614 = vmatprep.subr.bf16.mxu0 %v732
        %2615 = vmatpush1.bf16.msra.mxu0 %v731
        %2616 = vmatprep.subr.bf16.mxu0 %v736
        %2617 = vmatpush1.bf16.msra.mxu0 %v735
        %2618 = vmatprep.subr.bf16.mxu0 %v740
        %2619 = vmatpush1.bf16.msra.mxu0 %v739
        %2620 = vmatprep.subr.bf16.mxu0 %v744
        %2621 = vmatpush1.bf16.msra.mxu0 %v743
        %2622 = vmatprep.subr.bf16.mxu0 %v748
        %2623 = vmatpush1.bf16.msra.mxu0 %v747
        %2624 = vmatprep.subr.bf16.mxu0 %v752
        %2625 = vmatpush1.bf16.msra.mxu0 %v751
        %2626 = vmatprep.subr.bf16.mxu0 0
        %2627 = vmatpush1.bf16.msra.mxu0 0
        %2628 = vmatprep.subr.bf16.mxu0 0
        %2629 = vmatpush1.bf16.msra.mxu0 0
        %2630 = vmatprep.subr.bf16.mxu0 0
        %2631 = vmatpush1.bf16.msra.mxu0 0
        %2632 = vmatprep.subr.bf16.mxu0 0
        %2633 = vmatpush1.bf16.msra.mxu0 0
        %2634 = vmatprep.subr.bf16.mxu0 0
        %2635 = vmatpush1.bf16.msra.mxu0 0
        %2636 = vmatprep.subr.bf16.mxu0 0
        %2637 = vmatpush1.bf16.msra.mxu0 0
        %2638 = vmatprep.subr.bf16.mxu0 0
        %2639 = vmatpush1.bf16.msra.mxu0 0
        %2640 = vmatprep.subr.bf16.mxu0 0
        %2641 = vmatpush1.bf16.msra.mxu0 0
        %2642 = vmatprep.mubr.bf16.mxu0 0
        %2643 = vmatmul.mubr.bf16.gmra.mrb[0].mxu0 %v2567
        %v2644 = vpop.f32.mrb[0].mxu0
        %v2645 = vadd.f32 0.0, %v2644
        %v2646 = vpop.f32.mrb[0].mxu0
        %v2647 = vadd.f32 0.0, %v2646
        %v2648 = vpop.f32.mrb[0].mxu0
        %v2649 = vpop.f32.mrb[0].mxu0
        %2650 = vdwg.mxu0
        %v2655 = vrot.slane %v2604, 3
        %v2656 = vrot.slane %v2606, 3
        %v2657 = vrot.slane %v2645, 3
        %v2658 = vrot.slane %v2647, 3
        %v2663 = vadd.f32 %v2013, %v2655
        %v2664 = vadd.f32 %v2014, %v2656
        %v2665 = vadd.f32 %v2015, %v2657
        %v2666 = vadd.f32 %v2016, %v2658
        %v2667 = vxor.u32 %v2663, 2147483648
        %v2668 = vmul.f32 %v2667, 1.442695
        %v2669 = vpow.pop %v2668
        %v2670 = vadd.f32 %v2669, 1.0
        %v2671 = vrcp.pop %v2670
        %v2672 = vmul.f32 1.0, %v2671
        %v2673 = vxor.u32 %v2664, 2147483648
        %v2674 = vmul.f32 %v2673, 1.442695
        %v2675 = vpow.pop %v2674
        %v2676 = vadd.f32 %v2675, 1.0
        %v2677 = vrcp.pop %v2676
        %v2678 = vmul.f32 1.0, %v2677
        %v2679 = vtanh.pop %v2665
        %v2680 = vxor.u32 %v2666, 2147483648
        %v2681 = vmul.f32 %v2680, 1.442695
        %v2682 = vpow.pop %v2681
        %v2683 = vadd.f32 %v2682, 1.0
        %v2684 = vrcp.pop %v2683
        %v2685 = vmul.f32 1.0, %v2684
        %v2687 = vrot.slane %v2560, 7
        %v2689 = vmul.f32 %v2678, %v2687
        %v2690 = vmul.f32 %v2672, %v2679
        %v2691 = vadd.f32 %v2689, %v2690
        %v2692 = vtanh.pop %v2691
        %v2693 = vmul.f32 %v2685, %v2692
        %2694 = vst.msk [vmem:[#allocation2 + $0x8] sm:$0x20] %vm1596, %v2693
        %2695 = vst.msk [vmem:[#allocation2 - $0x3] sm:$0x20] %vm1598, %v2693
        %v2696 = vpack.c.bf16 %v2693, %v2693
        %v2698 = vshrl.u32 %v2696, 16
        %v2700 = vrot.slane %v2698, 2
        %2702 = vmatprep.subr.bf16.mxu0 %v722
        %2703 = vmatpush1.bf16.msra.mxu0 %v721
        %2704 = vmatprep.subr.bf16.mxu0 %v726
        %2705 = vmatpush1.bf16.msra.mxu0 %v725
        %2706 = vmatprep.subr.bf16.mxu0 %v730
        %2707 = vmatpush1.bf16.msra.mxu0 %v729
        %2708 = vmatprep.subr.bf16.mxu0 %v734
        %2709 = vmatpush1.bf16.msra.mxu0 %v733
        %2710 = vmatprep.subr.bf16.mxu0 %v738
        %2711 = vmatpush1.bf16.msra.mxu0 %v737
        %2712 = vmatprep.subr.bf16.mxu0 %v742
        %2713 = vmatpush1.bf16.msra.mxu0 %v741
        %2714 = vmatprep.subr.bf16.mxu0 %v746
        %2715 = vmatpush1.bf16.msra.mxu0 %v745
        %2716 = vmatprep.subr.bf16.mxu0 %v750
        %2717 = vmatpush1.bf16.msra.mxu0 %v749
        %2718 = vmatprep.subr.bf16.mxu0 0
        %2719 = vmatpush1.bf16.msra.mxu0 0
        %2720 = vmatprep.subr.bf16.mxu0 0
        %2721 = vmatpush1.bf16.msra.mxu0 0
        %2722 = vmatprep.subr.bf16.mxu0 0
        %2723 = vmatpush1.bf16.msra.mxu0 0
        %2724 = vmatprep.subr.bf16.mxu0 0
        %2725 = vmatpush1.bf16.msra.mxu0 0
        %2726 = vmatprep.subr.bf16.mxu0 0
        %2727 = vmatpush1.bf16.msra.mxu0 0
        %2728 = vmatprep.subr.bf16.mxu0 0
        %2729 = vmatpush1.bf16.msra.mxu0 0
        %2730 = vmatprep.subr.bf16.mxu0 0
        %2731 = vmatpush1.bf16.msra.mxu0 0
        %2732 = vmatprep.subr.bf16.mxu0 0
        %2733 = vmatpush1.bf16.msra.mxu0 0
        %2734 = vmatprep.mubr.bf16.mxu0 0
        %2735 = vmatmul.mubr.bf16.gmra.mrb[0].mxu0 %v2700
        %v2736 = vpop.f32.mrb[0].mxu0
        %v2737 = vadd.f32 0.0, %v2736
        %v2738 = vpop.f32.mrb[0].mxu0
        %v2739 = vadd.f32 0.0, %v2738
        %v2740 = vpop.f32.mrb[0].mxu0
        %v2741 = vpop.f32.mrb[0].mxu0
        %2742 = vdwg.mxu0
        %2743 = vmatprep.subr.bf16.mxu0 %v724
        %2744 = vmatpush1.bf16.msra.mxu0 %v723
        %2745 = vmatprep.subr.bf16.mxu0 %v728
        %2746 = vmatpush1.bf16.msra.mxu0 %v727
        %2747 = vmatprep.subr.bf16.mxu0 %v732
        %2748 = vmatpush1.bf16.msra.mxu0 %v731
        %2749 = vmatprep.subr.bf16.mxu0 %v736
        %2750 = vmatpush1.bf16.msra.mxu0 %v735
        %2751 = vmatprep.subr.bf16.mxu0 %v740
        %2752 = vmatpush1.bf16.msra.mxu0 %v739
        %2753 = vmatprep.subr.bf16.mxu0 %v744
        %2754 = vmatpush1.bf16.msra.mxu0 %v743
        %2755 = vmatprep.subr.bf16.mxu0 %v748
        %2756 = vmatpush1.bf16.msra.mxu0 %v747
        %2757 = vmatprep.subr.bf16.mxu0 %v752
        %2758 = vmatpush1.bf16.msra.mxu0 %v751
        %2759 = vmatprep.subr.bf16.mxu0 0
        %2760 = vmatpush1.bf16.msra.mxu0 0
        %2761 = vmatprep.subr.bf16.mxu0 0
        %2762 = vmatpush1.bf16.msra.mxu0 0
        %2763 = vmatprep.subr.bf16.mxu0 0
        %2764 = vmatpush1.bf16.msra.mxu0 0
        %2765 = vmatprep.subr.bf16.mxu0 0
        %2766 = vmatpush1.bf16.msra.mxu0 0
        %2767 = vmatprep.subr.bf16.mxu0 0
        %2768 = vmatpush1.bf16.msra.mxu0 0
        %2769 = vmatprep.subr.bf16.mxu0 0
        %2770 = vmatpush1.bf16.msra.mxu0 0
        %2771 = vmatprep.subr.bf16.mxu0 0
        %2772 = vmatpush1.bf16.msra.mxu0 0
        %2773 = vmatprep.subr.bf16.mxu0 0
        %2774 = vmatpush1.bf16.msra.mxu0 0
        %2775 = vmatprep.mubr.bf16.mxu0 0
        %2776 = vmatmul.mubr.bf16.gmra.mrb[0].mxu0 %v2700
        %v2777 = vpop.f32.mrb[0].mxu0
        %v2778 = vadd.f32 0.0, %v2777
        %v2779 = vpop.f32.mrb[0].mxu0
        %v2780 = vadd.f32 0.0, %v2779
        %v2781 = vpop.f32.mrb[0].mxu0
        %v2782 = vpop.f32.mrb[0].mxu0
        %2783 = vdwg.mxu0
        %v2788 = vrot.slane %v2737, 2
        %v2789 = vrot.slane %v2739, 2
        %v2790 = vrot.slane %v2778, 2
        %v2791 = vrot.slane %v2780, 2
        %v2796 = vadd.f32 %v2153, %v2788
        %v2797 = vadd.f32 %v2154, %v2789
        %v2798 = vadd.f32 %v2155, %v2790
        %v2799 = vadd.f32 %v2156, %v2791
        %v2800 = vxor.u32 %v2796, 2147483648
        %v2801 = vmul.f32 %v2800, 1.442695
        %v2802 = vpow.pop %v2801
        %v2803 = vadd.f32 %v2802, 1.0
        %v2804 = vrcp.pop %v2803
        %v2805 = vmul.f32 1.0, %v2804
        %v2806 = vxor.u32 %v2797, 2147483648
        %v2807 = vmul.f32 %v2806, 1.442695
        %v2808 = vpow.pop %v2807
        %v2809 = vadd.f32 %v2808, 1.0
        %v2810 = vrcp.pop %v2809
        %v2811 = vmul.f32 1.0, %v2810
        %v2812 = vtanh.pop %v2798
        %v2813 = vxor.u32 %v2799, 2147483648
        %v2814 = vmul.f32 %v2813, 1.442695
        %v2815 = vpow.pop %v2814
        %v2816 = vadd.f32 %v2815, 1.0
        %v2817 = vrcp.pop %v2816
        %v2818 = vmul.f32 1.0, %v2817
        %v2820 = vrot.slane %v2691, 7
        %v2822 = vmul.f32 %v2811, %v2820
        %v2823 = vmul.f32 %v2805, %v2812
        %v2824 = vadd.f32 %v2822, %v2823
        %v2825 = vtanh.pop %v2824
        %v2826 = vmul.f32 %v2818, %v2825
        %2827 = vst.msk [vmem:[#allocation2 + $0x8] sm:$0x40] %vm1731, %v2826
        %2828 = vst.msk [vmem:[#allocation2 - $0x5] sm:$0x40] %vm1733, %v2826
        %v2829 = vpack.c.bf16 %v2826, %v2826
        %v2831 = vrot.slane %v2829, 3
        %2833 = vmatprep.subr.bf16.mxu0 %v722
        %2834 = vmatpush1.bf16.msra.mxu0 %v721
        %2835 = vmatprep.subr.bf16.mxu0 %v726
        %2836 = vmatpush1.bf16.msra.mxu0 %v725
        %2837 = vmatprep.subr.bf16.mxu0 %v730
        %2838 = vmatpush1.bf16.msra.mxu0 %v729
        %2839 = vmatprep.subr.bf16.mxu0 %v734
        %2840 = vmatpush1.bf16.msra.mxu0 %v733
        %2841 = vmatprep.subr.bf16.mxu0 %v738
        %2842 = vmatpush1.bf16.msra.mxu0 %v737
        %2843 = vmatprep.subr.bf16.mxu0 %v742
        %2844 = vmatpush1.bf16.msra.mxu0 %v741
        %2845 = vmatprep.subr.bf16.mxu0 %v746
        %2846 = vmatpush1.bf16.msra.mxu0 %v745
        %2847 = vmatprep.subr.bf16.mxu0 %v750
        %2848 = vmatpush1.bf16.msra.mxu0 %v749
        %2849 = vmatprep.subr.bf16.mxu0 0
        %2850 = vmatpush1.bf16.msra.mxu0 0
        %2851 = vmatprep.subr.bf16.mxu0 0
        %2852 = vmatpush1.bf16.msra.mxu0 0
        %2853 = vmatprep.subr.bf16.mxu0 0
        %2854 = vmatpush1.bf16.msra.mxu0 0
        %2855 = vmatprep.subr.bf16.mxu0 0
        %2856 = vmatpush1.bf16.msra.mxu0 0
        %2857 = vmatprep.subr.bf16.mxu0 0
        %2858 = vmatpush1.bf16.msra.mxu0 0
        %2859 = vmatprep.subr.bf16.mxu0 0
        %2860 = vmatpush1.bf16.msra.mxu0 0
        %2861 = vmatprep.subr.bf16.mxu0 0
        %2862 = vmatpush1.bf16.msra.mxu0 0
        %2863 = vmatprep.subr.bf16.mxu0 0
        %2864 = vmatpush1.bf16.msra.mxu0 0
        %2865 = vmatprep.mubr.bf16.mxu0 0
        %2866 = vmatmul.mubr.bf16.gmra.mrb[0].mxu0 %v2831
        %v2867 = vpop.f32.mrb[0].mxu0
        %v2868 = vadd.f32 0.0, %v2867
        %v2869 = vpop.f32.mrb[0].mxu0
        %v2870 = vadd.f32 0.0, %v2869
        %v2871 = vpop.f32.mrb[0].mxu0
        %v2872 = vpop.f32.mrb[0].mxu0
        %2873 = vdwg.mxu0
        %2874 = vmatprep.subr.bf16.mxu0 %v724
        %2875 = vmatpush1.bf16.msra.mxu0 %v723
        %2876 = vmatprep.subr.bf16.mxu0 %v728
        %2877 = vmatpush1.bf16.msra.mxu0 %v727
        %2878 = vmatprep.subr.bf16.mxu0 %v732
        %2879 = vmatpush1.bf16.msra.mxu0 %v731
        %2880 = vmatprep.subr.bf16.mxu0 %v736
        %2881 = vmatpush1.bf16.msra.mxu0 %v735
        %2882 = vmatprep.subr.bf16.mxu0 %v740
        %2883 = vmatpush1.bf16.msra.mxu0 %v739
        %2884 = vmatprep.subr.bf16.mxu0 %v744
        %2885 = vmatpush1.bf16.msra.mxu0 %v743
        %2886 = vmatprep.subr.bf16.mxu0 %v748
        %2887 = vmatpush1.bf16.msra.mxu0 %v747
        %2888 = vmatprep.subr.bf16.mxu0 %v752
        %2889 = vmatpush1.bf16.msra.mxu0 %v751
        %2890 = vmatprep.subr.bf16.mxu0 0
        %2891 = vmatpush1.bf16.msra.mxu0 0
        %2892 = vmatprep.subr.bf16.mxu0 0
        %2893 = vmatpush1.bf16.msra.mxu0 0
        %2894 = vmatprep.subr.bf16.mxu0 0
        %2895 = vmatpush1.bf16.msra.mxu0 0
        %2896 = vmatprep.subr.bf16.mxu0 0
        %2897 = vmatpush1.bf16.msra.mxu0 0
        %2898 = vmatprep.subr.bf16.mxu0 0
        %2899 = vmatpush1.bf16.msra.mxu0 0
        %2900 = vmatprep.subr.bf16.mxu0 0
        %2901 = vmatpush1.bf16.msra.mxu0 0
        %2902 = vmatprep.subr.bf16.mxu0 0
        %2903 = vmatpush1.bf16.msra.mxu0 0
        %2904 = vmatprep.subr.bf16.mxu0 0
        %2905 = vmatpush1.bf16.msra.mxu0 0
        %2906 = vmatprep.mubr.bf16.mxu0 0
        %2907 = vmatmul.mubr.bf16.gmra.mrb[0].mxu0 %v2831
        %v2908 = vpop.f32.mrb[0].mxu0
        %v2909 = vadd.f32 0.0, %v2908
        %v2910 = vpop.f32.mrb[0].mxu0
        %v2911 = vadd.f32 0.0, %v2910
        %v2912 = vpop.f32.mrb[0].mxu0
        %v2913 = vpop.f32.mrb[0].mxu0
        %2914 = vdwg.mxu0
        %v2919 = vrot.slane %v2868, 1
        %v2920 = vrot.slane %v2870, 1
        %v2921 = vrot.slane %v2909, 1
        %v2922 = vrot.slane %v2911, 1
        %v2927 = vadd.f32 %v2297, %v2919
        %v2928 = vadd.f32 %v2298, %v2920
        %v2929 = vadd.f32 %v2299, %v2921
        %v2930 = vadd.f32 %v2300, %v2922
        %v2931 = vxor.u32 %v2927, 2147483648
        %v2932 = vmul.f32 %v2931, 1.442695
        %v2933 = vpow.pop %v2932
        %v2934 = vadd.f32 %v2933, 1.0
        %v2935 = vrcp.pop %v2934
        %v2936 = vmul.f32 1.0, %v2935
        %v2937 = vxor.u32 %v2928, 2147483648
        %v2938 = vmul.f32 %v2937, 1.442695
        %v2939 = vpow.pop %v2938
        %v2940 = vadd.f32 %v2939, 1.0
        %v2941 = vrcp.pop %v2940
        %v2942 = vmul.f32 1.0, %v2941
        %v2943 = vtanh.pop %v2929
        %v2944 = vxor.u32 %v2930, 2147483648
        %v2945 = vmul.f32 %v2944, 1.442695
        %v2946 = vpow.pop %v2945
        %v2947 = vadd.f32 %v2946, 1.0
        %v2948 = vrcp.pop %v2947
        %v2949 = vmul.f32 1.0, %v2948
        %v2951 = vrot.slane %v2824, 7
        %v2953 = vmul.f32 %v2942, %v2951
        %v2954 = vmul.f32 %v2936, %v2943
        %v2955 = vadd.f32 %v2953, %v2954
        %v2956 = vtanh.pop %v2955
        %v2957 = vmul.f32 %v2949, %v2956
        %2958 = vst.msk [vmem:[#allocation2 + $0x8] sm:$0x80] %vm1864, %v2957
        %2959 = vst.msk [vmem:[#allocation2 - $0x7] sm:$0x80] %vm1866, %v2957
        %v2960 = vld [vmem:[#allocation2] sm:$0xff]
        %v2961 = vld [vmem:[#allocation2 + $0x8] sm:$0xff]
        %v2962 = vpack.c.bf16 %v2961, %v2960
        %v2964 = vunpack.c.l.b16 %v2962
        %v2965 = vunpack.c.h.b16 %v2962
        %v2966 = vpack.c.b16 %v2964, %v2964
        %v2967 = vpack.c.b16 %v2965, %v2965
        %2970 = vst [vmem:[%s210] sm:$0xf] %v2966
        %2971 = vst [vmem:[%s210 + $0x4] sm:$0xf] %v2967
        %p2972 = scmp.lt.s32.totalorder %s16, 1
        %s2973 = scalar_select %p2972, %s16, 1
        %s2974 = smul.addr %s2973, 2
        %s2975 = smul.addr %s2974, 4
        %s2976 = scalar_lea.vmem %s4, %s2975
        // Predicated region
        $region41: #{forward.6} parent=35 // pred_check
          %p2977 = pneg %p123
        $region42: #{forward.6} parent=35 // pred_check_branch
          %2979 = sbr.rel (%p2977) target = $region44
        $region43: #{forward.6} parent=35 // pred_region
          _
        $region44: #{forward.6} parent=35 // pred_fallthru
          _
      $region36: #{forward.6} parent=5 // pred_fallthru
        _
      %p2980 = scmp.le.s32.totalorder 2, %s11
      // Predicated region
      $region45: #{forward.6} parent=5 // pred_check
        %p2981 = pneg %p2980
      $region46: #{forward.6} parent=5 // pred_check_branch
        %2983 = sbr.rel (%p2981) target = $region48
      $region47: #{forward.6} parent=5 // pred_region
        %s2984 = ssub.s32 %s11, 2
        // Predicated region
        $region49: #{forward.6} parent=47 // pred_check
          %p2985 = pneg %p129
        $region50: #{forward.6} parent=47 // pred_check_branch
          %2987 = sbr.rel (%p2985) target = $region52
        $region51: #{forward.6} parent=47 // pred_region
          %p2988 = scmp.lt.s32.totalorder %s17, 1
          %s2989 = scalar_select %p2988, %s17, 1
          %s2990 = smul.addr %s2989, 2
          %s2991 = smul.addr %s2990, 4
          %s2992 = scalar_lea.vmem %s4, %s2991
        $region52: #{forward.6} parent=47 // pred_fallthru
          _
      $region48: #{forward.6} parent=5 // pred_fallthru
        _
    $region6: #{forward.6} parent=1 // loop_footer
      %s15 = sadd.s32 1, %s11
    $region7: #{forward.6} parent=1 // loop_footer_branch
      %10 = sbr.rel target = $region3
    $region8: #{forward.6} parent=1 // loop_exit
      _
    %2993 = vsyncpa [#allocation4], 1
    %s2994 = scalar_lea.sflag [#allocation4], 1
    %2995 = vsyncpa %s2994, 1

// kernel: forward.5
$region0: #{forward.5}
  #allocation0 [shape = 'u32[]', space=smem, size = 0x4, offset = 0x4, fixed_abs, tag = 'smem constant byte address 0x4 - core index']
  #allocation1 [shape = 'u32[144,128]{1,0:T(1,128)}', space=vmem, size = 0x12000, scoped, tag = 'internal scratch']
  #allocation2 [shape = 'f32[1,16,128]{2,1,0:T(8,128)}', space=vmem, size = 0x2000, scoped, tag = 'scratch operand']
  %s0 = inlined_call_operand.vmem [shape: bf16[2,16,64], index: 0, kind: input, shape index: {}]
  %s1 = inlined_call_operand.vmem [shape: bf16[64,512], index: 1, kind: input, shape index: {}]
  %s2 = inlined_call_operand.hbm [shape: f32[1,512], index: 2, kind: input, shape index: {}]
  %s3 = inlined_call_operand.vmem [shape: bf16[128,512], index: 3, kind: input, shape index: {}]
  %s4 = inlined_call_operand.vmem [shape: bf16[2,16,128], index: 4, kind: output, shape index: {}]
  %s5 = sld [smem:[#allocation0]]
  $region53: #{forward.5} parent=0
    _
  %s7 = ssub.s32 1, %s5
  %s8 = scalar_select 0, %s7, %s5
  $region1: #{forward.5} parent=0
    #allocation3 [shape = 'u8[2048]{0}', space=vmem, size = 0x800, scoped, tag = 'input window, operand 2, single buffered']
    #allocation4 [shape = 's32[2]{0}', space=sflag, size = 0x8, scoped, tag = 'scoped memory for forward.5']
    %9 = vsyncpa [#allocation4], 0
    loop: start=0, step=1, limit=4
    $region2: #{forward.5} parent=1 // loop_pre_header
      _
    $region3: #{forward.5} parent=1 // loop_header
      %s11 = sphi 0, %s15
      %p12 = scmp.ge.s32.totalorder %s11, 4
      %s21 = sphi 0, %s23
      %s24 = sphi 0, %s21
      %s25 = sphi 0, %s24
      %s41 = sphi 0, %s25
      %s45 = sphi 0, %s45
      %s47 = sphi 0, %s45
      %s48 = sphi 0, %s47
      %s62 = sphi 0, %s48
      %s66 = sphi 0, %s66
      %s68 = sphi 0, %s66
      %s69 = sphi 0, %s68
      %s83 = sphi 0, %s69
      %s87 = sphi 0, %s87
      %s89 = sphi 0, %s87
      %s90 = sphi 0, %s89
      %s104 = sphi 0, %s90
      %s110 = sphi 0, %s112
      %s113 = sphi 0, %s110
      %s114 = sphi 0, %s113
      %s130 = sphi 0, %s114
    $region4: #{forward.5} parent=1 // loop_header_branch
      %14 = sbr.rel (%p12) target = $region8
    $region5: #{forward.5} parent=1 // loop_body
      %s16 = ssub.s32 %s11, 1
      %s17 = ssub.s32 %s11, 2
      %s18 = sadd.s32 %s11, 1
      %s19 = ssub.s32 %s11, %s18
      %p20 = scmp.eq.s32.totalorder %s19, 0
      %s22 = sadd.s32 %s21, 1
      %s23 = scalar_select %p20, %s21, %s22
      %p26 = pneg %p20
      %p27 = scmp.eq.s32.totalorder %s11, 1
      %p28 = por %p26, %p27
      %p29 = scmp.ne.s32.totalorder %s21, %s24
      %p30 = scmp.eq.s32.totalorder %s11, 0
      %p31 = por %p29, %p30
      %p32 = scmp.ne.s32.totalorder %s21, %s24
      %p33 = scmp.eq.s32.totalorder %s16, 1
      %p34 = por %p32, %p33
      %p35 = scmp.ne.s32.totalorder %s24, %s25
      %p36 = scmp.eq.s32.totalorder %s16, 0
      %p37 = por %p35, %p36
      %p38 = scmp.ne.s32.totalorder %s24, %s25
      %p39 = scmp.eq.s32.totalorder %s17, 1
      %p40 = por %p38, %p39
      %p42 = scmp.ne.s32.totalorder %s25, %s41
      %p43 = scmp.eq.s32.totalorder %s17, 0
      %p44 = por %p42, %p43
      %s46 = sadd.s32 %s45, 1
      %p49 = scmp.eq.s32.totalorder %s11, 1
      %p50 = scmp.ne.s32.totalorder %s45, %s47
      %p51 = scmp.eq.s32.totalorder %s11, 0
      %p52 = por %p50, %p51
      %p53 = scmp.ne.s32.totalorder %s45, %s47
      %p54 = scmp.eq.s32.totalorder %s16, 1
      %p55 = por %p53, %p54
      %p56 = scmp.ne.s32.totalorder %s47, %s48
      %p57 = scmp.eq.s32.totalorder %s16, 0
      %p58 = por %p56, %p57
      %p59 = scmp.ne.s32.totalorder %s47, %s48
      %p60 = scmp.eq.s32.totalorder %s17, 1
      %p61 = por %p59, %p60
      %p63 = scmp.ne.s32.totalorder %s48, %s62
      %p64 = scmp.eq.s32.totalorder %s17, 0
      %p65 = por %p63, %p64
      %s67 = sadd.s32 %s66, 1
      %p70 = scmp.eq.s32.totalorder %s11, 1
      %p71 = scmp.ne.s32.totalorder %s66, %s68
      %p72 = scmp.eq.s32.totalorder %s11, 0
      %p73 = por %p71, %p72
      %p74 = scmp.ne.s32.totalorder %s66, %s68
      %p75 = scmp.eq.s32.totalorder %s16, 1
      %p76 = por %p74, %p75
      %p77 = scmp.ne.s32.totalorder %s68, %s69
      %p78 = scmp.eq.s32.totalorder %s16, 0
      %p79 = por %p77, %p78
      %p80 = scmp.ne.s32.totalorder %s68, %s69
      %p81 = scmp.eq.s32.totalorder %s17, 1
      %p82 = por %p80, %p81
      %p84 = scmp.ne.s32.totalorder %s69, %s83
      %p85 = scmp.eq.s32.totalorder %s17, 0
      %p86 = por %p84, %p85
      %s88 = sadd.s32 %s87, 1
      %p91 = scmp.eq.s32.totalorder %s11, 1
      %p92 = scmp.ne.s32.totalorder %s87, %s89
      %p93 = scmp.eq.s32.totalorder %s11, 0
      %p94 = por %p92, %p93
      %p95 = scmp.ne.s32.totalorder %s87, %s89
      %p96 = scmp.eq.s32.totalorder %s16, 1
      %p97 = por %p95, %p96
      %p98 = scmp.ne.s32.totalorder %s89, %s90
      %p99 = scmp.eq.s32.totalorder %s16, 0
      %p100 = por %p98, %p99
      %p101 = scmp.ne.s32.totalorder %s89, %s90
      %p102 = scmp.eq.s32.totalorder %s17, 1
      %p103 = por %p101, %p102
      %p105 = scmp.ne.s32.totalorder %s90, %s104
      %p106 = scmp.eq.s32.totalorder %s17, 0
      %p107 = por %p105, %p106
      %s108 = ssub.s32 %s11, %s18
      %p109 = scmp.eq.s32.totalorder %s108, 0
      %s111 = sadd.s32 %s110, 1
      %s112 = scalar_select %p109, %s110, %s111
      %p115 = pneg %p109
      %p116 = scmp.eq.s32.totalorder %s11, 1
      %p117 = por %p115, %p116
      %p118 = scmp.ne.s32.totalorder %s110, %s113
      %p119 = scmp.eq.s32.totalorder %s11, 0
      %p120 = por %p118, %p119
      %p121 = scmp.ne.s32.totalorder %s110, %s113
      %p122 = scmp.eq.s32.totalorder %s16, 1
      %p123 = por %p121, %p122
      %p124 = scmp.ne.s32.totalorder %s113, %s114
      %p125 = scmp.eq.s32.totalorder %s16, 0
      %p126 = por %p124, %p125
      %p127 = scmp.ne.s32.totalorder %s113, %s114
      %p128 = scmp.eq.s32.totalorder %s17, 1
      %p129 = por %p127, %p128
      %p131 = scmp.ne.s32.totalorder %s114, %s130
      %p132 = scmp.eq.s32.totalorder %s17, 0
      %p133 = por %p131, %p132
      %p134 = scmp.le.s32.totalorder 1, %s11
      %p135 = scmp.lt.s32.totalorder %s11, 3
      %p136 = pnand %p134, %p135
      %p137 = pneg %p136
      // Predicated region
      $region9: #{forward.5} parent=5 // pred_check
        _
      $region10: #{forward.5} parent=5 // pred_check_branch
        %139 = sbr.rel (%p136) target = $region12
      $region11: #{forward.5} parent=5 // pred_region
        %s140 = ssub.s32 %s11, 1
        // Predicated region
        $region13: #{forward.5} parent=11 // pred_check
          %p141 = pneg %p58
        $region14: #{forward.5} parent=11 // pred_check_branch
          %143 = sbr.rel (%p141) target = $region16
        $region15: #{forward.5} parent=11 // pred_region
          _
        $region16: #{forward.5} parent=11 // pred_fallthru
          _
        // Predicated region
        $region17: #{forward.5} parent=11 // pred_check
          %p144 = pneg %p79
        $region18: #{forward.5} parent=11 // pred_check_branch
          %146 = sbr.rel (%p144) target = $region20
        $region19: #{forward.5} parent=11 // pred_region
          %s148 = ssub.s32 64, 64
          %149 = vsyncadd [#allocation4], %s148
          %s151 = sshll.u32 [#allocation3], 4
          %s152 = int_to_ptr.vmem [resolvable:$true] %s151
          %154 = dma.hbm_to_vmem [thread:$0]  %s2, 64, %s152, [#allocation4]
        $region20: #{forward.5} parent=11 // pred_fallthru
          _
        // Predicated region
        $region21: #{forward.5} parent=11 // pred_check
          %p155 = pneg %p100
        $region22: #{forward.5} parent=11 // pred_check_branch
          %157 = sbr.rel (%p155) target = $region24
        $region23: #{forward.5} parent=11 // pred_region
          _
        $region24: #{forward.5} parent=11 // pred_fallthru
          _
      $region12: #{forward.5} parent=5 // pred_fallthru
        _
      %p158 = scmp.lt.s32.totalorder %s11, 2
      // Predicated region
      $region25: #{forward.5} parent=5 // pred_check
        %p159 = pneg %p158
      $region26: #{forward.5} parent=5 // pred_check_branch
        %161 = sbr.rel (%p159) target = $region28
      $region27: #{forward.5} parent=5 // pred_region
        // Predicated region
        $region29: #{forward.5} parent=27 // pred_check
          %p162 = pneg %p31
        $region30: #{forward.5} parent=27 // pred_check_branch
          %164 = sbr.rel (%p162) target = $region32
        $region31: #{forward.5} parent=27 // pred_region
          %p165 = scmp.lt.s32.totalorder %s11, 1
          %s166 = scalar_select %p165, %s11, 1
          %s167 = smul.addr %s166, 2
          %s168 = smul.addr %s167, 4
          %s169 = scalar_lea.vmem %s0, %s168
        $region32: #{forward.5} parent=27 // pred_fallthru
          _
      $region28: #{forward.5} parent=5 // pred_fallthru
        _
      %p170 = scmp.le.s32.totalorder 1, %s11
      %p171 = scmp.lt.s32.totalorder %s11, 3
      %p172 = pnand %p170, %p171
      %p173 = pneg %p172
      // Predicated region
      $region33: #{forward.5} parent=5 // pred_check
        _
      $region34: #{forward.5} parent=5 // pred_check_branch
        %175 = sbr.rel (%p172) target = $region36
      $region35: #{forward.5} parent=5 // pred_region
        %s176 = ssub.s32 %s11, 1
        // Predicated region
        $region37: #{forward.5} parent=35 // pred_check
          %p177 = pneg %p79
        $region38: #{forward.5} parent=35 // pred_check_branch
          %179 = sbr.rel (%p177) target = $region40
        $region39: #{forward.5} parent=35 // pred_region
          %180 = dma.done [#allocation4], 64
        $region40: #{forward.5} parent=35 // pred_fallthru
          _
        %p181 = scmp.lt.s32.totalorder %s16, 1
        %s182 = scalar_select %p181, %s16, 1
        %s183 = smul.addr %s182, 2
        %s184 = smul.addr %s183, 4
        %s185 = scalar_lea.vmem %s0, %s184
        %p186 = pneg %p37
        %p187 = pneg %p34
        %p188 = pneg %p58
        %p189 = pneg %p55
        %p190 = pneg %p79
        %p191 = pneg %p76
        %p192 = pneg %p100
        %p193 = pneg %p97
        %p194 = pneg %p126
        %p195 = pneg %p123
        %p196 = scmp.lt.s32.totalorder %s16, 1
        %s197 = scalar_select %p196, %s16, 1
        %s198 = smul.addr %s197, 2
        %s199 = smul.addr %s198, 4
        %s200 = scalar_lea.vmem %s4, %s199
        %p201 = scmp.lt.s32.totalorder %s16, 1
        %s202 = scalar_select %p201, %s16, 1
        %s203 = smul.addr %s202, 2
        %s204 = smul.addr %s203, 4
        %s205 = scalar_lea.vmem %s0, %s204
        %p206 = scmp.lt.s32.totalorder %s16, 1
        %s207 = scalar_select %p206, %s16, 1
        %s208 = smul.addr %s207, 2
        %s209 = smul.addr %s208, 4
        %s210 = scalar_lea.vmem %s4, %s209
        %v212 = vld [vmem:[%s205] sm:$0xf]
        %v213 = vld [vmem:[%s205 + $0x4] sm:$0xf]
        %v214 = vld [vmem:[%s1] sm:$0xff]
        %v215 = vld [vmem:[%s1 + $0x8] sm:$0xff]
        %v216 = vld [vmem:[%s1 + $0x10] sm:$0xff]
        %v217 = vld [vmem:[%s1 + $0x18] sm:$0xff]
        %v218 = vld [vmem:[%s1 + $0x20] sm:$0xff]
        %v219 = vld [vmem:[%s1 + $0x28] sm:$0xff]
        %v220 = vld [vmem:[%s1 + $0x30] sm:$0xff]
        %v221 = vld [vmem:[%s1 + $0x38] sm:$0xff]
        %v222 = vld [vmem:[%s1 + $0x40] sm:$0xff]
        %v223 = vld [vmem:[%s1 + $0x48] sm:$0xff]
        %v224 = vld [vmem:[%s1 + $0x50] sm:$0xff]
        %v225 = vld [vmem:[%s1 + $0x58] sm:$0xff]
        %v226 = vld [vmem:[%s1 + $0x60] sm:$0xff]
        %v227 = vld [vmem:[%s1 + $0x68] sm:$0xff]
        %v228 = vld [vmem:[%s1 + $0x70] sm:$0xff]
        %v229 = vld [vmem:[%s1 + $0x78] sm:$0xff]
        %v230 = vld [vmem:[#allocation3] sm:$0xf]
        %v232 = vlaneseq
        %v233 = vshrl.u32 %v232, 7
        %v234 = vsub.s32 0, %v233
        %v235 = vrot.slane %v230, %v234
        %v236 = vlaneseq
        %v237 = vshrl.u32 %v236, 7
        %v238 = vsub.s32 1, %v237
        %v239 = vrot.slane %v230, %v238
        %v240 = vlaneseq
        %v241 = vshrl.u32 %v240, 7
        %v242 = vsub.s32 2, %v241
        %v243 = vrot.slane %v230, %v242
        %v244 = vlaneseq
        %v245 = vshrl.u32 %v244, 7
        %v246 = vsub.s32 3, %v245
        %v247 = vrot.slane %v230, %v246
        %v254 = vunpack.c.l.b16 %v212
        %v255 = vunpack.c.l.b16 %v213
        %v256 = vpack.c.b16 %v255, %v254
        %v273 = vunpack.c.l.b16 %v214
        %v274 = vunpack.c.h.b16 %v214
        %v275 = vunpack.c.l.b16 %v215
        %v276 = vunpack.c.h.b16 %v215
        %v277 = vunpack.c.l.b16 %v216
        %v278 = vunpack.c.h.b16 %v216
        %v279 = vunpack.c.l.b16 %v217
        %v280 = vunpack.c.h.b16 %v217
        %v281 = vunpack.c.l.b16 %v218
        %v282 = vunpack.c.h.b16 %v218
        %v283 = vunpack.c.l.b16 %v219
        %v284 = vunpack.c.h.b16 %v219
        %v285 = vunpack.c.l.b16 %v220
        %v286 = vunpack.c.h.b16 %v220
        %v287 = vunpack.c.l.b16 %v221
        %v288 = vunpack.c.h.b16 %v221
        %v289 = vunpack.c.l.b16 %v222
        %v290 = vunpack.c.h.b16 %v222
        %v291 = vunpack.c.l.b16 %v223
        %v292 = vunpack.c.h.b16 %v223
        %v293 = vunpack.c.l.b16 %v224
        %v294 = vunpack.c.h.b16 %v224
        %v295 = vunpack.c.l.b16 %v225
        %v296 = vunpack.c.h.b16 %v225
        %v297 = vunpack.c.l.b16 %v226
        %v298 = vunpack.c.h.b16 %v226
        %v299 = vunpack.c.l.b16 %v227
        %v300 = vunpack.c.h.b16 %v227
        %v301 = vunpack.c.l.b16 %v228
        %v302 = vunpack.c.h.b16 %v228
        %v303 = vunpack.c.l.b16 %v229
        %v304 = vunpack.c.h.b16 %v229
        %v305 = vpack.c.b16 %v277, %v273
        %v306 = vpack.c.b16 %v278, %v274
        %v307 = vpack.c.b16 %v279, %v275
        %v308 = vpack.c.b16 %v280, %v276
        %v309 = vpack.c.b16 %v285, %v281
        %v310 = vpack.c.b16 %v286, %v282
        %v311 = vpack.c.b16 %v287, %v283
        %v312 = vpack.c.b16 %v288, %v284
        %v313 = vpack.c.b16 %v293, %v289
        %v314 = vpack.c.b16 %v294, %v290
        %v315 = vpack.c.b16 %v295, %v291
        %v316 = vpack.c.b16 %v296, %v292
        %v317 = vpack.c.b16 %v301, %v297
        %v318 = vpack.c.b16 %v302, %v298
        %v319 = vpack.c.b16 %v303, %v299
        %v320 = vpack.c.b16 %v304, %v300
        %vm337 = vcmask 523264
        %v339 = vsel %vm337, %v256, 0
        %341 = vmatprep.subr.bf16.mxu0 %v306
        %342 = vmatpush1.bf16.msra.mxu0 %v305
        %343 = vmatprep.subr.bf16.mxu0 %v310
        %344 = vmatpush1.bf16.msra.mxu0 %v309
        %345 = vmatprep.subr.bf16.mxu0 %v314
        %346 = vmatpush1.bf16.msra.mxu0 %v313
        %347 = vmatprep.subr.bf16.mxu0 %v318
        %348 = vmatpush1.bf16.msra.mxu0 %v317
        %349 = vmatprep.subr.bf16.mxu0 0
        %350 = vmatpush1.bf16.msra.mxu0 0
        %351 = vmatprep.subr.bf16.mxu0 0
        %352 = vmatpush1.bf16.msra.mxu0 0
        %353 = vmatprep.subr.bf16.mxu0 0
        %354 = vmatpush1.bf16.msra.mxu0 0
        %355 = vmatprep.subr.bf16.mxu0 0
        %356 = vmatpush1.bf16.msra.mxu0 0
        %357 = vmatprep.subr.bf16.mxu0 0
        %358 = vmatpush1.bf16.msra.mxu0 0
        %359 = vmatprep.subr.bf16.mxu0 0
        %360 = vmatpush1.bf16.msra.mxu0 0
        %361 = vmatprep.subr.bf16.mxu0 0
        %362 = vmatpush1.bf16.msra.mxu0 0
        %363 = vmatprep.subr.bf16.mxu0 0
        %364 = vmatpush1.bf16.msra.mxu0 0
        %365 = vmatprep.subr.bf16.mxu0 0
        %366 = vmatpush1.bf16.msra.mxu0 0
        %367 = vmatprep.subr.bf16.mxu0 0
        %368 = vmatpush1.bf16.msra.mxu0 0
        %369 = vmatprep.subr.bf16.mxu0 0
        %370 = vmatpush1.bf16.msra.mxu0 0
        %371 = vmatprep.subr.bf16.mxu0 0
        %372 = vmatpush1.bf16.msra.mxu0 0
        %373 = vmatprep.mubr.bf16.mxu0 0
        %374 = vmatmul.mubr.bf16.gmra.mrb[0].mxu0 %v339
        %v375 = vpop.f32.mrb[0].mxu0
        %v376 = vadd.f32 %v235, %v375
        %v377 = vpop.f32.mrb[0].mxu0
        %v378 = vadd.f32 %v239, %v377
        %v379 = vpop.f32.mrb[0].mxu0
        %v380 = vadd.f32 %v235, %v379
        %v381 = vpop.f32.mrb[0].mxu0
        %v382 = vadd.f32 %v239, %v381
        %383 = vdwg.mxu0
        %384 = vmatprep.subr.bf16.mxu0 %v308
        %385 = vmatpush1.bf16.msra.mxu0 %v307
        %386 = vmatprep.subr.bf16.mxu0 %v312
        %387 = vmatpush1.bf16.msra.mxu0 %v311
        %388 = vmatprep.subr.bf16.mxu0 %v316
        %389 = vmatpush1.bf16.msra.mxu0 %v315
        %390 = vmatprep.subr.bf16.mxu0 %v320
        %391 = vmatpush1.bf16.msra.mxu0 %v319
        %392 = vmatprep.subr.bf16.mxu0 0
        %393 = vmatpush1.bf16.msra.mxu0 0
        %394 = vmatprep.subr.bf16.mxu0 0
        %395 = vmatpush1.bf16.msra.mxu0 0
        %396 = vmatprep.subr.bf16.mxu0 0
        %397 = vmatpush1.bf16.msra.mxu0 0
        %398 = vmatprep.subr.bf16.mxu0 0
        %399 = vmatpush1.bf16.msra.mxu0 0
        %400 = vmatprep.subr.bf16.mxu0 0
        %401 = vmatpush1.bf16.msra.mxu0 0
        %402 = vmatprep.subr.bf16.mxu0 0
        %403 = vmatpush1.bf16.msra.mxu0 0
        %404 = vmatprep.subr.bf16.mxu0 0
        %405 = vmatpush1.bf16.msra.mxu0 0
        %406 = vmatprep.subr.bf16.mxu0 0
        %407 = vmatpush1.bf16.msra.mxu0 0
        %408 = vmatprep.subr.bf16.mxu0 0
        %409 = vmatpush1.bf16.msra.mxu0 0
        %410 = vmatprep.subr.bf16.mxu0 0
        %411 = vmatpush1.bf16.msra.mxu0 0
        %412 = vmatprep.subr.bf16.mxu0 0
        %413 = vmatpush1.bf16.msra.mxu0 0
        %414 = vmatprep.subr.bf16.mxu0 0
        %415 = vmatpush1.bf16.msra.mxu0 0
        %416 = vmatprep.mubr.bf16.mxu0 0
        %417 = vmatmul.mubr.bf16.gmra.mrb[0].mxu0 %v339
        %v418 = vpop.f32.mrb[0].mxu0
        %v419 = vadd.f32 %v243, %v418
        %v420 = vpop.f32.mrb[0].mxu0
        %v421 = vadd.f32 %v247, %v420
        %v422 = vpop.f32.mrb[0].mxu0
        %v423 = vadd.f32 %v243, %v422
        %v424 = vpop.f32.mrb[0].mxu0
        %v425 = vadd.f32 %v247, %v424
        %426 = vdwg.mxu0
        %v427 = vlaneseq
        %v428 = vand.u32 %v427, 127
        %v429 = vadd.s32 %v428, 128
        %v430 = vadd.s32 %v428, 256
        %v431 = vadd.s32 %v428, 384
        %vm432 = vcmp.lt.s32.totalorder %v428, 0
        %v433 = vsub.s32 0, %v428
        %v434 = vsel %vm432, %v433, %v428
        %v435 = vshrl.u32 %v434, 7
        %v436 = vand.u32 %v434, 127
        %v437 = vsub.s32 0, %v436
        %v438 = vsel %vm432, %v437, %v436
        %vm439 = vcmp.lt.s32.totalorder %v429, 0
        %v440 = vsub.s32 0, %v429
        %v441 = vsel %vm439, %v440, %v429
        %v442 = vshrl.u32 %v441, 7
        %v443 = vand.u32 %v441, 127
        %v444 = vsub.s32 0, %v443
        %v445 = vsel %vm439, %v444, %v443
        %vm446 = vcmp.lt.s32.totalorder %v430, 0
        %v447 = vsub.s32 0, %v430
        %v448 = vsel %vm446, %v447, %v430
        %v449 = vshrl.u32 %v448, 7
        %v450 = vand.u32 %v448, 127
        %v451 = vsub.s32 0, %v450
        %v452 = vsel %vm446, %v451, %v450
        %vm453 = vcmp.lt.s32.totalorder %v431, 0
        %v454 = vsub.s32 0, %v431
        %v455 = vsel %vm453, %v454, %v431
        %v456 = vshrl.u32 %v455, 7
        %v457 = vand.u32 %v455, 127
        %v458 = vsub.s32 0, %v457
        %v459 = vsel %vm453, %v458, %v457
        %vm460 = vcmp.ne.s32.totalorder %v438, 0
        %vm461 = vcmp.ne.s32.totalorder %v445, 0
        %vm462 = vcmp.ne.s32.totalorder %v452, 0
        %vm463 = vcmp.ne.s32.totalorder %v459, 0
        %vm464 = vcmp.lt.s32.totalorder %v438, 0
        %vm465 = vcmp.lt.s32.totalorder %v445, 0
        %vm466 = vcmp.lt.s32.totalorder %v452, 0
        %vm467 = vcmp.lt.s32.totalorder %v459, 0
        %vm468 = vmand %vm464, %vm460
        %vm469 = vmand %vm465, %vm461
        %vm470 = vmand %vm466, %vm462
        %vm471 = vmand %vm467, %vm463
        %v472 = vadd.s32 %v438, 128
        %v473 = vadd.s32 %v445, 128
        %v474 = vadd.s32 %v452, 128
        %v475 = vadd.s32 %v459, 128
        %v476 = vsel %vm468, %v472, %v438
        %v477 = vsel %vm469, %v473, %v445
        %v478 = vsel %vm470, %v474, %v452
        %v479 = vsel %vm471, %v475, %v459
        %vm480 = vcmp.lt.s32.totalorder %v476, 64
        %vm481 = vcmp.lt.s32.totalorder %v477, 64
        %vm482 = vcmp.lt.s32.totalorder %v478, 64
        %vm483 = vcmp.lt.s32.totalorder %v479, 64
        %v484 = vld [vmem:[%s3] sm:$0xff]
        %v485 = vld [vmem:[%s3 + $0x8] sm:$0xff]
        %v486 = vld [vmem:[%s3 + $0x10] sm:$0xff]
        %v487 = vld [vmem:[%s3 + $0x18] sm:$0xff]
        %v488 = vld [vmem:[%s3 + $0x20] sm:$0xff]
        %v489 = vld [vmem:[%s3 + $0x28] sm:$0xff]
        %v490 = vld [vmem:[%s3 + $0x30] sm:$0xff]
        %v491 = vld [vmem:[%s3 + $0x38] sm:$0xff]
        %v492 = vld [vmem:[%s3 + $0x40] sm:$0xff]
        %v493 = vld [vmem:[%s3 + $0x48] sm:$0xff]
        %v494 = vld [vmem:[%s3 + $0x50] sm:$0xff]
        %v495 = vld [vmem:[%s3 + $0x58] sm:$0xff]
        %v496 = vld [vmem:[%s3 + $0x60] sm:$0xff]
        %v497 = vld [vmem:[%s3 + $0x68] sm:$0xff]
        %v498 = vld [vmem:[%s3 + $0x70] sm:$0xff]
        %v499 = vld [vmem:[%s3 + $0x78] sm:$0xff]
        %v500 = vld [vmem:[%s3 + $0x80] sm:$0xff]
        %v501 = vld [vmem:[%s3 + $0x88] sm:$0xff]
        %v502 = vld [vmem:[%s3 + $0x90] sm:$0xff]
        %v503 = vld [vmem:[%s3 + $0x98] sm:$0xff]
        %v504 = vld [vmem:[%s3 + $0xa0] sm:$0xff]
        %v505 = vld [vmem:[%s3 + $0xa8] sm:$0xff]
        %v506 = vld [vmem:[%s3 + $0xb0] sm:$0xff]
        %v507 = vld [vmem:[%s3 + $0xb8] sm:$0xff]
        %v508 = vld [vmem:[%s3 + $0xc0] sm:$0xff]
        %v509 = vld [vmem:[%s3 + $0xc8] sm:$0xff]
        %v510 = vld [vmem:[%s3 + $0xd0] sm:$0xff]
        %v511 = vld [vmem:[%s3 + $0xd8] sm:$0xff]
        %v512 = vld [vmem:[%s3 + $0xe0] sm:$0xff]
        %v513 = vld [vmem:[%s3 + $0xe8] sm:$0xff]
        %v514 = vld [vmem:[%s3 + $0xf0] sm:$0xff]
        %v515 = vld [vmem:[%s3 + $0xf8] sm:$0xff]
        %v520 = vrot.slane %v380, 7
        %v521 = vrot.slane %v382, 7
        %v522 = vrot.slane %v423, 7
        %v523 = vrot.slane %v425, 7
        %v528 = vsel %vm480, %v376, %v520
        %v529 = vsel %vm481, %v378, %v521
        %v530 = vsel %vm482, %v419, %v522
        %v531 = vsel %vm483, %v421, %v523
        %v564 = vunpack.c.l.b16 %v484
        %v565 = vunpack.c.h.b16 %v484
        %v566 = vunpack.c.l.b16 %v485
        %v567 = vunpack.c.h.b16 %v485
        %v568 = vunpack.c.l.b16 %v486
        %v569 = vunpack.c.h.b16 %v486
        %v570 = vunpack.c.l.b16 %v487
        %v571 = vunpack.c.h.b16 %v487
        %v572 = vunpack.c.l.b16 %v488
        %v573 = vunpack.c.h.b16 %v488
        %v574 = vunpack.c.l.b16 %v489
        %v575 = vunpack.c.h.b16 %v489
        %v576 = vunpack.c.l.b16 %v490
        %v577 = vunpack.c.h.b16 %v490
        %v578 = vunpack.c.l.b16 %v491
        %v579 = vunpack.c.h.b16 %v491
        %v580 = vunpack.c.l.b16 %v492
        %v581 = vunpack.c.h.b16 %v492
        %v582 = vunpack.c.l.b16 %v493
        %v583 = vunpack.c.h.b16 %v493
        %v584 = vunpack.c.l.b16 %v494
        %v585 = vunpack.c.h.b16 %v494
        %v586 = vunpack.c.l.b16 %v495
        %v587 = vunpack.c.h.b16 %v495
        %v588 = vunpack.c.l.b16 %v496
        %v589 = vunpack.c.h.b16 %v496
        %v590 = vunpack.c.l.b16 %v497
        %v591 = vunpack.c.h.b16 %v497
        %v592 = vunpack.c.l.b16 %v498
        %v593 = vunpack.c.h.b16 %v498
        %v594 = vunpack.c.l.b16 %v499
        %v595 = vunpack.c.h.b16 %v499
        %v596 = vunpack.c.l.b16 %v500
        %v597 = vunpack.c.h.b16 %v500
        %v598 = vunpack.c.l.b16 %v501
        %v599 = vunpack.c.h.b16 %v501
        %v600 = vunpack.c.l.b16 %v502
        %v601 = vunpack.c.h.b16 %v502
        %v602 = vunpack.c.l.b16 %v503
        %v603 = vunpack.c.h.b16 %v503
        %v604 = vunpack.c.l.b16 %v504
        %v605 = vunpack.c.h.b16 %v504
        %v606 = vunpack.c.l.b16 %v505
        %v607 = vunpack.c.h.b16 %v505
        %v608 = vunpack.c.l.b16 %v506
        %v609 = vunpack.c.h.b16 %v506
        %v610 = vunpack.c.l.b16 %v507
        %v611 = vunpack.c.h.b16 %v507
        %v612 = vunpack.c.l.b16 %v508
        %v613 = vunpack.c.h.b16 %v508
        %v614 = vunpack.c.l.b16 %v509
        %v615 = vunpack.c.h.b16 %v509
        %v616 = vunpack.c.l.b16 %v510
        %v617 = vunpack.c.h.b16 %v510
        %v618 = vunpack.c.l.b16 %v511
        %v619 = vunpack.c.h.b16 %v511
        %v620 = vunpack.c.l.b16 %v512
        %v621 = vunpack.c.h.b16 %v512
        %v622 = vunpack.c.l.b16 %v513
        %v623 = vunpack.c.h.b16 %v513
        %v624 = vunpack.c.l.b16 %v514
        %v625 = vunpack.c.h.b16 %v514
        %v626 = vunpack.c.l.b16 %v515
        %v627 = vunpack.c.h.b16 %v515
        %v628 = vpack.c.b16 %v568, %v564
        %v629 = vpack.c.b16 %v569, %v565
        %v630 = vpack.c.b16 %v570, %v566
        %v631 = vpack.c.b16 %v571, %v567
        %v632 = vpack.c.b16 %v576, %v572
        %v633 = vpack.c.b16 %v577, %v573
        %v634 = vpack.c.b16 %v578, %v574
        %v635 = vpack.c.b16 %v579, %v575
        %v636 = vpack.c.b16 %v584, %v580
        %v637 = vpack.c.b16 %v585, %v581
        %v638 = vpack.c.b16 %v586, %v582
        %v639 = vpack.c.b16 %v587, %v583
        %v640 = vpack.c.b16 %v592, %v588
        %v641 = vpack.c.b16 %v593, %v589
        %v642 = vpack.c.b16 %v594, %v590
        %v643 = vpack.c.b16 %v595, %v591
        %v644 = vpack.c.b16 %v600, %v596
        %v645 = vpack.c.b16 %v601, %v597
        %v646 = vpack.c.b16 %v602, %v598
        %v647 = vpack.c.b16 %v603, %v599
        %v648 = vpack.c.b16 %v608, %v604
        %v649 = vpack.c.b16 %v609, %v605
        %v650 = vpack.c.b16 %v610, %v606
        %v651 = vpack.c.b16 %v611, %v607
        %v652 = vpack.c.b16 %v616, %v612
        %v653 = vpack.c.b16 %v617, %v613
        %v654 = vpack.c.b16 %v618, %v614
        %v655 = vpack.c.b16 %v619, %v615
        %v656 = vpack.c.b16 %v624, %v620
        %v657 = vpack.c.b16 %v625, %v621
        %v658 = vpack.c.b16 %v626, %v622
        %v659 = vpack.c.b16 %v627, %v623
        %692 = vmatprep.subr.bf16.mxu0 %v629
        %693 = vmatpush1.bf16.msra.mxu0 %v628
        %694 = vmatprep.subr.bf16.mxu0 %v633
        %695 = vmatpush1.bf16.msra.mxu0 %v632
        %696 = vmatprep.subr.bf16.mxu0 %v637
        %697 = vmatpush1.bf16.msra.mxu0 %v636
        %698 = vmatprep.subr.bf16.mxu0 %v641
        %699 = vmatpush1.bf16.msra.mxu0 %v640
        %700 = vmatprep.subr.bf16.mxu0 %v645
        %701 = vmatpush1.bf16.msra.mxu0 %v644
        %702 = vmatprep.subr.bf16.mxu0 %v649
        %703 = vmatpush1.bf16.msra.mxu0 %v648
        %704 = vmatprep.subr.bf16.mxu0 %v653
        %705 = vmatpush1.bf16.msra.mxu0 %v652
        %706 = vmatprep.subr.bf16.mxu0 %v657
        %707 = vmatpush1.bf16.msra.mxu0 %v656
        %708 = vmatprep.subr.bf16.mxu0 0
        %709 = vmatpush1.bf16.msra.mxu0 0
        %710 = vmatprep.subr.bf16.mxu0 0
        %711 = vmatpush1.bf16.msra.mxu0 0
        %712 = vmatprep.subr.bf16.mxu0 0
        %713 = vmatpush1.bf16.msra.mxu0 0
        %714 = vmatprep.subr.bf16.mxu0 0
        %715 = vmatpush1.bf16.msra.mxu0 0
        %716 = vmatprep.subr.bf16.mxu0 0
        %717 = vmatpush1.bf16.msra.mxu0 0
        %718 = vmatprep.subr.bf16.mxu0 0
        %719 = vmatpush1.bf16.msra.mxu0 0
        %720 = vmatprep.subr.bf16.mxu0 0
        %721 = vmatpush1.bf16.msra.mxu0 0
        %722 = vmatprep.subr.bf16.mxu0 0
        %723 = vmatpush1.bf16.msra.mxu0 0
        %724 = vmatprep.mubr.bf16.mxu0 0
        %725 = vmatmul.mubr.bf16.gmra.mrb[0].mxu0 0
        %v726 = vpop.f32.mrb[0].mxu0
        %v727 = vadd.f32 0.0, %v726
        %v728 = vpop.f32.mrb[0].mxu0
        %v729 = vadd.f32 0.0, %v728
        %v730 = vpop.f32.mrb[0].mxu0
        %v731 = vpop.f32.mrb[0].mxu0
        %732 = vdwg.mxu0
        %733 = vmatprep.subr.bf16.mxu0 %v631
        %734 = vmatpush1.bf16.msra.mxu0 %v630
        %735 = vmatprep.subr.bf16.mxu0 %v635
        %736 = vmatpush1.bf16.msra.mxu0 %v634
        %737 = vmatprep.subr.bf16.mxu0 %v639
        %738 = vmatpush1.bf16.msra.mxu0 %v638
        %739 = vmatprep.subr.bf16.mxu0 %v643
        %740 = vmatpush1.bf16.msra.mxu0 %v642
        %741 = vmatprep.subr.bf16.mxu0 %v647
        %742 = vmatpush1.bf16.msra.mxu0 %v646
        %743 = vmatprep.subr.bf16.mxu0 %v651
        %744 = vmatpush1.bf16.msra.mxu0 %v650
        %745 = vmatprep.subr.bf16.mxu0 %v655
        %746 = vmatpush1.bf16.msra.mxu0 %v654
        %747 = vmatprep.subr.bf16.mxu0 %v659
        %748 = vmatpush1.bf16.msra.mxu0 %v658
        %749 = vmatprep.subr.bf16.mxu0 0
        %750 = vmatpush1.bf16.msra.mxu0 0
        %751 = vmatprep.subr.bf16.mxu0 0
        %752 = vmatpush1.bf16.msra.mxu0 0
        %753 = vmatprep.subr.bf16.mxu0 0
        %754 = vmatpush1.bf16.msra.mxu0 0
        %755 = vmatprep.subr.bf16.mxu0 0
        %756 = vmatpush1.bf16.msra.mxu0 0
        %757 = vmatprep.subr.bf16.mxu0 0
        %758 = vmatpush1.bf16.msra.mxu0 0
        %759 = vmatprep.subr.bf16.mxu0 0
        %760 = vmatpush1.bf16.msra.mxu0 0
        %761 = vmatprep.subr.bf16.mxu0 0
        %762 = vmatpush1.bf16.msra.mxu0 0
        %763 = vmatprep.subr.bf16.mxu0 0
        %764 = vmatpush1.bf16.msra.mxu0 0
        %765 = vmatprep.mubr.bf16.mxu0 0
        %766 = vmatmul.mubr.bf16.gmra.mrb[0].mxu0 0
        %v767 = vpop.f32.mrb[0].mxu0
        %v768 = vadd.f32 0.0, %v767
        %v769 = vpop.f32.mrb[0].mxu0
        %v770 = vadd.f32 0.0, %v769
        %v771 = vpop.f32.mrb[0].mxu0
        %v772 = vpop.f32.mrb[0].mxu0
        %773 = vdwg.mxu0
        %v774 = vadd.f32 %v528, %v727
        %v775 = vadd.f32 %v529, %v729
        %v776 = vadd.f32 %v530, %v768
        %v777 = vadd.f32 %v531, %v770
        %v778 = vxor.u32 %v774, 2147483648
        %v779 = vmul.f32 %v778, 1.442695
        %v780 = vpow.pop %v779
        %v781 = vadd.f32 %v780, 1.0
        %v782 = vrcp.pop %v781
        %v783 = vmul.f32 1.0, %v782
        %v784 = vxor.u32 %v775, 2147483648
        %v785 = vmul.f32 %v784, 1.442695
        %v786 = vpow.pop %v785
        %v787 = vadd.f32 %v786, 1.0
        %v788 = vrcp.pop %v787
        %v789 = vmul.f32 1.0, %v788
        %v790 = vtanh.pop %v776
        %v791 = vxor.u32 %v777, 2147483648
        %v792 = vmul.f32 %v791, 1.442695
        %v793 = vpow.pop %v792
        %v794 = vadd.f32 %v793, 1.0
        %v795 = vrcp.pop %v794
        %v796 = vmul.f32 1.0, %v795
        %v797 = vmul.f32 %v789, 0.0
        %v798 = vmul.f32 %v783, %v790
        %v799 = vadd.f32 %v797, %v798
        %v800 = vtanh.pop %v799
        %v801 = vmul.f32 %v796, %v800
        %vm802 = vcmask 516096
        %803 = vst.msk [vmem:[#allocation2] sm:$0x1] %vm802, %v801
        %vm804 = vcmask 1040896
        %805 = vst.msk [vmem:[#allocation2 + $0xf] sm:$0x1] %vm804, %v801
        %v806 = vrot.slane %v380, 5
        %v807 = vrot.slane %v382, 5
        %v808 = vrot.slane %v423, 5
        %v809 = vrot.slane %v425, 5
        %v814 = vsel %vm480, %v376, %v806
        %v815 = vsel %vm481, %v378, %v807
        %v816 = vsel %vm482, %v419, %v808
        %v817 = vsel %vm483, %v421, %v809
        %v818 = vpack.c.bf16 %v801, %v801
        %819 = vmatprep.subr.bf16.mxu0 %v629
        %820 = vmatpush1.bf16.msra.mxu0 %v628
        %821 = vmatprep.subr.bf16.mxu0 %v633
        %822 = vmatpush1.bf16.msra.mxu0 %v632
        %823 = vmatprep.subr.bf16.mxu0 %v637
        %824 = vmatpush1.bf16.msra.mxu0 %v636
        %825 = vmatprep.subr.bf16.mxu0 %v641
        %826 = vmatpush1.bf16.msra.mxu0 %v640
        %827 = vmatprep.subr.bf16.mxu0 %v645
        %828 = vmatpush1.bf16.msra.mxu0 %v644
        %829 = vmatprep.subr.bf16.mxu0 %v649
        %830 = vmatpush1.bf16.msra.mxu0 %v648
        %831 = vmatprep.subr.bf16.mxu0 %v653
        %832 = vmatpush1.bf16.msra.mxu0 %v652
        %833 = vmatprep.subr.bf16.mxu0 %v657
        %834 = vmatpush1.bf16.msra.mxu0 %v656
        %835 = vmatprep.subr.bf16.mxu0 0
        %836 = vmatpush1.bf16.msra.mxu0 0
        %837 = vmatprep.subr.bf16.mxu0 0
        %838 = vmatpush1.bf16.msra.mxu0 0
        %839 = vmatprep.subr.bf16.mxu0 0
        %840 = vmatpush1.bf16.msra.mxu0 0
        %841 = vmatprep.subr.bf16.mxu0 0
        %842 = vmatpush1.bf16.msra.mxu0 0
        %843 = vmatprep.subr.bf16.mxu0 0
        %844 = vmatpush1.bf16.msra.mxu0 0
        %845 = vmatprep.subr.bf16.mxu0 0
        %846 = vmatpush1.bf16.msra.mxu0 0
        %847 = vmatprep.subr.bf16.mxu0 0
        %848 = vmatpush1.bf16.msra.mxu0 0
        %849 = vmatprep.subr.bf16.mxu0 0
        %850 = vmatpush1.bf16.msra.mxu0 0
        %851 = vmatprep.mubr.bf16.mxu0 0
        %852 = vmatmul.mubr.bf16.gmra.mrb[0].mxu0 %v818
        %v853 = vpop.f32.mrb[0].mxu0
        %v854 = vadd.f32 0.0, %v853
        %v855 = vpop.f32.mrb[0].mxu0
        %v856 = vadd.f32 0.0, %v855
        %v857 = vpop.f32.mrb[0].mxu0
        %v858 = vpop.f32.mrb[0].mxu0
        %859 = vdwg.mxu0
        %860 = vmatprep.subr.bf16.mxu0 %v631
        %861 = vmatpush1.bf16.msra.mxu0 %v630
        %862 = vmatprep.subr.bf16.mxu0 %v635
        %863 = vmatpush1.bf16.msra.mxu0 %v634
        %864 = vmatprep.subr.bf16.mxu0 %v639
        %865 = vmatpush1.bf16.msra.mxu0 %v638
        %866 = vmatprep.subr.bf16.mxu0 %v643
        %867 = vmatpush1.bf16.msra.mxu0 %v642
        %868 = vmatprep.subr.bf16.mxu0 %v647
        %869 = vmatpush1.bf16.msra.mxu0 %v646
        %870 = vmatprep.subr.bf16.mxu0 %v651
        %871 = vmatpush1.bf16.msra.mxu0 %v650
        %872 = vmatprep.subr.bf16.mxu0 %v655
        %873 = vmatpush1.bf16.msra.mxu0 %v654
        %874 = vmatprep.subr.bf16.mxu0 %v659
        %875 = vmatpush1.bf16.msra.mxu0 %v658
        %876 = vmatprep.subr.bf16.mxu0 0
        %877 = vmatpush1.bf16.msra.mxu0 0
        %878 = vmatprep.subr.bf16.mxu0 0
        %879 = vmatpush1.bf16.msra.mxu0 0
        %880 = vmatprep.subr.bf16.mxu0 0
        %881 = vmatpush1.bf16.msra.mxu0 0
        %882 = vmatprep.subr.bf16.mxu0 0
        %883 = vmatpush1.bf16.msra.mxu0 0
        %884 = vmatprep.subr.bf16.mxu0 0
        %885 = vmatpush1.bf16.msra.mxu0 0
        %886 = vmatprep.subr.bf16.mxu0 0
        %887 = vmatpush1.bf16.msra.mxu0 0
        %888 = vmatprep.subr.bf16.mxu0 0
        %889 = vmatpush1.bf16.msra.mxu0 0
        %890 = vmatprep.subr.bf16.mxu0 0
        %891 = vmatpush1.bf16.msra.mxu0 0
        %892 = vmatprep.mubr.bf16.mxu0 0
        %893 = vmatmul.mubr.bf16.gmra.mrb[0].mxu0 %v818
        %v894 = vpop.f32.mrb[0].mxu0
        %v895 = vadd.f32 0.0, %v894
        %v896 = vpop.f32.mrb[0].mxu0
        %v897 = vadd.f32 0.0, %v896
        %v898 = vpop.f32.mrb[0].mxu0
        %v899 = vpop.f32.mrb[0].mxu0
        %900 = vdwg.mxu0
        %v905 = vrot.slane %v854, 7
        %v906 = vrot.slane %v856, 7
        %v907 = vrot.slane %v895, 7
        %v908 = vrot.slane %v897, 7
        %v913 = vadd.f32 %v814, %v905
        %v914 = vadd.f32 %v815, %v906
        %v915 = vadd.f32 %v816, %v907
        %v916 = vadd.f32 %v817, %v908
        %v917 = vxor.u32 %v913, 2147483648
        %v918 = vmul.f32 %v917, 1.442695
        %v919 = vpow.pop %v918
        %v920 = vadd.f32 %v919, 1.0
        %v921 = vrcp.pop %v920
        %v922 = vmul.f32 1.0, %v921
        %v923 = vxor.u32 %v914, 2147483648
        %v924 = vmul.f32 %v923, 1.442695
        %v925 = vpow.pop %v924
        %v926 = vadd.f32 %v925, 1.0
        %v927 = vrcp.pop %v926
        %v928 = vmul.f32 1.0, %v927
        %v929 = vtanh.pop %v915
        %v930 = vxor.u32 %v916, 2147483648
        %v931 = vmul.f32 %v930, 1.442695
        %v932 = vpow.pop %v931
        %v933 = vadd.f32 %v932, 1.0
        %v934 = vrcp.pop %v933
        %v935 = vmul.f32 1.0, %v934
        %v937 = vrot.slane %v799, 7
        %v939 = vmul.f32 %v928, %v937
        %v940 = vmul.f32 %v922, %v929
        %v941 = vadd.f32 %v939, %v940
        %v942 = vtanh.pop %v941
        %v943 = vmul.f32 %v935, %v942
        %vm944 = vcmask 517121
        %945 = vst.msk [vmem:[#allocation2] sm:$0x2] %vm944, %v943
        %vm946 = vcmask 1041921
        %947 = vst.msk [vmem:[#allocation2 + $0xd] sm:$0x2] %vm946, %v943
        %v948 = vrot.slane %v380, 3
        %v949 = vrot.slane %v382, 3
        %v950 = vrot.slane %v423, 3
        %v951 = vrot.slane %v425, 3
        %v956 = vsel %vm480, %v376, %v948
        %v957 = vsel %vm481, %v378, %v949
        %v958 = vsel %vm482, %v419, %v950
        %v959 = vsel %vm483, %v421, %v951
        %v960 = vpack.c.bf16 %v943, %v943
        %v962 = vshrl.u32 %v960, 16
        %965 = vmatprep.subr.bf16.mxu0 %v629
        %966 = vmatpush1.bf16.msra.mxu0 %v628
        %967 = vmatprep.subr.bf16.mxu0 %v633
        %968 = vmatpush1.bf16.msra.mxu0 %v632
        %969 = vmatprep.subr.bf16.mxu0 %v637
        %970 = vmatpush1.bf16.msra.mxu0 %v636
        %971 = vmatprep.subr.bf16.mxu0 %v641
        %972 = vmatpush1.bf16.msra.mxu0 %v640
        %973 = vmatprep.subr.bf16.mxu0 %v645
        %974 = vmatpush1.bf16.msra.mxu0 %v644
        %975 = vmatprep.subr.bf16.mxu0 %v649
        %976 = vmatpush1.bf16.msra.mxu0 %v648
        %977 = vmatprep.subr.bf16.mxu0 %v653
        %978 = vmatpush1.bf16.msra.mxu0 %v652
        %979 = vmatprep.subr.bf16.mxu0 %v657
        %980 = vmatpush1.bf16.msra.mxu0 %v656
        %981 = vmatprep.subr.bf16.mxu0 0
        %982 = vmatpush1.bf16.msra.mxu0 0
        %983 = vmatprep.subr.bf16.mxu0 0
        %984 = vmatpush1.bf16.msra.mxu0 0
        %985 = vmatprep.subr.bf16.mxu0 0
        %986 = vmatpush1.bf16.msra.mxu0 0
        %987 = vmatprep.subr.bf16.mxu0 0
        %988 = vmatpush1.bf16.msra.mxu0 0
        %989 = vmatprep.subr.bf16.mxu0 0
        %990 = vmatpush1.bf16.msra.mxu0 0
        %991 = vmatprep.subr.bf16.mxu0 0
        %992 = vmatpush1.bf16.msra.mxu0 0
        %993 = vmatprep.subr.bf16.mxu0 0
        %994 = vmatpush1.bf16.msra.mxu0 0
        %995 = vmatprep.subr.bf16.mxu0 0
        %996 = vmatpush1.bf16.msra.mxu0 0
        %997 = vmatprep.mubr.bf16.mxu0 0
        %998 = vmatmul.mubr.bf16.gmra.mrb[0].mxu0 %v962
        %v999 = vpop.f32.mrb[0].mxu0
        %v1000 = vadd.f32 0.0, %v999
        %v1001 = vpop.f32.mrb[0].mxu0
        %v1002 = vadd.f32 0.0, %v1001
        %v1003 = vpop.f32.mrb[0].mxu0
        %v1004 = vpop.f32.mrb[0].mxu0
        %1005 = vdwg.mxu0
        %1006 = vmatprep.subr.bf16.mxu0 %v631
        %1007 = vmatpush1.bf16.msra.mxu0 %v630
        %1008 = vmatprep.subr.bf16.mxu0 %v635
        %1009 = vmatpush1.bf16.msra.mxu0 %v634
        %1010 = vmatprep.subr.bf16.mxu0 %v639
        %1011 = vmatpush1.bf16.msra.mxu0 %v638
        %1012 = vmatprep.subr.bf16.mxu0 %v643
        %1013 = vmatpush1.bf16.msra.mxu0 %v642
        %1014 = vmatprep.subr.bf16.mxu0 %v647
        %1015 = vmatpush1.bf16.msra.mxu0 %v646
        %1016 = vmatprep.subr.bf16.mxu0 %v651
        %1017 = vmatpush1.bf16.msra.mxu0 %v650
        %1018 = vmatprep.subr.bf16.mxu0 %v655
        %1019 = vmatpush1.bf16.msra.mxu0 %v654
        %1020 = vmatprep.subr.bf16.mxu0 %v659
        %1021 = vmatpush1.bf16.msra.mxu0 %v658
        %1022 = vmatprep.subr.bf16.mxu0 0
        %1023 = vmatpush1.bf16.msra.mxu0 0
        %1024 = vmatprep.subr.bf16.mxu0 0
        %1025 = vmatpush1.bf16.msra.mxu0 0
        %1026 = vmatprep.subr.bf16.mxu0 0
        %1027 = vmatpush1.bf16.msra.mxu0 0
        %1028 = vmatprep.subr.bf16.mxu0 0
        %1029 = vmatpush1.bf16.msra.mxu0 0
        %1030 = vmatprep.subr.bf16.mxu0 0
        %1031 = vmatpush1.bf16.msra.mxu0 0
        %1032 = vmatprep.subr.bf16.mxu0 0
        %1033 = vmatpush1.bf16.msra.mxu0 0
        %1034 = vmatprep.subr.bf16.mxu0 0
        %1035 = vmatpush1.bf16.msra.mxu0 0
        %1036 = vmatprep.subr.bf16.mxu0 0
        %1037 = vmatpush1.bf16.msra.mxu0 0
        %1038 = vmatprep.mubr.bf16.mxu0 0
        %1039 = vmatmul.mubr.bf16.gmra.mrb[0].mxu0 %v962
        %v1040 = vpop.f32.mrb[0].mxu0
        %v1041 = vadd.f32 0.0, %v1040
        %v1042 = vpop.f32.mrb[0].mxu0
        %v1043 = vadd.f32 0.0, %v1042
        %v1044 = vpop.f32.mrb[0].mxu0
        %v1045 = vpop.f32.mrb[0].mxu0
        %1046 = vdwg.mxu0
        %v1051 = vrot.slane %v1000, 6
        %v1052 = vrot.slane %v1002, 6
        %v1053 = vrot.slane %v1041, 6
        %v1054 = vrot.slane %v1043, 6
        %v1059 = vadd.f32 %v956, %v1051
        %v1060 = vadd.f32 %v957, %v1052
        %v1061 = vadd.f32 %v958, %v1053
        %v1062 = vadd.f32 %v959, %v1054
        %v1063 = vxor.u32 %v1059, 2147483648
        %v1064 = vmul.f32 %v1063, 1.442695
        %v1065 = vpow.pop %v1064
        %v1066 = vadd.f32 %v1065, 1.0
        %v1067 = vrcp.pop %v1066
        %v1068 = vmul.f32 1.0, %v1067
        %v1069 = vxor.u32 %v1060, 2147483648
        %v1070 = vmul.f32 %v1069, 1.442695
        %v1071 = vpow.pop %v1070
        %v1072 = vadd.f32 %v1071, 1.0
        %v1073 = vrcp.pop %v1072
        %v1074 = vmul.f32 1.0, %v1073
        %v1075 = vtanh.pop %v1061
        %v1076 = vxor.u32 %v1062, 2147483648
        %v1077 = vmul.f32 %v1076, 1.442695
        %v1078 = vpow.pop %v1077
        %v1079 = vadd.f32 %v1078, 1.0
        %v1080 = vrcp.pop %v1079
        %v1081 = vmul.f32 1.0, %v1080
        %v1083 = vrot.slane %v941, 7
        %v1085 = vmul.f32 %v1074, %v1083
        %v1086 = vmul.f32 %v1068, %v1075
        %v1087 = vadd.f32 %v1085, %v1086
        %v1088 = vtanh.pop %v1087
        %v1089 = vmul.f32 %v1081, %v1088
        %vm1090 = vcmask 518146
        %1091 = vst.msk [vmem:[#allocation2] sm:$0x4] %vm1090, %v1089
        %vm1092 = vcmask 1042946
        %1093 = vst.msk [vmem:[#allocation2 + $0xb] sm:$0x4] %vm1092, %v1089
        %v1094 = vrot.slane %v380, 1
        %v1095 = vrot.slane %v382, 1
        %v1096 = vrot.slane %v423, 1
        %v1097 = vrot.slane %v425, 1
        %v1102 = vsel %vm480, %v376, %v1094
        %v1103 = vsel %vm481, %v378, %v1095
        %v1104 = vsel %vm482, %v419, %v1096
        %v1105 = vsel %vm483, %v421, %v1097
        %v1106 = vpack.c.bf16 %v1089, %v1089
        %v1108 = vrot.slane %v1106, 1
        %1110 = vmatprep.subr.bf16.mxu0 %v629
        %1111 = vmatpush1.bf16.msra.mxu0 %v628
        %1112 = vmatprep.subr.bf16.mxu0 %v633
        %1113 = vmatpush1.bf16.msra.mxu0 %v632
        %1114 = vmatprep.subr.bf16.mxu0 %v637
        %1115 = vmatpush1.bf16.msra.mxu0 %v636
        %1116 = vmatprep.subr.bf16.mxu0 %v641
        %1117 = vmatpush1.bf16.msra.mxu0 %v640
        %1118 = vmatprep.subr.bf16.mxu0 %v645
        %1119 = vmatpush1.bf16.msra.mxu0 %v644
        %1120 = vmatprep.subr.bf16.mxu0 %v649
        %1121 = vmatpush1.bf16.msra.mxu0 %v648
        %1122 = vmatprep.subr.bf16.mxu0 %v653
        %1123 = vmatpush1.bf16.msra.mxu0 %v652
        %1124 = vmatprep.subr.bf16.mxu0 %v657
        %1125 = vmatpush1.bf16.msra.mxu0 %v656
        %1126 = vmatprep.subr.bf16.mxu0 0
        %1127 = vmatpush1.bf16.msra.mxu0 0
        %1128 = vmatprep.subr.bf16.mxu0 0
        %1129 = vmatpush1.bf16.msra.mxu0 0
        %1130 = vmatprep.subr.bf16.mxu0 0
        %1131 = vmatpush1.bf16.msra.mxu0 0
        %1132 = vmatprep.subr.bf16.mxu0 0
        %1133 = vmatpush1.bf16.msra.mxu0 0
        %1134 = vmatprep.subr.bf16.mxu0 0
        %1135 = vmatpush1.bf16.msra.mxu0 0
        %1136 = vmatprep.subr.bf16.mxu0 0
        %1137 = vmatpush1.bf16.msra.mxu0 0
        %1138 = vmatprep.subr.bf16.mxu0 0
        %1139 = vmatpush1.bf16.msra.mxu0 0
        %1140 = vmatprep.subr.bf16.mxu0 0
        %1141 = vmatpush1.bf16.msra.mxu0 0
        %1142 = vmatprep.mubr.bf16.mxu0 0
        %1143 = vmatmul.mubr.bf16.gmra.mrb[0].mxu0 %v1108
        %v1144 = vpop.f32.mrb[0].mxu0
        %v1145 = vadd.f32 0.0, %v1144
        %v1146 = vpop.f32.mrb[0].mxu0
        %v1147 = vadd.f32 0.0, %v1146
        %v1148 = vpop.f32.mrb[0].mxu0
        %v1149 = vpop.f32.mrb[0].mxu0
        %1150 = vdwg.mxu0
        %1151 = vmatprep.subr.bf16.mxu0 %v631
        %1152 = vmatpush1.bf16.msra.mxu0 %v630
        %1153 = vmatprep.subr.bf16.mxu0 %v635
        %1154 = vmatpush1.bf16.msra.mxu0 %v634
        %1155 = vmatprep.subr.bf16.mxu0 %v639
        %1156 = vmatpush1.bf16.msra.mxu0 %v638
        %1157 = vmatprep.subr.bf16.mxu0 %v643
        %1158 = vmatpush1.bf16.msra.mxu0 %v642
        %1159 = vmatprep.subr.bf16.mxu0 %v647
        %1160 = vmatpush1.bf16.msra.mxu0 %v646
        %1161 = vmatprep.subr.bf16.mxu0 %v651
        %1162 = vmatpush1.bf16.msra.mxu0 %v650
        %1163 = vmatprep.subr.bf16.mxu0 %v655
        %1164 = vmatpush1.bf16.msra.mxu0 %v654
        %1165 = vmatprep.subr.bf16.mxu0 %v659
        %1166 = vmatpush1.bf16.msra.mxu0 %v658
        %1167 = vmatprep.subr.bf16.mxu0 0
        %1168 = vmatpush1.bf16.msra.mxu0 0
        %1169 = vmatprep.subr.bf16.mxu0 0
        %1170 = vmatpush1.bf16.msra.mxu0 0
        %1171 = vmatprep.subr.bf16.mxu0 0
        %1172 = vmatpush1.bf16.msra.mxu0 0
        %1173 = vmatprep.subr.bf16.mxu0 0
        %1174 = vmatpush1.bf16.msra.mxu0 0
        %1175 = vmatprep.subr.bf16.mxu0 0
        %1176 = vmatpush1.bf16.msra.mxu0 0
        %1177 = vmatprep.subr.bf16.mxu0 0
        %1178 = vmatpush1.bf16.msra.mxu0 0
        %1179 = vmatprep.subr.bf16.mxu0 0
        %1180 = vmatpush1.bf16.msra.mxu0 0
        %1181 = vmatprep.subr.bf16.mxu0 0
        %1182 = vmatpush1.bf16.msra.mxu0 0
        %1183 = vmatprep.mubr.bf16.mxu0 0
        %1184 = vmatmul.mubr.bf16.gmra.mrb[0].mxu0 %v1108
        %v1185 = vpop.f32.mrb[0].mxu0
        %v1186 = vadd.f32 0.0, %v1185
        %v1187 = vpop.f32.mrb[0].mxu0
        %v1188 = vadd.f32 0.0, %v1187
        %v1189 = vpop.f32.mrb[0].mxu0
        %v1190 = vpop.f32.mrb[0].mxu0
        %1191 = vdwg.mxu0
        %v1196 = vrot.slane %v1145, 5
        %v1197 = vrot.slane %v1147, 5
        %v1198 = vrot.slane %v1186, 5
        %v1199 = vrot.slane %v1188, 5
        %v1204 = vadd.f32 %v1102, %v1196
        %v1205 = vadd.f32 %v1103, %v1197
        %v1206 = vadd.f32 %v1104, %v1198
        %v1207 = vadd.f32 %v1105, %v1199
        %v1208 = vxor.u32 %v1204, 2147483648
        %v1209 = vmul.f32 %v1208, 1.442695
        %v1210 = vpow.pop %v1209
        %v1211 = vadd.f32 %v1210, 1.0
        %v1212 = vrcp.pop %v1211
        %v1213 = vmul.f32 1.0, %v1212
        %v1214 = vxor.u32 %v1205, 2147483648
        %v1215 = vmul.f32 %v1214, 1.442695
        %v1216 = vpow.pop %v1215
        %v1217 = vadd.f32 %v1216, 1.0
        %v1218 = vrcp.pop %v1217
        %v1219 = vmul.f32 1.0, %v1218
        %v1220 = vtanh.pop %v1206
        %v1221 = vxor.u32 %v1207, 2147483648
        %v1222 = vmul.f32 %v1221, 1.442695
        %v1223 = vpow.pop %v1222
        %v1224 = vadd.f32 %v1223, 1.0
        %v1225 = vrcp.pop %v1224
        %v1226 = vmul.f32 1.0, %v1225
        %v1228 = vrot.slane %v1087, 7
        %v1230 = vmul.f32 %v1219, %v1228
        %v1231 = vmul.f32 %v1213, %v1220
        %v1232 = vadd.f32 %v1230, %v1231
        %v1233 = vtanh.pop %v1232
        %v1234 = vmul.f32 %v1226, %v1233
        %vm1235 = vcmask 519171
        %1236 = vst.msk [vmem:[#allocation2] sm:$0x8] %vm1235, %v1234
        %vm1237 = vcmask 1043971
        %1238 = vst.msk [vmem:[#allocation2 + $0x9] sm:$0x8] %vm1237, %v1234
        %v1239 = vpack.c.bf16 %v1234, %v1234
        %v1241 = vshrl.u32 %v1239, 16
        %v1243 = vrot.slane %v1241, 1
        %1245 = vmatprep.subr.bf16.mxu0 %v629
        %1246 = vmatpush1.bf16.msra.mxu0 %v628
        %1247 = vmatprep.subr.bf16.mxu0 %v633
        %1248 = vmatpush1.bf16.msra.mxu0 %v632
        %1249 = vmatprep.subr.bf16.mxu0 %v637
        %1250 = vmatpush1.bf16.msra.mxu0 %v636
        %1251 = vmatprep.subr.bf16.mxu0 %v641
        %1252 = vmatpush1.bf16.msra.mxu0 %v640
        %1253 = vmatprep.subr.bf16.mxu0 %v645
        %1254 = vmatpush1.bf16.msra.mxu0 %v644
        %1255 = vmatprep.subr.bf16.mxu0 %v649
        %1256 = vmatpush1.bf16.msra.mxu0 %v648
        %1257 = vmatprep.subr.bf16.mxu0 %v653
        %1258 = vmatpush1.bf16.msra.mxu0 %v652
        %1259 = vmatprep.subr.bf16.mxu0 %v657
        %1260 = vmatpush1.bf16.msra.mxu0 %v656
        %1261 = vmatprep.subr.bf16.mxu0 0
        %1262 = vmatpush1.bf16.msra.mxu0 0
        %1263 = vmatprep.subr.bf16.mxu0 0
        %1264 = vmatpush1.bf16.msra.mxu0 0
        %1265 = vmatprep.subr.bf16.mxu0 0
        %1266 = vmatpush1.bf16.msra.mxu0 0
        %1267 = vmatprep.subr.bf16.mxu0 0
        %1268 = vmatpush1.bf16.msra.mxu0 0
        %1269 = vmatprep.subr.bf16.mxu0 0
        %1270 = vmatpush1.bf16.msra.mxu0 0
        %1271 = vmatprep.subr.bf16.mxu0 0
        %1272 = vmatpush1.bf16.msra.mxu0 0
        %1273 = vmatprep.subr.bf16.mxu0 0
        %1274 = vmatpush1.bf16.msra.mxu0 0
        %1275 = vmatprep.subr.bf16.mxu0 0
        %1276 = vmatpush1.bf16.msra.mxu0 0
        %1277 = vmatprep.mubr.bf16.mxu0 0
        %1278 = vmatmul.mubr.bf16.gmra.mrb[0].mxu0 %v1243
        %v1279 = vpop.f32.mrb[0].mxu0
        %v1280 = vadd.f32 0.0, %v1279
        %v1281 = vpop.f32.mrb[0].mxu0
        %v1282 = vadd.f32 0.0, %v1281
        %v1283 = vpop.f32.mrb[0].mxu0
        %v1284 = vpop.f32.mrb[0].mxu0
        %1285 = vdwg.mxu0
        %1286 = vmatprep.subr.bf16.mxu0 %v631
        %1287 = vmatpush1.bf16.msra.mxu0 %v630
        %1288 = vmatprep.subr.bf16.mxu0 %v635
        %1289 = vmatpush1.bf16.msra.mxu0 %v634
        %1290 = vmatprep.subr.bf16.mxu0 %v639
        %1291 = vmatpush1.bf16.msra.mxu0 %v638
        %1292 = vmatprep.subr.bf16.mxu0 %v643
        %1293 = vmatpush1.bf16.msra.mxu0 %v642
        %1294 = vmatprep.subr.bf16.mxu0 %v647
        %1295 = vmatpush1.bf16.msra.mxu0 %v646
        %1296 = vmatprep.subr.bf16.mxu0 %v651
        %1297 = vmatpush1.bf16.msra.mxu0 %v650
        %1298 = vmatprep.subr.bf16.mxu0 %v655
        %1299 = vmatpush1.bf16.msra.mxu0 %v654
        %1300 = vmatprep.subr.bf16.mxu0 %v659
        %1301 = vmatpush1.bf16.msra.mxu0 %v658
        %1302 = vmatprep.subr.bf16.mxu0 0
        %1303 = vmatpush1.bf16.msra.mxu0 0
        %1304 = vmatprep.subr.bf16.mxu0 0
        %1305 = vmatpush1.bf16.msra.mxu0 0
        %1306 = vmatprep.subr.bf16.mxu0 0
        %1307 = vmatpush1.bf16.msra.mxu0 0
        %1308 = vmatprep.subr.bf16.mxu0 0
        %1309 = vmatpush1.bf16.msra.mxu0 0
        %1310 = vmatprep.subr.bf16.mxu0 0
        %1311 = vmatpush1.bf16.msra.mxu0 0
        %1312 = vmatprep.subr.bf16.mxu0 0
        %1313 = vmatpush1.bf16.msra.mxu0 0
        %1314 = vmatprep.subr.bf16.mxu0 0
        %1315 = vmatpush1.bf16.msra.mxu0 0
        %1316 = vmatprep.subr.bf16.mxu0 0
        %1317 = vmatpush1.bf16.msra.mxu0 0
        %1318 = vmatprep.mubr.bf16.mxu0 0
        %1319 = vmatmul.mubr.bf16.gmra.mrb[0].mxu0 %v1243
        %v1320 = vpop.f32.mrb[0].mxu0
        %v1321 = vadd.f32 0.0, %v1320
        %v1322 = vpop.f32.mrb[0].mxu0
        %v1323 = vadd.f32 0.0, %v1322
        %v1324 = vpop.f32.mrb[0].mxu0
        %v1325 = vpop.f32.mrb[0].mxu0
        %1326 = vdwg.mxu0
        %v1331 = vrot.slane %v1280, 4
        %v1332 = vrot.slane %v1282, 4
        %v1333 = vrot.slane %v1321, 4
        %v1334 = vrot.slane %v1323, 4
        %v1339 = vadd.f32 %v528, %v1331
        %v1340 = vadd.f32 %v529, %v1332
        %v1341 = vadd.f32 %v530, %v1333
        %v1342 = vadd.f32 %v531, %v1334
        %v1343 = vxor.u32 %v1339, 2147483648
        %v1344 = vmul.f32 %v1343, 1.442695
        %v1345 = vpow.pop %v1344
        %v1346 = vadd.f32 %v1345, 1.0
        %v1347 = vrcp.pop %v1346
        %v1348 = vmul.f32 1.0, %v1347
        %v1349 = vxor.u32 %v1340, 2147483648
        %v1350 = vmul.f32 %v1349, 1.442695
        %v1351 = vpow.pop %v1350
        %v1352 = vadd.f32 %v1351, 1.0
        %v1353 = vrcp.pop %v1352
        %v1354 = vmul.f32 1.0, %v1353
        %v1355 = vtanh.pop %v1341
        %v1356 = vxor.u32 %v1342, 2147483648
        %v1357 = vmul.f32 %v1356, 1.442695
        %v1358 = vpow.pop %v1357
        %v1359 = vadd.f32 %v1358, 1.0
        %v1360 = vrcp.pop %v1359
        %v1361 = vmul.f32 1.0, %v1360
        %v1363 = vrot.slane %v1232, 7
        %v1365 = vmul.f32 %v1354, %v1363
        %v1366 = vmul.f32 %v1348, %v1355
        %v1367 = vadd.f32 %v1365, %v1366
        %v1368 = vtanh.pop %v1367
        %v1369 = vmul.f32 %v1361, %v1368
        %vm1370 = vcmask 520196
        %1371 = vst.msk [vmem:[#allocation2] sm:$0x10] %vm1370, %v1369
        %vm1372 = vcmask 1044996
        %1373 = vst.msk [vmem:[#allocation2 + $0x7] sm:$0x10] %vm1372, %v1369
        %v1374 = vpack.c.bf16 %v1369, %v1369
        %v1376 = vrot.slane %v1374, 2
        %1378 = vmatprep.subr.bf16.mxu0 %v629
        %1379 = vmatpush1.bf16.msra.mxu0 %v628
        %1380 = vmatprep.subr.bf16.mxu0 %v633
        %1381 = vmatpush1.bf16.msra.mxu0 %v632
        %1382 = vmatprep.subr.bf16.mxu0 %v637
        %1383 = vmatpush1.bf16.msra.mxu0 %v636
        %1384 = vmatprep.subr.bf16.mxu0 %v641
        %1385 = vmatpush1.bf16.msra.mxu0 %v640
        %1386 = vmatprep.subr.bf16.mxu0 %v645
        %1387 = vmatpush1.bf16.msra.mxu0 %v644
        %1388 = vmatprep.subr.bf16.mxu0 %v649
        %1389 = vmatpush1.bf16.msra.mxu0 %v648
        %1390 = vmatprep.subr.bf16.mxu0 %v653
        %1391 = vmatpush1.bf16.msra.mxu0 %v652
        %1392 = vmatprep.subr.bf16.mxu0 %v657
        %1393 = vmatpush1.bf16.msra.mxu0 %v656
        %1394 = vmatprep.subr.bf16.mxu0 0
        %1395 = vmatpush1.bf16.msra.mxu0 0
        %1396 = vmatprep.subr.bf16.mxu0 0
        %1397 = vmatpush1.bf16.msra.mxu0 0
        %1398 = vmatprep.subr.bf16.mxu0 0
        %1399 = vmatpush1.bf16.msra.mxu0 0
        %1400 = vmatprep.subr.bf16.mxu0 0
        %1401 = vmatpush1.bf16.msra.mxu0 0
        %1402 = vmatprep.subr.bf16.mxu0 0
        %1403 = vmatpush1.bf16.msra.mxu0 0
        %1404 = vmatprep.subr.bf16.mxu0 0
        %1405 = vmatpush1.bf16.msra.mxu0 0
        %1406 = vmatprep.subr.bf16.mxu0 0
        %1407 = vmatpush1.bf16.msra.mxu0 0
        %1408 = vmatprep.subr.bf16.mxu0 0
        %1409 = vmatpush1.bf16.msra.mxu0 0
        %1410 = vmatprep.mubr.bf16.mxu0 0
        %1411 = vmatmul.mubr.bf16.gmra.mrb[0].mxu0 %v1376
        %v1412 = vpop.f32.mrb[0].mxu0
        %v1413 = vadd.f32 0.0, %v1412
        %v1414 = vpop.f32.mrb[0].mxu0
        %v1415 = vadd.f32 0.0, %v1414
        %v1416 = vpop.f32.mrb[0].mxu0
        %v1417 = vpop.f32.mrb[0].mxu0
        %1418 = vdwg.mxu0
        %1419 = vmatprep.subr.bf16.mxu0 %v631
        %1420 = vmatpush1.bf16.msra.mxu0 %v630
        %1421 = vmatprep.subr.bf16.mxu0 %v635
        %1422 = vmatpush1.bf16.msra.mxu0 %v634
        %1423 = vmatprep.subr.bf16.mxu0 %v639
        %1424 = vmatpush1.bf16.msra.mxu0 %v638
        %1425 = vmatprep.subr.bf16.mxu0 %v643
        %1426 = vmatpush1.bf16.msra.mxu0 %v642
        %1427 = vmatprep.subr.bf16.mxu0 %v647
        %1428 = vmatpush1.bf16.msra.mxu0 %v646
        %1429 = vmatprep.subr.bf16.mxu0 %v651
        %1430 = vmatpush1.bf16.msra.mxu0 %v650
        %1431 = vmatprep.subr.bf16.mxu0 %v655
        %1432 = vmatpush1.bf16.msra.mxu0 %v654
        %1433 = vmatprep.subr.bf16.mxu0 %v659
        %1434 = vmatpush1.bf16.msra.mxu0 %v658
        %1435 = vmatprep.subr.bf16.mxu0 0
        %1436 = vmatpush1.bf16.msra.mxu0 0
        %1437 = vmatprep.subr.bf16.mxu0 0
        %1438 = vmatpush1.bf16.msra.mxu0 0
        %1439 = vmatprep.subr.bf16.mxu0 0
        %1440 = vmatpush1.bf16.msra.mxu0 0
        %1441 = vmatprep.subr.bf16.mxu0 0
        %1442 = vmatpush1.bf16.msra.mxu0 0
        %1443 = vmatprep.subr.bf16.mxu0 0
        %1444 = vmatpush1.bf16.msra.mxu0 0
        %1445 = vmatprep.subr.bf16.mxu0 0
        %1446 = vmatpush1.bf16.msra.mxu0 0
        %1447 = vmatprep.subr.bf16.mxu0 0
        %1448 = vmatpush1.bf16.msra.mxu0 0
        %1449 = vmatprep.subr.bf16.mxu0 0
        %1450 = vmatpush1.bf16.msra.mxu0 0
        %1451 = vmatprep.mubr.bf16.mxu0 0
        %1452 = vmatmul.mubr.bf16.gmra.mrb[0].mxu0 %v1376
        %v1453 = vpop.f32.mrb[0].mxu0
        %v1454 = vadd.f32 0.0, %v1453
        %v1455 = vpop.f32.mrb[0].mxu0
        %v1456 = vadd.f32 0.0, %v1455
        %v1457 = vpop.f32.mrb[0].mxu0
        %v1458 = vpop.f32.mrb[0].mxu0
        %1459 = vdwg.mxu0
        %v1464 = vrot.slane %v1413, 3
        %v1465 = vrot.slane %v1415, 3
        %v1466 = vrot.slane %v1454, 3
        %v1467 = vrot.slane %v1456, 3
        %v1472 = vadd.f32 %v814, %v1464
        %v1473 = vadd.f32 %v815, %v1465
        %v1474 = vadd.f32 %v816, %v1466
        %v1475 = vadd.f32 %v817, %v1467
        %v1476 = vxor.u32 %v1472, 2147483648
        %v1477 = vmul.f32 %v1476, 1.442695
        %v1478 = vpow.pop %v1477
        %v1479 = vadd.f32 %v1478, 1.0
        %v1480 = vrcp.pop %v1479
        %v1481 = vmul.f32 1.0, %v1480
        %v1482 = vxor.u32 %v1473, 2147483648
        %v1483 = vmul.f32 %v1482, 1.442695
        %v1484 = vpow.pop %v1483
        %v1485 = vadd.f32 %v1484, 1.0
        %v1486 = vrcp.pop %v1485
        %v1487 = vmul.f32 1.0, %v1486
        %v1488 = vtanh.pop %v1474
        %v1489 = vxor.u32 %v1475, 2147483648
        %v1490 = vmul.f32 %v1489, 1.442695
        %v1491 = vpow.pop %v1490
        %v1492 = vadd.f32 %v1491, 1.0
        %v1493 = vrcp.pop %v1492
        %v1494 = vmul.f32 1.0, %v1493
        %v1496 = vrot.slane %v1367, 7
        %v1498 = vmul.f32 %v1487, %v1496
        %v1499 = vmul.f32 %v1481, %v1488
        %v1500 = vadd.f32 %v1498, %v1499
        %v1501 = vtanh.pop %v1500
        %v1502 = vmul.f32 %v1494, %v1501
        %vm1503 = vcmask 521221
        %1504 = vst.msk [vmem:[#allocation2] sm:$0x20] %vm1503, %v1502
        %vm1505 = vcmask 1046021
        %1506 = vst.msk [vmem:[#allocation2 + $0x5] sm:$0x20] %vm1505, %v1502
        %v1507 = vpack.c.bf16 %v1502, %v1502
        %v1509 = vshrl.u32 %v1507, 16
        %v1511 = vrot.slane %v1509, 2
        %1513 = vmatprep.subr.bf16.mxu0 %v629
        %1514 = vmatpush1.bf16.msra.mxu0 %v628
        %1515 = vmatprep.subr.bf16.mxu0 %v633
        %1516 = vmatpush1.bf16.msra.mxu0 %v632
        %1517 = vmatprep.subr.bf16.mxu0 %v637
        %1518 = vmatpush1.bf16.msra.mxu0 %v636
        %1519 = vmatprep.subr.bf16.mxu0 %v641
        %1520 = vmatpush1.bf16.msra.mxu0 %v640
        %1521 = vmatprep.subr.bf16.mxu0 %v645
        %1522 = vmatpush1.bf16.msra.mxu0 %v644
        %1523 = vmatprep.subr.bf16.mxu0 %v649
        %1524 = vmatpush1.bf16.msra.mxu0 %v648
        %1525 = vmatprep.subr.bf16.mxu0 %v653
        %1526 = vmatpush1.bf16.msra.mxu0 %v652
        %1527 = vmatprep.subr.bf16.mxu0 %v657
        %1528 = vmatpush1.bf16.msra.mxu0 %v656
        %1529 = vmatprep.subr.bf16.mxu0 0
        %1530 = vmatpush1.bf16.msra.mxu0 0
        %1531 = vmatprep.subr.bf16.mxu0 0
        %1532 = vmatpush1.bf16.msra.mxu0 0
        %1533 = vmatprep.subr.bf16.mxu0 0
        %1534 = vmatpush1.bf16.msra.mxu0 0
        %1535 = vmatprep.subr.bf16.mxu0 0
        %1536 = vmatpush1.bf16.msra.mxu0 0
        %1537 = vmatprep.subr.bf16.mxu0 0
        %1538 = vmatpush1.bf16.msra.mxu0 0
        %1539 = vmatprep.subr.bf16.mxu0 0
        %1540 = vmatpush1.bf16.msra.mxu0 0
        %1541 = vmatprep.subr.bf16.mxu0 0
        %1542 = vmatpush1.bf16.msra.mxu0 0
        %1543 = vmatprep.subr.bf16.mxu0 0
        %1544 = vmatpush1.bf16.msra.mxu0 0
        %1545 = vmatprep.mubr.bf16.mxu0 0
        %1546 = vmatmul.mubr.bf16.gmra.mrb[0].mxu0 %v1511
        %v1547 = vpop.f32.mrb[0].mxu0
        %v1548 = vadd.f32 0.0, %v1547
        %v1549 = vpop.f32.mrb[0].mxu0
        %v1550 = vadd.f32 0.0, %v1549
        %v1551 = vpop.f32.mrb[0].mxu0
        %v1552 = vpop.f32.mrb[0].mxu0
        %1553 = vdwg.mxu0
        %1554 = vmatprep.subr.bf16.mxu0 %v631
        %1555 = vmatpush1.bf16.msra.mxu0 %v630
        %1556 = vmatprep.subr.bf16.mxu0 %v635
        %1557 = vmatpush1.bf16.msra.mxu0 %v634
        %1558 = vmatprep.subr.bf16.mxu0 %v639
        %1559 = vmatpush1.bf16.msra.mxu0 %v638
        %1560 = vmatprep.subr.bf16.mxu0 %v643
        %1561 = vmatpush1.bf16.msra.mxu0 %v642
        %1562 = vmatprep.subr.bf16.mxu0 %v647
        %1563 = vmatpush1.bf16.msra.mxu0 %v646
        %1564 = vmatprep.subr.bf16.mxu0 %v651
        %1565 = vmatpush1.bf16.msra.mxu0 %v650
        %1566 = vmatprep.subr.bf16.mxu0 %v655
        %1567 = vmatpush1.bf16.msra.mxu0 %v654
        %1568 = vmatprep.subr.bf16.mxu0 %v659
        %1569 = vmatpush1.bf16.msra.mxu0 %v658
        %1570 = vmatprep.subr.bf16.mxu0 0
        %1571 = vmatpush1.bf16.msra.mxu0 0
        %1572 = vmatprep.subr.bf16.mxu0 0
        %1573 = vmatpush1.bf16.msra.mxu0 0
        %1574 = vmatprep.subr.bf16.mxu0 0
        %1575 = vmatpush1.bf16.msra.mxu0 0
        %1576 = vmatprep.subr.bf16.mxu0 0
        %1577 = vmatpush1.bf16.msra.mxu0 0
        %1578 = vmatprep.subr.bf16.mxu0 0
        %1579 = vmatpush1.bf16.msra.mxu0 0
        %1580 = vmatprep.subr.bf16.mxu0 0
        %1581 = vmatpush1.bf16.msra.mxu0 0
        %1582 = vmatprep.subr.bf16.mxu0 0
        %1583 = vmatpush1.bf16.msra.mxu0 0
        %1584 = vmatprep.subr.bf16.mxu0 0
        %1585 = vmatpush1.bf16.msra.mxu0 0
        %1586 = vmatprep.mubr.bf16.mxu0 0
        %1587 = vmatmul.mubr.bf16.gmra.mrb[0].mxu0 %v1511
        %v1588 = vpop.f32.mrb[0].mxu0
        %v1589 = vadd.f32 0.0, %v1588
        %v1590 = vpop.f32.mrb[0].mxu0
        %v1591 = vadd.f32 0.0, %v1590
        %v1592 = vpop.f32.mrb[0].mxu0
        %v1593 = vpop.f32.mrb[0].mxu0
        %1594 = vdwg.mxu0
        %v1599 = vrot.slane %v1548, 2
        %v1600 = vrot.slane %v1550, 2
        %v1601 = vrot.slane %v1589, 2
        %v1602 = vrot.slane %v1591, 2
        %v1607 = vadd.f32 %v956, %v1599
        %v1608 = vadd.f32 %v957, %v1600
        %v1609 = vadd.f32 %v958, %v1601
        %v1610 = vadd.f32 %v959, %v1602
        %v1611 = vxor.u32 %v1607, 2147483648
        %v1612 = vmul.f32 %v1611, 1.442695
        %v1613 = vpow.pop %v1612
        %v1614 = vadd.f32 %v1613, 1.0
        %v1615 = vrcp.pop %v1614
        %v1616 = vmul.f32 1.0, %v1615
        %v1617 = vxor.u32 %v1608, 2147483648
        %v1618 = vmul.f32 %v1617, 1.442695
        %v1619 = vpow.pop %v1618
        %v1620 = vadd.f32 %v1619, 1.0
        %v1621 = vrcp.pop %v1620
        %v1622 = vmul.f32 1.0, %v1621
        %v1623 = vtanh.pop %v1609
        %v1624 = vxor.u32 %v1610, 2147483648
        %v1625 = vmul.f32 %v1624, 1.442695
        %v1626 = vpow.pop %v1625
        %v1627 = vadd.f32 %v1626, 1.0
        %v1628 = vrcp.pop %v1627
        %v1629 = vmul.f32 1.0, %v1628
        %v1631 = vrot.slane %v1500, 7
        %v1633 = vmul.f32 %v1622, %v1631
        %v1634 = vmul.f32 %v1616, %v1623
        %v1635 = vadd.f32 %v1633, %v1634
        %v1636 = vtanh.pop %v1635
        %v1637 = vmul.f32 %v1629, %v1636
        %vm1638 = vcmask 522246
        %1639 = vst.msk [vmem:[#allocation2] sm:$0x40] %vm1638, %v1637
        %vm1640 = vcmask 1047046
        %1641 = vst.msk [vmem:[#allocation2 + $0x3] sm:$0x40] %vm1640, %v1637
        %v1642 = vpack.c.bf16 %v1637, %v1637
        %v1644 = vrot.slane %v1642, 3
        %1646 = vmatprep.subr.bf16.mxu0 %v629
        %1647 = vmatpush1.bf16.msra.mxu0 %v628
        %1648 = vmatprep.subr.bf16.mxu0 %v633
        %1649 = vmatpush1.bf16.msra.mxu0 %v632
        %1650 = vmatprep.subr.bf16.mxu0 %v637
        %1651 = vmatpush1.bf16.msra.mxu0 %v636
        %1652 = vmatprep.subr.bf16.mxu0 %v641
        %1653 = vmatpush1.bf16.msra.mxu0 %v640
        %1654 = vmatprep.subr.bf16.mxu0 %v645
        %1655 = vmatpush1.bf16.msra.mxu0 %v644
        %1656 = vmatprep.subr.bf16.mxu0 %v649
        %1657 = vmatpush1.bf16.msra.mxu0 %v648
        %1658 = vmatprep.subr.bf16.mxu0 %v653
        %1659 = vmatpush1.bf16.msra.mxu0 %v652
        %1660 = vmatprep.subr.bf16.mxu0 %v657
        %1661 = vmatpush1.bf16.msra.mxu0 %v656
        %1662 = vmatprep.subr.bf16.mxu0 0
        %1663 = vmatpush1.bf16.msra.mxu0 0
        %1664 = vmatprep.subr.bf16.mxu0 0
        %1665 = vmatpush1.bf16.msra.mxu0 0
        %1666 = vmatprep.subr.bf16.mxu0 0
        %1667 = vmatpush1.bf16.msra.mxu0 0
        %1668 = vmatprep.subr.bf16.mxu0 0
        %1669 = vmatpush1.bf16.msra.mxu0 0
        %1670 = vmatprep.subr.bf16.mxu0 0
        %1671 = vmatpush1.bf16.msra.mxu0 0
        %1672 = vmatprep.subr.bf16.mxu0 0
        %1673 = vmatpush1.bf16.msra.mxu0 0
        %1674 = vmatprep.subr.bf16.mxu0 0
        %1675 = vmatpush1.bf16.msra.mxu0 0
        %1676 = vmatprep.subr.bf16.mxu0 0
        %1677 = vmatpush1.bf16.msra.mxu0 0
        %1678 = vmatprep.mubr.bf16.mxu0 0
        %1679 = vmatmul.mubr.bf16.gmra.mrb[0].mxu0 %v1644
        %v1680 = vpop.f32.mrb[0].mxu0
        %v1681 = vadd.f32 0.0, %v1680
        %v1682 = vpop.f32.mrb[0].mxu0
        %v1683 = vadd.f32 0.0, %v1682
        %v1684 = vpop.f32.mrb[0].mxu0
        %v1685 = vpop.f32.mrb[0].mxu0
        %1686 = vdwg.mxu0
        %1687 = vmatprep.subr.bf16.mxu0 %v631
        %1688 = vmatpush1.bf16.msra.mxu0 %v630
        %1689 = vmatprep.subr.bf16.mxu0 %v635
        %1690 = vmatpush1.bf16.msra.mxu0 %v634
        %1691 = vmatprep.subr.bf16.mxu0 %v639
        %1692 = vmatpush1.bf16.msra.mxu0 %v638
        %1693 = vmatprep.subr.bf16.mxu0 %v643
        %1694 = vmatpush1.bf16.msra.mxu0 %v642
        %1695 = vmatprep.subr.bf16.mxu0 %v647
        %1696 = vmatpush1.bf16.msra.mxu0 %v646
        %1697 = vmatprep.subr.bf16.mxu0 %v651
        %1698 = vmatpush1.bf16.msra.mxu0 %v650
        %1699 = vmatprep.subr.bf16.mxu0 %v655
        %1700 = vmatpush1.bf16.msra.mxu0 %v654
        %1701 = vmatprep.subr.bf16.mxu0 %v659
        %1702 = vmatpush1.bf16.msra.mxu0 %v658
        %1703 = vmatprep.subr.bf16.mxu0 0
        %1704 = vmatpush1.bf16.msra.mxu0 0
        %1705 = vmatprep.subr.bf16.mxu0 0
        %1706 = vmatpush1.bf16.msra.mxu0 0
        %1707 = vmatprep.subr.bf16.mxu0 0
        %1708 = vmatpush1.bf16.msra.mxu0 0
        %1709 = vmatprep.subr.bf16.mxu0 0
        %1710 = vmatpush1.bf16.msra.mxu0 0
        %1711 = vmatprep.subr.bf16.mxu0 0
        %1712 = vmatpush1.bf16.msra.mxu0 0
        %1713 = vmatprep.subr.bf16.mxu0 0
        %1714 = vmatpush1.bf16.msra.mxu0 0
        %1715 = vmatprep.subr.bf16.mxu0 0
        %1716 = vmatpush1.bf16.msra.mxu0 0
        %1717 = vmatprep.subr.bf16.mxu0 0
        %1718 = vmatpush1.bf16.msra.mxu0 0
        %1719 = vmatprep.mubr.bf16.mxu0 0
        %1720 = vmatmul.mubr.bf16.gmra.mrb[0].mxu0 %v1644
        %v1721 = vpop.f32.mrb[0].mxu0
        %v1722 = vadd.f32 0.0, %v1721
        %v1723 = vpop.f32.mrb[0].mxu0
        %v1724 = vadd.f32 0.0, %v1723
        %v1725 = vpop.f32.mrb[0].mxu0
        %v1726 = vpop.f32.mrb[0].mxu0
        %1727 = vdwg.mxu0
        %v1732 = vrot.slane %v1681, 1
        %v1733 = vrot.slane %v1683, 1
        %v1734 = vrot.slane %v1722, 1
        %v1735 = vrot.slane %v1724, 1
        %v1740 = vadd.f32 %v1102, %v1732
        %v1741 = vadd.f32 %v1103, %v1733
        %v1742 = vadd.f32 %v1104, %v1734
        %v1743 = vadd.f32 %v1105, %v1735
        %v1744 = vxor.u32 %v1740, 2147483648
        %v1745 = vmul.f32 %v1744, 1.442695
        %v1746 = vpow.pop %v1745
        %v1747 = vadd.f32 %v1746, 1.0
        %v1748 = vrcp.pop %v1747
        %v1749 = vmul.f32 1.0, %v1748
        %v1750 = vxor.u32 %v1741, 2147483648
        %v1751 = vmul.f32 %v1750, 1.442695
        %v1752 = vpow.pop %v1751
        %v1753 = vadd.f32 %v1752, 1.0
        %v1754 = vrcp.pop %v1753
        %v1755 = vmul.f32 1.0, %v1754
        %v1756 = vtanh.pop %v1742
        %v1757 = vxor.u32 %v1743, 2147483648
        %v1758 = vmul.f32 %v1757, 1.442695
        %v1759 = vpow.pop %v1758
        %v1760 = vadd.f32 %v1759, 1.0
        %v1761 = vrcp.pop %v1760
        %v1762 = vmul.f32 1.0, %v1761
        %v1764 = vrot.slane %v1635, 7
        %v1766 = vmul.f32 %v1755, %v1764
        %v1767 = vmul.f32 %v1749, %v1756
        %v1768 = vadd.f32 %v1766, %v1767
        %v1769 = vtanh.pop %v1768
        %v1770 = vmul.f32 %v1762, %v1769
        %vm1771 = vcmask 523271
        %1772 = vst.msk [vmem:[#allocation2] sm:$0x80] %vm1771, %v1770
        %vm1773 = vcmask 1048071
        %1774 = vst.msk [vmem:[#allocation2 + $0x1] sm:$0x80] %vm1773, %v1770
        %v1779 = vrot.slane %v376, 7
        %v1780 = vrot.slane %v378, 7
        %v1781 = vrot.slane %v419, 7
        %v1782 = vrot.slane %v421, 7
        %v1787 = vsel %vm480, %v380, %v1779
        %v1788 = vsel %vm481, %v382, %v1780
        %v1789 = vsel %vm482, %v423, %v1781
        %v1790 = vsel %vm483, %v425, %v1782
        %v1791 = vpack.c.bf16 %v1770, %v1770
        %v1793 = vshrl.u32 %v1791, 16
        %v1795 = vrot.slane %v1793, 3
        %1797 = vmatprep.subr.bf16.mxu0 %v629
        %1798 = vmatpush1.bf16.msra.mxu0 %v628
        %1799 = vmatprep.subr.bf16.mxu0 %v633
        %1800 = vmatpush1.bf16.msra.mxu0 %v632
        %1801 = vmatprep.subr.bf16.mxu0 %v637
        %1802 = vmatpush1.bf16.msra.mxu0 %v636
        %1803 = vmatprep.subr.bf16.mxu0 %v641
        %1804 = vmatpush1.bf16.msra.mxu0 %v640
        %1805 = vmatprep.subr.bf16.mxu0 %v645
        %1806 = vmatpush1.bf16.msra.mxu0 %v644
        %1807 = vmatprep.subr.bf16.mxu0 %v649
        %1808 = vmatpush1.bf16.msra.mxu0 %v648
        %1809 = vmatprep.subr.bf16.mxu0 %v653
        %1810 = vmatpush1.bf16.msra.mxu0 %v652
        %1811 = vmatprep.subr.bf16.mxu0 %v657
        %1812 = vmatpush1.bf16.msra.mxu0 %v656
        %1813 = vmatprep.subr.bf16.mxu0 0
        %1814 = vmatpush1.bf16.msra.mxu0 0
        %1815 = vmatprep.subr.bf16.mxu0 0
        %1816 = vmatpush1.bf16.msra.mxu0 0
        %1817 = vmatprep.subr.bf16.mxu0 0
        %1818 = vmatpush1.bf16.msra.mxu0 0
        %1819 = vmatprep.subr.bf16.mxu0 0
        %1820 = vmatpush1.bf16.msra.mxu0 0
        %1821 = vmatprep.subr.bf16.mxu0 0
        %1822 = vmatpush1.bf16.msra.mxu0 0
        %1823 = vmatprep.subr.bf16.mxu0 0
        %1824 = vmatpush1.bf16.msra.mxu0 0
        %1825 = vmatprep.subr.bf16.mxu0 0
        %1826 = vmatpush1.bf16.msra.mxu0 0
        %1827 = vmatprep.subr.bf16.mxu0 0
        %1828 = vmatpush1.bf16.msra.mxu0 0
        %1829 = vmatprep.mubr.bf16.mxu0 0
        %1830 = vmatmul.mubr.bf16.gmra.mrb[0].mxu0 %v1795
        %v1831 = vpop.f32.mrb[0].mxu0
        %v1832 = vadd.f32 0.0, %v1831
        %v1833 = vpop.f32.mrb[0].mxu0
        %v1834 = vadd.f32 0.0, %v1833
        %v1835 = vpop.f32.mrb[0].mxu0
        %v1836 = vpop.f32.mrb[0].mxu0
        %1837 = vdwg.mxu0
        %1838 = vmatprep.subr.bf16.mxu0 %v631
        %1839 = vmatpush1.bf16.msra.mxu0 %v630
        %1840 = vmatprep.subr.bf16.mxu0 %v635
        %1841 = vmatpush1.bf16.msra.mxu0 %v634
        %1842 = vmatprep.subr.bf16.mxu0 %v639
        %1843 = vmatpush1.bf16.msra.mxu0 %v638
        %1844 = vmatprep.subr.bf16.mxu0 %v643
        %1845 = vmatpush1.bf16.msra.mxu0 %v642
        %1846 = vmatprep.subr.bf16.mxu0 %v647
        %1847 = vmatpush1.bf16.msra.mxu0 %v646
        %1848 = vmatprep.subr.bf16.mxu0 %v651
        %1849 = vmatpush1.bf16.msra.mxu0 %v650
        %1850 = vmatprep.subr.bf16.mxu0 %v655
        %1851 = vmatpush1.bf16.msra.mxu0 %v654
        %1852 = vmatprep.subr.bf16.mxu0 %v659
        %1853 = vmatpush1.bf16.msra.mxu0 %v658
        %1854 = vmatprep.subr.bf16.mxu0 0
        %1855 = vmatpush1.bf16.msra.mxu0 0
        %1856 = vmatprep.subr.bf16.mxu0 0
        %1857 = vmatpush1.bf16.msra.mxu0 0
        %1858 = vmatprep.subr.bf16.mxu0 0
        %1859 = vmatpush1.bf16.msra.mxu0 0
        %1860 = vmatprep.subr.bf16.mxu0 0
        %1861 = vmatpush1.bf16.msra.mxu0 0
        %1862 = vmatprep.subr.bf16.mxu0 0
        %1863 = vmatpush1.bf16.msra.mxu0 0
        %1864 = vmatprep.subr.bf16.mxu0 0
        %1865 = vmatpush1.bf16.msra.mxu0 0
        %1866 = vmatprep.subr.bf16.mxu0 0
        %1867 = vmatpush1.bf16.msra.mxu0 0
        %1868 = vmatprep.subr.bf16.mxu0 0
        %1869 = vmatpush1.bf16.msra.mxu0 0
        %1870 = vmatprep.mubr.bf16.mxu0 0
        %1871 = vmatmul.mubr.bf16.gmra.mrb[0].mxu0 %v1795
        %v1872 = vpop.f32.mrb[0].mxu0
        %v1873 = vadd.f32 0.0, %v1872
        %v1874 = vpop.f32.mrb[0].mxu0
        %v1875 = vadd.f32 0.0, %v1874
        %v1876 = vpop.f32.mrb[0].mxu0
        %v1877 = vpop.f32.mrb[0].mxu0
        %1878 = vdwg.mxu0
        %v1879 = vadd.f32 %v1787, %v1832
        %v1880 = vadd.f32 %v1788, %v1834
        %v1881 = vadd.f32 %v1789, %v1873
        %v1882 = vadd.f32 %v1790, %v1875
        %v1883 = vxor.u32 %v1879, 2147483648
        %v1884 = vmul.f32 %v1883, 1.442695
        %v1885 = vpow.pop %v1884
        %v1886 = vadd.f32 %v1885, 1.0
        %v1887 = vrcp.pop %v1886
        %v1888 = vmul.f32 1.0, %v1887
        %v1889 = vxor.u32 %v1880, 2147483648
        %v1890 = vmul.f32 %v1889, 1.442695
        %v1891 = vpow.pop %v1890
        %v1892 = vadd.f32 %v1891, 1.0
        %v1893 = vrcp.pop %v1892
        %v1894 = vmul.f32 1.0, %v1893
        %v1895 = vtanh.pop %v1881
        %v1896 = vxor.u32 %v1882, 2147483648
        %v1897 = vmul.f32 %v1896, 1.442695
        %v1898 = vpow.pop %v1897
        %v1899 = vadd.f32 %v1898, 1.0
        %v1900 = vrcp.pop %v1899
        %v1901 = vmul.f32 1.0, %v1900
        %v1903 = vrot.slane %v1768, 7
        %v1905 = vmul.f32 %v1894, %v1903
        %v1906 = vmul.f32 %v1888, %v1895
        %v1907 = vadd.f32 %v1905, %v1906
        %v1908 = vtanh.pop %v1907
        %v1909 = vmul.f32 %v1901, %v1908
        %1910 = vst.msk [vmem:[#allocation2 + $0x8] sm:$0x1] %vm802, %v1909
        %1911 = vst.msk [vmem:[#allocation2 + $0x7] sm:$0x1] %vm804, %v1909
        %v1912 = vrot.slane %v376, 5
        %v1913 = vrot.slane %v378, 5
        %v1914 = vrot.slane %v419, 5
        %v1915 = vrot.slane %v421, 5
        %v1920 = vsel %vm480, %v380, %v1912
        %v1921 = vsel %vm481, %v382, %v1913
        %v1922 = vsel %vm482, %v423, %v1914
        %v1923 = vsel %vm483, %v425, %v1915
        %v1924 = vpack.c.bf16 %v1909, %v1909
        %1925 = vmatprep.subr.bf16.mxu0 %v629
        %1926 = vmatpush1.bf16.msra.mxu0 %v628
        %1927 = vmatprep.subr.bf16.mxu0 %v633
        %1928 = vmatpush1.bf16.msra.mxu0 %v632
        %1929 = vmatprep.subr.bf16.mxu0 %v637
        %1930 = vmatpush1.bf16.msra.mxu0 %v636
        %1931 = vmatprep.subr.bf16.mxu0 %v641
        %1932 = vmatpush1.bf16.msra.mxu0 %v640
        %1933 = vmatprep.subr.bf16.mxu0 %v645
        %1934 = vmatpush1.bf16.msra.mxu0 %v644
        %1935 = vmatprep.subr.bf16.mxu0 %v649
        %1936 = vmatpush1.bf16.msra.mxu0 %v648
        %1937 = vmatprep.subr.bf16.mxu0 %v653
        %1938 = vmatpush1.bf16.msra.mxu0 %v652
        %1939 = vmatprep.subr.bf16.mxu0 %v657
        %1940 = vmatpush1.bf16.msra.mxu0 %v656
        %1941 = vmatprep.subr.bf16.mxu0 0
        %1942 = vmatpush1.bf16.msra.mxu0 0
        %1943 = vmatprep.subr.bf16.mxu0 0
        %1944 = vmatpush1.bf16.msra.mxu0 0
        %1945 = vmatprep.subr.bf16.mxu0 0
        %1946 = vmatpush1.bf16.msra.mxu0 0
        %1947 = vmatprep.subr.bf16.mxu0 0
        %1948 = vmatpush1.bf16.msra.mxu0 0
        %1949 = vmatprep.subr.bf16.mxu0 0
        %1950 = vmatpush1.bf16.msra.mxu0 0
        %1951 = vmatprep.subr.bf16.mxu0 0
        %1952 = vmatpush1.bf16.msra.mxu0 0
        %1953 = vmatprep.subr.bf16.mxu0 0
        %1954 = vmatpush1.bf16.msra.mxu0 0
        %1955 = vmatprep.subr.bf16.mxu0 0
        %1956 = vmatpush1.bf16.msra.mxu0 0
        %1957 = vmatprep.mubr.bf16.mxu0 0
        %1958 = vmatmul.mubr.bf16.gmra.mrb[0].mxu0 %v1924
        %v1959 = vpop.f32.mrb[0].mxu0
        %v1960 = vadd.f32 0.0, %v1959
        %v1961 = vpop.f32.mrb[0].mxu0
        %v1962 = vadd.f32 0.0, %v1961
        %v1963 = vpop.f32.mrb[0].mxu0
        %v1964 = vpop.f32.mrb[0].mxu0
        %1965 = vdwg.mxu0
        %1966 = vmatprep.subr.bf16.mxu0 %v631
        %1967 = vmatpush1.bf16.msra.mxu0 %v630
        %1968 = vmatprep.subr.bf16.mxu0 %v635
        %1969 = vmatpush1.bf16.msra.mxu0 %v634
        %1970 = vmatprep.subr.bf16.mxu0 %v639
        %1971 = vmatpush1.bf16.msra.mxu0 %v638
        %1972 = vmatprep.subr.bf16.mxu0 %v643
        %1973 = vmatpush1.bf16.msra.mxu0 %v642
        %1974 = vmatprep.subr.bf16.mxu0 %v647
        %1975 = vmatpush1.bf16.msra.mxu0 %v646
        %1976 = vmatprep.subr.bf16.mxu0 %v651
        %1977 = vmatpush1.bf16.msra.mxu0 %v650
        %1978 = vmatprep.subr.bf16.mxu0 %v655
        %1979 = vmatpush1.bf16.msra.mxu0 %v654
        %1980 = vmatprep.subr.bf16.mxu0 %v659
        %1981 = vmatpush1.bf16.msra.mxu0 %v658
        %1982 = vmatprep.subr.bf16.mxu0 0
        %1983 = vmatpush1.bf16.msra.mxu0 0
        %1984 = vmatprep.subr.bf16.mxu0 0
        %1985 = vmatpush1.bf16.msra.mxu0 0
        %1986 = vmatprep.subr.bf16.mxu0 0
        %1987 = vmatpush1.bf16.msra.mxu0 0
        %1988 = vmatprep.subr.bf16.mxu0 0
        %1989 = vmatpush1.bf16.msra.mxu0 0
        %1990 = vmatprep.subr.bf16.mxu0 0
        %1991 = vmatpush1.bf16.msra.mxu0 0
        %1992 = vmatprep.subr.bf16.mxu0 0
        %1993 = vmatpush1.bf16.msra.mxu0 0
        %1994 = vmatprep.subr.bf16.mxu0 0
        %1995 = vmatpush1.bf16.msra.mxu0 0
        %1996 = vmatprep.subr.bf16.mxu0 0
        %1997 = vmatpush1.bf16.msra.mxu0 0
        %1998 = vmatprep.mubr.bf16.mxu0 0
        %1999 = vmatmul.mubr.bf16.gmra.mrb[0].mxu0 %v1924
        %v2000 = vpop.f32.mrb[0].mxu0
        %v2001 = vadd.f32 0.0, %v2000
        %v2002 = vpop.f32.mrb[0].mxu0
        %v2003 = vadd.f32 0.0, %v2002
        %v2004 = vpop.f32.mrb[0].mxu0
        %v2005 = vpop.f32.mrb[0].mxu0
        %2006 = vdwg.mxu0
        %v2011 = vrot.slane %v1960, 7
        %v2012 = vrot.slane %v1962, 7
        %v2013 = vrot.slane %v2001, 7
        %v2014 = vrot.slane %v2003, 7
        %v2019 = vadd.f32 %v1920, %v2011
        %v2020 = vadd.f32 %v1921, %v2012
        %v2021 = vadd.f32 %v1922, %v2013
        %v2022 = vadd.f32 %v1923, %v2014
        %v2023 = vxor.u32 %v2019, 2147483648
        %v2024 = vmul.f32 %v2023, 1.442695
        %v2025 = vpow.pop %v2024
        %v2026 = vadd.f32 %v2025, 1.0
        %v2027 = vrcp.pop %v2026
        %v2028 = vmul.f32 1.0, %v2027
        %v2029 = vxor.u32 %v2020, 2147483648
        %v2030 = vmul.f32 %v2029, 1.442695
        %v2031 = vpow.pop %v2030
        %v2032 = vadd.f32 %v2031, 1.0
        %v2033 = vrcp.pop %v2032
        %v2034 = vmul.f32 1.0, %v2033
        %v2035 = vtanh.pop %v2021
        %v2036 = vxor.u32 %v2022, 2147483648
        %v2037 = vmul.f32 %v2036, 1.442695
        %v2038 = vpow.pop %v2037
        %v2039 = vadd.f32 %v2038, 1.0
        %v2040 = vrcp.pop %v2039
        %v2041 = vmul.f32 1.0, %v2040
        %v2043 = vrot.slane %v1907, 7
        %v2045 = vmul.f32 %v2034, %v2043
        %v2046 = vmul.f32 %v2028, %v2035
        %v2047 = vadd.f32 %v2045, %v2046
        %v2048 = vtanh.pop %v2047
        %v2049 = vmul.f32 %v2041, %v2048
        %2050 = vst.msk [vmem:[#allocation2 + $0x8] sm:$0x2] %vm944, %v2049
        %2051 = vst.msk [vmem:[#allocation2 + $0x5] sm:$0x2] %vm946, %v2049
        %v2052 = vrot.slane %v376, 3
        %v2053 = vrot.slane %v378, 3
        %v2054 = vrot.slane %v419, 3
        %v2055 = vrot.slane %v421, 3
        %v2060 = vsel %vm480, %v380, %v2052
        %v2061 = vsel %vm481, %v382, %v2053
        %v2062 = vsel %vm482, %v423, %v2054
        %v2063 = vsel %vm483, %v425, %v2055
        %v2064 = vpack.c.bf16 %v2049, %v2049
        %v2066 = vshrl.u32 %v2064, 16
        %2069 = vmatprep.subr.bf16.mxu0 %v629
        %2070 = vmatpush1.bf16.msra.mxu0 %v628
        %2071 = vmatprep.subr.bf16.mxu0 %v633
        %2072 = vmatpush1.bf16.msra.mxu0 %v632
        %2073 = vmatprep.subr.bf16.mxu0 %v637
        %2074 = vmatpush1.bf16.msra.mxu0 %v636
        %2075 = vmatprep.subr.bf16.mxu0 %v641
        %2076 = vmatpush1.bf16.msra.mxu0 %v640
        %2077 = vmatprep.subr.bf16.mxu0 %v645
        %2078 = vmatpush1.bf16.msra.mxu0 %v644
        %2079 = vmatprep.subr.bf16.mxu0 %v649
        %2080 = vmatpush1.bf16.msra.mxu0 %v648
        %2081 = vmatprep.subr.bf16.mxu0 %v653
        %2082 = vmatpush1.bf16.msra.mxu0 %v652
        %2083 = vmatprep.subr.bf16.mxu0 %v657
        %2084 = vmatpush1.bf16.msra.mxu0 %v656
        %2085 = vmatprep.subr.bf16.mxu0 0
        %2086 = vmatpush1.bf16.msra.mxu0 0
        %2087 = vmatprep.subr.bf16.mxu0 0
        %2088 = vmatpush1.bf16.msra.mxu0 0
        %2089 = vmatprep.subr.bf16.mxu0 0
        %2090 = vmatpush1.bf16.msra.mxu0 0
        %2091 = vmatprep.subr.bf16.mxu0 0
        %2092 = vmatpush1.bf16.msra.mxu0 0
        %2093 = vmatprep.subr.bf16.mxu0 0
        %2094 = vmatpush1.bf16.msra.mxu0 0
        %2095 = vmatprep.subr.bf16.mxu0 0
        %2096 = vmatpush1.bf16.msra.mxu0 0
        %2097 = vmatprep.subr.bf16.mxu0 0
        %2098 = vmatpush1.bf16.msra.mxu0 0
        %2099 = vmatprep.subr.bf16.mxu0 0
        %2100 = vmatpush1.bf16.msra.mxu0 0
        %2101 = vmatprep.mubr.bf16.mxu0 0
        %2102 = vmatmul.mubr.bf16.gmra.mrb[0].mxu0 %v2066
        %v2103 = vpop.f32.mrb[0].mxu0
        %v2104 = vadd.f32 0.0, %v2103
        %v2105 = vpop.f32.mrb[0].mxu0
        %v2106 = vadd.f32 0.0, %v2105
        %v2107 = vpop.f32.mrb[0].mxu0
        %v2108 = vpop.f32.mrb[0].mxu0
        %2109 = vdwg.mxu0
        %2110 = vmatprep.subr.bf16.mxu0 %v631
        %2111 = vmatpush1.bf16.msra.mxu0 %v630
        %2112 = vmatprep.subr.bf16.mxu0 %v635
        %2113 = vmatpush1.bf16.msra.mxu0 %v634
        %2114 = vmatprep.subr.bf16.mxu0 %v639
        %2115 = vmatpush1.bf16.msra.mxu0 %v638
        %2116 = vmatprep.subr.bf16.mxu0 %v643
        %2117 = vmatpush1.bf16.msra.mxu0 %v642
        %2118 = vmatprep.subr.bf16.mxu0 %v647
        %2119 = vmatpush1.bf16.msra.mxu0 %v646
        %2120 = vmatprep.subr.bf16.mxu0 %v651
        %2121 = vmatpush1.bf16.msra.mxu0 %v650
        %2122 = vmatprep.subr.bf16.mxu0 %v655
        %2123 = vmatpush1.bf16.msra.mxu0 %v654
        %2124 = vmatprep.subr.bf16.mxu0 %v659
        %2125 = vmatpush1.bf16.msra.mxu0 %v658
        %2126 = vmatprep.subr.bf16.mxu0 0
        %2127 = vmatpush1.bf16.msra.mxu0 0
        %2128 = vmatprep.subr.bf16.mxu0 0
        %2129 = vmatpush1.bf16.msra.mxu0 0
        %2130 = vmatprep.subr.bf16.mxu0 0
        %2131 = vmatpush1.bf16.msra.mxu0 0
        %2132 = vmatprep.subr.bf16.mxu0 0
        %2133 = vmatpush1.bf16.msra.mxu0 0
        %2134 = vmatprep.subr.bf16.mxu0 0
        %2135 = vmatpush1.bf16.msra.mxu0 0
        %2136 = vmatprep.subr.bf16.mxu0 0
        %2137 = vmatpush1.bf16.msra.mxu0 0
        %2138 = vmatprep.subr.bf16.mxu0 0
        %2139 = vmatpush1.bf16.msra.mxu0 0
        %2140 = vmatprep.subr.bf16.mxu0 0
        %2141 = vmatpush1.bf16.msra.mxu0 0
        %2142 = vmatprep.mubr.bf16.mxu0 0
        %2143 = vmatmul.mubr.bf16.gmra.mrb[0].mxu0 %v2066
        %v2144 = vpop.f32.mrb[0].mxu0
        %v2145 = vadd.f32 0.0, %v2144
        %v2146 = vpop.f32.mrb[0].mxu0
        %v2147 = vadd.f32 0.0, %v2146
        %v2148 = vpop.f32.mrb[0].mxu0
        %v2149 = vpop.f32.mrb[0].mxu0
        %2150 = vdwg.mxu0
        %v2155 = vrot.slane %v2104, 6
        %v2156 = vrot.slane %v2106, 6
        %v2157 = vrot.slane %v2145, 6
        %v2158 = vrot.slane %v2147, 6
        %v2163 = vadd.f32 %v2060, %v2155
        %v2164 = vadd.f32 %v2061, %v2156
        %v2165 = vadd.f32 %v2062, %v2157
        %v2166 = vadd.f32 %v2063, %v2158
        %v2167 = vxor.u32 %v2163, 2147483648
        %v2168 = vmul.f32 %v2167, 1.442695
        %v2169 = vpow.pop %v2168
        %v2170 = vadd.f32 %v2169, 1.0
        %v2171 = vrcp.pop %v2170
        %v2172 = vmul.f32 1.0, %v2171
        %v2173 = vxor.u32 %v2164, 2147483648
        %v2174 = vmul.f32 %v2173, 1.442695
        %v2175 = vpow.pop %v2174
        %v2176 = vadd.f32 %v2175, 1.0
        %v2177 = vrcp.pop %v2176
        %v2178 = vmul.f32 1.0, %v2177
        %v2179 = vtanh.pop %v2165
        %v2180 = vxor.u32 %v2166, 2147483648
        %v2181 = vmul.f32 %v2180, 1.442695
        %v2182 = vpow.pop %v2181
        %v2183 = vadd.f32 %v2182, 1.0
        %v2184 = vrcp.pop %v2183
        %v2185 = vmul.f32 1.0, %v2184
        %v2187 = vrot.slane %v2047, 7
        %v2189 = vmul.f32 %v2178, %v2187
        %v2190 = vmul.f32 %v2172, %v2179
        %v2191 = vadd.f32 %v2189, %v2190
        %v2192 = vtanh.pop %v2191
        %v2193 = vmul.f32 %v2185, %v2192
        %2194 = vst.msk [vmem:[#allocation2 + $0x8] sm:$0x4] %vm1090, %v2193
        %2195 = vst.msk [vmem:[#allocation2 + $0x3] sm:$0x4] %vm1092, %v2193
        %v2196 = vrot.slane %v376, 1
        %v2197 = vrot.slane %v378, 1
        %v2198 = vrot.slane %v419, 1
        %v2199 = vrot.slane %v421, 1
        %v2204 = vsel %vm480, %v380, %v2196
        %v2205 = vsel %vm481, %v382, %v2197
        %v2206 = vsel %vm482, %v423, %v2198
        %v2207 = vsel %vm483, %v425, %v2199
        %v2208 = vpack.c.bf16 %v2193, %v2193
        %v2210 = vrot.slane %v2208, 1
        %2212 = vmatprep.subr.bf16.mxu0 %v629
        %2213 = vmatpush1.bf16.msra.mxu0 %v628
        %2214 = vmatprep.subr.bf16.mxu0 %v633
        %2215 = vmatpush1.bf16.msra.mxu0 %v632
        %2216 = vmatprep.subr.bf16.mxu0 %v637
        %2217 = vmatpush1.bf16.msra.mxu0 %v636
        %2218 = vmatprep.subr.bf16.mxu0 %v641
        %2219 = vmatpush1.bf16.msra.mxu0 %v640
        %2220 = vmatprep.subr.bf16.mxu0 %v645
        %2221 = vmatpush1.bf16.msra.mxu0 %v644
        %2222 = vmatprep.subr.bf16.mxu0 %v649
        %2223 = vmatpush1.bf16.msra.mxu0 %v648
        %2224 = vmatprep.subr.bf16.mxu0 %v653
        %2225 = vmatpush1.bf16.msra.mxu0 %v652
        %2226 = vmatprep.subr.bf16.mxu0 %v657
        %2227 = vmatpush1.bf16.msra.mxu0 %v656
        %2228 = vmatprep.subr.bf16.mxu0 0
        %2229 = vmatpush1.bf16.msra.mxu0 0
        %2230 = vmatprep.subr.bf16.mxu0 0
        %2231 = vmatpush1.bf16.msra.mxu0 0
        %2232 = vmatprep.subr.bf16.mxu0 0
        %2233 = vmatpush1.bf16.msra.mxu0 0
        %2234 = vmatprep.subr.bf16.mxu0 0
        %2235 = vmatpush1.bf16.msra.mxu0 0
        %2236 = vmatprep.subr.bf16.mxu0 0
        %2237 = vmatpush1.bf16.msra.mxu0 0
        %2238 = vmatprep.subr.bf16.mxu0 0
        %2239 = vmatpush1.bf16.msra.mxu0 0
        %2240 = vmatprep.subr.bf16.mxu0 0
        %2241 = vmatpush1.bf16.msra.mxu0 0
        %2242 = vmatprep.subr.bf16.mxu0 0
        %2243 = vmatpush1.bf16.msra.mxu0 0
        %2244 = vmatprep.mubr.bf16.mxu0 0
        %2245 = vmatmul.mubr.bf16.gmra.mrb[0].mxu0 %v2210
        %v2246 = vpop.f32.mrb[0].mxu0
        %v2247 = vadd.f32 0.0, %v2246
        %v2248 = vpop.f32.mrb[0].mxu0
        %v2249 = vadd.f32 0.0, %v2248
        %v2250 = vpop.f32.mrb[0].mxu0
        %v2251 = vpop.f32.mrb[0].mxu0
        %2252 = vdwg.mxu0
        %2253 = vmatprep.subr.bf16.mxu0 %v631
        %2254 = vmatpush1.bf16.msra.mxu0 %v630
        %2255 = vmatprep.subr.bf16.mxu0 %v635
        %2256 = vmatpush1.bf16.msra.mxu0 %v634
        %2257 = vmatprep.subr.bf16.mxu0 %v639
        %2258 = vmatpush1.bf16.msra.mxu0 %v638
        %2259 = vmatprep.subr.bf16.mxu0 %v643
        %2260 = vmatpush1.bf16.msra.mxu0 %v642
        %2261 = vmatprep.subr.bf16.mxu0 %v647
        %2262 = vmatpush1.bf16.msra.mxu0 %v646
        %2263 = vmatprep.subr.bf16.mxu0 %v651
        %2264 = vmatpush1.bf16.msra.mxu0 %v650
        %2265 = vmatprep.subr.bf16.mxu0 %v655
        %2266 = vmatpush1.bf16.msra.mxu0 %v654
        %2267 = vmatprep.subr.bf16.mxu0 %v659
        %2268 = vmatpush1.bf16.msra.mxu0 %v658
        %2269 = vmatprep.subr.bf16.mxu0 0
        %2270 = vmatpush1.bf16.msra.mxu0 0
        %2271 = vmatprep.subr.bf16.mxu0 0
        %2272 = vmatpush1.bf16.msra.mxu0 0
        %2273 = vmatprep.subr.bf16.mxu0 0
        %2274 = vmatpush1.bf16.msra.mxu0 0
        %2275 = vmatprep.subr.bf16.mxu0 0
        %2276 = vmatpush1.bf16.msra.mxu0 0
        %2277 = vmatprep.subr.bf16.mxu0 0
        %2278 = vmatpush1.bf16.msra.mxu0 0
        %2279 = vmatprep.subr.bf16.mxu0 0
        %2280 = vmatpush1.bf16.msra.mxu0 0
        %2281 = vmatprep.subr.bf16.mxu0 0
        %2282 = vmatpush1.bf16.msra.mxu0 0
        %2283 = vmatprep.subr.bf16.mxu0 0
        %2284 = vmatpush1.bf16.msra.mxu0 0
        %2285 = vmatprep.mubr.bf16.mxu0 0
        %2286 = vmatmul.mubr.bf16.gmra.mrb[0].mxu0 %v2210
        %v2287 = vpop.f32.mrb[0].mxu0
        %v2288 = vadd.f32 0.0, %v2287
        %v2289 = vpop.f32.mrb[0].mxu0
        %v2290 = vadd.f32 0.0, %v2289
        %v2291 = vpop.f32.mrb[0].mxu0
        %v2292 = vpop.f32.mrb[0].mxu0
        %2293 = vdwg.mxu0
        %v2298 = vrot.slane %v2247, 5
        %v2299 = vrot.slane %v2249, 5
        %v2300 = vrot.slane %v2288, 5
        %v2301 = vrot.slane %v2290, 5
        %v2306 = vadd.f32 %v2204, %v2298
        %v2307 = vadd.f32 %v2205, %v2299
        %v2308 = vadd.f32 %v2206, %v2300
        %v2309 = vadd.f32 %v2207, %v2301
        %v2310 = vxor.u32 %v2306, 2147483648
        %v2311 = vmul.f32 %v2310, 1.442695
        %v2312 = vpow.pop %v2311
        %v2313 = vadd.f32 %v2312, 1.0
        %v2314 = vrcp.pop %v2313
        %v2315 = vmul.f32 1.0, %v2314
        %v2316 = vxor.u32 %v2307, 2147483648
        %v2317 = vmul.f32 %v2316, 1.442695
        %v2318 = vpow.pop %v2317
        %v2319 = vadd.f32 %v2318, 1.0
        %v2320 = vrcp.pop %v2319
        %v2321 = vmul.f32 1.0, %v2320
        %v2322 = vtanh.pop %v2308
        %v2323 = vxor.u32 %v2309, 2147483648
        %v2324 = vmul.f32 %v2323, 1.442695
        %v2325 = vpow.pop %v2324
        %v2326 = vadd.f32 %v2325, 1.0
        %v2327 = vrcp.pop %v2326
        %v2328 = vmul.f32 1.0, %v2327
        %v2330 = vrot.slane %v2191, 7
        %v2332 = vmul.f32 %v2321, %v2330
        %v2333 = vmul.f32 %v2315, %v2322
        %v2334 = vadd.f32 %v2332, %v2333
        %v2335 = vtanh.pop %v2334
        %v2336 = vmul.f32 %v2328, %v2335
        %2337 = vst.msk [vmem:[#allocation2 + $0x8] sm:$0x8] %vm1235, %v2336
        %2338 = vst.msk [vmem:[#allocation2 + $0x1] sm:$0x8] %vm1237, %v2336
        %v2339 = vpack.c.bf16 %v2336, %v2336
        %v2341 = vshrl.u32 %v2339, 16
        %v2343 = vrot.slane %v2341, 1
        %2345 = vmatprep.subr.bf16.mxu0 %v629
        %2346 = vmatpush1.bf16.msra.mxu0 %v628
        %2347 = vmatprep.subr.bf16.mxu0 %v633
        %2348 = vmatpush1.bf16.msra.mxu0 %v632
        %2349 = vmatprep.subr.bf16.mxu0 %v637
        %2350 = vmatpush1.bf16.msra.mxu0 %v636
        %2351 = vmatprep.subr.bf16.mxu0 %v641
        %2352 = vmatpush1.bf16.msra.mxu0 %v640
        %2353 = vmatprep.subr.bf16.mxu0 %v645
        %2354 = vmatpush1.bf16.msra.mxu0 %v644
        %2355 = vmatprep.subr.bf16.mxu0 %v649
        %2356 = vmatpush1.bf16.msra.mxu0 %v648
        %2357 = vmatprep.subr.bf16.mxu0 %v653
        %2358 = vmatpush1.bf16.msra.mxu0 %v652
        %2359 = vmatprep.subr.bf16.mxu0 %v657
        %2360 = vmatpush1.bf16.msra.mxu0 %v656
        %2361 = vmatprep.subr.bf16.mxu0 0
        %2362 = vmatpush1.bf16.msra.mxu0 0
        %2363 = vmatprep.subr.bf16.mxu0 0
        %2364 = vmatpush1.bf16.msra.mxu0 0
        %2365 = vmatprep.subr.bf16.mxu0 0
        %2366 = vmatpush1.bf16.msra.mxu0 0
        %2367 = vmatprep.subr.bf16.mxu0 0
        %2368 = vmatpush1.bf16.msra.mxu0 0
        %2369 = vmatprep.subr.bf16.mxu0 0
        %2370 = vmatpush1.bf16.msra.mxu0 0
        %2371 = vmatprep.subr.bf16.mxu0 0
        %2372 = vmatpush1.bf16.msra.mxu0 0
        %2373 = vmatprep.subr.bf16.mxu0 0
        %2374 = vmatpush1.bf16.msra.mxu0 0
        %2375 = vmatprep.subr.bf16.mxu0 0
        %2376 = vmatpush1.bf16.msra.mxu0 0
        %2377 = vmatprep.mubr.bf16.mxu0 0
        %2378 = vmatmul.mubr.bf16.gmra.mrb[0].mxu0 %v2343
        %v2379 = vpop.f32.mrb[0].mxu0
        %v2380 = vadd.f32 0.0, %v2379
        %v2381 = vpop.f32.mrb[0].mxu0
        %v2382 = vadd.f32 0.0, %v2381
        %v2383 = vpop.f32.mrb[0].mxu0
        %v2384 = vpop.f32.mrb[0].mxu0
        %2385 = vdwg.mxu0
        %2386 = vmatprep.subr.bf16.mxu0 %v631
        %2387 = vmatpush1.bf16.msra.mxu0 %v630
        %2388 = vmatprep.subr.bf16.mxu0 %v635
        %2389 = vmatpush1.bf16.msra.mxu0 %v634
        %2390 = vmatprep.subr.bf16.mxu0 %v639
        %2391 = vmatpush1.bf16.msra.mxu0 %v638
        %2392 = vmatprep.subr.bf16.mxu0 %v643
        %2393 = vmatpush1.bf16.msra.mxu0 %v642
        %2394 = vmatprep.subr.bf16.mxu0 %v647
        %2395 = vmatpush1.bf16.msra.mxu0 %v646
        %2396 = vmatprep.subr.bf16.mxu0 %v651
        %2397 = vmatpush1.bf16.msra.mxu0 %v650
        %2398 = vmatprep.subr.bf16.mxu0 %v655
        %2399 = vmatpush1.bf16.msra.mxu0 %v654
        %2400 = vmatprep.subr.bf16.mxu0 %v659
        %2401 = vmatpush1.bf16.msra.mxu0 %v658
        %2402 = vmatprep.subr.bf16.mxu0 0
        %2403 = vmatpush1.bf16.msra.mxu0 0
        %2404 = vmatprep.subr.bf16.mxu0 0
        %2405 = vmatpush1.bf16.msra.mxu0 0
        %2406 = vmatprep.subr.bf16.mxu0 0
        %2407 = vmatpush1.bf16.msra.mxu0 0
        %2408 = vmatprep.subr.bf16.mxu0 0
        %2409 = vmatpush1.bf16.msra.mxu0 0
        %2410 = vmatprep.subr.bf16.mxu0 0
        %2411 = vmatpush1.bf16.msra.mxu0 0
        %2412 = vmatprep.subr.bf16.mxu0 0
        %2413 = vmatpush1.bf16.msra.mxu0 0
        %2414 = vmatprep.subr.bf16.mxu0 0
        %2415 = vmatpush1.bf16.msra.mxu0 0
        %2416 = vmatprep.subr.bf16.mxu0 0
        %2417 = vmatpush1.bf16.msra.mxu0 0
        %2418 = vmatprep.mubr.bf16.mxu0 0
        %2419 = vmatmul.mubr.bf16.gmra.mrb[0].mxu0 %v2343
        %v2420 = vpop.f32.mrb[0].mxu0
        %v2421 = vadd.f32 0.0, %v2420
        %v2422 = vpop.f32.mrb[0].mxu0
        %v2423 = vadd.f32 0.0, %v2422
        %v2424 = vpop.f32.mrb[0].mxu0
        %v2425 = vpop.f32.mrb[0].mxu0
        %2426 = vdwg.mxu0
        %v2431 = vrot.slane %v2380, 4
        %v2432 = vrot.slane %v2382, 4
        %v2433 = vrot.slane %v2421, 4
        %v2434 = vrot.slane %v2423, 4
        %v2439 = vadd.f32 %v1787, %v2431
        %v2440 = vadd.f32 %v1788, %v2432
        %v2441 = vadd.f32 %v1789, %v2433
        %v2442 = vadd.f32 %v1790, %v2434
        %v2443 = vxor.u32 %v2439, 2147483648
        %v2444 = vmul.f32 %v2443, 1.442695
        %v2445 = vpow.pop %v2444
        %v2446 = vadd.f32 %v2445, 1.0
        %v2447 = vrcp.pop %v2446
        %v2448 = vmul.f32 1.0, %v2447
        %v2449 = vxor.u32 %v2440, 2147483648
        %v2450 = vmul.f32 %v2449, 1.442695
        %v2451 = vpow.pop %v2450
        %v2452 = vadd.f32 %v2451, 1.0
        %v2453 = vrcp.pop %v2452
        %v2454 = vmul.f32 1.0, %v2453
        %v2455 = vtanh.pop %v2441
        %v2456 = vxor.u32 %v2442, 2147483648
        %v2457 = vmul.f32 %v2456, 1.442695
        %v2458 = vpow.pop %v2457
        %v2459 = vadd.f32 %v2458, 1.0
        %v2460 = vrcp.pop %v2459
        %v2461 = vmul.f32 1.0, %v2460
        %v2463 = vrot.slane %v2334, 7
        %v2465 = vmul.f32 %v2454, %v2463
        %v2466 = vmul.f32 %v2448, %v2455
        %v2467 = vadd.f32 %v2465, %v2466
        %v2468 = vtanh.pop %v2467
        %v2469 = vmul.f32 %v2461, %v2468
        %2470 = vst.msk [vmem:[#allocation2 + $0x8] sm:$0x10] %vm1370, %v2469
        %2471 = vst.msk [vmem:[#allocation2 - $0x1] sm:$0x10] %vm1372, %v2469
        %v2472 = vpack.c.bf16 %v2469, %v2469
        %v2474 = vrot.slane %v2472, 2
        %2476 = vmatprep.subr.bf16.mxu0 %v629
        %2477 = vmatpush1.bf16.msra.mxu0 %v628
        %2478 = vmatprep.subr.bf16.mxu0 %v633
        %2479 = vmatpush1.bf16.msra.mxu0 %v632
        %2480 = vmatprep.subr.bf16.mxu0 %v637
        %2481 = vmatpush1.bf16.msra.mxu0 %v636
        %2482 = vmatprep.subr.bf16.mxu0 %v641
        %2483 = vmatpush1.bf16.msra.mxu0 %v640
        %2484 = vmatprep.subr.bf16.mxu0 %v645
        %2485 = vmatpush1.bf16.msra.mxu0 %v644
        %2486 = vmatprep.subr.bf16.mxu0 %v649
        %2487 = vmatpush1.bf16.msra.mxu0 %v648
        %2488 = vmatprep.subr.bf16.mxu0 %v653
        %2489 = vmatpush1.bf16.msra.mxu0 %v652
        %2490 = vmatprep.subr.bf16.mxu0 %v657
        %2491 = vmatpush1.bf16.msra.mxu0 %v656
        %2492 = vmatprep.subr.bf16.mxu0 0
        %2493 = vmatpush1.bf16.msra.mxu0 0
        %2494 = vmatprep.subr.bf16.mxu0 0
        %2495 = vmatpush1.bf16.msra.mxu0 0
        %2496 = vmatprep.subr.bf16.mxu0 0
        %2497 = vmatpush1.bf16.msra.mxu0 0
        %2498 = vmatprep.subr.bf16.mxu0 0
        %2499 = vmatpush1.bf16.msra.mxu0 0
        %2500 = vmatprep.subr.bf16.mxu0 0
        %2501 = vmatpush1.bf16.msra.mxu0 0
        %2502 = vmatprep.subr.bf16.mxu0 0
        %2503 = vmatpush1.bf16.msra.mxu0 0
        %2504 = vmatprep.subr.bf16.mxu0 0
        %2505 = vmatpush1.bf16.msra.mxu0 0
        %2506 = vmatprep.subr.bf16.mxu0 0
        %2507 = vmatpush1.bf16.msra.mxu0 0
        %2508 = vmatprep.mubr.bf16.mxu0 0
        %2509 = vmatmul.mubr.bf16.gmra.mrb[0].mxu0 %v2474
        %v2510 = vpop.f32.mrb[0].mxu0
        %v2511 = vadd.f32 0.0, %v2510
        %v2512 = vpop.f32.mrb[0].mxu0
        %v2513 = vadd.f32 0.0, %v2512
        %v2514 = vpop.f32.mrb[0].mxu0
        %v2515 = vpop.f32.mrb[0].mxu0
        %2516 = vdwg.mxu0
        %2517 = vmatprep.subr.bf16.mxu0 %v631
        %2518 = vmatpush1.bf16.msra.mxu0 %v630
        %2519 = vmatprep.subr.bf16.mxu0 %v635
        %2520 = vmatpush1.bf16.msra.mxu0 %v634
        %2521 = vmatprep.subr.bf16.mxu0 %v639
        %2522 = vmatpush1.bf16.msra.mxu0 %v638
        %2523 = vmatprep.subr.bf16.mxu0 %v643
        %2524 = vmatpush1.bf16.msra.mxu0 %v642
        %2525 = vmatprep.subr.bf16.mxu0 %v647
        %2526 = vmatpush1.bf16.msra.mxu0 %v646
        %2527 = vmatprep.subr.bf16.mxu0 %v651
        %2528 = vmatpush1.bf16.msra.mxu0 %v650
        %2529 = vmatprep.subr.bf16.mxu0 %v655
        %2530 = vmatpush1.bf16.msra.mxu0 %v654
        %2531 = vmatprep.subr.bf16.mxu0 %v659
        %2532 = vmatpush1.bf16.msra.mxu0 %v658
        %2533 = vmatprep.subr.bf16.mxu0 0
        %2534 = vmatpush1.bf16.msra.mxu0 0
        %2535 = vmatprep.subr.bf16.mxu0 0
        %2536 = vmatpush1.bf16.msra.mxu0 0
        %2537 = vmatprep.subr.bf16.mxu0 0
        %2538 = vmatpush1.bf16.msra.mxu0 0
        %2539 = vmatprep.subr.bf16.mxu0 0
        %2540 = vmatpush1.bf16.msra.mxu0 0
        %2541 = vmatprep.subr.bf16.mxu0 0
        %2542 = vmatpush1.bf16.msra.mxu0 0
        %2543 = vmatprep.subr.bf16.mxu0 0
        %2544 = vmatpush1.bf16.msra.mxu0 0
        %2545 = vmatprep.subr.bf16.mxu0 0
        %2546 = vmatpush1.bf16.msra.mxu0 0
        %2547 = vmatprep.subr.bf16.mxu0 0
        %2548 = vmatpush1.bf16.msra.mxu0 0
        %2549 = vmatprep.mubr.bf16.mxu0 0
        %2550 = vmatmul.mubr.bf16.gmra.mrb[0].mxu0 %v2474
        %v2551 = vpop.f32.mrb[0].mxu0
        %v2552 = vadd.f32 0.0, %v2551
        %v2553 = vpop.f32.mrb[0].mxu0
        %v2554 = vadd.f32 0.0, %v2553
        %v2555 = vpop.f32.mrb[0].mxu0
        %v2556 = vpop.f32.mrb[0].mxu0
        %2557 = vdwg.mxu0
        %v2562 = vrot.slane %v2511, 3
        %v2563 = vrot.slane %v2513, 3
        %v2564 = vrot.slane %v2552, 3
        %v2565 = vrot.slane %v2554, 3
        %v2570 = vadd.f32 %v1920, %v2562
        %v2571 = vadd.f32 %v1921, %v2563
        %v2572 = vadd.f32 %v1922, %v2564
        %v2573 = vadd.f32 %v1923, %v2565
        %v2574 = vxor.u32 %v2570, 2147483648
        %v2575 = vmul.f32 %v2574, 1.442695
        %v2576 = vpow.pop %v2575
        %v2577 = vadd.f32 %v2576, 1.0
        %v2578 = vrcp.pop %v2577
        %v2579 = vmul.f32 1.0, %v2578
        %v2580 = vxor.u32 %v2571, 2147483648
        %v2581 = vmul.f32 %v2580, 1.442695
        %v2582 = vpow.pop %v2581
        %v2583 = vadd.f32 %v2582, 1.0
        %v2584 = vrcp.pop %v2583
        %v2585 = vmul.f32 1.0, %v2584
        %v2586 = vtanh.pop %v2572
        %v2587 = vxor.u32 %v2573, 2147483648
        %v2588 = vmul.f32 %v2587, 1.442695
        %v2589 = vpow.pop %v2588
        %v2590 = vadd.f32 %v2589, 1.0
        %v2591 = vrcp.pop %v2590
        %v2592 = vmul.f32 1.0, %v2591
        %v2594 = vrot.slane %v2467, 7
        %v2596 = vmul.f32 %v2585, %v2594
        %v2597 = vmul.f32 %v2579, %v2586
        %v2598 = vadd.f32 %v2596, %v2597
        %v2599 = vtanh.pop %v2598
        %v2600 = vmul.f32 %v2592, %v2599
        %2601 = vst.msk [vmem:[#allocation2 + $0x8] sm:$0x20] %vm1503, %v2600
        %2602 = vst.msk [vmem:[#allocation2 - $0x3] sm:$0x20] %vm1505, %v2600
        %v2603 = vpack.c.bf16 %v2600, %v2600
        %v2605 = vshrl.u32 %v2603, 16
        %v2607 = vrot.slane %v2605, 2
        %2609 = vmatprep.subr.bf16.mxu0 %v629
        %2610 = vmatpush1.bf16.msra.mxu0 %v628
        %2611 = vmatprep.subr.bf16.mxu0 %v633
        %2612 = vmatpush1.bf16.msra.mxu0 %v632
        %2613 = vmatprep.subr.bf16.mxu0 %v637
        %2614 = vmatpush1.bf16.msra.mxu0 %v636
        %2615 = vmatprep.subr.bf16.mxu0 %v641
        %2616 = vmatpush1.bf16.msra.mxu0 %v640
        %2617 = vmatprep.subr.bf16.mxu0 %v645
        %2618 = vmatpush1.bf16.msra.mxu0 %v644
        %2619 = vmatprep.subr.bf16.mxu0 %v649
        %2620 = vmatpush1.bf16.msra.mxu0 %v648
        %2621 = vmatprep.subr.bf16.mxu0 %v653
        %2622 = vmatpush1.bf16.msra.mxu0 %v652
        %2623 = vmatprep.subr.bf16.mxu0 %v657
        %2624 = vmatpush1.bf16.msra.mxu0 %v656
        %2625 = vmatprep.subr.bf16.mxu0 0
        %2626 = vmatpush1.bf16.msra.mxu0 0
        %2627 = vmatprep.subr.bf16.mxu0 0
        %2628 = vmatpush1.bf16.msra.mxu0 0
        %2629 = vmatprep.subr.bf16.mxu0 0
        %2630 = vmatpush1.bf16.msra.mxu0 0
        %2631 = vmatprep.subr.bf16.mxu0 0
        %2632 = vmatpush1.bf16.msra.mxu0 0
        %2633 = vmatprep.subr.bf16.mxu0 0
        %2634 = vmatpush1.bf16.msra.mxu0 0
        %2635 = vmatprep.subr.bf16.mxu0 0
        %2636 = vmatpush1.bf16.msra.mxu0 0
        %2637 = vmatprep.subr.bf16.mxu0 0
        %2638 = vmatpush1.bf16.msra.mxu0 0
        %2639 = vmatprep.subr.bf16.mxu0 0
        %2640 = vmatpush1.bf16.msra.mxu0 0
        %2641 = vmatprep.mubr.bf16.mxu0 0
        %2642 = vmatmul.mubr.bf16.gmra.mrb[0].mxu0 %v2607
        %v2643 = vpop.f32.mrb[0].mxu0
        %v2644 = vadd.f32 0.0, %v2643
        %v2645 = vpop.f32.mrb[0].mxu0
        %v2646 = vadd.f32 0.0, %v2645
        %v2647 = vpop.f32.mrb[0].mxu0
        %v2648 = vpop.f32.mrb[0].mxu0
        %2649 = vdwg.mxu0
        %2650 = vmatprep.subr.bf16.mxu0 %v631
        %2651 = vmatpush1.bf16.msra.mxu0 %v630
        %2652 = vmatprep.subr.bf16.mxu0 %v635
        %2653 = vmatpush1.bf16.msra.mxu0 %v634
        %2654 = vmatprep.subr.bf16.mxu0 %v639
        %2655 = vmatpush1.bf16.msra.mxu0 %v638
        %2656 = vmatprep.subr.bf16.mxu0 %v643
        %2657 = vmatpush1.bf16.msra.mxu0 %v642
        %2658 = vmatprep.subr.bf16.mxu0 %v647
        %2659 = vmatpush1.bf16.msra.mxu0 %v646
        %2660 = vmatprep.subr.bf16.mxu0 %v651
        %2661 = vmatpush1.bf16.msra.mxu0 %v650
        %2662 = vmatprep.subr.bf16.mxu0 %v655
        %2663 = vmatpush1.bf16.msra.mxu0 %v654
        %2664 = vmatprep.subr.bf16.mxu0 %v659
        %2665 = vmatpush1.bf16.msra.mxu0 %v658
        %2666 = vmatprep.subr.bf16.mxu0 0
        %2667 = vmatpush1.bf16.msra.mxu0 0
        %2668 = vmatprep.subr.bf16.mxu0 0
        %2669 = vmatpush1.bf16.msra.mxu0 0
        %2670 = vmatprep.subr.bf16.mxu0 0
        %2671 = vmatpush1.bf16.msra.mxu0 0
        %2672 = vmatprep.subr.bf16.mxu0 0
        %2673 = vmatpush1.bf16.msra.mxu0 0
        %2674 = vmatprep.subr.bf16.mxu0 0
        %2675 = vmatpush1.bf16.msra.mxu0 0
        %2676 = vmatprep.subr.bf16.mxu0 0
        %2677 = vmatpush1.bf16.msra.mxu0 0
        %2678 = vmatprep.subr.bf16.mxu0 0
        %2679 = vmatpush1.bf16.msra.mxu0 0
        %2680 = vmatprep.subr.bf16.mxu0 0
        %2681 = vmatpush1.bf16.msra.mxu0 0
        %2682 = vmatprep.mubr.bf16.mxu0 0
        %2683 = vmatmul.mubr.bf16.gmra.mrb[0].mxu0 %v2607
        %v2684 = vpop.f32.mrb[0].mxu0
        %v2685 = vadd.f32 0.0, %v2684
        %v2686 = vpop.f32.mrb[0].mxu0
        %v2687 = vadd.f32 0.0, %v2686
        %v2688 = vpop.f32.mrb[0].mxu0
        %v2689 = vpop.f32.mrb[0].mxu0
        %2690 = vdwg.mxu0
        %v2695 = vrot.slane %v2644, 2
        %v2696 = vrot.slane %v2646, 2
        %v2697 = vrot.slane %v2685, 2
        %v2698 = vrot.slane %v2687, 2
        %v2703 = vadd.f32 %v2060, %v2695
        %v2704 = vadd.f32 %v2061, %v2696
        %v2705 = vadd.f32 %v2062, %v2697
        %v2706 = vadd.f32 %v2063, %v2698
        %v2707 = vxor.u32 %v2703, 2147483648
        %v2708 = vmul.f32 %v2707, 1.442695
        %v2709 = vpow.pop %v2708
        %v2710 = vadd.f32 %v2709, 1.0
        %v2711 = vrcp.pop %v2710
        %v2712 = vmul.f32 1.0, %v2711
        %v2713 = vxor.u32 %v2704, 2147483648
        %v2714 = vmul.f32 %v2713, 1.442695
        %v2715 = vpow.pop %v2714
        %v2716 = vadd.f32 %v2715, 1.0
        %v2717 = vrcp.pop %v2716
        %v2718 = vmul.f32 1.0, %v2717
        %v2719 = vtanh.pop %v2705
        %v2720 = vxor.u32 %v2706, 2147483648
        %v2721 = vmul.f32 %v2720, 1.442695
        %v2722 = vpow.pop %v2721
        %v2723 = vadd.f32 %v2722, 1.0
        %v2724 = vrcp.pop %v2723
        %v2725 = vmul.f32 1.0, %v2724
        %v2727 = vrot.slane %v2598, 7
        %v2729 = vmul.f32 %v2718, %v2727
        %v2730 = vmul.f32 %v2712, %v2719
        %v2731 = vadd.f32 %v2729, %v2730
        %v2732 = vtanh.pop %v2731
        %v2733 = vmul.f32 %v2725, %v2732
        %2734 = vst.msk [vmem:[#allocation2 + $0x8] sm:$0x40] %vm1638, %v2733
        %2735 = vst.msk [vmem:[#allocation2 - $0x5] sm:$0x40] %vm1640, %v2733
        %v2736 = vpack.c.bf16 %v2733, %v2733
        %v2738 = vrot.slane %v2736, 3
        %2740 = vmatprep.subr.bf16.mxu0 %v629
        %2741 = vmatpush1.bf16.msra.mxu0 %v628
        %2742 = vmatprep.subr.bf16.mxu0 %v633
        %2743 = vmatpush1.bf16.msra.mxu0 %v632
        %2744 = vmatprep.subr.bf16.mxu0 %v637
        %2745 = vmatpush1.bf16.msra.mxu0 %v636
        %2746 = vmatprep.subr.bf16.mxu0 %v641
        %2747 = vmatpush1.bf16.msra.mxu0 %v640
        %2748 = vmatprep.subr.bf16.mxu0 %v645
        %2749 = vmatpush1.bf16.msra.mxu0 %v644
        %2750 = vmatprep.subr.bf16.mxu0 %v649
        %2751 = vmatpush1.bf16.msra.mxu0 %v648
        %2752 = vmatprep.subr.bf16.mxu0 %v653
        %2753 = vmatpush1.bf16.msra.mxu0 %v652
        %2754 = vmatprep.subr.bf16.mxu0 %v657
        %2755 = vmatpush1.bf16.msra.mxu0 %v656
        %2756 = vmatprep.subr.bf16.mxu0 0
        %2757 = vmatpush1.bf16.msra.mxu0 0
        %2758 = vmatprep.subr.bf16.mxu0 0
        %2759 = vmatpush1.bf16.msra.mxu0 0
        %2760 = vmatprep.subr.bf16.mxu0 0
        %2761 = vmatpush1.bf16.msra.mxu0 0
        %2762 = vmatprep.subr.bf16.mxu0 0
        %2763 = vmatpush1.bf16.msra.mxu0 0
        %2764 = vmatprep.subr.bf16.mxu0 0
        %2765 = vmatpush1.bf16.msra.mxu0 0
        %2766 = vmatprep.subr.bf16.mxu0 0
        %2767 = vmatpush1.bf16.msra.mxu0 0
        %2768 = vmatprep.subr.bf16.mxu0 0
        %2769 = vmatpush1.bf16.msra.mxu0 0
        %2770 = vmatprep.subr.bf16.mxu0 0
        %2771 = vmatpush1.bf16.msra.mxu0 0
        %2772 = vmatprep.mubr.bf16.mxu0 0
        %2773 = vmatmul.mubr.bf16.gmra.mrb[0].mxu0 %v2738
        %v2774 = vpop.f32.mrb[0].mxu0
        %v2775 = vadd.f32 0.0, %v2774
        %v2776 = vpop.f32.mrb[0].mxu0
        %v2777 = vadd.f32 0.0, %v2776
        %v2778 = vpop.f32.mrb[0].mxu0
        %v2779 = vpop.f32.mrb[0].mxu0
        %2780 = vdwg.mxu0
        %2781 = vmatprep.subr.bf16.mxu0 %v631
        %2782 = vmatpush1.bf16.msra.mxu0 %v630
        %2783 = vmatprep.subr.bf16.mxu0 %v635
        %2784 = vmatpush1.bf16.msra.mxu0 %v634
        %2785 = vmatprep.subr.bf16.mxu0 %v639
        %2786 = vmatpush1.bf16.msra.mxu0 %v638
        %2787 = vmatprep.subr.bf16.mxu0 %v643
        %2788 = vmatpush1.bf16.msra.mxu0 %v642
        %2789 = vmatprep.subr.bf16.mxu0 %v647
        %2790 = vmatpush1.bf16.msra.mxu0 %v646
        %2791 = vmatprep.subr.bf16.mxu0 %v651
        %2792 = vmatpush1.bf16.msra.mxu0 %v650
        %2793 = vmatprep.subr.bf16.mxu0 %v655
        %2794 = vmatpush1.bf16.msra.mxu0 %v654
        %2795 = vmatprep.subr.bf16.mxu0 %v659
        %2796 = vmatpush1.bf16.msra.mxu0 %v658
        %2797 = vmatprep.subr.bf16.mxu0 0
        %2798 = vmatpush1.bf16.msra.mxu0 0
        %2799 = vmatprep.subr.bf16.mxu0 0
        %2800 = vmatpush1.bf16.msra.mxu0 0
        %2801 = vmatprep.subr.bf16.mxu0 0
        %2802 = vmatpush1.bf16.msra.mxu0 0
        %2803 = vmatprep.subr.bf16.mxu0 0
        %2804 = vmatpush1.bf16.msra.mxu0 0
        %2805 = vmatprep.subr.bf16.mxu0 0
        %2806 = vmatpush1.bf16.msra.mxu0 0
        %2807 = vmatprep.subr.bf16.mxu0 0
        %2808 = vmatpush1.bf16.msra.mxu0 0
        %2809 = vmatprep.subr.bf16.mxu0 0
        %2810 = vmatpush1.bf16.msra.mxu0 0
        %2811 = vmatprep.subr.bf16.mxu0 0
        %2812 = vmatpush1.bf16.msra.mxu0 0
        %2813 = vmatprep.mubr.bf16.mxu0 0
        %2814 = vmatmul.mubr.bf16.gmra.mrb[0].mxu0 %v2738
        %v2815 = vpop.f32.mrb[0].mxu0
        %v2816 = vadd.f32 0.0, %v2815
        %v2817 = vpop.f32.mrb[0].mxu0
        %v2818 = vadd.f32 0.0, %v2817
        %v2819 = vpop.f32.mrb[0].mxu0
        %v2820 = vpop.f32.mrb[0].mxu0
        %2821 = vdwg.mxu0
        %v2826 = vrot.slane %v2775, 1
        %v2827 = vrot.slane %v2777, 1
        %v2828 = vrot.slane %v2816, 1
        %v2829 = vrot.slane %v2818, 1
        %v2834 = vadd.f32 %v2204, %v2826
        %v2835 = vadd.f32 %v2205, %v2827
        %v2836 = vadd.f32 %v2206, %v2828
        %v2837 = vadd.f32 %v2207, %v2829
        %v2838 = vxor.u32 %v2834, 2147483648
        %v2839 = vmul.f32 %v2838, 1.442695
        %v2840 = vpow.pop %v2839
        %v2841 = vadd.f32 %v2840, 1.0
        %v2842 = vrcp.pop %v2841
        %v2843 = vmul.f32 1.0, %v2842
        %v2844 = vxor.u32 %v2835, 2147483648
        %v2845 = vmul.f32 %v2844, 1.442695
        %v2846 = vpow.pop %v2845
        %v2847 = vadd.f32 %v2846, 1.0
        %v2848 = vrcp.pop %v2847
        %v2849 = vmul.f32 1.0, %v2848
        %v2850 = vtanh.pop %v2836
        %v2851 = vxor.u32 %v2837, 2147483648
        %v2852 = vmul.f32 %v2851, 1.442695
        %v2853 = vpow.pop %v2852
        %v2854 = vadd.f32 %v2853, 1.0
        %v2855 = vrcp.pop %v2854
        %v2856 = vmul.f32 1.0, %v2855
        %v2858 = vrot.slane %v2731, 7
        %v2860 = vmul.f32 %v2849, %v2858
        %v2861 = vmul.f32 %v2843, %v2850
        %v2862 = vadd.f32 %v2860, %v2861
        %v2863 = vtanh.pop %v2862
        %v2864 = vmul.f32 %v2856, %v2863
        %2865 = vst.msk [vmem:[#allocation2 + $0x8] sm:$0x80] %vm1771, %v2864
        %2866 = vst.msk [vmem:[#allocation2 - $0x7] sm:$0x80] %vm1773, %v2864
        %v2867 = vld [vmem:[#allocation2] sm:$0xff]
        %v2868 = vld [vmem:[#allocation2 + $0x8] sm:$0xff]
        %v2869 = vpack.c.bf16 %v2868, %v2867
        %v2871 = vunpack.c.l.b16 %v2869
        %v2872 = vunpack.c.h.b16 %v2869
        %v2873 = vpack.c.b16 %v2871, %v2871
        %v2874 = vpack.c.b16 %v2872, %v2872
        %2877 = vst [vmem:[%s210] sm:$0xf] %v2873
        %2878 = vst [vmem:[%s210 + $0x4] sm:$0xf] %v2874
        %p2879 = scmp.lt.s32.totalorder %s16, 1
        %s2880 = scalar_select %p2879, %s16, 1
        %s2881 = smul.addr %s2880, 2
        %s2882 = smul.addr %s2881, 4
        %s2883 = scalar_lea.vmem %s4, %s2882
        // Predicated region
        $region41: #{forward.5} parent=35 // pred_check
          %p2884 = pneg %p123
        $region42: #{forward.5} parent=35 // pred_check_branch
          %2886 = sbr.rel (%p2884) target = $region44
        $region43: #{forward.5} parent=35 // pred_region
          _
        $region44: #{forward.5} parent=35 // pred_fallthru
          _
      $region36: #{forward.5} parent=5 // pred_fallthru
        _
      %p2887 = scmp.le.s32.totalorder 2, %s11
      // Predicated region
      $region45: #{forward.5} parent=5 // pred_check
        %p2888 = pneg %p2887
      $region46: #{forward.5} parent=5 // pred_check_branch
        %2890 = sbr.rel (%p2888) target = $region48
      $region47: #{forward.5} parent=5 // pred_region
        %s2891 = ssub.s32 %s11, 2
        // Predicated region
        $region49: #{forward.5} parent=47 // pred_check
          %p2892 = pneg %p129
        $region50: #{forward.5} parent=47 // pred_check_branch
          %2894 = sbr.rel (%p2892) target = $region52
        $region51: #{forward.5} parent=47 // pred_region
          %p2895 = scmp.lt.s32.totalorder %s17, 1
          %s2896 = scalar_select %p2895, %s17, 1
          %s2897 = smul.addr %s2896, 2
          %s2898 = smul.addr %s2897, 4
          %s2899 = scalar_lea.vmem %s4, %s2898
        $region52: #{forward.5} parent=47 // pred_fallthru
          _
      $region48: #{forward.5} parent=5 // pred_fallthru
        _
    $region6: #{forward.5} parent=1 // loop_footer
      %s15 = sadd.s32 1, %s11
    $region7: #{forward.5} parent=1 // loop_footer_branch
      %10 = sbr.rel target = $region3
    $region8: #{forward.5} parent=1 // loop_exit
      _
    %2900 = vsyncpa [#allocation4], 1
    %s2901 = scalar_lea.sflag [#allocation4], 1
    %2902 = vsyncpa %s2901, 1

</llo_original>
